<compile_context>
chip_gen: v7x
topology: tpu7x:2x2x1
jax: 0.10.0
libtpu: 0.0.40
codegen_flags: <defaults>
</compile_context>

<pallas_src>
import functools

import jax
import jax.numpy as jnp
from jax.experimental import pallas as pl
from jax.experimental.pallas import tpu as pltpu


def _round_up(x, m=128):
    return ((x + m - 1) // m) * m


def _pack_conv_weight(w, *, cin_pad, cout_pad):
    """(Cout, Cin, 3, 3) torch-layout -> (9, cin_pad, cout_pad), tap-major."""
    cout, cin, kh, kw = w.shape
    p = jnp.transpose(w, (2, 3, 1, 0)).reshape(kh * kw, cin, cout)
    return jnp.pad(p, ((0, 0), (0, cin_pad - cin), (0, cout_pad - cout)))


def _pad_bias(b, cpad):
    return jnp.pad(b, (0, cpad - b.shape[0])).reshape(1, cpad)


# ----------------------------------------------------------------------------
# Fused 2-layer conv kernel: one grid step == one image.
# ----------------------------------------------------------------------------
def _fused_features_kernel(x_ref, w1_ref, b1_ref, w2_ref, b2_ref, o_ref,
                           h1p_ref, *, H, W):
    cin = x_ref.shape[-1]
    c1p = w1_ref.shape[-1]

    # ---- Layer 1: 3x3 "same" conv via 9 shifted taps, f32 MXU accumulation.
    # Taps are sliced directly from the spatially padded VMEM input block.
    acc1 = None
    for di in range(3):
        for dj in range(3):
            tap = x_ref[0, di:di + H, dj:dj + W, :].reshape(H * W, cin)
            part = jnp.dot(tap, w1_ref[di * 3 + dj],
                           preferred_element_type=jnp.float32)
            acc1 = part if acc1 is None else acc1 + part
    h1 = jnp.maximum(acc1 + b1_ref[...], 0.0)            # (H*W, c1p)

    # Stage the spatially padded layer-1 feature map in VMEM scratch.
    # Padded channels carry ReLU(0 + 0) == 0, so they contribute nothing.
    h1p_ref[...] = jnp.zeros(h1p_ref.shape, h1p_ref.dtype)
    h1p_ref[1:H + 1, 1:W + 1, :] = h1.reshape(H, W, c1p)

    # ---- Layer 2: same 9-tap scheme; K = c1p (128) keeps the MXU K dim full.
    acc2 = None
    for di in range(3):
        for dj in range(3):
            tap = h1p_ref[di:di + H, dj:dj + W, :].reshape(H * W, c1p)
            part = jnp.dot(tap, w2_ref[di * 3 + dj],
                           preferred_element_type=jnp.float32)
            acc2 = part if acc2 is None else acc2 + part

    # Lane-dense (H*W, 128) store -> unmasked vst.
    o_ref[0] = jnp.maximum(acc2 + b2_ref[...], 0.0).astype(o_ref.dtype)


def _fused_features(x_pad, w1p, b1p, w2p, b2p, *, H, W):
    """x_pad: (N, H+2, W+2, Cin_pad) NHWC f32 -> (N, H*W, Cout_pad) f32."""
    N, Hp, Wp, cin = x_pad.shape
    c1p = w1p.shape[-1]
    c2p = w2p.shape[-1]
    kernel = functools.partial(_fused_features_kernel, H=H, W=W)

    return pl.pallas_call(
        kernel,
        out_shape=jax.ShapeDtypeStruct((N, H * W, c2p), jnp.float32),
        grid_spec=pltpu.PrefetchScalarGridSpec(
            num_scalar_prefetch=0,
            grid=(N,),
            in_specs=[
                pl.BlockSpec((1, Hp, Wp, cin), lambda n: (n, 0, 0, 0)),
                pl.BlockSpec((9, cin, c1p), lambda n: (0, 0, 0)),
                pl.BlockSpec((1, c1p), lambda n: (0, 0)),
                pl.BlockSpec((9, c1p, c2p), lambda n: (0, 0, 0)),
                pl.BlockSpec((1, c2p), lambda n: (0, 0)),
            ],
            out_specs=pl.BlockSpec((1, H * W, c2p), lambda n: (n, 0, 0)),
            scratch_shapes=[pltpu.VMEM((Hp, Wp, c1p), jnp.float32)],
        ),
        compiler_params=pltpu.CompilerParams(
            dimension_semantics=("parallel",)),
    )(x_pad, w1p, b1p, w2p, b2p)


# ----------------------------------------------------------------------------
# PMMODEL equivalent.
# ----------------------------------------------------------------------------
class PMModelPallas:
    def __init__(self, key, *, c1=16, c2=32, input_space="BGR"):
        k1, k2, k3, k4 = jax.random.split(key, 4)
        self.input_space = input_space
        self.channels = c2            # mirrors PMMODEL.channels

        # Synthetic backbone parameters in PyTorch OIHW layout (reference path).
        self.w1 = jax.random.normal(k1, (c1, 3, 3, 3), jnp.float32) * 0.1
        self.b1 = jax.random.normal(k2, (c1,), jnp.float32) * 0.1
        self.w2 = jax.random.normal(k3, (c2, c1, 3, 3), jnp.float32) * 0.1
        self.b2 = jax.random.normal(k4, (c2,), jnp.float32) * 0.1

        # Pad widths: Cin -> 8 sublanes, Cout -> 128 lanes (lane-dense stores).
        self._cin_pad = 8
        c1p = _round_up(c1, 128)
        c2p = _round_up(c2, 128)

        # Fold the BGR channel flip of _adjust_colorspace into w1's Cin axis.
        w1_eff = self.w1
        if input_space == "BGR":
            w1_eff = jnp.flip(self.w1, axis=1)
        else:
            assert input_space == "RGB"

        # Pack weights / biases once (jit constants; no per-forward transpose).
        self.w1_packed = _pack_conv_weight(w1_eff, cin_pad=self._cin_pad,
                                           cout_pad=c1p)       # (9, 8, 128)
        self.b1_packed = _pad_bias(self.b1, c1p)                # (1, 128)
        self.w2_packed = _pack_conv_weight(self.w2, cin_pad=c1p,
                                           cout_pad=c2p)        # (9, 128, 128)
        self.b2_packed = _pad_bias(self.b2, c2p)                # (1, 128)

    def _check_colorspace_input(self, x):
        # Same validation as _adjust_colorspace; the flip itself is folded
        # into self.w1_packed, so no runtime channel flip is needed.
        if x.shape[1] != 3:
            raise ValueError("Bad input shape")

    def forward(self, x):
        """x: NCHW float32 -> feature map NCHW (global_pool/last_linear = Identity)."""
        self._check_colorspace_input(x)
        N, _, H, W = x.shape
        # Model-boundary layout glue only: NCHW -> NHWC, spatial pad for "same"
        # conv, zero-pad the 3 input channels up to 8.
        x_nhwc = jnp.transpose(x, (0, 2, 3, 1))
        x_pad = jnp.pad(x_nhwc,
                        ((0, 0), (1, 1), (1, 1), (0, self._cin_pad - 3)))
        feat = _fused_features(x_pad, self.w1_packed, self.b1_packed,
                               self.w2_packed, self.b2_packed, H=H, W=W)
        # Slice the padded channels back out and return NCHW (model boundary).
        feat = feat.reshape(N, H, W, -1)[..., :self.channels]
        return jnp.transpose(feat, (0, 3, 1, 2))


if __name__ == "__main__":
    key = jax.random.PRNGKey(0)
    k_in, k_model = jax.random.split(key)

    # Small shapes consistent with the module: RGB images, batch=2, 16x16.
    x = jax.random.normal(k_in, (2, 3, 16, 16), jnp.float32)

    model = PMModelPallas(k_model)
    fwd = jax.jit(model.forward)
    out = fwd(x)
    jax.block_until_ready(out)

    # Sanity check against a plain-JAX reference using the ORIGINAL op order
    # (runtime BGR flip, un-packed weights).
    def ref_conv(xi, w, b):
        y = jax.lax.conv_general_dilated(
            xi, w, window_strides=(1, 1), padding="SAME",
            dimension_numbers=("NCHW", "OIHW", "NCHW"))
        return jnp.maximum(y + b[None, :, None, None], 0.0)

    xr = jnp.flip(x, axis=1) if model.input_space == "BGR" else x
    ref = ref_conv(ref_conv(xr, model.w1, model.b1), model.w2, model.b2)

    assert out.shape == (2, model.channels, 16, 16)
    assert jnp.allclose(out, ref, rtol=1e-2, atol=1e-2), \
        float(jnp.max(jnp.abs(out - ref)))

    print("KERNEL_OK")
</pallas_src>

<mosaic_0001>
module attributes {stable_mosaic.version = 11 : i64} {
  func.func @_fused_features_kernel(%arg0: i32, %arg1: memref<1x18x18x8xf32, #tpu.memory_space<vmem>>, %arg2: memref<9x8x128xf32, #tpu.memory_space<vmem>>, %arg3: memref<1x128xf32, #tpu.memory_space<vmem>>, %arg4: memref<9x128x128xf32, #tpu.memory_space<vmem>>, %arg5: memref<1x128xf32, #tpu.memory_space<vmem>>, %arg6: memref<1x256x128xf32, #tpu.memory_space<vmem>>, %arg7: memref<18x18x128xf32, #tpu.memory_space<vmem>>) attributes {dimension_semantics = [#tpu.dimension_semantics<parallel>], iteration_bounds = array<i64: 2>, scalar_prefetch = 0 : i64, scratch_operands = 1 : i64, tpu.core_type = #tpu.core_type<tc>, window_params = [{transform_indices = @transform_0, window_bounds = array<i64: 1, 18, 18, 8>}, {pipeline_mode = #tpu.pipeline_mode<synchronous>, transform_indices = @transform_1, window_bounds = array<i64: 9, 8, 128>}, {pipeline_mode = #tpu.pipeline_mode<synchronous>, transform_indices = @transform_2, window_bounds = array<i64: 1, 128>}, {pipeline_mode = #tpu.pipeline_mode<synchronous>, transform_indices = @transform_3, window_bounds = array<i64: 9, 128, 128>}, {pipeline_mode = #tpu.pipeline_mode<synchronous>, transform_indices = @transform_4, window_bounds = array<i64: 1, 128>}, {transform_indices = @transform_5, window_bounds = array<i64: 1, 256, 128>}]} {
    %c0 = arith.constant 0 : index
    %c0_0 = arith.constant 0 : index
    %c0_1 = arith.constant 0 : index
    %c0_2 = arith.constant 0 : index
    %0 = vector.load %arg1[%c0, %c0_0, %c0_1, %c0_2] : memref<1x18x18x8xf32, #tpu.memory_space<vmem>>, vector<1x16x16x8xf32>
    %1 = vector.shape_cast %0 : vector<1x16x16x8xf32> to vector<16x16x8xf32>
    %2 = vector.shape_cast %1 : vector<16x16x8xf32> to vector<256x8xf32>
    %c0_3 = arith.constant 0 : index
    %c0_4 = arith.constant 0 : index
    %c0_5 = arith.constant 0 : index
    %3 = vector.load %arg2[%c0_3, %c0_4, %c0_5] : memref<9x8x128xf32, #tpu.memory_space<vmem>>, vector<1x8x128xf32>
    %4 = vector.shape_cast %3 : vector<1x8x128xf32> to vector<8x128xf32>
    %cst = arith.constant dense<0.000000e+00> : vector<256x128xf32>
    %5 = tpu.matmul %2, %4, %cst {dimension_numbers = #tpu.dot_dimension_numbers<[1], [0], [0], [1], [0, 0, 1, 1], [], []>} : vector<256x8xf32>, vector<8x128xf32>, vector<256x128xf32> -> vector<256x128xf32>
    %c0_6 = arith.constant 0 : index
    %c0_7 = arith.constant 0 : index
    %c1 = arith.constant 1 : index
    %c0_8 = arith.constant 0 : index
    %6 = vector.load %arg1[%c0_6, %c0_7, %c1, %c0_8] : memref<1x18x18x8xf32, #tpu.memory_space<vmem>>, vector<1x16x16x8xf32>
    %7 = vector.shape_cast %6 : vector<1x16x16x8xf32> to vector<16x16x8xf32>
    %8 = vector.shape_cast %7 : vector<16x16x8xf32> to vector<256x8xf32>
    %c1_9 = arith.constant 1 : index
    %c0_10 = arith.constant 0 : index
    %c0_11 = arith.constant 0 : index
    %9 = vector.load %arg2[%c1_9, %c0_10, %c0_11] : memref<9x8x128xf32, #tpu.memory_space<vmem>>, vector<1x8x128xf32>
    %10 = vector.shape_cast %9 : vector<1x8x128xf32> to vector<8x128xf32>
    %cst_12 = arith.constant dense<0.000000e+00> : vector<256x128xf32>
    %11 = tpu.matmul %8, %10, %cst_12 {dimension_numbers = #tpu.dot_dimension_numbers<[1], [0], [0], [1], [0, 0, 1, 1], [], []>} : vector<256x8xf32>, vector<8x128xf32>, vector<256x128xf32> -> vector<256x128xf32>
    %12 = arith.addf %5, %11 : vector<256x128xf32>
    %c0_13 = arith.constant 0 : index
    %c0_14 = arith.constant 0 : index
    %c2 = arith.constant 2 : index
    %c0_15 = arith.constant 0 : index
    %13 = vector.load %arg1[%c0_13, %c0_14, %c2, %c0_15] : memref<1x18x18x8xf32, #tpu.memory_space<vmem>>, vector<1x16x16x8xf32>
    %14 = vector.shape_cast %13 : vector<1x16x16x8xf32> to vector<16x16x8xf32>
    %15 = vector.shape_cast %14 : vector<16x16x8xf32> to vector<256x8xf32>
    %c2_16 = arith.constant 2 : index
    %c0_17 = arith.constant 0 : index
    %c0_18 = arith.constant 0 : index
    %16 = vector.load %arg2[%c2_16, %c0_17, %c0_18] : memref<9x8x128xf32, #tpu.memory_space<vmem>>, vector<1x8x128xf32>
    %17 = vector.shape_cast %16 : vector<1x8x128xf32> to vector<8x128xf32>
    %cst_19 = arith.constant dense<0.000000e+00> : vector<256x128xf32>
    %18 = tpu.matmul %15, %17, %cst_19 {dimension_numbers = #tpu.dot_dimension_numbers<[1], [0], [0], [1], [0, 0, 1, 1], [], []>} : vector<256x8xf32>, vector<8x128xf32>, vector<256x128xf32> -> vector<256x128xf32>
    %19 = arith.addf %12, %18 : vector<256x128xf32>
    %c0_20 = arith.constant 0 : index
    %c1_21 = arith.constant 1 : index
    %c0_22 = arith.constant 0 : index
    %c0_23 = arith.constant 0 : index
    %20 = vector.load %arg1[%c0_20, %c1_21, %c0_22, %c0_23] : memref<1x18x18x8xf32, #tpu.memory_space<vmem>>, vector<1x16x16x8xf32>
    %21 = vector.shape_cast %20 : vector<1x16x16x8xf32> to vector<16x16x8xf32>
    %22 = vector.shape_cast %21 : vector<16x16x8xf32> to vector<256x8xf32>
    %c3 = arith.constant 3 : index
    %c0_24 = arith.constant 0 : index
    %c0_25 = arith.constant 0 : index
    %23 = vector.load %arg2[%c3, %c0_24, %c0_25] : memref<9x8x128xf32, #tpu.memory_space<vmem>>, vector<1x8x128xf32>
    %24 = vector.shape_cast %23 : vector<1x8x128xf32> to vector<8x128xf32>
    %cst_26 = arith.constant dense<0.000000e+00> : vector<256x128xf32>
    %25 = tpu.matmul %22, %24, %cst_26 {dimension_numbers = #tpu.dot_dimension_numbers<[1], [0], [0], [1], [0, 0, 1, 1], [], []>} : vector<256x8xf32>, vector<8x128xf32>, vector<256x128xf32> -> vector<256x128xf32>
    %26 = arith.addf %19, %25 : vector<256x128xf32>
    %c0_27 = arith.constant 0 : index
    %c1_28 = arith.constant 1 : index
    %c1_29 = arith.constant 1 : index
    %c0_30 = arith.constant 0 : index
    %27 = vector.load %arg1[%c0_27, %c1_28, %c1_29, %c0_30] : memref<1x18x18x8xf32, #tpu.memory_space<vmem>>, vector<1x16x16x8xf32>
    %28 = vector.shape_cast %27 : vector<1x16x16x8xf32> to vector<16x16x8xf32>
    %29 = vector.shape_cast %28 : vector<16x16x8xf32> to vector<256x8xf32>
    %c4 = arith.constant 4 : index
    %c0_31 = arith.constant 0 : index
    %c0_32 = arith.constant 0 : index
    %30 = vector.load %arg2[%c4, %c0_31, %c0_32] : memref<9x8x128xf32, #tpu.memory_space<vmem>>, vector<1x8x128xf32>
    %31 = vector.shape_cast %30 : vector<1x8x128xf32> to vector<8x128xf32>
    %cst_33 = arith.constant dense<0.000000e+00> : vector<256x128xf32>
    %32 = tpu.matmul %29, %31, %cst_33 {dimension_numbers = #tpu.dot_dimension_numbers<[1], [0], [0], [1], [0, 0, 1, 1], [], []>} : vector<256x8xf32>, vector<8x128xf32>, vector<256x128xf32> -> vector<256x128xf32>
    %33 = arith.addf %26, %32 : vector<256x128xf32>
    %c0_34 = arith.constant 0 : index
    %c1_35 = arith.constant 1 : index
    %c2_36 = arith.constant 2 : index
    %c0_37 = arith.constant 0 : index
    %34 = vector.load %arg1[%c0_34, %c1_35, %c2_36, %c0_37] : memref<1x18x18x8xf32, #tpu.memory_space<vmem>>, vector<1x16x16x8xf32>
    %35 = vector.shape_cast %34 : vector<1x16x16x8xf32> to vector<16x16x8xf32>
    %36 = vector.shape_cast %35 : vector<16x16x8xf32> to vector<256x8xf32>
    %c5 = arith.constant 5 : index
    %c0_38 = arith.constant 0 : index
    %c0_39 = arith.constant 0 : index
    %37 = vector.load %arg2[%c5, %c0_38, %c0_39] : memref<9x8x128xf32, #tpu.memory_space<vmem>>, vector<1x8x128xf32>
    %38 = vector.shape_cast %37 : vector<1x8x128xf32> to vector<8x128xf32>
    %cst_40 = arith.constant dense<0.000000e+00> : vector<256x128xf32>
    %39 = tpu.matmul %36, %38, %cst_40 {dimension_numbers = #tpu.dot_dimension_numbers<[1], [0], [0], [1], [0, 0, 1, 1], [], []>} : vector<256x8xf32>, vector<8x128xf32>, vector<256x128xf32> -> vector<256x128xf32>
    %40 = arith.addf %33, %39 : vector<256x128xf32>
    %c0_41 = arith.constant 0 : index
    %c2_42 = arith.constant 2 : index
    %c0_43 = arith.constant 0 : index
    %c0_44 = arith.constant 0 : index
    %41 = vector.load %arg1[%c0_41, %c2_42, %c0_43, %c0_44] : memref<1x18x18x8xf32, #tpu.memory_space<vmem>>, vector<1x16x16x8xf32>
    %42 = vector.shape_cast %41 : vector<1x16x16x8xf32> to vector<16x16x8xf32>
    %43 = vector.shape_cast %42 : vector<16x16x8xf32> to vector<256x8xf32>
    %c6 = arith.constant 6 : index
    %c0_45 = arith.constant 0 : index
    %c0_46 = arith.constant 0 : index
    %44 = vector.load %arg2[%c6, %c0_45, %c0_46] : memref<9x8x128xf32, #tpu.memory_space<vmem>>, vector<1x8x128xf32>
    %45 = vector.shape_cast %44 : vector<1x8x128xf32> to vector<8x128xf32>
    %cst_47 = arith.constant dense<0.000000e+00> : vector<256x128xf32>
    %46 = tpu.matmul %43, %45, %cst_47 {dimension_numbers = #tpu.dot_dimension_numbers<[1], [0], [0], [1], [0, 0, 1, 1], [], []>} : vector<256x8xf32>, vector<8x128xf32>, vector<256x128xf32> -> vector<256x128xf32>
    %47 = arith.addf %40, %46 : vector<256x128xf32>
    %c0_48 = arith.constant 0 : index
    %c2_49 = arith.constant 2 : index
    %c1_50 = arith.constant 1 : index
    %c0_51 = arith.constant 0 : index
    %48 = vector.load %arg1[%c0_48, %c2_49, %c1_50, %c0_51] : memref<1x18x18x8xf32, #tpu.memory_space<vmem>>, vector<1x16x16x8xf32>
    %49 = vector.shape_cast %48 : vector<1x16x16x8xf32> to vector<16x16x8xf32>
    %50 = vector.shape_cast %49 : vector<16x16x8xf32> to vector<256x8xf32>
    %c7 = arith.constant 7 : index
    %c0_52 = arith.constant 0 : index
    %c0_53 = arith.constant 0 : index
    %51 = vector.load %arg2[%c7, %c0_52, %c0_53] : memref<9x8x128xf32, #tpu.memory_space<vmem>>, vector<1x8x128xf32>
    %52 = vector.shape_cast %51 : vector<1x8x128xf32> to vector<8x128xf32>
    %cst_54 = arith.constant dense<0.000000e+00> : vector<256x128xf32>
    %53 = tpu.matmul %50, %52, %cst_54 {dimension_numbers = #tpu.dot_dimension_numbers<[1], [0], [0], [1], [0, 0, 1, 1], [], []>} : vector<256x8xf32>, vector<8x128xf32>, vector<256x128xf32> -> vector<256x128xf32>
    %54 = arith.addf %47, %53 : vector<256x128xf32>
    %c0_55 = arith.constant 0 : index
    %c2_56 = arith.constant 2 : index
    %c2_57 = arith.constant 2 : index
    %c0_58 = arith.constant 0 : index
    %55 = vector.load %arg1[%c0_55, %c2_56, %c2_57, %c0_58] : memref<1x18x18x8xf32, #tpu.memory_space<vmem>>, vector<1x16x16x8xf32>
    %56 = vector.shape_cast %55 : vector<1x16x16x8xf32> to vector<16x16x8xf32>
    %57 = vector.shape_cast %56 : vector<16x16x8xf32> to vector<256x8xf32>
    %c8 = arith.constant 8 : index
    %c0_59 = arith.constant 0 : index
    %c0_60 = arith.constant 0 : index
    %58 = vector.load %arg2[%c8, %c0_59, %c0_60] : memref<9x8x128xf32, #tpu.memory_space<vmem>>, vector<1x8x128xf32>
    %59 = vector.shape_cast %58 : vector<1x8x128xf32> to vector<8x128xf32>
    %cst_61 = arith.constant dense<0.000000e+00> : vector<256x128xf32>
    %60 = tpu.matmul %57, %59, %cst_61 {dimension_numbers = #tpu.dot_dimension_numbers<[1], [0], [0], [1], [0, 0, 1, 1], [], []>} : vector<256x8xf32>, vector<8x128xf32>, vector<256x128xf32> -> vector<256x128xf32>
    %61 = arith.addf %54, %60 : vector<256x128xf32>
    %c0_62 = arith.constant 0 : index
    %c0_63 = arith.constant 0 : index
    %62 = vector.load %arg3[%c0_62, %c0_63] : memref<1x128xf32, #tpu.memory_space<vmem>>, vector<1x128xf32>
    %63 = vector.broadcast %62 : vector<1x128xf32> to vector<256x128xf32>
    %64 = arith.addf %61, %63 : vector<256x128xf32>
    %cst_64 = arith.constant 0.000000e+00 : f32
    %65 = vector.broadcast %cst_64 : f32 to vector<256x128xf32>
    %66 = arith.maximumf %64, %65 : vector<256x128xf32>
    %cst_65 = arith.constant 0.000000e+00 : f32
    %67 = vector.broadcast %cst_65 : f32 to vector<18x18x128xf32>
    %c0_66 = arith.constant 0 : index
    %c0_67 = arith.constant 0 : index
    %c0_68 = arith.constant 0 : index
    %68 = vector.load %arg7[%c0_66, %c0_67, %c0_68] : memref<18x18x128xf32, #tpu.memory_space<vmem>>, vector<18x18x128xf32>
    tpu.vector_store %arg7[%c0_66, %c0_67, %c0_68], %67 {strides = array<i32>} : memref<18x18x128xf32, #tpu.memory_space<vmem>>, vector<18x18x128xf32>,
    %69 = vector.shape_cast %66 : vector<256x128xf32> to vector<16x16x128xf32>
    %c1_69 = arith.constant 1 : index
    %c1_70 = arith.constant 1 : index
    %c0_71 = arith.constant 0 : index
    %70 = vector.load %arg7[%c1_69, %c1_70, %c0_71] : memref<18x18x128xf32, #tpu.memory_space<vmem>>, vector<16x16x128xf32>
    tpu.vector_store %arg7[%c1_69, %c1_70, %c0_71], %69 {strides = array<i32>} : memref<18x18x128xf32, #tpu.memory_space<vmem>>, vector<16x16x128xf32>,
    %c0_72 = arith.constant 0 : index
    %c0_73 = arith.constant 0 : index
    %c0_74 = arith.constant 0 : index
    %71 = vector.load %arg7[%c0_72, %c0_73, %c0_74] : memref<18x18x128xf32, #tpu.memory_space<vmem>>, vector<16x16x128xf32>
    %72 = vector.shape_cast %71 : vector<16x16x128xf32> to vector<256x128xf32>
    %c0_75 = arith.constant 0 : index
    %c0_76 = arith.constant 0 : index
    %c0_77 = arith.constant 0 : index
    %73 = vector.load %arg4[%c0_75, %c0_76, %c0_77] : memref<9x128x128xf32, #tpu.memory_space<vmem>>, vector<1x128x128xf32>
    %74 = vector.shape_cast %73 : vector<1x128x128xf32> to vector<128x128xf32>
    %cst_78 = arith.constant dense<0.000000e+00> : vector<256x128xf32>
    %75 = tpu.matmul %72, %74, %cst_78 {dimension_numbers = #tpu.dot_dimension_numbers<[1], [0], [0], [1], [0, 0, 1, 1], [], []>} : vector<256x128xf32>, vector<128x128xf32>, vector<256x128xf32> -> vector<256x128xf32>
    %c0_79 = arith.constant 0 : index
    %c1_80 = arith.constant 1 : index
    %c0_81 = arith.constant 0 : index
    %76 = vector.load %arg7[%c0_79, %c1_80, %c0_81] : memref<18x18x128xf32, #tpu.memory_space<vmem>>, vector<16x16x128xf32>
    %77 = vector.shape_cast %76 : vector<16x16x128xf32> to vector<256x128xf32>
    %c1_82 = arith.constant 1 : index
    %c0_83 = arith.constant 0 : index
    %c0_84 = arith.constant 0 : index
    %78 = vector.load %arg4[%c1_82, %c0_83, %c0_84] : memref<9x128x128xf32, #tpu.memory_space<vmem>>, vector<1x128x128xf32>
    %79 = vector.shape_cast %78 : vector<1x128x128xf32> to vector<128x128xf32>
    %cst_85 = arith.constant dense<0.000000e+00> : vector<256x128xf32>
    %80 = tpu.matmul %77, %79, %cst_85 {dimension_numbers = #tpu.dot_dimension_numbers<[1], [0], [0], [1], [0, 0, 1, 1], [], []>} : vector<256x128xf32>, vector<128x128xf32>, vector<256x128xf32> -> vector<256x128xf32>
    %81 = arith.addf %75, %80 : vector<256x128xf32>
    %c0_86 = arith.constant 0 : index
    %c2_87 = arith.constant 2 : index
    %c0_88 = arith.constant 0 : index
    %82 = vector.load %arg7[%c0_86, %c2_87, %c0_88] : memref<18x18x128xf32, #tpu.memory_space<vmem>>, vector<16x16x128xf32>
    %83 = vector.shape_cast %82 : vector<16x16x128xf32> to vector<256x128xf32>
    %c2_89 = arith.constant 2 : index
    %c0_90 = arith.constant 0 : index
    %c0_91 = arith.constant 0 : index
    %84 = vector.load %arg4[%c2_89, %c0_90, %c0_91] : memref<9x128x128xf32, #tpu.memory_space<vmem>>, vector<1x128x128xf32>
    %85 = vector.shape_cast %84 : vector<1x128x128xf32> to vector<128x128xf32>
    %cst_92 = arith.constant dense<0.000000e+00> : vector<256x128xf32>
    %86 = tpu.matmul %83, %85, %cst_92 {dimension_numbers = #tpu.dot_dimension_numbers<[1], [0], [0], [1], [0, 0, 1, 1], [], []>} : vector<256x128xf32>, vector<128x128xf32>, vector<256x128xf32> -> vector<256x128xf32>
    %87 = arith.addf %81, %86 : vector<256x128xf32>
    %c1_93 = arith.constant 1 : index
    %c0_94 = arith.constant 0 : index
    %c0_95 = arith.constant 0 : index
    %88 = vector.load %arg7[%c1_93, %c0_94, %c0_95] : memref<18x18x128xf32, #tpu.memory_space<vmem>>, vector<16x16x128xf32>
    %89 = vector.shape_cast %88 : vector<16x16x128xf32> to vector<256x128xf32>
    %c3_96 = arith.constant 3 : index
    %c0_97 = arith.constant 0 : index
    %c0_98 = arith.constant 0 : index
    %90 = vector.load %arg4[%c3_96, %c0_97, %c0_98] : memref<9x128x128xf32, #tpu.memory_space<vmem>>, vector<1x128x128xf32>
    %91 = vector.shape_cast %90 : vector<1x128x128xf32> to vector<128x128xf32>
    %cst_99 = arith.constant dense<0.000000e+00> : vector<256x128xf32>
    %92 = tpu.matmul %89, %91, %cst_99 {dimension_numbers = #tpu.dot_dimension_numbers<[1], [0], [0], [1], [0, 0, 1, 1], [], []>} : vector<256x128xf32>, vector<128x128xf32>, vector<256x128xf32> -> vector<256x128xf32>
    %93 = arith.addf %87, %92 : vector<256x128xf32>
    %c1_100 = arith.constant 1 : index
    %c1_101 = arith.constant 1 : index
    %c0_102 = arith.constant 0 : index
    %94 = vector.load %arg7[%c1_100, %c1_101, %c0_102] : memref<18x18x128xf32, #tpu.memory_space<vmem>>, vector<16x16x128xf32>
    %95 = vector.shape_cast %94 : vector<16x16x128xf32> to vector<256x128xf32>
    %c4_103 = arith.constant 4 : index
    %c0_104 = arith.constant 0 : index
    %c0_105 = arith.constant 0 : index
    %96 = vector.load %arg4[%c4_103, %c0_104, %c0_105] : memref<9x128x128xf32, #tpu.memory_space<vmem>>, vector<1x128x128xf32>
    %97 = vector.shape_cast %96 : vector<1x128x128xf32> to vector<128x128xf32>
    %cst_106 = arith.constant dense<0.000000e+00> : vector<256x128xf32>
    %98 = tpu.matmul %95, %97, %cst_106 {dimension_numbers = #tpu.dot_dimension_numbers<[1], [0], [0], [1], [0, 0, 1, 1], [], []>} : vector<256x128xf32>, vector<128x128xf32>, vector<256x128xf32> -> vector<256x128xf32>
    %99 = arith.addf %93, %98 : vector<256x128xf32>
    %c1_107 = arith.constant 1 : index
    %c2_108 = arith.constant 2 : index
    %c0_109 = arith.constant 0 : index
    %100 = vector.load %arg7[%c1_107, %c2_108, %c0_109] : memref<18x18x128xf32, #tpu.memory_space<vmem>>, vector<16x16x128xf32>
    %101 = vector.shape_cast %100 : vector<16x16x128xf32> to vector<256x128xf32>
    %c5_110 = arith.constant 5 : index
    %c0_111 = arith.constant 0 : index
    %c0_112 = arith.constant 0 : index
    %102 = vector.load %arg4[%c5_110, %c0_111, %c0_112] : memref<9x128x128xf32, #tpu.memory_space<vmem>>, vector<1x128x128xf32>
    %103 = vector.shape_cast %102 : vector<1x128x128xf32> to vector<128x128xf32>
    %cst_113 = arith.constant dense<0.000000e+00> : vector<256x128xf32>
    %104 = tpu.matmul %101, %103, %cst_113 {dimension_numbers = #tpu.dot_dimension_numbers<[1], [0], [0], [1], [0, 0, 1, 1], [], []>} : vector<256x128xf32>, vector<128x128xf32>, vector<256x128xf32> -> vector<256x128xf32>
    %105 = arith.addf %99, %104 : vector<256x128xf32>
    %c2_114 = arith.constant 2 : index
    %c0_115 = arith.constant 0 : index
    %c0_116 = arith.constant 0 : index
    %106 = vector.load %arg7[%c2_114, %c0_115, %c0_116] : memref<18x18x128xf32, #tpu.memory_space<vmem>>, vector<16x16x128xf32>
    %107 = vector.shape_cast %106 : vector<16x16x128xf32> to vector<256x128xf32>
    %c6_117 = arith.constant 6 : index
    %c0_118 = arith.constant 0 : index
    %c0_119 = arith.constant 0 : index
    %108 = vector.load %arg4[%c6_117, %c0_118, %c0_119] : memref<9x128x128xf32, #tpu.memory_space<vmem>>, vector<1x128x128xf32>
    %109 = vector.shape_cast %108 : vector<1x128x128xf32> to vector<128x128xf32>
    %cst_120 = arith.constant dense<0.000000e+00> : vector<256x128xf32>
    %110 = tpu.matmul %107, %109, %cst_120 {dimension_numbers = #tpu.dot_dimension_numbers<[1], [0], [0], [1], [0, 0, 1, 1], [], []>} : vector<256x128xf32>, vector<128x128xf32>, vector<256x128xf32> -> vector<256x128xf32>
    %111 = arith.addf %105, %110 : vector<256x128xf32>
    %c2_121 = arith.constant 2 : index
    %c1_122 = arith.constant 1 : index
    %c0_123 = arith.constant 0 : index
    %112 = vector.load %arg7[%c2_121, %c1_122, %c0_123] : memref<18x18x128xf32, #tpu.memory_space<vmem>>, vector<16x16x128xf32>
    %113 = vector.shape_cast %112 : vector<16x16x128xf32> to vector<256x128xf32>
    %c7_124 = arith.constant 7 : index
    %c0_125 = arith.constant 0 : index
    %c0_126 = arith.constant 0 : index
    %114 = vector.load %arg4[%c7_124, %c0_125, %c0_126] : memref<9x128x128xf32, #tpu.memory_space<vmem>>, vector<1x128x128xf32>
    %115 = vector.shape_cast %114 : vector<1x128x128xf32> to vector<128x128xf32>
    %cst_127 = arith.constant dense<0.000000e+00> : vector<256x128xf32>
    %116 = tpu.matmul %113, %115, %cst_127 {dimension_numbers = #tpu.dot_dimension_numbers<[1], [0], [0], [1], [0, 0, 1, 1], [], []>} : vector<256x128xf32>, vector<128x128xf32>, vector<256x128xf32> -> vector<256x128xf32>
    %117 = arith.addf %111, %116 : vector<256x128xf32>
    %c2_128 = arith.constant 2 : index
    %c2_129 = arith.constant 2 : index
    %c0_130 = arith.constant 0 : index
    %118 = vector.load %arg7[%c2_128, %c2_129, %c0_130] : memref<18x18x128xf32, #tpu.memory_space<vmem>>, vector<16x16x128xf32>
    %119 = vector.shape_cast %118 : vector<16x16x128xf32> to vector<256x128xf32>
    %c8_131 = arith.constant 8 : index
    %c0_132 = arith.constant 0 : index
    %c0_133 = arith.constant 0 : index
    %120 = vector.load %arg4[%c8_131, %c0_132, %c0_133] : memref<9x128x128xf32, #tpu.memory_space<vmem>>, vector<1x128x128xf32>
    %121 = vector.shape_cast %120 : vector<1x128x128xf32> to vector<128x128xf32>
    %cst_134 = arith.constant dense<0.000000e+00> : vector<256x128xf32>
    %122 = tpu.matmul %119, %121, %cst_134 {dimension_numbers = #tpu.dot_dimension_numbers<[1], [0], [0], [1], [0, 0, 1, 1], [], []>} : vector<256x128xf32>, vector<128x128xf32>, vector<256x128xf32> -> vector<256x128xf32>
    %123 = arith.addf %117, %122 : vector<256x128xf32>
    %c0_135 = arith.constant 0 : index
    %c0_136 = arith.constant 0 : index
    %124 = vector.load %arg5[%c0_135, %c0_136] : memref<1x128xf32, #tpu.memory_space<vmem>>, vector<1x128xf32>
    %125 = vector.broadcast %124 : vector<1x128xf32> to vector<256x128xf32>
    %126 = arith.addf %123, %125 : vector<256x128xf32>
    %cst_137 = arith.constant 0.000000e+00 : f32
    %127 = vector.broadcast %cst_137 : f32 to vector<256x128xf32>
    %128 = arith.maximumf %126, %127 : vector<256x128xf32>
    %c0_138 = arith.constant 0 : index
    %c0_139 = arith.constant 0 : index
    %c0_140 = arith.constant 0 : index
    %129 = vector.load %arg6[%c0_138, %c0_139, %c0_140] : memref<1x256x128xf32, #tpu.memory_space<vmem>>, vector<1x256x128xf32>
    %130 = vector.shape_cast %129 : vector<1x256x128xf32> to vector<256x128xf32>
    %131 = vector.shape_cast %128 : vector<256x128xf32> to vector<1x256x128xf32>
    tpu.vector_store %arg6[%c0_138, %c0_139, %c0_140], %131 {strides = array<i32>} : memref<1x256x128xf32, #tpu.memory_space<vmem>>, vector<1x256x128xf32>,
    return
  }
  func.func @transform_0(%arg0: i32) -> (i32, i32, i32, i32) {
    %c0_i32 = arith.constant 0 : i32
    %c0_i32_0 = arith.constant 0 : i32
    %c0_i32_1 = arith.constant 0 : i32
    %c0_i32_2 = arith.constant 0 : i32
    return %arg0, %c0_i32, %c0_i32_0, %c0_i32_1 : i32, i32, i32, i32
  }
  func.func @transform_1(%arg0: i32) -> (i32, i32, i32) {
    %c0_i32 = arith.constant 0 : i32
    %c0_i32_0 = arith.constant 0 : i32
    %c0_i32_1 = arith.constant 0 : i32
    %c0_i32_2 = arith.constant 0 : i32
    return %c0_i32, %c0_i32_0, %c0_i32_1 : i32, i32, i32
  }
  func.func @transform_2(%arg0: i32) -> (i32, i32) {
    %c0_i32 = arith.constant 0 : i32
    %c0_i32_0 = arith.constant 0 : i32
    %c0_i32_1 = arith.constant 0 : i32
    return %c0_i32, %c0_i32_0 : i32, i32
  }
  func.func @transform_3(%arg0: i32) -> (i32, i32, i32) {
    %c0_i32 = arith.constant 0 : i32
    %c0_i32_0 = arith.constant 0 : i32
    %c0_i32_1 = arith.constant 0 : i32
    %c0_i32_2 = arith.constant 0 : i32
    return %c0_i32, %c0_i32_0, %c0_i32_1 : i32, i32, i32
  }
  func.func @transform_4(%arg0: i32) -> (i32, i32) {
    %c0_i32 = arith.constant 0 : i32
    %c0_i32_0 = arith.constant 0 : i32
    %c0_i32_1 = arith.constant 0 : i32
    return %c0_i32, %c0_i32_0 : i32, i32
  }
  func.func @transform_5(%arg0: i32) -> (i32, i32, i32) {
    %c0_i32 = arith.constant 0 : i32
    %c0_i32_0 = arith.constant 0 : i32
    %c0_i32_1 = arith.constant 0 : i32
    return %arg0, %c0_i32, %c0_i32_0 : i32, i32, i32
  }
}

</mosaic_0001>

<llo_original>
// kernel: forward.1
$region0: #{forward.1}
  #allocation0 [shape = 'u32[]', space=smem, size = 0x4, offset = 0x4, fixed_abs, tag = 'smem constant byte address 0x4 - core index']
  #allocation1 [shape = 'u32[144,128]{1,0:T(1,128)}', space=vmem, size = 0x12000, scoped, tag = 'internal scratch']
  #allocation2 [shape = 'f32[18,18,128]{2,1,0:T(8,128)}', space=vmem, size = 0x36000, scoped, tag = 'scratch operand']
  %s0 = inlined_call_operand.vmem [shape: f32[2,18,18,8], index: 0, kind: input, shape index: {}]
  %s1 = inlined_call_operand.vmem [shape: f32[9,8,128], index: 1, kind: input, shape index: {}]
  %s2 = inlined_call_operand.vmem [shape: f32[1,128], index: 2, kind: input, shape index: {}]
  %s3 = inlined_call_operand.vmem [shape: f32[9,128,128], index: 3, kind: input, shape index: {}]
  %s4 = inlined_call_operand.vmem [shape: f32[1,128], index: 4, kind: input, shape index: {}]
  %s5 = inlined_call_operand.vmem [shape: f32[2,256,128], index: 5, kind: output, shape index: {}]
  %s6 = sld [smem:[#allocation0]]
  $region53: #{forward.1} parent=0
    _
  %s8 = ssub.s32 1, %s6
  %s9 = scalar_select 0, %s8, %s6
  loop: start=0, step=1, limit=4
  $region2: #{forward.1} parent=0 // loop_pre_header
    _
  $region3: #{forward.1} parent=0 // loop_header
    %s11 = sphi 0, %s15
    %p12 = scmp.ge.s32.totalorder %s11, 4
    %s21 = sphi 0, %s23
    %s24 = sphi 0, %s21
    %s25 = sphi 0, %s24
    %s41 = sphi 0, %s25
    %s45 = sphi 0, %s45
    %s47 = sphi 0, %s45
    %s48 = sphi 0, %s47
    %s62 = sphi 0, %s48
    %s66 = sphi 0, %s66
    %s68 = sphi 0, %s66
    %s69 = sphi 0, %s68
    %s83 = sphi 0, %s69
    %s87 = sphi 0, %s87
    %s89 = sphi 0, %s87
    %s90 = sphi 0, %s89
    %s104 = sphi 0, %s90
    %s108 = sphi 0, %s108
    %s110 = sphi 0, %s108
    %s111 = sphi 0, %s110
    %s125 = sphi 0, %s111
    %s131 = sphi 0, %s133
    %s134 = sphi 0, %s131
    %s135 = sphi 0, %s134
    %s151 = sphi 0, %s135
  $region4: #{forward.1} parent=0 // loop_header_branch
    %14 = sbr.rel (%p12) target = $region8
  $region5: #{forward.1} parent=0 // loop_body
    %s16 = ssub.s32 %s11, 1
    %s17 = ssub.s32 %s11, 2
    %s18 = sadd.s32 %s11, 1
    %s19 = ssub.s32 %s11, %s18
    %p20 = scmp.eq.s32.totalorder %s19, 0
    %s22 = sadd.s32 %s21, 1
    %s23 = scalar_select %p20, %s21, %s22
    %p26 = pneg %p20
    %p27 = scmp.eq.s32.totalorder %s11, 1
    %p28 = por %p26, %p27
    %p29 = scmp.ne.s32.totalorder %s21, %s24
    %p30 = scmp.eq.s32.totalorder %s11, 0
    %p31 = por %p29, %p30
    %p32 = scmp.ne.s32.totalorder %s21, %s24
    %p33 = scmp.eq.s32.totalorder %s16, 1
    %p34 = por %p32, %p33
    %p35 = scmp.ne.s32.totalorder %s24, %s25
    %p36 = scmp.eq.s32.totalorder %s16, 0
    %p37 = por %p35, %p36
    %p38 = scmp.ne.s32.totalorder %s24, %s25
    %p39 = scmp.eq.s32.totalorder %s17, 1
    %p40 = por %p38, %p39
    %p42 = scmp.ne.s32.totalorder %s25, %s41
    %p43 = scmp.eq.s32.totalorder %s17, 0
    %p44 = por %p42, %p43
    %s46 = sadd.s32 %s45, 1
    %p49 = scmp.eq.s32.totalorder %s11, 1
    %p50 = scmp.ne.s32.totalorder %s45, %s47
    %p51 = scmp.eq.s32.totalorder %s11, 0
    %p52 = por %p50, %p51
    %p53 = scmp.ne.s32.totalorder %s45, %s47
    %p54 = scmp.eq.s32.totalorder %s16, 1
    %p55 = por %p53, %p54
    %p56 = scmp.ne.s32.totalorder %s47, %s48
    %p57 = scmp.eq.s32.totalorder %s16, 0
    %p58 = por %p56, %p57
    %p59 = scmp.ne.s32.totalorder %s47, %s48
    %p60 = scmp.eq.s32.totalorder %s17, 1
    %p61 = por %p59, %p60
    %p63 = scmp.ne.s32.totalorder %s48, %s62
    %p64 = scmp.eq.s32.totalorder %s17, 0
    %p65 = por %p63, %p64
    %s67 = sadd.s32 %s66, 1
    %p70 = scmp.eq.s32.totalorder %s11, 1
    %p71 = scmp.ne.s32.totalorder %s66, %s68
    %p72 = scmp.eq.s32.totalorder %s11, 0
    %p73 = por %p71, %p72
    %p74 = scmp.ne.s32.totalorder %s66, %s68
    %p75 = scmp.eq.s32.totalorder %s16, 1
    %p76 = por %p74, %p75
    %p77 = scmp.ne.s32.totalorder %s68, %s69
    %p78 = scmp.eq.s32.totalorder %s16, 0
    %p79 = por %p77, %p78
    %p80 = scmp.ne.s32.totalorder %s68, %s69
    %p81 = scmp.eq.s32.totalorder %s17, 1
    %p82 = por %p80, %p81
    %p84 = scmp.ne.s32.totalorder %s69, %s83
    %p85 = scmp.eq.s32.totalorder %s17, 0
    %p86 = por %p84, %p85
    %s88 = sadd.s32 %s87, 1
    %p91 = scmp.eq.s32.totalorder %s11, 1
    %p92 = scmp.ne.s32.totalorder %s87, %s89
    %p93 = scmp.eq.s32.totalorder %s11, 0
    %p94 = por %p92, %p93
    %p95 = scmp.ne.s32.totalorder %s87, %s89
    %p96 = scmp.eq.s32.totalorder %s16, 1
    %p97 = por %p95, %p96
    %p98 = scmp.ne.s32.totalorder %s89, %s90
    %p99 = scmp.eq.s32.totalorder %s16, 0
    %p100 = por %p98, %p99
    %p101 = scmp.ne.s32.totalorder %s89, %s90
    %p102 = scmp.eq.s32.totalorder %s17, 1
    %p103 = por %p101, %p102
    %p105 = scmp.ne.s32.totalorder %s90, %s104
    %p106 = scmp.eq.s32.totalorder %s17, 0
    %p107 = por %p105, %p106
    %s109 = sadd.s32 %s108, 1
    %p112 = scmp.eq.s32.totalorder %s11, 1
    %p113 = scmp.ne.s32.totalorder %s108, %s110
    %p114 = scmp.eq.s32.totalorder %s11, 0
    %p115 = por %p113, %p114
    %p116 = scmp.ne.s32.totalorder %s108, %s110
    %p117 = scmp.eq.s32.totalorder %s16, 1
    %p118 = por %p116, %p117
    %p119 = scmp.ne.s32.totalorder %s110, %s111
    %p120 = scmp.eq.s32.totalorder %s16, 0
    %p121 = por %p119, %p120
    %p122 = scmp.ne.s32.totalorder %s110, %s111
    %p123 = scmp.eq.s32.totalorder %s17, 1
    %p124 = por %p122, %p123
    %p126 = scmp.ne.s32.totalorder %s111, %s125
    %p127 = scmp.eq.s32.totalorder %s17, 0
    %p128 = por %p126, %p127
    %s129 = ssub.s32 %s11, %s18
    %p130 = scmp.eq.s32.totalorder %s129, 0
    %s132 = sadd.s32 %s131, 1
    %s133 = scalar_select %p130, %s131, %s132
    %p136 = pneg %p130
    %p137 = scmp.eq.s32.totalorder %s11, 1
    %p138 = por %p136, %p137
    %p139 = scmp.ne.s32.totalorder %s131, %s134
    %p140 = scmp.eq.s32.totalorder %s11, 0
    %p141 = por %p139, %p140
    %p142 = scmp.ne.s32.totalorder %s131, %s134
    %p143 = scmp.eq.s32.totalorder %s16, 1
    %p144 = por %p142, %p143
    %p145 = scmp.ne.s32.totalorder %s134, %s135
    %p146 = scmp.eq.s32.totalorder %s16, 0
    %p147 = por %p145, %p146
    %p148 = scmp.ne.s32.totalorder %s134, %s135
    %p149 = scmp.eq.s32.totalorder %s17, 1
    %p150 = por %p148, %p149
    %p152 = scmp.ne.s32.totalorder %s135, %s151
    %p153 = scmp.eq.s32.totalorder %s17, 0
    %p154 = por %p152, %p153
    %p155 = scmp.le.s32.totalorder 1, %s11
    %p156 = scmp.lt.s32.totalorder %s11, 3
    %p157 = pnand %p155, %p156
    %p158 = pneg %p157
    // Predicated region
    $region9: #{forward.1} parent=5 // pred_check
      _
    $region10: #{forward.1} parent=5 // pred_check_branch
      %160 = sbr.rel (%p157) target = $region12
    $region11: #{forward.1} parent=5 // pred_region
      %s161 = ssub.s32 %s11, 1
      // Predicated region
      $region13: #{forward.1} parent=11 // pred_check
        %p162 = pneg %p58
      $region14: #{forward.1} parent=11 // pred_check_branch
        %164 = sbr.rel (%p162) target = $region16
      $region15: #{forward.1} parent=11 // pred_region
        _
      $region16: #{forward.1} parent=11 // pred_fallthru
        _
      // Predicated region
      $region17: #{forward.1} parent=11 // pred_check
        %p165 = pneg %p79
      $region18: #{forward.1} parent=11 // pred_check_branch
        %167 = sbr.rel (%p165) target = $region20
      $region19: #{forward.1} parent=11 // pred_region
        _
      $region20: #{forward.1} parent=11 // pred_fallthru
        _
      // Predicated region
      $region21: #{forward.1} parent=11 // pred_check
        %p168 = pneg %p100
      $region22: #{forward.1} parent=11 // pred_check_branch
        %170 = sbr.rel (%p168) target = $region24
      $region23: #{forward.1} parent=11 // pred_region
        _
      $region24: #{forward.1} parent=11 // pred_fallthru
        _
      // Predicated region
      $region25: #{forward.1} parent=11 // pred_check
        %p171 = pneg %p121
      $region26: #{forward.1} parent=11 // pred_check_branch
        %173 = sbr.rel (%p171) target = $region28
      $region27: #{forward.1} parent=11 // pred_region
        _
      $region28: #{forward.1} parent=11 // pred_fallthru
        _
    $region12: #{forward.1} parent=5 // pred_fallthru
      _
    %p174 = scmp.lt.s32.totalorder %s11, 2
    // Predicated region
    $region29: #{forward.1} parent=5 // pred_check
      %p175 = pneg %p174
    $region30: #{forward.1} parent=5 // pred_check_branch
      %177 = sbr.rel (%p175) target = $region32
    $region31: #{forward.1} parent=5 // pred_region
      // Predicated region
      $region33: #{forward.1} parent=31 // pred_check
        %p178 = pneg %p31
      $region34: #{forward.1} parent=31 // pred_check_branch
        %180 = sbr.rel (%p178) target = $region36
      $region35: #{forward.1} parent=31 // pred_region
        %p181 = scmp.lt.s32.totalorder %s11, 1
        %s182 = scalar_select %p181, %s11, 1
        %s183 = smul.addr %s182, 54
        %s184 = smul.addr %s183, 8
        %s185 = scalar_lea.vmem %s0, %s184
      $region36: #{forward.1} parent=31 // pred_fallthru
        _
    $region32: #{forward.1} parent=5 // pred_fallthru
      _
    %p186 = scmp.le.s32.totalorder 1, %s11
    %p187 = scmp.lt.s32.totalorder %s11, 3
    %p188 = pnand %p186, %p187
    %p189 = pneg %p188
    // Predicated region
    $region37: #{forward.1} parent=5 // pred_check
      _
    $region38: #{forward.1} parent=5 // pred_check_branch
      %191 = sbr.rel (%p188) target = $region40
    $region39: #{forward.1} parent=5 // pred_region
      %s192 = ssub.s32 %s11, 1
      %p193 = scmp.lt.s32.totalorder %s16, 1
      %s194 = scalar_select %p193, %s16, 1
      %s195 = smul.addr %s194, 54
      %s196 = smul.addr %s195, 8
      %s197 = scalar_lea.vmem %s0, %s196
      %p198 = pneg %p37
      %p199 = pneg %p34
      %p200 = pneg %p58
      %p201 = pneg %p55
      %p202 = pneg %p79
      %p203 = pneg %p76
      %p204 = pneg %p100
      %p205 = pneg %p97
      %p206 = pneg %p121
      %p207 = pneg %p118
      %p208 = pneg %p147
      %p209 = pneg %p144
      %p210 = scmp.lt.s32.totalorder %s16, 1
      %s211 = scalar_select %p210, %s16, 1
      %s212 = smul.addr %s211, 32
      %s213 = smul.addr %s212, 8
      %s214 = scalar_lea.vmem %s5, %s213
      %p215 = scmp.lt.s32.totalorder %s16, 1
      %s216 = scalar_select %p215, %s16, 1
      %s217 = smul.addr %s216, 54
      %s218 = smul.addr %s217, 8
      %s219 = scalar_lea.vmem %s0, %s218
      %p220 = scmp.lt.s32.totalorder %s16, 1
      %s221 = scalar_select %p220, %s16, 1
      %s222 = smul.addr %s221, 32
      %s223 = smul.addr %s222, 8
      %s224 = scalar_lea.vmem %s5, %s223
      %v225 = vld [vmem:[%s219] sm:$0xff]
      %v226 = vld [vmem:[%s219 + $0x8] sm:$0xff]
      %v227 = vld [vmem:[%s219 + $0x18] sm:$0xff]
      %v228 = vld [vmem:[%s219 + $0x20] sm:$0xff]
      %v229 = vld [vmem:[%s219 + $0x30] sm:$0xff]
      %v230 = vld [vmem:[%s219 + $0x38] sm:$0xff]
      %v231 = vld [vmem:[%s219 + $0x48] sm:$0xff]
      %v232 = vld [vmem:[%s219 + $0x50] sm:$0xff]
      %v233 = vld [vmem:[%s219 + $0x60] sm:$0xff]
      %v234 = vld [vmem:[%s219 + $0x68] sm:$0xff]
      %v235 = vld [vmem:[%s219 + $0x78] sm:$0xff]
      %v236 = vld [vmem:[%s219 + $0x80] sm:$0xff]
      %v237 = vld [vmem:[%s219 + $0x90] sm:$0xff]
      %v238 = vld [vmem:[%s219 + $0x98] sm:$0xff]
      %v239 = vld [vmem:[%s219 + $0xa8] sm:$0xff]
      %v240 = vld [vmem:[%s219 + $0xb0] sm:$0xff]
      %v241 = vld [vmem:[%s219 + $0xc0] sm:$0xff]
      %v242 = vld [vmem:[%s219 + $0xc8] sm:$0xff]
      %v243 = vld [vmem:[%s219 + $0xd8] sm:$0xff]
      %v244 = vld [vmem:[%s219 + $0xe0] sm:$0xff]
      %v245 = vld [vmem:[%s219 + $0xf0] sm:$0xff]
      %v246 = vld [vmem:[%s219 + $0xf8] sm:$0xff]
      %v247 = vld [vmem:[%s219 + $0x108] sm:$0xff]
      %v248 = vld [vmem:[%s219 + $0x110] sm:$0xff]
      %v249 = vld [vmem:[%s219 + $0x120] sm:$0xff]
      %v250 = vld [vmem:[%s219 + $0x128] sm:$0xff]
      %v251 = vld [vmem:[%s219 + $0x138] sm:$0xff]
      %v252 = vld [vmem:[%s219 + $0x140] sm:$0xff]
      %v253 = vld [vmem:[%s219 + $0x150] sm:$0xff]
      %v254 = vld [vmem:[%s219 + $0x158] sm:$0xff]
      %v255 = vld [vmem:[%s219 + $0x168] sm:$0xff]
      %v256 = vld [vmem:[%s219 + $0x170] sm:$0xff]
      %v257 = vld [vmem:[%s1] sm:$0xff]
      %v258 = vld [vmem:[%s219 + $0x1] sm:$0xff]
      %v259 = vld [vmem:[%s219 + $0x9] sm:$0xff]
      %v260 = vld [vmem:[%s219 + $0x19] sm:$0xff]
      %v261 = vld [vmem:[%s219 + $0x21] sm:$0xff]
      %v262 = vld [vmem:[%s219 + $0x31] sm:$0xff]
      %v263 = vld [vmem:[%s219 + $0x39] sm:$0xff]
      %v264 = vld [vmem:[%s219 + $0x49] sm:$0xff]
      %v265 = vld [vmem:[%s219 + $0x51] sm:$0xff]
      %v266 = vld [vmem:[%s219 + $0x61] sm:$0xff]
      %v267 = vld [vmem:[%s219 + $0x69] sm:$0xff]
      %v268 = vld [vmem:[%s219 + $0x79] sm:$0xff]
      %v269 = vld [vmem:[%s219 + $0x81] sm:$0xff]
      %v270 = vld [vmem:[%s219 + $0x91] sm:$0xff]
      %v271 = vld [vmem:[%s219 + $0x99] sm:$0xff]
      %v272 = vld [vmem:[%s219 + $0xa9] sm:$0xff]
      %v273 = vld [vmem:[%s219 + $0xb1] sm:$0xff]
      %v274 = vld [vmem:[%s219 + $0xc1] sm:$0xff]
      %v275 = vld [vmem:[%s219 + $0xc9] sm:$0xff]
      %v276 = vld [vmem:[%s219 + $0xd9] sm:$0xff]
      %v277 = vld [vmem:[%s219 + $0xe1] sm:$0xff]
      %v278 = vld [vmem:[%s219 + $0xf1] sm:$0xff]
      %v279 = vld [vmem:[%s219 + $0xf9] sm:$0xff]
      %v280 = vld [vmem:[%s219 + $0x109] sm:$0xff]
      %v281 = vld [vmem:[%s219 + $0x111] sm:$0xff]
      %v282 = vld [vmem:[%s219 + $0x121] sm:$0xff]
      %v283 = vld [vmem:[%s219 + $0x129] sm:$0xff]
      %v284 = vld [vmem:[%s219 + $0x139] sm:$0xff]
      %v285 = vld [vmem:[%s219 + $0x141] sm:$0xff]
      %v286 = vld [vmem:[%s219 + $0x151] sm:$0xff]
      %v287 = vld [vmem:[%s219 + $0x159] sm:$0xff]
      %v288 = vld [vmem:[%s219 + $0x169] sm:$0xff]
      %v289 = vld [vmem:[%s219 + $0x171] sm:$0xff]
      %s290 = scalar_lea.vmem %s1, 8
      %v291 = vld [vmem:[%s290] sm:$0xff]
      %vm292 = vcmask 64512
      %v294 = vsel %vm292, %v258, 0
      %v297 = vsel %vm292, %v259, 0
      %v300 = vsel %vm292, %v260, 0
      %v303 = vsel %vm292, %v261, 0
      %v306 = vsel %vm292, %v262, 0
      %v309 = vsel %vm292, %v263, 0
      %v312 = vsel %vm292, %v264, 0
      %v315 = vsel %vm292, %v265, 0
      %v318 = vsel %vm292, %v266, 0
      %v321 = vsel %vm292, %v267, 0
      %v324 = vsel %vm292, %v268, 0
      %v327 = vsel %vm292, %v269, 0
      %v330 = vsel %vm292, %v270, 0
      %v333 = vsel %vm292, %v271, 0
      %v336 = vsel %vm292, %v272, 0
      %v339 = vsel %vm292, %v273, 0
      %v342 = vsel %vm292, %v274, 0
      %v345 = vsel %vm292, %v275, 0
      %v348 = vsel %vm292, %v276, 0
      %v351 = vsel %vm292, %v277, 0
      %v354 = vsel %vm292, %v278, 0
      %v357 = vsel %vm292, %v279, 0
      %v360 = vsel %vm292, %v280, 0
      %v363 = vsel %vm292, %v281, 0
      %v366 = vsel %vm292, %v282, 0
      %v369 = vsel %vm292, %v283, 0
      %v372 = vsel %vm292, %v284, 0
      %v375 = vsel %vm292, %v285, 0
      %v378 = vsel %vm292, %v286, 0
      %v381 = vsel %vm292, %v287, 0
      %v384 = vsel %vm292, %v288, 0
      %v387 = vsel %vm292, %v289, 0
      %389 = vmatprep.subr.mxu0 0.0
      %390 = vmatpush1.msra.mxu0 %v291
      %391 = vmatprep.subr.mxu0 0.0
      %392 = vmatpush1.msra.mxu0 0.0
      %393 = vmatprep.subr.mxu0 0.0
      %394 = vmatpush1.msra.mxu0 0.0
      %395 = vmatprep.subr.mxu0 0.0
      %396 = vmatpush1.msra.mxu0 0.0
      %397 = vmatprep.subr.mxu0 0.0
      %398 = vmatpush1.msra.mxu0 0.0
      %399 = vmatprep.subr.mxu0 0.0
      %400 = vmatpush1.msra.mxu0 0.0
      %401 = vmatprep.subr.mxu0 0.0
      %402 = vmatpush1.msra.mxu0 0.0
      %403 = vmatprep.subr.mxu0 0.0
      %404 = vmatpush1.msra.mxu0 0.0
      %405 = vmatprep.subr.mxu0 0.0
      %406 = vmatpush1.msra.mxu0 0.0
      %407 = vmatprep.subr.mxu0 0.0
      %408 = vmatpush1.msra.mxu0 0.0
      %409 = vmatprep.subr.mxu0 0.0
      %410 = vmatpush1.msra.mxu0 0.0
      %411 = vmatprep.subr.mxu0 0.0
      %412 = vmatpush1.msra.mxu0 0.0
      %413 = vmatprep.subr.mxu0 0.0
      %414 = vmatpush1.msra.mxu0 0.0
      %415 = vmatprep.subr.mxu0 0.0
      %416 = vmatpush1.msra.mxu0 0.0
      %417 = vmatprep.subr.mxu0 0.0
      %418 = vmatpush1.msra.mxu0 0.0
      %419 = vmatprep.subr.mxu0 0.0
      %420 = vmatpush1.msra.mxu0 0.0
      %421 = vmatprep.subr.mxu0 0.0
      %422 = vmatpush1.msra.mxu0 0.0
      %423 = vmatprep.subr.mxu0 0.0
      %424 = vmatpush1.msra.mxu0 0.0
      %425 = vmatprep.subr.mxu0 0.0
      %426 = vmatpush1.msra.mxu0 0.0
      %427 = vmatprep.subr.mxu0 0.0
      %428 = vmatpush1.msra.mxu0 0.0
      %429 = vmatprep.subr.mxu0 0.0
      %430 = vmatpush1.msra.mxu0 0.0
      %431 = vmatprep.subr.mxu0 0.0
      %432 = vmatpush1.msra.mxu0 0.0
      %433 = vmatprep.subr.mxu0 0.0
      %434 = vmatpush1.msra.mxu0 0.0
      %435 = vmatprep.subr.mxu0 0.0
      %436 = vmatpush1.msra.mxu0 0.0
      %437 = vmatprep.subr.mxu0 0.0
      %438 = vmatpush1.msra.mxu0 0.0
      %439 = vmatprep.subr.mxu0 0.0
      %440 = vmatpush1.msra.mxu0 0.0
      %441 = vmatprep.subr.mxu0 0.0
      %442 = vmatpush1.msra.mxu0 0.0
      %443 = vmatprep.subr.mxu0 0.0
      %444 = vmatpush1.msra.mxu0 0.0
      %445 = vmatprep.subr.mxu0 0.0
      %446 = vmatpush1.msra.mxu0 0.0
      %447 = vmatprep.subr.mxu0 0.0
      %448 = vmatpush1.msra.mxu0 0.0
      %449 = vmatprep.subr.mxu0 0.0
      %450 = vmatpush1.msra.mxu0 0.0
      %451 = vmatprep.subr.mxu0 0.0
      %452 = vmatpush1.msra.mxu0 0.0
      %453 = vmatprep.mubr.f32.mxu0 0.0
      %454 = vmatmul.mubr.f32.gmra.mrb[0].mxu0 %v294
      %v455 = vpop.f32.mrb[0].mxu0
      %v456 = vadd.f32 0.0, %v455
      %v457 = vpop.f32.mrb[0].mxu0
      %458 = vmatprep.mubr.f32.mxu0 0.0
      %459 = vmatmul.mubr.f32.gmra.mrb[0].mxu0 %v297
      %v460 = vpop.f32.mrb[0].mxu0
      %v461 = vadd.f32 0.0, %v460
      %v462 = vpop.f32.mrb[0].mxu0
      %463 = vmatprep.mubr.f32.mxu0 0.0
      %464 = vmatmul.mubr.f32.gmra.mrb[0].mxu0 %v300
      %v465 = vpop.f32.mrb[0].mxu0
      %v466 = vadd.f32 0.0, %v465
      %v467 = vpop.f32.mrb[0].mxu0
      %468 = vmatprep.mubr.f32.mxu0 0.0
      %469 = vmatmul.mubr.f32.gmra.mrb[0].mxu0 %v303
      %v470 = vpop.f32.mrb[0].mxu0
      %v471 = vadd.f32 0.0, %v470
      %v472 = vpop.f32.mrb[0].mxu0
      %473 = vmatprep.mubr.f32.mxu0 0.0
      %474 = vmatmul.mubr.f32.gmra.mrb[0].mxu0 %v306
      %v475 = vpop.f32.mrb[0].mxu0
      %v476 = vadd.f32 0.0, %v475
      %v477 = vpop.f32.mrb[0].mxu0
      %478 = vmatprep.mubr.f32.mxu0 0.0
      %479 = vmatmul.mubr.f32.gmra.mrb[0].mxu0 %v309
      %v480 = vpop.f32.mrb[0].mxu0
      %v481 = vadd.f32 0.0, %v480
      %v482 = vpop.f32.mrb[0].mxu0
      %483 = vmatprep.mubr.f32.mxu0 0.0
      %484 = vmatmul.mubr.f32.gmra.mrb[0].mxu0 %v312
      %v485 = vpop.f32.mrb[0].mxu0
      %v486 = vadd.f32 0.0, %v485
      %v487 = vpop.f32.mrb[0].mxu0
      %488 = vmatprep.mubr.f32.mxu0 0.0
      %489 = vmatmul.mubr.f32.gmra.mrb[0].mxu0 %v315
      %v490 = vpop.f32.mrb[0].mxu0
      %v491 = vadd.f32 0.0, %v490
      %v492 = vpop.f32.mrb[0].mxu0
      %493 = vmatprep.mubr.f32.mxu0 0.0
      %494 = vmatmul.mubr.f32.gmra.mrb[0].mxu0 %v318
      %v495 = vpop.f32.mrb[0].mxu0
      %v496 = vadd.f32 0.0, %v495
      %v497 = vpop.f32.mrb[0].mxu0
      %498 = vmatprep.mubr.f32.mxu0 0.0
      %499 = vmatmul.mubr.f32.gmra.mrb[0].mxu0 %v321
      %v500 = vpop.f32.mrb[0].mxu0
      %v501 = vadd.f32 0.0, %v500
      %v502 = vpop.f32.mrb[0].mxu0
      %503 = vmatprep.mubr.f32.mxu0 0.0
      %504 = vmatmul.mubr.f32.gmra.mrb[0].mxu0 %v324
      %v505 = vpop.f32.mrb[0].mxu0
      %v506 = vadd.f32 0.0, %v505
      %v507 = vpop.f32.mrb[0].mxu0
      %508 = vmatprep.mubr.f32.mxu0 0.0
      %509 = vmatmul.mubr.f32.gmra.mrb[0].mxu0 %v327
      %v510 = vpop.f32.mrb[0].mxu0
      %v511 = vadd.f32 0.0, %v510
      %v512 = vpop.f32.mrb[0].mxu0
      %513 = vmatprep.mubr.f32.mxu0 0.0
      %514 = vmatmul.mubr.f32.gmra.mrb[0].mxu0 %v330
      %v515 = vpop.f32.mrb[0].mxu0
      %v516 = vadd.f32 0.0, %v515
      %v517 = vpop.f32.mrb[0].mxu0
      %518 = vmatprep.mubr.f32.mxu0 0.0
      %519 = vmatmul.mubr.f32.gmra.mrb[0].mxu0 %v333
      %v520 = vpop.f32.mrb[0].mxu0
      %v521 = vadd.f32 0.0, %v520
      %v522 = vpop.f32.mrb[0].mxu0
      %523 = vmatprep.mubr.f32.mxu0 0.0
      %524 = vmatmul.mubr.f32.gmra.mrb[0].mxu0 %v336
      %v525 = vpop.f32.mrb[0].mxu0
      %v526 = vadd.f32 0.0, %v525
      %v527 = vpop.f32.mrb[0].mxu0
      %528 = vmatprep.mubr.f32.mxu0 0.0
      %529 = vmatmul.mubr.f32.gmra.mrb[0].mxu0 %v339
      %v530 = vpop.f32.mrb[0].mxu0
      %v531 = vadd.f32 0.0, %v530
      %v532 = vpop.f32.mrb[0].mxu0
      %533 = vmatprep.mubr.f32.mxu0 0.0
      %534 = vmatmul.mubr.f32.gmra.mrb[0].mxu0 %v342
      %v535 = vpop.f32.mrb[0].mxu0
      %v536 = vadd.f32 0.0, %v535
      %v537 = vpop.f32.mrb[0].mxu0
      %538 = vmatprep.mubr.f32.mxu0 0.0
      %539 = vmatmul.mubr.f32.gmra.mrb[0].mxu0 %v345
      %v540 = vpop.f32.mrb[0].mxu0
      %v541 = vadd.f32 0.0, %v540
      %v542 = vpop.f32.mrb[0].mxu0
      %543 = vmatprep.mubr.f32.mxu0 0.0
      %544 = vmatmul.mubr.f32.gmra.mrb[0].mxu0 %v348
      %v545 = vpop.f32.mrb[0].mxu0
      %v546 = vadd.f32 0.0, %v545
      %v547 = vpop.f32.mrb[0].mxu0
      %548 = vmatprep.mubr.f32.mxu0 0.0
      %549 = vmatmul.mubr.f32.gmra.mrb[0].mxu0 %v351
      %v550 = vpop.f32.mrb[0].mxu0
      %v551 = vadd.f32 0.0, %v550
      %v552 = vpop.f32.mrb[0].mxu0
      %553 = vmatprep.mubr.f32.mxu0 0.0
      %554 = vmatmul.mubr.f32.gmra.mrb[0].mxu0 %v354
      %v555 = vpop.f32.mrb[0].mxu0
      %v556 = vadd.f32 0.0, %v555
      %v557 = vpop.f32.mrb[0].mxu0
      %558 = vmatprep.mubr.f32.mxu0 0.0
      %559 = vmatmul.mubr.f32.gmra.mrb[0].mxu0 %v357
      %v560 = vpop.f32.mrb[0].mxu0
      %v561 = vadd.f32 0.0, %v560
      %v562 = vpop.f32.mrb[0].mxu0
      %563 = vmatprep.mubr.f32.mxu0 0.0
      %564 = vmatmul.mubr.f32.gmra.mrb[0].mxu0 %v360
      %v565 = vpop.f32.mrb[0].mxu0
      %v566 = vadd.f32 0.0, %v565
      %v567 = vpop.f32.mrb[0].mxu0
      %568 = vmatprep.mubr.f32.mxu0 0.0
      %569 = vmatmul.mubr.f32.gmra.mrb[0].mxu0 %v363
      %v570 = vpop.f32.mrb[0].mxu0
      %v571 = vadd.f32 0.0, %v570
      %v572 = vpop.f32.mrb[0].mxu0
      %573 = vmatprep.mubr.f32.mxu0 0.0
      %574 = vmatmul.mubr.f32.gmra.mrb[0].mxu0 %v366
      %v575 = vpop.f32.mrb[0].mxu0
      %v576 = vadd.f32 0.0, %v575
      %v577 = vpop.f32.mrb[0].mxu0
      %578 = vmatprep.mubr.f32.mxu0 0.0
      %579 = vmatmul.mubr.f32.gmra.mrb[0].mxu0 %v369
      %v580 = vpop.f32.mrb[0].mxu0
      %v581 = vadd.f32 0.0, %v580
      %v582 = vpop.f32.mrb[0].mxu0
      %583 = vmatprep.mubr.f32.mxu0 0.0
      %584 = vmatmul.mubr.f32.gmra.mrb[0].mxu0 %v372
      %v585 = vpop.f32.mrb[0].mxu0
      %v586 = vadd.f32 0.0, %v585
      %v587 = vpop.f32.mrb[0].mxu0
      %588 = vmatprep.mubr.f32.mxu0 0.0
      %589 = vmatmul.mubr.f32.gmra.mrb[0].mxu0 %v375
      %v590 = vpop.f32.mrb[0].mxu0
      %v591 = vadd.f32 0.0, %v590
      %v592 = vpop.f32.mrb[0].mxu0
      %593 = vmatprep.mubr.f32.mxu0 0.0
      %594 = vmatmul.mubr.f32.gmra.mrb[0].mxu0 %v378
      %v595 = vpop.f32.mrb[0].mxu0
      %v596 = vadd.f32 0.0, %v595
      %v597 = vpop.f32.mrb[0].mxu0
      %598 = vmatprep.mubr.f32.mxu0 0.0
      %599 = vmatmul.mubr.f32.gmra.mrb[0].mxu0 %v381
      %v600 = vpop.f32.mrb[0].mxu0
      %v601 = vadd.f32 0.0, %v600
      %v602 = vpop.f32.mrb[0].mxu0
      %603 = vmatprep.mubr.f32.mxu0 0.0
      %604 = vmatmul.mubr.f32.gmra.mrb[0].mxu0 %v384
      %v605 = vpop.f32.mrb[0].mxu0
      %v606 = vadd.f32 0.0, %v605
      %v607 = vpop.f32.mrb[0].mxu0
      %608 = vmatprep.mubr.f32.mxu0 0.0
      %609 = vmatmul.mubr.f32.gmra.mrb[0].mxu0 %v387
      %v610 = vpop.f32.mrb[0].mxu0
      %v611 = vadd.f32 0.0, %v610
      %v612 = vpop.f32.mrb[0].mxu0
      %613 = vdwg.mxu0
      %v615 = vsel %vm292, %v225, 0
      %v618 = vsel %vm292, %v226, 0
      %v621 = vsel %vm292, %v227, 0
      %v624 = vsel %vm292, %v228, 0
      %v627 = vsel %vm292, %v229, 0
      %v630 = vsel %vm292, %v230, 0
      %v633 = vsel %vm292, %v231, 0
      %v636 = vsel %vm292, %v232, 0
      %v639 = vsel %vm292, %v233, 0
      %v642 = vsel %vm292, %v234, 0
      %v645 = vsel %vm292, %v235, 0
      %v648 = vsel %vm292, %v236, 0
      %v651 = vsel %vm292, %v237, 0
      %v654 = vsel %vm292, %v238, 0
      %v657 = vsel %vm292, %v239, 0
      %v660 = vsel %vm292, %v240, 0
      %v663 = vsel %vm292, %v241, 0
      %v666 = vsel %vm292, %v242, 0
      %v669 = vsel %vm292, %v243, 0
      %v672 = vsel %vm292, %v244, 0
      %v675 = vsel %vm292, %v245, 0
      %v678 = vsel %vm292, %v246, 0
      %v681 = vsel %vm292, %v247, 0
      %v684 = vsel %vm292, %v248, 0
      %v687 = vsel %vm292, %v249, 0
      %v690 = vsel %vm292, %v250, 0
      %v693 = vsel %vm292, %v251, 0
      %v696 = vsel %vm292, %v252, 0
      %v699 = vsel %vm292, %v253, 0
      %v702 = vsel %vm292, %v254, 0
      %v705 = vsel %vm292, %v255, 0
      %v708 = vsel %vm292, %v256, 0
      %710 = vmatprep.subr.mxu0 0.0
      %711 = vmatpush1.msra.mxu0 %v257
      %712 = vmatprep.subr.mxu0 0.0
      %713 = vmatpush1.msra.mxu0 0.0
      %714 = vmatprep.subr.mxu0 0.0
      %715 = vmatpush1.msra.mxu0 0.0
      %716 = vmatprep.subr.mxu0 0.0
      %717 = vmatpush1.msra.mxu0 0.0
      %718 = vmatprep.subr.mxu0 0.0
      %719 = vmatpush1.msra.mxu0 0.0
      %720 = vmatprep.subr.mxu0 0.0
      %721 = vmatpush1.msra.mxu0 0.0
      %722 = vmatprep.subr.mxu0 0.0
      %723 = vmatpush1.msra.mxu0 0.0
      %724 = vmatprep.subr.mxu0 0.0
      %725 = vmatpush1.msra.mxu0 0.0
      %726 = vmatprep.subr.mxu0 0.0
      %727 = vmatpush1.msra.mxu0 0.0
      %728 = vmatprep.subr.mxu0 0.0
      %729 = vmatpush1.msra.mxu0 0.0
      %730 = vmatprep.subr.mxu0 0.0
      %731 = vmatpush1.msra.mxu0 0.0
      %732 = vmatprep.subr.mxu0 0.0
      %733 = vmatpush1.msra.mxu0 0.0
      %734 = vmatprep.subr.mxu0 0.0
      %735 = vmatpush1.msra.mxu0 0.0
      %736 = vmatprep.subr.mxu0 0.0
      %737 = vmatpush1.msra.mxu0 0.0
      %738 = vmatprep.subr.mxu0 0.0
      %739 = vmatpush1.msra.mxu0 0.0
      %740 = vmatprep.subr.mxu0 0.0
      %741 = vmatpush1.msra.mxu0 0.0
      %742 = vmatprep.subr.mxu0 0.0
      %743 = vmatpush1.msra.mxu0 0.0
      %744 = vmatprep.subr.mxu0 0.0
      %745 = vmatpush1.msra.mxu0 0.0
      %746 = vmatprep.subr.mxu0 0.0
      %747 = vmatpush1.msra.mxu0 0.0
      %748 = vmatprep.subr.mxu0 0.0
      %749 = vmatpush1.msra.mxu0 0.0
      %750 = vmatprep.subr.mxu0 0.0
      %751 = vmatpush1.msra.mxu0 0.0
      %752 = vmatprep.subr.mxu0 0.0
      %753 = vmatpush1.msra.mxu0 0.0
      %754 = vmatprep.subr.mxu0 0.0
      %755 = vmatpush1.msra.mxu0 0.0
      %756 = vmatprep.subr.mxu0 0.0
      %757 = vmatpush1.msra.mxu0 0.0
      %758 = vmatprep.subr.mxu0 0.0
      %759 = vmatpush1.msra.mxu0 0.0
      %760 = vmatprep.subr.mxu0 0.0
      %761 = vmatpush1.msra.mxu0 0.0
      %762 = vmatprep.subr.mxu0 0.0
      %763 = vmatpush1.msra.mxu0 0.0
      %764 = vmatprep.subr.mxu0 0.0
      %765 = vmatpush1.msra.mxu0 0.0
      %766 = vmatprep.subr.mxu0 0.0
      %767 = vmatpush1.msra.mxu0 0.0
      %768 = vmatprep.subr.mxu0 0.0
      %769 = vmatpush1.msra.mxu0 0.0
      %770 = vmatprep.subr.mxu0 0.0
      %771 = vmatpush1.msra.mxu0 0.0
      %772 = vmatprep.subr.mxu0 0.0
      %773 = vmatpush1.msra.mxu0 0.0
      %774 = vmatprep.mubr.f32.mxu0 0.0
      %775 = vmatmul.mubr.f32.gmra.mrb[0].mxu0 %v615
      %v776 = vpop.f32.mrb[0].mxu0
      %v777 = vadd.f32 %v456, %v776
      %v778 = vpop.f32.mrb[0].mxu0
      %779 = vmatprep.mubr.f32.mxu0 0.0
      %780 = vmatmul.mubr.f32.gmra.mrb[0].mxu0 %v618
      %v781 = vpop.f32.mrb[0].mxu0
      %v782 = vadd.f32 %v461, %v781
      %v783 = vpop.f32.mrb[0].mxu0
      %784 = vmatprep.mubr.f32.mxu0 0.0
      %785 = vmatmul.mubr.f32.gmra.mrb[0].mxu0 %v621
      %v786 = vpop.f32.mrb[0].mxu0
      %v787 = vadd.f32 %v466, %v786
      %v788 = vpop.f32.mrb[0].mxu0
      %789 = vmatprep.mubr.f32.mxu0 0.0
      %790 = vmatmul.mubr.f32.gmra.mrb[0].mxu0 %v624
      %v791 = vpop.f32.mrb[0].mxu0
      %v792 = vadd.f32 %v471, %v791
      %v793 = vpop.f32.mrb[0].mxu0
      %794 = vmatprep.mubr.f32.mxu0 0.0
      %795 = vmatmul.mubr.f32.gmra.mrb[0].mxu0 %v627
      %v796 = vpop.f32.mrb[0].mxu0
      %v797 = vadd.f32 %v476, %v796
      %v798 = vpop.f32.mrb[0].mxu0
      %799 = vmatprep.mubr.f32.mxu0 0.0
      %800 = vmatmul.mubr.f32.gmra.mrb[0].mxu0 %v630
      %v801 = vpop.f32.mrb[0].mxu0
      %v802 = vadd.f32 %v481, %v801
      %v803 = vpop.f32.mrb[0].mxu0
      %804 = vmatprep.mubr.f32.mxu0 0.0
      %805 = vmatmul.mubr.f32.gmra.mrb[0].mxu0 %v633
      %v806 = vpop.f32.mrb[0].mxu0
      %v807 = vadd.f32 %v486, %v806
      %v808 = vpop.f32.mrb[0].mxu0
      %809 = vmatprep.mubr.f32.mxu0 0.0
      %810 = vmatmul.mubr.f32.gmra.mrb[0].mxu0 %v636
      %v811 = vpop.f32.mrb[0].mxu0
      %v812 = vadd.f32 %v491, %v811
      %v813 = vpop.f32.mrb[0].mxu0
      %814 = vmatprep.mubr.f32.mxu0 0.0
      %815 = vmatmul.mubr.f32.gmra.mrb[0].mxu0 %v639
      %v816 = vpop.f32.mrb[0].mxu0
      %v817 = vadd.f32 %v496, %v816
      %v818 = vpop.f32.mrb[0].mxu0
      %819 = vmatprep.mubr.f32.mxu0 0.0
      %820 = vmatmul.mubr.f32.gmra.mrb[0].mxu0 %v642
      %v821 = vpop.f32.mrb[0].mxu0
      %v822 = vadd.f32 %v501, %v821
      %v823 = vpop.f32.mrb[0].mxu0
      %824 = vmatprep.mubr.f32.mxu0 0.0
      %825 = vmatmul.mubr.f32.gmra.mrb[0].mxu0 %v645
      %v826 = vpop.f32.mrb[0].mxu0
      %v827 = vadd.f32 %v506, %v826
      %v828 = vpop.f32.mrb[0].mxu0
      %829 = vmatprep.mubr.f32.mxu0 0.0
      %830 = vmatmul.mubr.f32.gmra.mrb[0].mxu0 %v648
      %v831 = vpop.f32.mrb[0].mxu0
      %v832 = vadd.f32 %v511, %v831
      %v833 = vpop.f32.mrb[0].mxu0
      %834 = vmatprep.mubr.f32.mxu0 0.0
      %835 = vmatmul.mubr.f32.gmra.mrb[0].mxu0 %v651
      %v836 = vpop.f32.mrb[0].mxu0
      %v837 = vadd.f32 %v516, %v836
      %v838 = vpop.f32.mrb[0].mxu0
      %839 = vmatprep.mubr.f32.mxu0 0.0
      %840 = vmatmul.mubr.f32.gmra.mrb[0].mxu0 %v654
      %v841 = vpop.f32.mrb[0].mxu0
      %v842 = vadd.f32 %v521, %v841
      %v843 = vpop.f32.mrb[0].mxu0
      %844 = vmatprep.mubr.f32.mxu0 0.0
      %845 = vmatmul.mubr.f32.gmra.mrb[0].mxu0 %v657
      %v846 = vpop.f32.mrb[0].mxu0
      %v847 = vadd.f32 %v526, %v846
      %v848 = vpop.f32.mrb[0].mxu0
      %849 = vmatprep.mubr.f32.mxu0 0.0
      %850 = vmatmul.mubr.f32.gmra.mrb[0].mxu0 %v660
      %v851 = vpop.f32.mrb[0].mxu0
      %v852 = vadd.f32 %v531, %v851
      %v853 = vpop.f32.mrb[0].mxu0
      %854 = vmatprep.mubr.f32.mxu0 0.0
      %855 = vmatmul.mubr.f32.gmra.mrb[0].mxu0 %v663
      %v856 = vpop.f32.mrb[0].mxu0
      %v857 = vadd.f32 %v536, %v856
      %v858 = vpop.f32.mrb[0].mxu0
      %859 = vmatprep.mubr.f32.mxu0 0.0
      %860 = vmatmul.mubr.f32.gmra.mrb[0].mxu0 %v666
      %v861 = vpop.f32.mrb[0].mxu0
      %v862 = vadd.f32 %v541, %v861
      %v863 = vpop.f32.mrb[0].mxu0
      %864 = vmatprep.mubr.f32.mxu0 0.0
      %865 = vmatmul.mubr.f32.gmra.mrb[0].mxu0 %v669
      %v866 = vpop.f32.mrb[0].mxu0
      %v867 = vadd.f32 %v546, %v866
      %v868 = vpop.f32.mrb[0].mxu0
      %869 = vmatprep.mubr.f32.mxu0 0.0
      %870 = vmatmul.mubr.f32.gmra.mrb[0].mxu0 %v672
      %v871 = vpop.f32.mrb[0].mxu0
      %v872 = vadd.f32 %v551, %v871
      %v873 = vpop.f32.mrb[0].mxu0
      %874 = vmatprep.mubr.f32.mxu0 0.0
      %875 = vmatmul.mubr.f32.gmra.mrb[0].mxu0 %v675
      %v876 = vpop.f32.mrb[0].mxu0
      %v877 = vadd.f32 %v556, %v876
      %v878 = vpop.f32.mrb[0].mxu0
      %879 = vmatprep.mubr.f32.mxu0 0.0
      %880 = vmatmul.mubr.f32.gmra.mrb[0].mxu0 %v678
      %v881 = vpop.f32.mrb[0].mxu0
      %v882 = vadd.f32 %v561, %v881
      %v883 = vpop.f32.mrb[0].mxu0
      %884 = vmatprep.mubr.f32.mxu0 0.0
      %885 = vmatmul.mubr.f32.gmra.mrb[0].mxu0 %v681
      %v886 = vpop.f32.mrb[0].mxu0
      %v887 = vadd.f32 %v566, %v886
      %v888 = vpop.f32.mrb[0].mxu0
      %889 = vmatprep.mubr.f32.mxu0 0.0
      %890 = vmatmul.mubr.f32.gmra.mrb[0].mxu0 %v684
      %v891 = vpop.f32.mrb[0].mxu0
      %v892 = vadd.f32 %v571, %v891
      %v893 = vpop.f32.mrb[0].mxu0
      %894 = vmatprep.mubr.f32.mxu0 0.0
      %895 = vmatmul.mubr.f32.gmra.mrb[0].mxu0 %v687
      %v896 = vpop.f32.mrb[0].mxu0
      %v897 = vadd.f32 %v576, %v896
      %v898 = vpop.f32.mrb[0].mxu0
      %899 = vmatprep.mubr.f32.mxu0 0.0
      %900 = vmatmul.mubr.f32.gmra.mrb[0].mxu0 %v690
      %v901 = vpop.f32.mrb[0].mxu0
      %v902 = vadd.f32 %v581, %v901
      %v903 = vpop.f32.mrb[0].mxu0
      %904 = vmatprep.mubr.f32.mxu0 0.0
      %905 = vmatmul.mubr.f32.gmra.mrb[0].mxu0 %v693
      %v906 = vpop.f32.mrb[0].mxu0
      %v907 = vadd.f32 %v586, %v906
      %v908 = vpop.f32.mrb[0].mxu0
      %909 = vmatprep.mubr.f32.mxu0 0.0
      %910 = vmatmul.mubr.f32.gmra.mrb[0].mxu0 %v696
      %v911 = vpop.f32.mrb[0].mxu0
      %v912 = vadd.f32 %v591, %v911
      %v913 = vpop.f32.mrb[0].mxu0
      %914 = vmatprep.mubr.f32.mxu0 0.0
      %915 = vmatmul.mubr.f32.gmra.mrb[0].mxu0 %v699
      %v916 = vpop.f32.mrb[0].mxu0
      %v917 = vadd.f32 %v596, %v916
      %v918 = vpop.f32.mrb[0].mxu0
      %919 = vmatprep.mubr.f32.mxu0 0.0
      %920 = vmatmul.mubr.f32.gmra.mrb[0].mxu0 %v702
      %v921 = vpop.f32.mrb[0].mxu0
      %v922 = vadd.f32 %v601, %v921
      %v923 = vpop.f32.mrb[0].mxu0
      %924 = vmatprep.mubr.f32.mxu0 0.0
      %925 = vmatmul.mubr.f32.gmra.mrb[0].mxu0 %v705
      %v926 = vpop.f32.mrb[0].mxu0
      %v927 = vadd.f32 %v606, %v926
      %v928 = vpop.f32.mrb[0].mxu0
      %929 = vmatprep.mubr.f32.mxu0 0.0
      %930 = vmatmul.mubr.f32.gmra.mrb[0].mxu0 %v708
      %v931 = vpop.f32.mrb[0].mxu0
      %v932 = vadd.f32 %v611, %v931
      %v933 = vpop.f32.mrb[0].mxu0
      %934 = vdwg.mxu0
      %v935 = vld [vmem:[%s219 + $0x2] sm:$0xff]
      %v936 = vld [vmem:[%s219 + $0xa] sm:$0xff]
      %v937 = vld [vmem:[%s219 + $0x1a] sm:$0xff]
      %v938 = vld [vmem:[%s219 + $0x22] sm:$0xff]
      %v939 = vld [vmem:[%s219 + $0x32] sm:$0xff]
      %v940 = vld [vmem:[%s219 + $0x3a] sm:$0xff]
      %v941 = vld [vmem:[%s219 + $0x4a] sm:$0xff]
      %v942 = vld [vmem:[%s219 + $0x52] sm:$0xff]
      %v943 = vld [vmem:[%s219 + $0x62] sm:$0xff]
      %v944 = vld [vmem:[%s219 + $0x6a] sm:$0xff]
      %v945 = vld [vmem:[%s219 + $0x7a] sm:$0xff]
      %v946 = vld [vmem:[%s219 + $0x82] sm:$0xff]
      %v947 = vld [vmem:[%s219 + $0x92] sm:$0xff]
      %v948 = vld [vmem:[%s219 + $0x9a] sm:$0xff]
      %v949 = vld [vmem:[%s219 + $0xaa] sm:$0xff]
      %v950 = vld [vmem:[%s219 + $0xb2] sm:$0xff]
      %v951 = vld [vmem:[%s219 + $0xc2] sm:$0xff]
      %v952 = vld [vmem:[%s219 + $0xca] sm:$0xff]
      %v953 = vld [vmem:[%s219 + $0xda] sm:$0xff]
      %v954 = vld [vmem:[%s219 + $0xe2] sm:$0xff]
      %v955 = vld [vmem:[%s219 + $0xf2] sm:$0xff]
      %v956 = vld [vmem:[%s219 + $0xfa] sm:$0xff]
      %v957 = vld [vmem:[%s219 + $0x10a] sm:$0xff]
      %v958 = vld [vmem:[%s219 + $0x112] sm:$0xff]
      %v959 = vld [vmem:[%s219 + $0x122] sm:$0xff]
      %v960 = vld [vmem:[%s219 + $0x12a] sm:$0xff]
      %v961 = vld [vmem:[%s219 + $0x13a] sm:$0xff]
      %v962 = vld [vmem:[%s219 + $0x142] sm:$0xff]
      %v963 = vld [vmem:[%s219 + $0x152] sm:$0xff]
      %v964 = vld [vmem:[%s219 + $0x15a] sm:$0xff]
      %v965 = vld [vmem:[%s219 + $0x16a] sm:$0xff]
      %v966 = vld [vmem:[%s219 + $0x172] sm:$0xff]
      %s967 = scalar_lea.vmem %s1, 16
      %v968 = vld [vmem:[%s967] sm:$0xff]
      %v970 = vsel %vm292, %v935, 0
      %v973 = vsel %vm292, %v936, 0
      %v976 = vsel %vm292, %v937, 0
      %v979 = vsel %vm292, %v938, 0
      %v982 = vsel %vm292, %v939, 0
      %v985 = vsel %vm292, %v940, 0
      %v988 = vsel %vm292, %v941, 0
      %v991 = vsel %vm292, %v942, 0
      %v994 = vsel %vm292, %v943, 0
      %v997 = vsel %vm292, %v944, 0
      %v1000 = vsel %vm292, %v945, 0
      %v1003 = vsel %vm292, %v946, 0
      %v1006 = vsel %vm292, %v947, 0
      %v1009 = vsel %vm292, %v948, 0
      %v1012 = vsel %vm292, %v949, 0
      %v1015 = vsel %vm292, %v950, 0
      %v1018 = vsel %vm292, %v951, 0
      %v1021 = vsel %vm292, %v952, 0
      %v1024 = vsel %vm292, %v953, 0
      %v1027 = vsel %vm292, %v954, 0
      %v1030 = vsel %vm292, %v955, 0
      %v1033 = vsel %vm292, %v956, 0
      %v1036 = vsel %vm292, %v957, 0
      %v1039 = vsel %vm292, %v958, 0
      %v1042 = vsel %vm292, %v959, 0
      %v1045 = vsel %vm292, %v960, 0
      %v1048 = vsel %vm292, %v961, 0
      %v1051 = vsel %vm292, %v962, 0
      %v1054 = vsel %vm292, %v963, 0
      %v1057 = vsel %vm292, %v964, 0
      %v1060 = vsel %vm292, %v965, 0
      %v1063 = vsel %vm292, %v966, 0
      %1065 = vmatprep.subr.mxu0 0.0
      %1066 = vmatpush1.msra.mxu0 %v968
      %1067 = vmatprep.subr.mxu0 0.0
      %1068 = vmatpush1.msra.mxu0 0.0
      %1069 = vmatprep.subr.mxu0 0.0
      %1070 = vmatpush1.msra.mxu0 0.0
      %1071 = vmatprep.subr.mxu0 0.0
      %1072 = vmatpush1.msra.mxu0 0.0
      %1073 = vmatprep.subr.mxu0 0.0
      %1074 = vmatpush1.msra.mxu0 0.0
      %1075 = vmatprep.subr.mxu0 0.0
      %1076 = vmatpush1.msra.mxu0 0.0
      %1077 = vmatprep.subr.mxu0 0.0
      %1078 = vmatpush1.msra.mxu0 0.0
      %1079 = vmatprep.subr.mxu0 0.0
      %1080 = vmatpush1.msra.mxu0 0.0
      %1081 = vmatprep.subr.mxu0 0.0
      %1082 = vmatpush1.msra.mxu0 0.0
      %1083 = vmatprep.subr.mxu0 0.0
      %1084 = vmatpush1.msra.mxu0 0.0
      %1085 = vmatprep.subr.mxu0 0.0
      %1086 = vmatpush1.msra.mxu0 0.0
      %1087 = vmatprep.subr.mxu0 0.0
      %1088 = vmatpush1.msra.mxu0 0.0
      %1089 = vmatprep.subr.mxu0 0.0
      %1090 = vmatpush1.msra.mxu0 0.0
      %1091 = vmatprep.subr.mxu0 0.0
      %1092 = vmatpush1.msra.mxu0 0.0
      %1093 = vmatprep.subr.mxu0 0.0
      %1094 = vmatpush1.msra.mxu0 0.0
      %1095 = vmatprep.subr.mxu0 0.0
      %1096 = vmatpush1.msra.mxu0 0.0
      %1097 = vmatprep.subr.mxu0 0.0
      %1098 = vmatpush1.msra.mxu0 0.0
      %1099 = vmatprep.subr.mxu0 0.0
      %1100 = vmatpush1.msra.mxu0 0.0
      %1101 = vmatprep.subr.mxu0 0.0
      %1102 = vmatpush1.msra.mxu0 0.0
      %1103 = vmatprep.subr.mxu0 0.0
      %1104 = vmatpush1.msra.mxu0 0.0
      %1105 = vmatprep.subr.mxu0 0.0
      %1106 = vmatpush1.msra.mxu0 0.0
      %1107 = vmatprep.subr.mxu0 0.0
      %1108 = vmatpush1.msra.mxu0 0.0
      %1109 = vmatprep.subr.mxu0 0.0
      %1110 = vmatpush1.msra.mxu0 0.0
      %1111 = vmatprep.subr.mxu0 0.0
      %1112 = vmatpush1.msra.mxu0 0.0
      %1113 = vmatprep.subr.mxu0 0.0
      %1114 = vmatpush1.msra.mxu0 0.0
      %1115 = vmatprep.subr.mxu0 0.0
      %1116 = vmatpush1.msra.mxu0 0.0
      %1117 = vmatprep.subr.mxu0 0.0
      %1118 = vmatpush1.msra.mxu0 0.0
      %1119 = vmatprep.subr.mxu0 0.0
      %1120 = vmatpush1.msra.mxu0 0.0
      %1121 = vmatprep.subr.mxu0 0.0
      %1122 = vmatpush1.msra.mxu0 0.0
      %1123 = vmatprep.subr.mxu0 0.0
      %1124 = vmatpush1.msra.mxu0 0.0
      %1125 = vmatprep.subr.mxu0 0.0
      %1126 = vmatpush1.msra.mxu0 0.0
      %1127 = vmatprep.subr.mxu0 0.0
      %1128 = vmatpush1.msra.mxu0 0.0
      %1129 = vmatprep.mubr.f32.mxu0 0.0
      %1130 = vmatmul.mubr.f32.gmra.mrb[0].mxu0 %v970
      %v1131 = vpop.f32.mrb[0].mxu0
      %v1132 = vadd.f32 0.0, %v1131
      %v1133 = vpop.f32.mrb[0].mxu0
      %1134 = vmatprep.mubr.f32.mxu0 0.0
      %1135 = vmatmul.mubr.f32.gmra.mrb[0].mxu0 %v973
      %v1136 = vpop.f32.mrb[0].mxu0
      %v1137 = vadd.f32 0.0, %v1136
      %v1138 = vpop.f32.mrb[0].mxu0
      %1139 = vmatprep.mubr.f32.mxu0 0.0
      %1140 = vmatmul.mubr.f32.gmra.mrb[0].mxu0 %v976
      %v1141 = vpop.f32.mrb[0].mxu0
      %v1142 = vadd.f32 0.0, %v1141
      %v1143 = vpop.f32.mrb[0].mxu0
      %1144 = vmatprep.mubr.f32.mxu0 0.0
      %1145 = vmatmul.mubr.f32.gmra.mrb[0].mxu0 %v979
      %v1146 = vpop.f32.mrb[0].mxu0
      %v1147 = vadd.f32 0.0, %v1146
      %v1148 = vpop.f32.mrb[0].mxu0
      %1149 = vmatprep.mubr.f32.mxu0 0.0
      %1150 = vmatmul.mubr.f32.gmra.mrb[0].mxu0 %v982
      %v1151 = vpop.f32.mrb[0].mxu0
      %v1152 = vadd.f32 0.0, %v1151
      %v1153 = vpop.f32.mrb[0].mxu0
      %1154 = vmatprep.mubr.f32.mxu0 0.0
      %1155 = vmatmul.mubr.f32.gmra.mrb[0].mxu0 %v985
      %v1156 = vpop.f32.mrb[0].mxu0
      %v1157 = vadd.f32 0.0, %v1156
      %v1158 = vpop.f32.mrb[0].mxu0
      %1159 = vmatprep.mubr.f32.mxu0 0.0
      %1160 = vmatmul.mubr.f32.gmra.mrb[0].mxu0 %v988
      %v1161 = vpop.f32.mrb[0].mxu0
      %v1162 = vadd.f32 0.0, %v1161
      %v1163 = vpop.f32.mrb[0].mxu0
      %1164 = vmatprep.mubr.f32.mxu0 0.0
      %1165 = vmatmul.mubr.f32.gmra.mrb[0].mxu0 %v991
      %v1166 = vpop.f32.mrb[0].mxu0
      %v1167 = vadd.f32 0.0, %v1166
      %v1168 = vpop.f32.mrb[0].mxu0
      %1169 = vmatprep.mubr.f32.mxu0 0.0
      %1170 = vmatmul.mubr.f32.gmra.mrb[0].mxu0 %v994
      %v1171 = vpop.f32.mrb[0].mxu0
      %v1172 = vadd.f32 0.0, %v1171
      %v1173 = vpop.f32.mrb[0].mxu0
      %1174 = vmatprep.mubr.f32.mxu0 0.0
      %1175 = vmatmul.mubr.f32.gmra.mrb[0].mxu0 %v997
      %v1176 = vpop.f32.mrb[0].mxu0
      %v1177 = vadd.f32 0.0, %v1176
      %v1178 = vpop.f32.mrb[0].mxu0
      %1179 = vmatprep.mubr.f32.mxu0 0.0
      %1180 = vmatmul.mubr.f32.gmra.mrb[0].mxu0 %v1000
      %v1181 = vpop.f32.mrb[0].mxu0
      %v1182 = vadd.f32 0.0, %v1181
      %v1183 = vpop.f32.mrb[0].mxu0
      %1184 = vmatprep.mubr.f32.mxu0 0.0
      %1185 = vmatmul.mubr.f32.gmra.mrb[0].mxu0 %v1003
      %v1186 = vpop.f32.mrb[0].mxu0
      %v1187 = vadd.f32 0.0, %v1186
      %v1188 = vpop.f32.mrb[0].mxu0
      %1189 = vmatprep.mubr.f32.mxu0 0.0
      %1190 = vmatmul.mubr.f32.gmra.mrb[0].mxu0 %v1006
      %v1191 = vpop.f32.mrb[0].mxu0
      %v1192 = vadd.f32 0.0, %v1191
      %v1193 = vpop.f32.mrb[0].mxu0
      %1194 = vmatprep.mubr.f32.mxu0 0.0
      %1195 = vmatmul.mubr.f32.gmra.mrb[0].mxu0 %v1009
      %v1196 = vpop.f32.mrb[0].mxu0
      %v1197 = vadd.f32 0.0, %v1196
      %v1198 = vpop.f32.mrb[0].mxu0
      %1199 = vmatprep.mubr.f32.mxu0 0.0
      %1200 = vmatmul.mubr.f32.gmra.mrb[0].mxu0 %v1012
      %v1201 = vpop.f32.mrb[0].mxu0
      %v1202 = vadd.f32 0.0, %v1201
      %v1203 = vpop.f32.mrb[0].mxu0
      %1204 = vmatprep.mubr.f32.mxu0 0.0
      %1205 = vmatmul.mubr.f32.gmra.mrb[0].mxu0 %v1015
      %v1206 = vpop.f32.mrb[0].mxu0
      %v1207 = vadd.f32 0.0, %v1206
      %v1208 = vpop.f32.mrb[0].mxu0
      %1209 = vmatprep.mubr.f32.mxu0 0.0
      %1210 = vmatmul.mubr.f32.gmra.mrb[0].mxu0 %v1018
      %v1211 = vpop.f32.mrb[0].mxu0
      %v1212 = vadd.f32 0.0, %v1211
      %v1213 = vpop.f32.mrb[0].mxu0
      %1214 = vmatprep.mubr.f32.mxu0 0.0
      %1215 = vmatmul.mubr.f32.gmra.mrb[0].mxu0 %v1021
      %v1216 = vpop.f32.mrb[0].mxu0
      %v1217 = vadd.f32 0.0, %v1216
      %v1218 = vpop.f32.mrb[0].mxu0
      %1219 = vmatprep.mubr.f32.mxu0 0.0
      %1220 = vmatmul.mubr.f32.gmra.mrb[0].mxu0 %v1024
      %v1221 = vpop.f32.mrb[0].mxu0
      %v1222 = vadd.f32 0.0, %v1221
      %v1223 = vpop.f32.mrb[0].mxu0
      %1224 = vmatprep.mubr.f32.mxu0 0.0
      %1225 = vmatmul.mubr.f32.gmra.mrb[0].mxu0 %v1027
      %v1226 = vpop.f32.mrb[0].mxu0
      %v1227 = vadd.f32 0.0, %v1226
      %v1228 = vpop.f32.mrb[0].mxu0
      %1229 = vmatprep.mubr.f32.mxu0 0.0
      %1230 = vmatmul.mubr.f32.gmra.mrb[0].mxu0 %v1030
      %v1231 = vpop.f32.mrb[0].mxu0
      %v1232 = vadd.f32 0.0, %v1231
      %v1233 = vpop.f32.mrb[0].mxu0
      %1234 = vmatprep.mubr.f32.mxu0 0.0
      %1235 = vmatmul.mubr.f32.gmra.mrb[0].mxu0 %v1033
      %v1236 = vpop.f32.mrb[0].mxu0
      %v1237 = vadd.f32 0.0, %v1236
      %v1238 = vpop.f32.mrb[0].mxu0
      %1239 = vmatprep.mubr.f32.mxu0 0.0
      %1240 = vmatmul.mubr.f32.gmra.mrb[0].mxu0 %v1036
      %v1241 = vpop.f32.mrb[0].mxu0
      %v1242 = vadd.f32 0.0, %v1241
      %v1243 = vpop.f32.mrb[0].mxu0
      %1244 = vmatprep.mubr.f32.mxu0 0.0
      %1245 = vmatmul.mubr.f32.gmra.mrb[0].mxu0 %v1039
      %v1246 = vpop.f32.mrb[0].mxu0
      %v1247 = vadd.f32 0.0, %v1246
      %v1248 = vpop.f32.mrb[0].mxu0
      %1249 = vmatprep.mubr.f32.mxu0 0.0
      %1250 = vmatmul.mubr.f32.gmra.mrb[0].mxu0 %v1042
      %v1251 = vpop.f32.mrb[0].mxu0
      %v1252 = vadd.f32 0.0, %v1251
      %v1253 = vpop.f32.mrb[0].mxu0
      %1254 = vmatprep.mubr.f32.mxu0 0.0
      %1255 = vmatmul.mubr.f32.gmra.mrb[0].mxu0 %v1045
      %v1256 = vpop.f32.mrb[0].mxu0
      %v1257 = vadd.f32 0.0, %v1256
      %v1258 = vpop.f32.mrb[0].mxu0
      %1259 = vmatprep.mubr.f32.mxu0 0.0
      %1260 = vmatmul.mubr.f32.gmra.mrb[0].mxu0 %v1048
      %v1261 = vpop.f32.mrb[0].mxu0
      %v1262 = vadd.f32 0.0, %v1261
      %v1263 = vpop.f32.mrb[0].mxu0
      %1264 = vmatprep.mubr.f32.mxu0 0.0
      %1265 = vmatmul.mubr.f32.gmra.mrb[0].mxu0 %v1051
      %v1266 = vpop.f32.mrb[0].mxu0
      %v1267 = vadd.f32 0.0, %v1266
      %v1268 = vpop.f32.mrb[0].mxu0
      %1269 = vmatprep.mubr.f32.mxu0 0.0
      %1270 = vmatmul.mubr.f32.gmra.mrb[0].mxu0 %v1054
      %v1271 = vpop.f32.mrb[0].mxu0
      %v1272 = vadd.f32 0.0, %v1271
      %v1273 = vpop.f32.mrb[0].mxu0
      %1274 = vmatprep.mubr.f32.mxu0 0.0
      %1275 = vmatmul.mubr.f32.gmra.mrb[0].mxu0 %v1057
      %v1276 = vpop.f32.mrb[0].mxu0
      %v1277 = vadd.f32 0.0, %v1276
      %v1278 = vpop.f32.mrb[0].mxu0
      %1279 = vmatprep.mubr.f32.mxu0 0.0
      %1280 = vmatmul.mubr.f32.gmra.mrb[0].mxu0 %v1060
      %v1281 = vpop.f32.mrb[0].mxu0
      %v1282 = vadd.f32 0.0, %v1281
      %v1283 = vpop.f32.mrb[0].mxu0
      %1284 = vmatprep.mubr.f32.mxu0 0.0
      %1285 = vmatmul.mubr.f32.gmra.mrb[0].mxu0 %v1063
      %v1286 = vpop.f32.mrb[0].mxu0
      %v1287 = vadd.f32 0.0, %v1286
      %v1288 = vpop.f32.mrb[0].mxu0
      %1289 = vdwg.mxu0
      %v1290 = vadd.f32 %v777, %v1132
      %v1291 = vadd.f32 %v782, %v1137
      %v1292 = vadd.f32 %v787, %v1142
      %v1293 = vadd.f32 %v792, %v1147
      %v1294 = vadd.f32 %v797, %v1152
      %v1295 = vadd.f32 %v802, %v1157
      %v1296 = vadd.f32 %v807, %v1162
      %v1297 = vadd.f32 %v812, %v1167
      %v1298 = vadd.f32 %v817, %v1172
      %v1299 = vadd.f32 %v822, %v1177
      %v1300 = vadd.f32 %v827, %v1182
      %v1301 = vadd.f32 %v832, %v1187
      %v1302 = vadd.f32 %v837, %v1192
      %v1303 = vadd.f32 %v842, %v1197
      %v1304 = vadd.f32 %v847, %v1202
      %v1305 = vadd.f32 %v852, %v1207
      %v1306 = vadd.f32 %v857, %v1212
      %v1307 = vadd.f32 %v862, %v1217
      %v1308 = vadd.f32 %v867, %v1222
      %v1309 = vadd.f32 %v872, %v1227
      %v1310 = vadd.f32 %v877, %v1232
      %v1311 = vadd.f32 %v882, %v1237
      %v1312 = vadd.f32 %v887, %v1242
      %v1313 = vadd.f32 %v892, %v1247
      %v1314 = vadd.f32 %v897, %v1252
      %v1315 = vadd.f32 %v902, %v1257
      %v1316 = vadd.f32 %v907, %v1262
      %v1317 = vadd.f32 %v912, %v1267
      %v1318 = vadd.f32 %v917, %v1272
      %v1319 = vadd.f32 %v922, %v1277
      %v1320 = vadd.f32 %v927, %v1282
      %v1321 = vadd.f32 %v932, %v1287
      %s1322 = scalar_lea.vmem %s219, 24
      %v1323 = vld [vmem:[%s1322] sm:$0xff]
      %v1324 = vld [vmem:[%s1322 + $0x8] sm:$0xff]
      %v1325 = vld [vmem:[%s1322 + $0x18] sm:$0xff]
      %v1326 = vld [vmem:[%s1322 + $0x20] sm:$0xff]
      %v1327 = vld [vmem:[%s1322 + $0x30] sm:$0xff]
      %v1328 = vld [vmem:[%s1322 + $0x38] sm:$0xff]
      %v1329 = vld [vmem:[%s1322 + $0x48] sm:$0xff]
      %v1330 = vld [vmem:[%s1322 + $0x50] sm:$0xff]
      %v1331 = vld [vmem:[%s1322 + $0x60] sm:$0xff]
      %v1332 = vld [vmem:[%s1322 + $0x68] sm:$0xff]
      %v1333 = vld [vmem:[%s1322 + $0x78] sm:$0xff]
      %v1334 = vld [vmem:[%s1322 + $0x80] sm:$0xff]
      %v1335 = vld [vmem:[%s1322 + $0x90] sm:$0xff]
      %v1336 = vld [vmem:[%s1322 + $0x98] sm:$0xff]
      %v1337 = vld [vmem:[%s1322 + $0xa8] sm:$0xff]
      %v1338 = vld [vmem:[%s1322 + $0xb0] sm:$0xff]
      %v1339 = vld [vmem:[%s1322 + $0xc0] sm:$0xff]
      %v1340 = vld [vmem:[%s1322 + $0xc8] sm:$0xff]
      %v1341 = vld [vmem:[%s1322 + $0xd8] sm:$0xff]
      %v1342 = vld [vmem:[%s1322 + $0xe0] sm:$0xff]
      %v1343 = vld [vmem:[%s1322 + $0xf0] sm:$0xff]
      %v1344 = vld [vmem:[%s1322 + $0xf8] sm:$0xff]
      %v1345 = vld [vmem:[%s1322 + $0x108] sm:$0xff]
      %v1346 = vld [vmem:[%s1322 + $0x110] sm:$0xff]
      %v1347 = vld [vmem:[%s1322 + $0x120] sm:$0xff]
      %v1348 = vld [vmem:[%s1322 + $0x128] sm:$0xff]
      %v1349 = vld [vmem:[%s1322 + $0x138] sm:$0xff]
      %v1350 = vld [vmem:[%s1322 + $0x140] sm:$0xff]
      %v1351 = vld [vmem:[%s1322 + $0x150] sm:$0xff]
      %v1352 = vld [vmem:[%s1322 + $0x158] sm:$0xff]
      %v1353 = vld [vmem:[%s1322 + $0x168] sm:$0xff]
      %v1354 = vld [vmem:[%s1322 + $0x170] sm:$0xff]
      %s1355 = scalar_lea.vmem %s1, 24
      %v1356 = vld [vmem:[%s1355] sm:$0xff]
      %v1358 = vsel %vm292, %v1323, 0
      %v1361 = vsel %vm292, %v1324, 0
      %v1364 = vsel %vm292, %v1325, 0
      %v1367 = vsel %vm292, %v1326, 0
      %v1370 = vsel %vm292, %v1327, 0
      %v1373 = vsel %vm292, %v1328, 0
      %v1376 = vsel %vm292, %v1329, 0
      %v1379 = vsel %vm292, %v1330, 0
      %v1382 = vsel %vm292, %v1331, 0
      %v1385 = vsel %vm292, %v1332, 0
      %v1388 = vsel %vm292, %v1333, 0
      %v1391 = vsel %vm292, %v1334, 0
      %v1394 = vsel %vm292, %v1335, 0
      %v1397 = vsel %vm292, %v1336, 0
      %v1400 = vsel %vm292, %v1337, 0
      %v1403 = vsel %vm292, %v1338, 0
      %v1406 = vsel %vm292, %v1339, 0
      %v1409 = vsel %vm292, %v1340, 0
      %v1412 = vsel %vm292, %v1341, 0
      %v1415 = vsel %vm292, %v1342, 0
      %v1418 = vsel %vm292, %v1343, 0
      %v1421 = vsel %vm292, %v1344, 0
      %v1424 = vsel %vm292, %v1345, 0
      %v1427 = vsel %vm292, %v1346, 0
      %v1430 = vsel %vm292, %v1347, 0
      %v1433 = vsel %vm292, %v1348, 0
      %v1436 = vsel %vm292, %v1349, 0
      %v1439 = vsel %vm292, %v1350, 0
      %v1442 = vsel %vm292, %v1351, 0
      %v1445 = vsel %vm292, %v1352, 0
      %v1448 = vsel %vm292, %v1353, 0
      %v1451 = vsel %vm292, %v1354, 0
      %1453 = vmatprep.subr.mxu0 0.0
      %1454 = vmatpush1.msra.mxu0 %v1356
      %1455 = vmatprep.subr.mxu0 0.0
      %1456 = vmatpush1.msra.mxu0 0.0
      %1457 = vmatprep.subr.mxu0 0.0
      %1458 = vmatpush1.msra.mxu0 0.0
      %1459 = vmatprep.subr.mxu0 0.0
      %1460 = vmatpush1.msra.mxu0 0.0
      %1461 = vmatprep.subr.mxu0 0.0
      %1462 = vmatpush1.msra.mxu0 0.0
      %1463 = vmatprep.subr.mxu0 0.0
      %1464 = vmatpush1.msra.mxu0 0.0
      %1465 = vmatprep.subr.mxu0 0.0
      %1466 = vmatpush1.msra.mxu0 0.0
      %1467 = vmatprep.subr.mxu0 0.0
      %1468 = vmatpush1.msra.mxu0 0.0
      %1469 = vmatprep.subr.mxu0 0.0
      %1470 = vmatpush1.msra.mxu0 0.0
      %1471 = vmatprep.subr.mxu0 0.0
      %1472 = vmatpush1.msra.mxu0 0.0
      %1473 = vmatprep.subr.mxu0 0.0
      %1474 = vmatpush1.msra.mxu0 0.0
      %1475 = vmatprep.subr.mxu0 0.0
      %1476 = vmatpush1.msra.mxu0 0.0
      %1477 = vmatprep.subr.mxu0 0.0
      %1478 = vmatpush1.msra.mxu0 0.0
      %1479 = vmatprep.subr.mxu0 0.0
      %1480 = vmatpush1.msra.mxu0 0.0
      %1481 = vmatprep.subr.mxu0 0.0
      %1482 = vmatpush1.msra.mxu0 0.0
      %1483 = vmatprep.subr.mxu0 0.0
      %1484 = vmatpush1.msra.mxu0 0.0
      %1485 = vmatprep.subr.mxu0 0.0
      %1486 = vmatpush1.msra.mxu0 0.0
      %1487 = vmatprep.subr.mxu0 0.0
      %1488 = vmatpush1.msra.mxu0 0.0
      %1489 = vmatprep.subr.mxu0 0.0
      %1490 = vmatpush1.msra.mxu0 0.0
      %1491 = vmatprep.subr.mxu0 0.0
      %1492 = vmatpush1.msra.mxu0 0.0
      %1493 = vmatprep.subr.mxu0 0.0
      %1494 = vmatpush1.msra.mxu0 0.0
      %1495 = vmatprep.subr.mxu0 0.0
      %1496 = vmatpush1.msra.mxu0 0.0
      %1497 = vmatprep.subr.mxu0 0.0
      %1498 = vmatpush1.msra.mxu0 0.0
      %1499 = vmatprep.subr.mxu0 0.0
      %1500 = vmatpush1.msra.mxu0 0.0
      %1501 = vmatprep.subr.mxu0 0.0
      %1502 = vmatpush1.msra.mxu0 0.0
      %1503 = vmatprep.subr.mxu0 0.0
      %1504 = vmatpush1.msra.mxu0 0.0
      %1505 = vmatprep.subr.mxu0 0.0
      %1506 = vmatpush1.msra.mxu0 0.0
      %1507 = vmatprep.subr.mxu0 0.0
      %1508 = vmatpush1.msra.mxu0 0.0
      %1509 = vmatprep.subr.mxu0 0.0
      %1510 = vmatpush1.msra.mxu0 0.0
      %1511 = vmatprep.subr.mxu0 0.0
      %1512 = vmatpush1.msra.mxu0 0.0
      %1513 = vmatprep.subr.mxu0 0.0
      %1514 = vmatpush1.msra.mxu0 0.0
      %1515 = vmatprep.subr.mxu0 0.0
      %1516 = vmatpush1.msra.mxu0 0.0
      %1517 = vmatprep.mubr.f32.mxu0 0.0
      %1518 = vmatmul.mubr.f32.gmra.mrb[0].mxu0 %v1358
      %v1519 = vpop.f32.mrb[0].mxu0
      %v1520 = vadd.f32 0.0, %v1519
      %v1521 = vpop.f32.mrb[0].mxu0
      %1522 = vmatprep.mubr.f32.mxu0 0.0
      %1523 = vmatmul.mubr.f32.gmra.mrb[0].mxu0 %v1361
      %v1524 = vpop.f32.mrb[0].mxu0
      %v1525 = vadd.f32 0.0, %v1524
      %v1526 = vpop.f32.mrb[0].mxu0
      %1527 = vmatprep.mubr.f32.mxu0 0.0
      %1528 = vmatmul.mubr.f32.gmra.mrb[0].mxu0 %v1364
      %v1529 = vpop.f32.mrb[0].mxu0
      %v1530 = vadd.f32 0.0, %v1529
      %v1531 = vpop.f32.mrb[0].mxu0
      %1532 = vmatprep.mubr.f32.mxu0 0.0
      %1533 = vmatmul.mubr.f32.gmra.mrb[0].mxu0 %v1367
      %v1534 = vpop.f32.mrb[0].mxu0
      %v1535 = vadd.f32 0.0, %v1534
      %v1536 = vpop.f32.mrb[0].mxu0
      %1537 = vmatprep.mubr.f32.mxu0 0.0
      %1538 = vmatmul.mubr.f32.gmra.mrb[0].mxu0 %v1370
      %v1539 = vpop.f32.mrb[0].mxu0
      %v1540 = vadd.f32 0.0, %v1539
      %v1541 = vpop.f32.mrb[0].mxu0
      %1542 = vmatprep.mubr.f32.mxu0 0.0
      %1543 = vmatmul.mubr.f32.gmra.mrb[0].mxu0 %v1373
      %v1544 = vpop.f32.mrb[0].mxu0
      %v1545 = vadd.f32 0.0, %v1544
      %v1546 = vpop.f32.mrb[0].mxu0
      %1547 = vmatprep.mubr.f32.mxu0 0.0
      %1548 = vmatmul.mubr.f32.gmra.mrb[0].mxu0 %v1376
      %v1549 = vpop.f32.mrb[0].mxu0
      %v1550 = vadd.f32 0.0, %v1549
      %v1551 = vpop.f32.mrb[0].mxu0
      %1552 = vmatprep.mubr.f32.mxu0 0.0
      %1553 = vmatmul.mubr.f32.gmra.mrb[0].mxu0 %v1379
      %v1554 = vpop.f32.mrb[0].mxu0
      %v1555 = vadd.f32 0.0, %v1554
      %v1556 = vpop.f32.mrb[0].mxu0
      %1557 = vmatprep.mubr.f32.mxu0 0.0
      %1558 = vmatmul.mubr.f32.gmra.mrb[0].mxu0 %v1382
      %v1559 = vpop.f32.mrb[0].mxu0
      %v1560 = vadd.f32 0.0, %v1559
      %v1561 = vpop.f32.mrb[0].mxu0
      %1562 = vmatprep.mubr.f32.mxu0 0.0
      %1563 = vmatmul.mubr.f32.gmra.mrb[0].mxu0 %v1385
      %v1564 = vpop.f32.mrb[0].mxu0
      %v1565 = vadd.f32 0.0, %v1564
      %v1566 = vpop.f32.mrb[0].mxu0
      %1567 = vmatprep.mubr.f32.mxu0 0.0
      %1568 = vmatmul.mubr.f32.gmra.mrb[0].mxu0 %v1388
      %v1569 = vpop.f32.mrb[0].mxu0
      %v1570 = vadd.f32 0.0, %v1569
      %v1571 = vpop.f32.mrb[0].mxu0
      %1572 = vmatprep.mubr.f32.mxu0 0.0
      %1573 = vmatmul.mubr.f32.gmra.mrb[0].mxu0 %v1391
      %v1574 = vpop.f32.mrb[0].mxu0
      %v1575 = vadd.f32 0.0, %v1574
      %v1576 = vpop.f32.mrb[0].mxu0
      %1577 = vmatprep.mubr.f32.mxu0 0.0
      %1578 = vmatmul.mubr.f32.gmra.mrb[0].mxu0 %v1394
      %v1579 = vpop.f32.mrb[0].mxu0
      %v1580 = vadd.f32 0.0, %v1579
      %v1581 = vpop.f32.mrb[0].mxu0
      %1582 = vmatprep.mubr.f32.mxu0 0.0
      %1583 = vmatmul.mubr.f32.gmra.mrb[0].mxu0 %v1397
      %v1584 = vpop.f32.mrb[0].mxu0
      %v1585 = vadd.f32 0.0, %v1584
      %v1586 = vpop.f32.mrb[0].mxu0
      %1587 = vmatprep.mubr.f32.mxu0 0.0
      %1588 = vmatmul.mubr.f32.gmra.mrb[0].mxu0 %v1400
      %v1589 = vpop.f32.mrb[0].mxu0
      %v1590 = vadd.f32 0.0, %v1589
      %v1591 = vpop.f32.mrb[0].mxu0
      %1592 = vmatprep.mubr.f32.mxu0 0.0
      %1593 = vmatmul.mubr.f32.gmra.mrb[0].mxu0 %v1403
      %v1594 = vpop.f32.mrb[0].mxu0
      %v1595 = vadd.f32 0.0, %v1594
      %v1596 = vpop.f32.mrb[0].mxu0
      %1597 = vmatprep.mubr.f32.mxu0 0.0
      %1598 = vmatmul.mubr.f32.gmra.mrb[0].mxu0 %v1406
      %v1599 = vpop.f32.mrb[0].mxu0
      %v1600 = vadd.f32 0.0, %v1599
      %v1601 = vpop.f32.mrb[0].mxu0
      %1602 = vmatprep.mubr.f32.mxu0 0.0
      %1603 = vmatmul.mubr.f32.gmra.mrb[0].mxu0 %v1409
      %v1604 = vpop.f32.mrb[0].mxu0
      %v1605 = vadd.f32 0.0, %v1604
      %v1606 = vpop.f32.mrb[0].mxu0
      %1607 = vmatprep.mubr.f32.mxu0 0.0
      %1608 = vmatmul.mubr.f32.gmra.mrb[0].mxu0 %v1412
      %v1609 = vpop.f32.mrb[0].mxu0
      %v1610 = vadd.f32 0.0, %v1609
      %v1611 = vpop.f32.mrb[0].mxu0
      %1612 = vmatprep.mubr.f32.mxu0 0.0
      %1613 = vmatmul.mubr.f32.gmra.mrb[0].mxu0 %v1415
      %v1614 = vpop.f32.mrb[0].mxu0
      %v1615 = vadd.f32 0.0, %v1614
      %v1616 = vpop.f32.mrb[0].mxu0
      %1617 = vmatprep.mubr.f32.mxu0 0.0
      %1618 = vmatmul.mubr.f32.gmra.mrb[0].mxu0 %v1418
      %v1619 = vpop.f32.mrb[0].mxu0
      %v1620 = vadd.f32 0.0, %v1619
      %v1621 = vpop.f32.mrb[0].mxu0
      %1622 = vmatprep.mubr.f32.mxu0 0.0
      %1623 = vmatmul.mubr.f32.gmra.mrb[0].mxu0 %v1421
      %v1624 = vpop.f32.mrb[0].mxu0
      %v1625 = vadd.f32 0.0, %v1624
      %v1626 = vpop.f32.mrb[0].mxu0
      %1627 = vmatprep.mubr.f32.mxu0 0.0
      %1628 = vmatmul.mubr.f32.gmra.mrb[0].mxu0 %v1424
      %v1629 = vpop.f32.mrb[0].mxu0
      %v1630 = vadd.f32 0.0, %v1629
      %v1631 = vpop.f32.mrb[0].mxu0
      %1632 = vmatprep.mubr.f32.mxu0 0.0
      %1633 = vmatmul.mubr.f32.gmra.mrb[0].mxu0 %v1427
      %v1634 = vpop.f32.mrb[0].mxu0
      %v1635 = vadd.f32 0.0, %v1634
      %v1636 = vpop.f32.mrb[0].mxu0
      %1637 = vmatprep.mubr.f32.mxu0 0.0
      %1638 = vmatmul.mubr.f32.gmra.mrb[0].mxu0 %v1430
      %v1639 = vpop.f32.mrb[0].mxu0
      %v1640 = vadd.f32 0.0, %v1639
      %v1641 = vpop.f32.mrb[0].mxu0
      %1642 = vmatprep.mubr.f32.mxu0 0.0
      %1643 = vmatmul.mubr.f32.gmra.mrb[0].mxu0 %v1433
      %v1644 = vpop.f32.mrb[0].mxu0
      %v1645 = vadd.f32 0.0, %v1644
      %v1646 = vpop.f32.mrb[0].mxu0
      %1647 = vmatprep.mubr.f32.mxu0 0.0
      %1648 = vmatmul.mubr.f32.gmra.mrb[0].mxu0 %v1436
      %v1649 = vpop.f32.mrb[0].mxu0
      %v1650 = vadd.f32 0.0, %v1649
      %v1651 = vpop.f32.mrb[0].mxu0
      %1652 = vmatprep.mubr.f32.mxu0 0.0
      %1653 = vmatmul.mubr.f32.gmra.mrb[0].mxu0 %v1439
      %v1654 = vpop.f32.mrb[0].mxu0
      %v1655 = vadd.f32 0.0, %v1654
      %v1656 = vpop.f32.mrb[0].mxu0
      %1657 = vmatprep.mubr.f32.mxu0 0.0
      %1658 = vmatmul.mubr.f32.gmra.mrb[0].mxu0 %v1442
      %v1659 = vpop.f32.mrb[0].mxu0
      %v1660 = vadd.f32 0.0, %v1659
      %v1661 = vpop.f32.mrb[0].mxu0
      %1662 = vmatprep.mubr.f32.mxu0 0.0
      %1663 = vmatmul.mubr.f32.gmra.mrb[0].mxu0 %v1445
      %v1664 = vpop.f32.mrb[0].mxu0
      %v1665 = vadd.f32 0.0, %v1664
      %v1666 = vpop.f32.mrb[0].mxu0
      %1667 = vmatprep.mubr.f32.mxu0 0.0
      %1668 = vmatmul.mubr.f32.gmra.mrb[0].mxu0 %v1448
      %v1669 = vpop.f32.mrb[0].mxu0
      %v1670 = vadd.f32 0.0, %v1669
      %v1671 = vpop.f32.mrb[0].mxu0
      %1672 = vmatprep.mubr.f32.mxu0 0.0
      %1673 = vmatmul.mubr.f32.gmra.mrb[0].mxu0 %v1451
      %v1674 = vpop.f32.mrb[0].mxu0
      %v1675 = vadd.f32 0.0, %v1674
      %v1676 = vpop.f32.mrb[0].mxu0
      %1677 = vdwg.mxu0
      %v1678 = vadd.f32 %v1290, %v1520
      %v1679 = vadd.f32 %v1291, %v1525
      %v1680 = vadd.f32 %v1292, %v1530
      %v1681 = vadd.f32 %v1293, %v1535
      %v1682 = vadd.f32 %v1294, %v1540
      %v1683 = vadd.f32 %v1295, %v1545
      %v1684 = vadd.f32 %v1296, %v1550
      %v1685 = vadd.f32 %v1297, %v1555
      %v1686 = vadd.f32 %v1298, %v1560
      %v1687 = vadd.f32 %v1299, %v1565
      %v1688 = vadd.f32 %v1300, %v1570
      %v1689 = vadd.f32 %v1301, %v1575
      %v1690 = vadd.f32 %v1302, %v1580
      %v1691 = vadd.f32 %v1303, %v1585
      %v1692 = vadd.f32 %v1304, %v1590
      %v1693 = vadd.f32 %v1305, %v1595
      %v1694 = vadd.f32 %v1306, %v1600
      %v1695 = vadd.f32 %v1307, %v1605
      %v1696 = vadd.f32 %v1308, %v1610
      %v1697 = vadd.f32 %v1309, %v1615
      %v1698 = vadd.f32 %v1310, %v1620
      %v1699 = vadd.f32 %v1311, %v1625
      %v1700 = vadd.f32 %v1312, %v1630
      %v1701 = vadd.f32 %v1313, %v1635
      %v1702 = vadd.f32 %v1314, %v1640
      %v1703 = vadd.f32 %v1315, %v1645
      %v1704 = vadd.f32 %v1316, %v1650
      %v1705 = vadd.f32 %v1317, %v1655
      %v1706 = vadd.f32 %v1318, %v1660
      %v1707 = vadd.f32 %v1319, %v1665
      %v1708 = vadd.f32 %v1320, %v1670
      %v1709 = vadd.f32 %v1321, %v1675
      %v1710 = vld [vmem:[%s1322 + $0x1] sm:$0xff]
      %v1711 = vld [vmem:[%s1322 + $0x9] sm:$0xff]
      %v1712 = vld [vmem:[%s1322 + $0x19] sm:$0xff]
      %v1713 = vld [vmem:[%s1322 + $0x21] sm:$0xff]
      %v1714 = vld [vmem:[%s1322 + $0x31] sm:$0xff]
      %v1715 = vld [vmem:[%s1322 + $0x39] sm:$0xff]
      %v1716 = vld [vmem:[%s1322 + $0x49] sm:$0xff]
      %v1717 = vld [vmem:[%s1322 + $0x51] sm:$0xff]
      %v1718 = vld [vmem:[%s1322 + $0x61] sm:$0xff]
      %v1719 = vld [vmem:[%s1322 + $0x69] sm:$0xff]
      %v1720 = vld [vmem:[%s1322 + $0x79] sm:$0xff]
      %v1721 = vld [vmem:[%s1322 + $0x81] sm:$0xff]
      %v1722 = vld [vmem:[%s1322 + $0x91] sm:$0xff]
      %v1723 = vld [vmem:[%s1322 + $0x99] sm:$0xff]
      %v1724 = vld [vmem:[%s1322 + $0xa9] sm:$0xff]
      %v1725 = vld [vmem:[%s1322 + $0xb1] sm:$0xff]
      %v1726 = vld [vmem:[%s1322 + $0xc1] sm:$0xff]
      %v1727 = vld [vmem:[%s1322 + $0xc9] sm:$0xff]
      %v1728 = vld [vmem:[%s1322 + $0xd9] sm:$0xff]
      %v1729 = vld [vmem:[%s1322 + $0xe1] sm:$0xff]
      %v1730 = vld [vmem:[%s1322 + $0xf1] sm:$0xff]
      %v1731 = vld [vmem:[%s1322 + $0xf9] sm:$0xff]
      %v1732 = vld [vmem:[%s1322 + $0x109] sm:$0xff]
      %v1733 = vld [vmem:[%s1322 + $0x111] sm:$0xff]
      %v1734 = vld [vmem:[%s1322 + $0x121] sm:$0xff]
      %v1735 = vld [vmem:[%s1322 + $0x129] sm:$0xff]
      %v1736 = vld [vmem:[%s1322 + $0x139] sm:$0xff]
      %v1737 = vld [vmem:[%s1322 + $0x141] sm:$0xff]
      %v1738 = vld [vmem:[%s1322 + $0x151] sm:$0xff]
      %v1739 = vld [vmem:[%s1322 + $0x159] sm:$0xff]
      %v1740 = vld [vmem:[%s1322 + $0x169] sm:$0xff]
      %v1741 = vld [vmem:[%s1322 + $0x171] sm:$0xff]
      %s1742 = scalar_lea.vmem %s1, 32
      %v1743 = vld [vmem:[%s1742] sm:$0xff]
      %v1745 = vsel %vm292, %v1710, 0
      %v1748 = vsel %vm292, %v1711, 0
      %v1751 = vsel %vm292, %v1712, 0
      %v1754 = vsel %vm292, %v1713, 0
      %v1757 = vsel %vm292, %v1714, 0
      %v1760 = vsel %vm292, %v1715, 0
      %v1763 = vsel %vm292, %v1716, 0
      %v1766 = vsel %vm292, %v1717, 0
      %v1769 = vsel %vm292, %v1718, 0
      %v1772 = vsel %vm292, %v1719, 0
      %v1775 = vsel %vm292, %v1720, 0
      %v1778 = vsel %vm292, %v1721, 0
      %v1781 = vsel %vm292, %v1722, 0
      %v1784 = vsel %vm292, %v1723, 0
      %v1787 = vsel %vm292, %v1724, 0
      %v1790 = vsel %vm292, %v1725, 0
      %v1793 = vsel %vm292, %v1726, 0
      %v1796 = vsel %vm292, %v1727, 0
      %v1799 = vsel %vm292, %v1728, 0
      %v1802 = vsel %vm292, %v1729, 0
      %v1805 = vsel %vm292, %v1730, 0
      %v1808 = vsel %vm292, %v1731, 0
      %v1811 = vsel %vm292, %v1732, 0
      %v1814 = vsel %vm292, %v1733, 0
      %v1817 = vsel %vm292, %v1734, 0
      %v1820 = vsel %vm292, %v1735, 0
      %v1823 = vsel %vm292, %v1736, 0
      %v1826 = vsel %vm292, %v1737, 0
      %v1829 = vsel %vm292, %v1738, 0
      %v1832 = vsel %vm292, %v1739, 0
      %v1835 = vsel %vm292, %v1740, 0
      %v1838 = vsel %vm292, %v1741, 0
      %1840 = vmatprep.subr.mxu0 0.0
      %1841 = vmatpush1.msra.mxu0 %v1743
      %1842 = vmatprep.subr.mxu0 0.0
      %1843 = vmatpush1.msra.mxu0 0.0
      %1844 = vmatprep.subr.mxu0 0.0
      %1845 = vmatpush1.msra.mxu0 0.0
      %1846 = vmatprep.subr.mxu0 0.0
      %1847 = vmatpush1.msra.mxu0 0.0
      %1848 = vmatprep.subr.mxu0 0.0
      %1849 = vmatpush1.msra.mxu0 0.0
      %1850 = vmatprep.subr.mxu0 0.0
      %1851 = vmatpush1.msra.mxu0 0.0
      %1852 = vmatprep.subr.mxu0 0.0
      %1853 = vmatpush1.msra.mxu0 0.0
      %1854 = vmatprep.subr.mxu0 0.0
      %1855 = vmatpush1.msra.mxu0 0.0
      %1856 = vmatprep.subr.mxu0 0.0
      %1857 = vmatpush1.msra.mxu0 0.0
      %1858 = vmatprep.subr.mxu0 0.0
      %1859 = vmatpush1.msra.mxu0 0.0
      %1860 = vmatprep.subr.mxu0 0.0
      %1861 = vmatpush1.msra.mxu0 0.0
      %1862 = vmatprep.subr.mxu0 0.0
      %1863 = vmatpush1.msra.mxu0 0.0
      %1864 = vmatprep.subr.mxu0 0.0
      %1865 = vmatpush1.msra.mxu0 0.0
      %1866 = vmatprep.subr.mxu0 0.0
      %1867 = vmatpush1.msra.mxu0 0.0
      %1868 = vmatprep.subr.mxu0 0.0
      %1869 = vmatpush1.msra.mxu0 0.0
      %1870 = vmatprep.subr.mxu0 0.0
      %1871 = vmatpush1.msra.mxu0 0.0
      %1872 = vmatprep.subr.mxu0 0.0
      %1873 = vmatpush1.msra.mxu0 0.0
      %1874 = vmatprep.subr.mxu0 0.0
      %1875 = vmatpush1.msra.mxu0 0.0
      %1876 = vmatprep.subr.mxu0 0.0
      %1877 = vmatpush1.msra.mxu0 0.0
      %1878 = vmatprep.subr.mxu0 0.0
      %1879 = vmatpush1.msra.mxu0 0.0
      %1880 = vmatprep.subr.mxu0 0.0
      %1881 = vmatpush1.msra.mxu0 0.0
      %1882 = vmatprep.subr.mxu0 0.0
      %1883 = vmatpush1.msra.mxu0 0.0
      %1884 = vmatprep.subr.mxu0 0.0
      %1885 = vmatpush1.msra.mxu0 0.0
      %1886 = vmatprep.subr.mxu0 0.0
      %1887 = vmatpush1.msra.mxu0 0.0
      %1888 = vmatprep.subr.mxu0 0.0
      %1889 = vmatpush1.msra.mxu0 0.0
      %1890 = vmatprep.subr.mxu0 0.0
      %1891 = vmatpush1.msra.mxu0 0.0
      %1892 = vmatprep.subr.mxu0 0.0
      %1893 = vmatpush1.msra.mxu0 0.0
      %1894 = vmatprep.subr.mxu0 0.0
      %1895 = vmatpush1.msra.mxu0 0.0
      %1896 = vmatprep.subr.mxu0 0.0
      %1897 = vmatpush1.msra.mxu0 0.0
      %1898 = vmatprep.subr.mxu0 0.0
      %1899 = vmatpush1.msra.mxu0 0.0
      %1900 = vmatprep.subr.mxu0 0.0
      %1901 = vmatpush1.msra.mxu0 0.0
      %1902 = vmatprep.subr.mxu0 0.0
      %1903 = vmatpush1.msra.mxu0 0.0
      %1904 = vmatprep.mubr.f32.mxu0 0.0
      %1905 = vmatmul.mubr.f32.gmra.mrb[0].mxu0 %v1745
      %v1906 = vpop.f32.mrb[0].mxu0
      %v1907 = vadd.f32 0.0, %v1906
      %v1908 = vpop.f32.mrb[0].mxu0
      %1909 = vmatprep.mubr.f32.mxu0 0.0
      %1910 = vmatmul.mubr.f32.gmra.mrb[0].mxu0 %v1748
      %v1911 = vpop.f32.mrb[0].mxu0
      %v1912 = vadd.f32 0.0, %v1911
      %v1913 = vpop.f32.mrb[0].mxu0
      %1914 = vmatprep.mubr.f32.mxu0 0.0
      %1915 = vmatmul.mubr.f32.gmra.mrb[0].mxu0 %v1751
      %v1916 = vpop.f32.mrb[0].mxu0
      %v1917 = vadd.f32 0.0, %v1916
      %v1918 = vpop.f32.mrb[0].mxu0
      %1919 = vmatprep.mubr.f32.mxu0 0.0
      %1920 = vmatmul.mubr.f32.gmra.mrb[0].mxu0 %v1754
      %v1921 = vpop.f32.mrb[0].mxu0
      %v1922 = vadd.f32 0.0, %v1921
      %v1923 = vpop.f32.mrb[0].mxu0
      %1924 = vmatprep.mubr.f32.mxu0 0.0
      %1925 = vmatmul.mubr.f32.gmra.mrb[0].mxu0 %v1757
      %v1926 = vpop.f32.mrb[0].mxu0
      %v1927 = vadd.f32 0.0, %v1926
      %v1928 = vpop.f32.mrb[0].mxu0
      %1929 = vmatprep.mubr.f32.mxu0 0.0
      %1930 = vmatmul.mubr.f32.gmra.mrb[0].mxu0 %v1760
      %v1931 = vpop.f32.mrb[0].mxu0
      %v1932 = vadd.f32 0.0, %v1931
      %v1933 = vpop.f32.mrb[0].mxu0
      %1934 = vmatprep.mubr.f32.mxu0 0.0
      %1935 = vmatmul.mubr.f32.gmra.mrb[0].mxu0 %v1763
      %v1936 = vpop.f32.mrb[0].mxu0
      %v1937 = vadd.f32 0.0, %v1936
      %v1938 = vpop.f32.mrb[0].mxu0
      %1939 = vmatprep.mubr.f32.mxu0 0.0
      %1940 = vmatmul.mubr.f32.gmra.mrb[0].mxu0 %v1766
      %v1941 = vpop.f32.mrb[0].mxu0
      %v1942 = vadd.f32 0.0, %v1941
      %v1943 = vpop.f32.mrb[0].mxu0
      %1944 = vmatprep.mubr.f32.mxu0 0.0
      %1945 = vmatmul.mubr.f32.gmra.mrb[0].mxu0 %v1769
      %v1946 = vpop.f32.mrb[0].mxu0
      %v1947 = vadd.f32 0.0, %v1946
      %v1948 = vpop.f32.mrb[0].mxu0
      %1949 = vmatprep.mubr.f32.mxu0 0.0
      %1950 = vmatmul.mubr.f32.gmra.mrb[0].mxu0 %v1772
      %v1951 = vpop.f32.mrb[0].mxu0
      %v1952 = vadd.f32 0.0, %v1951
      %v1953 = vpop.f32.mrb[0].mxu0
      %1954 = vmatprep.mubr.f32.mxu0 0.0
      %1955 = vmatmul.mubr.f32.gmra.mrb[0].mxu0 %v1775
      %v1956 = vpop.f32.mrb[0].mxu0
      %v1957 = vadd.f32 0.0, %v1956
      %v1958 = vpop.f32.mrb[0].mxu0
      %1959 = vmatprep.mubr.f32.mxu0 0.0
      %1960 = vmatmul.mubr.f32.gmra.mrb[0].mxu0 %v1778
      %v1961 = vpop.f32.mrb[0].mxu0
      %v1962 = vadd.f32 0.0, %v1961
      %v1963 = vpop.f32.mrb[0].mxu0
      %1964 = vmatprep.mubr.f32.mxu0 0.0
      %1965 = vmatmul.mubr.f32.gmra.mrb[0].mxu0 %v1781
      %v1966 = vpop.f32.mrb[0].mxu0
      %v1967 = vadd.f32 0.0, %v1966
      %v1968 = vpop.f32.mrb[0].mxu0
      %1969 = vmatprep.mubr.f32.mxu0 0.0
      %1970 = vmatmul.mubr.f32.gmra.mrb[0].mxu0 %v1784
      %v1971 = vpop.f32.mrb[0].mxu0
      %v1972 = vadd.f32 0.0, %v1971
      %v1973 = vpop.f32.mrb[0].mxu0
      %1974 = vmatprep.mubr.f32.mxu0 0.0
      %1975 = vmatmul.mubr.f32.gmra.mrb[0].mxu0 %v1787
      %v1976 = vpop.f32.mrb[0].mxu0
      %v1977 = vadd.f32 0.0, %v1976
      %v1978 = vpop.f32.mrb[0].mxu0
      %1979 = vmatprep.mubr.f32.mxu0 0.0
      %1980 = vmatmul.mubr.f32.gmra.mrb[0].mxu0 %v1790
      %v1981 = vpop.f32.mrb[0].mxu0
      %v1982 = vadd.f32 0.0, %v1981
      %v1983 = vpop.f32.mrb[0].mxu0
      %1984 = vmatprep.mubr.f32.mxu0 0.0
      %1985 = vmatmul.mubr.f32.gmra.mrb[0].mxu0 %v1793
      %v1986 = vpop.f32.mrb[0].mxu0
      %v1987 = vadd.f32 0.0, %v1986
      %v1988 = vpop.f32.mrb[0].mxu0
      %1989 = vmatprep.mubr.f32.mxu0 0.0
      %1990 = vmatmul.mubr.f32.gmra.mrb[0].mxu0 %v1796
      %v1991 = vpop.f32.mrb[0].mxu0
      %v1992 = vadd.f32 0.0, %v1991
      %v1993 = vpop.f32.mrb[0].mxu0
      %1994 = vmatprep.mubr.f32.mxu0 0.0
      %1995 = vmatmul.mubr.f32.gmra.mrb[0].mxu0 %v1799
      %v1996 = vpop.f32.mrb[0].mxu0
      %v1997 = vadd.f32 0.0, %v1996
      %v1998 = vpop.f32.mrb[0].mxu0
      %1999 = vmatprep.mubr.f32.mxu0 0.0
      %2000 = vmatmul.mubr.f32.gmra.mrb[0].mxu0 %v1802
      %v2001 = vpop.f32.mrb[0].mxu0
      %v2002 = vadd.f32 0.0, %v2001
      %v2003 = vpop.f32.mrb[0].mxu0
      %2004 = vmatprep.mubr.f32.mxu0 0.0
      %2005 = vmatmul.mubr.f32.gmra.mrb[0].mxu0 %v1805
      %v2006 = vpop.f32.mrb[0].mxu0
      %v2007 = vadd.f32 0.0, %v2006
      %v2008 = vpop.f32.mrb[0].mxu0
      %2009 = vmatprep.mubr.f32.mxu0 0.0
      %2010 = vmatmul.mubr.f32.gmra.mrb[0].mxu0 %v1808
      %v2011 = vpop.f32.mrb[0].mxu0
      %v2012 = vadd.f32 0.0, %v2011
      %v2013 = vpop.f32.mrb[0].mxu0
      %2014 = vmatprep.mubr.f32.mxu0 0.0
      %2015 = vmatmul.mubr.f32.gmra.mrb[0].mxu0 %v1811
      %v2016 = vpop.f32.mrb[0].mxu0
      %v2017 = vadd.f32 0.0, %v2016
      %v2018 = vpop.f32.mrb[0].mxu0
      %2019 = vmatprep.mubr.f32.mxu0 0.0
      %2020 = vmatmul.mubr.f32.gmra.mrb[0].mxu0 %v1814
      %v2021 = vpop.f32.mrb[0].mxu0
      %v2022 = vadd.f32 0.0, %v2021
      %v2023 = vpop.f32.mrb[0].mxu0
      %2024 = vmatprep.mubr.f32.mxu0 0.0
      %2025 = vmatmul.mubr.f32.gmra.mrb[0].mxu0 %v1817
      %v2026 = vpop.f32.mrb[0].mxu0
      %v2027 = vadd.f32 0.0, %v2026
      %v2028 = vpop.f32.mrb[0].mxu0
      %2029 = vmatprep.mubr.f32.mxu0 0.0
      %2030 = vmatmul.mubr.f32.gmra.mrb[0].mxu0 %v1820
      %v2031 = vpop.f32.mrb[0].mxu0
      %v2032 = vadd.f32 0.0, %v2031
      %v2033 = vpop.f32.mrb[0].mxu0
      %2034 = vmatprep.mubr.f32.mxu0 0.0
      %2035 = vmatmul.mubr.f32.gmra.mrb[0].mxu0 %v1823
      %v2036 = vpop.f32.mrb[0].mxu0
      %v2037 = vadd.f32 0.0, %v2036
      %v2038 = vpop.f32.mrb[0].mxu0
      %2039 = vmatprep.mubr.f32.mxu0 0.0
      %2040 = vmatmul.mubr.f32.gmra.mrb[0].mxu0 %v1826
      %v2041 = vpop.f32.mrb[0].mxu0
      %v2042 = vadd.f32 0.0, %v2041
      %v2043 = vpop.f32.mrb[0].mxu0
      %2044 = vmatprep.mubr.f32.mxu0 0.0
      %2045 = vmatmul.mubr.f32.gmra.mrb[0].mxu0 %v1829
      %v2046 = vpop.f32.mrb[0].mxu0
      %v2047 = vadd.f32 0.0, %v2046
      %v2048 = vpop.f32.mrb[0].mxu0
      %2049 = vmatprep.mubr.f32.mxu0 0.0
      %2050 = vmatmul.mubr.f32.gmra.mrb[0].mxu0 %v1832
      %v2051 = vpop.f32.mrb[0].mxu0
      %v2052 = vadd.f32 0.0, %v2051
      %v2053 = vpop.f32.mrb[0].mxu0
      %2054 = vmatprep.mubr.f32.mxu0 0.0
      %2055 = vmatmul.mubr.f32.gmra.mrb[0].mxu0 %v1835
      %v2056 = vpop.f32.mrb[0].mxu0
      %v2057 = vadd.f32 0.0, %v2056
      %v2058 = vpop.f32.mrb[0].mxu0
      %2059 = vmatprep.mubr.f32.mxu0 0.0
      %2060 = vmatmul.mubr.f32.gmra.mrb[0].mxu0 %v1838
      %v2061 = vpop.f32.mrb[0].mxu0
      %v2062 = vadd.f32 0.0, %v2061
      %v2063 = vpop.f32.mrb[0].mxu0
      %2064 = vdwg.mxu0
      %v2065 = vadd.f32 %v1678, %v1907
      %v2066 = vadd.f32 %v1679, %v1912
      %v2067 = vadd.f32 %v1680, %v1917
      %v2068 = vadd.f32 %v1681, %v1922
      %v2069 = vadd.f32 %v1682, %v1927
      %v2070 = vadd.f32 %v1683, %v1932
      %v2071 = vadd.f32 %v1684, %v1937
      %v2072 = vadd.f32 %v1685, %v1942
      %v2073 = vadd.f32 %v1686, %v1947
      %v2074 = vadd.f32 %v1687, %v1952
      %v2075 = vadd.f32 %v1688, %v1957
      %v2076 = vadd.f32 %v1689, %v1962
      %v2077 = vadd.f32 %v1690, %v1967
      %v2078 = vadd.f32 %v1691, %v1972
      %v2079 = vadd.f32 %v1692, %v1977
      %v2080 = vadd.f32 %v1693, %v1982
      %v2081 = vadd.f32 %v1694, %v1987
      %v2082 = vadd.f32 %v1695, %v1992
      %v2083 = vadd.f32 %v1696, %v1997
      %v2084 = vadd.f32 %v1697, %v2002
      %v2085 = vadd.f32 %v1698, %v2007
      %v2086 = vadd.f32 %v1699, %v2012
      %v2087 = vadd.f32 %v1700, %v2017
      %v2088 = vadd.f32 %v1701, %v2022
      %v2089 = vadd.f32 %v1702, %v2027
      %v2090 = vadd.f32 %v1703, %v2032
      %v2091 = vadd.f32 %v1704, %v2037
      %v2092 = vadd.f32 %v1705, %v2042
      %v2093 = vadd.f32 %v1706, %v2047
      %v2094 = vadd.f32 %v1707, %v2052
      %v2095 = vadd.f32 %v1708, %v2057
      %v2096 = vadd.f32 %v1709, %v2062
      %v2097 = vld [vmem:[%s1322 + $0x2] sm:$0xff]
      %v2098 = vld [vmem:[%s1322 + $0xa] sm:$0xff]
      %v2099 = vld [vmem:[%s1322 + $0x1a] sm:$0xff]
      %v2100 = vld [vmem:[%s1322 + $0x22] sm:$0xff]
      %v2101 = vld [vmem:[%s1322 + $0x32] sm:$0xff]
      %v2102 = vld [vmem:[%s1322 + $0x3a] sm:$0xff]
      %v2103 = vld [vmem:[%s1322 + $0x4a] sm:$0xff]
      %v2104 = vld [vmem:[%s1322 + $0x52] sm:$0xff]
      %v2105 = vld [vmem:[%s1322 + $0x62] sm:$0xff]
      %v2106 = vld [vmem:[%s1322 + $0x6a] sm:$0xff]
      %v2107 = vld [vmem:[%s1322 + $0x7a] sm:$0xff]
      %v2108 = vld [vmem:[%s1322 + $0x82] sm:$0xff]
      %v2109 = vld [vmem:[%s1322 + $0x92] sm:$0xff]
      %v2110 = vld [vmem:[%s1322 + $0x9a] sm:$0xff]
      %v2111 = vld [vmem:[%s1322 + $0xaa] sm:$0xff]
      %v2112 = vld [vmem:[%s1322 + $0xb2] sm:$0xff]
      %v2113 = vld [vmem:[%s1322 + $0xc2] sm:$0xff]
      %v2114 = vld [vmem:[%s1322 + $0xca] sm:$0xff]
      %v2115 = vld [vmem:[%s1322 + $0xda] sm:$0xff]
      %v2116 = vld [vmem:[%s1322 + $0xe2] sm:$0xff]
      %v2117 = vld [vmem:[%s1322 + $0xf2] sm:$0xff]
      %v2118 = vld [vmem:[%s1322 + $0xfa] sm:$0xff]
      %v2119 = vld [vmem:[%s1322 + $0x10a] sm:$0xff]
      %v2120 = vld [vmem:[%s1322 + $0x112] sm:$0xff]
      %v2121 = vld [vmem:[%s1322 + $0x122] sm:$0xff]
      %v2122 = vld [vmem:[%s1322 + $0x12a] sm:$0xff]
      %v2123 = vld [vmem:[%s1322 + $0x13a] sm:$0xff]
      %v2124 = vld [vmem:[%s1322 + $0x142] sm:$0xff]
      %v2125 = vld [vmem:[%s1322 + $0x152] sm:$0xff]
      %v2126 = vld [vmem:[%s1322 + $0x15a] sm:$0xff]
      %v2127 = vld [vmem:[%s1322 + $0x16a] sm:$0xff]
      %v2128 = vld [vmem:[%s1322 + $0x172] sm:$0xff]
      %s2129 = scalar_lea.vmem %s1, 40
      %v2130 = vld [vmem:[%s2129] sm:$0xff]
      %v2132 = vsel %vm292, %v2097, 0
      %v2135 = vsel %vm292, %v2098, 0
      %v2138 = vsel %vm292, %v2099, 0
      %v2141 = vsel %vm292, %v2100, 0
      %v2144 = vsel %vm292, %v2101, 0
      %v2147 = vsel %vm292, %v2102, 0
      %v2150 = vsel %vm292, %v2103, 0
      %v2153 = vsel %vm292, %v2104, 0
      %v2156 = vsel %vm292, %v2105, 0
      %v2159 = vsel %vm292, %v2106, 0
      %v2162 = vsel %vm292, %v2107, 0
      %v2165 = vsel %vm292, %v2108, 0
      %v2168 = vsel %vm292, %v2109, 0
      %v2171 = vsel %vm292, %v2110, 0
      %v2174 = vsel %vm292, %v2111, 0
      %v2177 = vsel %vm292, %v2112, 0
      %v2180 = vsel %vm292, %v2113, 0
      %v2183 = vsel %vm292, %v2114, 0
      %v2186 = vsel %vm292, %v2115, 0
      %v2189 = vsel %vm292, %v2116, 0
      %v2192 = vsel %vm292, %v2117, 0
      %v2195 = vsel %vm292, %v2118, 0
      %v2198 = vsel %vm292, %v2119, 0
      %v2201 = vsel %vm292, %v2120, 0
      %v2204 = vsel %vm292, %v2121, 0
      %v2207 = vsel %vm292, %v2122, 0
      %v2210 = vsel %vm292, %v2123, 0
      %v2213 = vsel %vm292, %v2124, 0
      %v2216 = vsel %vm292, %v2125, 0
      %v2219 = vsel %vm292, %v2126, 0
      %v2222 = vsel %vm292, %v2127, 0
      %v2225 = vsel %vm292, %v2128, 0
      %2227 = vmatprep.subr.mxu0 0.0
      %2228 = vmatpush1.msra.mxu0 %v2130
      %2229 = vmatprep.subr.mxu0 0.0
      %2230 = vmatpush1.msra.mxu0 0.0
      %2231 = vmatprep.subr.mxu0 0.0
      %2232 = vmatpush1.msra.mxu0 0.0
      %2233 = vmatprep.subr.mxu0 0.0
      %2234 = vmatpush1.msra.mxu0 0.0
      %2235 = vmatprep.subr.mxu0 0.0
      %2236 = vmatpush1.msra.mxu0 0.0
      %2237 = vmatprep.subr.mxu0 0.0
      %2238 = vmatpush1.msra.mxu0 0.0
      %2239 = vmatprep.subr.mxu0 0.0
      %2240 = vmatpush1.msra.mxu0 0.0
      %2241 = vmatprep.subr.mxu0 0.0
      %2242 = vmatpush1.msra.mxu0 0.0
      %2243 = vmatprep.subr.mxu0 0.0
      %2244 = vmatpush1.msra.mxu0 0.0
      %2245 = vmatprep.subr.mxu0 0.0
      %2246 = vmatpush1.msra.mxu0 0.0
      %2247 = vmatprep.subr.mxu0 0.0
      %2248 = vmatpush1.msra.mxu0 0.0
      %2249 = vmatprep.subr.mxu0 0.0
      %2250 = vmatpush1.msra.mxu0 0.0
      %2251 = vmatprep.subr.mxu0 0.0
      %2252 = vmatpush1.msra.mxu0 0.0
      %2253 = vmatprep.subr.mxu0 0.0
      %2254 = vmatpush1.msra.mxu0 0.0
      %2255 = vmatprep.subr.mxu0 0.0
      %2256 = vmatpush1.msra.mxu0 0.0
      %2257 = vmatprep.subr.mxu0 0.0
      %2258 = vmatpush1.msra.mxu0 0.0
      %2259 = vmatprep.subr.mxu0 0.0
      %2260 = vmatpush1.msra.mxu0 0.0
      %2261 = vmatprep.subr.mxu0 0.0
      %2262 = vmatpush1.msra.mxu0 0.0
      %2263 = vmatprep.subr.mxu0 0.0
      %2264 = vmatpush1.msra.mxu0 0.0
      %2265 = vmatprep.subr.mxu0 0.0
      %2266 = vmatpush1.msra.mxu0 0.0
      %2267 = vmatprep.subr.mxu0 0.0
      %2268 = vmatpush1.msra.mxu0 0.0
      %2269 = vmatprep.subr.mxu0 0.0
      %2270 = vmatpush1.msra.mxu0 0.0
      %2271 = vmatprep.subr.mxu0 0.0
      %2272 = vmatpush1.msra.mxu0 0.0
      %2273 = vmatprep.subr.mxu0 0.0
      %2274 = vmatpush1.msra.mxu0 0.0
      %2275 = vmatprep.subr.mxu0 0.0
      %2276 = vmatpush1.msra.mxu0 0.0
      %2277 = vmatprep.subr.mxu0 0.0
      %2278 = vmatpush1.msra.mxu0 0.0
      %2279 = vmatprep.subr.mxu0 0.0
      %2280 = vmatpush1.msra.mxu0 0.0
      %2281 = vmatprep.subr.mxu0 0.0
      %2282 = vmatpush1.msra.mxu0 0.0
      %2283 = vmatprep.subr.mxu0 0.0
      %2284 = vmatpush1.msra.mxu0 0.0
      %2285 = vmatprep.subr.mxu0 0.0
      %2286 = vmatpush1.msra.mxu0 0.0
      %2287 = vmatprep.subr.mxu0 0.0
      %2288 = vmatpush1.msra.mxu0 0.0
      %2289 = vmatprep.subr.mxu0 0.0
      %2290 = vmatpush1.msra.mxu0 0.0
      %2291 = vmatprep.mubr.f32.mxu0 0.0
      %2292 = vmatmul.mubr.f32.gmra.mrb[0].mxu0 %v2132
      %v2293 = vpop.f32.mrb[0].mxu0
      %v2294 = vadd.f32 0.0, %v2293
      %v2295 = vpop.f32.mrb[0].mxu0
      %2296 = vmatprep.mubr.f32.mxu0 0.0
      %2297 = vmatmul.mubr.f32.gmra.mrb[0].mxu0 %v2135
      %v2298 = vpop.f32.mrb[0].mxu0
      %v2299 = vadd.f32 0.0, %v2298
      %v2300 = vpop.f32.mrb[0].mxu0
      %2301 = vmatprep.mubr.f32.mxu0 0.0
      %2302 = vmatmul.mubr.f32.gmra.mrb[0].mxu0 %v2138
      %v2303 = vpop.f32.mrb[0].mxu0
      %v2304 = vadd.f32 0.0, %v2303
      %v2305 = vpop.f32.mrb[0].mxu0
      %2306 = vmatprep.mubr.f32.mxu0 0.0
      %2307 = vmatmul.mubr.f32.gmra.mrb[0].mxu0 %v2141
      %v2308 = vpop.f32.mrb[0].mxu0
      %v2309 = vadd.f32 0.0, %v2308
      %v2310 = vpop.f32.mrb[0].mxu0
      %2311 = vmatprep.mubr.f32.mxu0 0.0
      %2312 = vmatmul.mubr.f32.gmra.mrb[0].mxu0 %v2144
      %v2313 = vpop.f32.mrb[0].mxu0
      %v2314 = vadd.f32 0.0, %v2313
      %v2315 = vpop.f32.mrb[0].mxu0
      %2316 = vmatprep.mubr.f32.mxu0 0.0
      %2317 = vmatmul.mubr.f32.gmra.mrb[0].mxu0 %v2147
      %v2318 = vpop.f32.mrb[0].mxu0
      %v2319 = vadd.f32 0.0, %v2318
      %v2320 = vpop.f32.mrb[0].mxu0
      %2321 = vmatprep.mubr.f32.mxu0 0.0
      %2322 = vmatmul.mubr.f32.gmra.mrb[0].mxu0 %v2150
      %v2323 = vpop.f32.mrb[0].mxu0
      %v2324 = vadd.f32 0.0, %v2323
      %v2325 = vpop.f32.mrb[0].mxu0
      %2326 = vmatprep.mubr.f32.mxu0 0.0
      %2327 = vmatmul.mubr.f32.gmra.mrb[0].mxu0 %v2153
      %v2328 = vpop.f32.mrb[0].mxu0
      %v2329 = vadd.f32 0.0, %v2328
      %v2330 = vpop.f32.mrb[0].mxu0
      %2331 = vmatprep.mubr.f32.mxu0 0.0
      %2332 = vmatmul.mubr.f32.gmra.mrb[0].mxu0 %v2156
      %v2333 = vpop.f32.mrb[0].mxu0
      %v2334 = vadd.f32 0.0, %v2333
      %v2335 = vpop.f32.mrb[0].mxu0
      %2336 = vmatprep.mubr.f32.mxu0 0.0
      %2337 = vmatmul.mubr.f32.gmra.mrb[0].mxu0 %v2159
      %v2338 = vpop.f32.mrb[0].mxu0
      %v2339 = vadd.f32 0.0, %v2338
      %v2340 = vpop.f32.mrb[0].mxu0
      %2341 = vmatprep.mubr.f32.mxu0 0.0
      %2342 = vmatmul.mubr.f32.gmra.mrb[0].mxu0 %v2162
      %v2343 = vpop.f32.mrb[0].mxu0
      %v2344 = vadd.f32 0.0, %v2343
      %v2345 = vpop.f32.mrb[0].mxu0
      %2346 = vmatprep.mubr.f32.mxu0 0.0
      %2347 = vmatmul.mubr.f32.gmra.mrb[0].mxu0 %v2165
      %v2348 = vpop.f32.mrb[0].mxu0
      %v2349 = vadd.f32 0.0, %v2348
      %v2350 = vpop.f32.mrb[0].mxu0
      %2351 = vmatprep.mubr.f32.mxu0 0.0
      %2352 = vmatmul.mubr.f32.gmra.mrb[0].mxu0 %v2168
      %v2353 = vpop.f32.mrb[0].mxu0
      %v2354 = vadd.f32 0.0, %v2353
      %v2355 = vpop.f32.mrb[0].mxu0
      %2356 = vmatprep.mubr.f32.mxu0 0.0
      %2357 = vmatmul.mubr.f32.gmra.mrb[0].mxu0 %v2171
      %v2358 = vpop.f32.mrb[0].mxu0
      %v2359 = vadd.f32 0.0, %v2358
      %v2360 = vpop.f32.mrb[0].mxu0
      %2361 = vmatprep.mubr.f32.mxu0 0.0
      %2362 = vmatmul.mubr.f32.gmra.mrb[0].mxu0 %v2174
      %v2363 = vpop.f32.mrb[0].mxu0
      %v2364 = vadd.f32 0.0, %v2363
      %v2365 = vpop.f32.mrb[0].mxu0
      %2366 = vmatprep.mubr.f32.mxu0 0.0
      %2367 = vmatmul.mubr.f32.gmra.mrb[0].mxu0 %v2177
      %v2368 = vpop.f32.mrb[0].mxu0
      %v2369 = vadd.f32 0.0, %v2368
      %v2370 = vpop.f32.mrb[0].mxu0
      %2371 = vmatprep.mubr.f32.mxu0 0.0
      %2372 = vmatmul.mubr.f32.gmra.mrb[0].mxu0 %v2180
      %v2373 = vpop.f32.mrb[0].mxu0
      %v2374 = vadd.f32 0.0, %v2373
      %v2375 = vpop.f32.mrb[0].mxu0
      %2376 = vmatprep.mubr.f32.mxu0 0.0
      %2377 = vmatmul.mubr.f32.gmra.mrb[0].mxu0 %v2183
      %v2378 = vpop.f32.mrb[0].mxu0
      %v2379 = vadd.f32 0.0, %v2378
      %v2380 = vpop.f32.mrb[0].mxu0
      %2381 = vmatprep.mubr.f32.mxu0 0.0
      %2382 = vmatmul.mubr.f32.gmra.mrb[0].mxu0 %v2186
      %v2383 = vpop.f32.mrb[0].mxu0
      %v2384 = vadd.f32 0.0, %v2383
      %v2385 = vpop.f32.mrb[0].mxu0
      %2386 = vmatprep.mubr.f32.mxu0 0.0
      %2387 = vmatmul.mubr.f32.gmra.mrb[0].mxu0 %v2189
      %v2388 = vpop.f32.mrb[0].mxu0
      %v2389 = vadd.f32 0.0, %v2388
      %v2390 = vpop.f32.mrb[0].mxu0
      %2391 = vmatprep.mubr.f32.mxu0 0.0
      %2392 = vmatmul.mubr.f32.gmra.mrb[0].mxu0 %v2192
      %v2393 = vpop.f32.mrb[0].mxu0
      %v2394 = vadd.f32 0.0, %v2393
      %v2395 = vpop.f32.mrb[0].mxu0
      %2396 = vmatprep.mubr.f32.mxu0 0.0
      %2397 = vmatmul.mubr.f32.gmra.mrb[0].mxu0 %v2195
      %v2398 = vpop.f32.mrb[0].mxu0
      %v2399 = vadd.f32 0.0, %v2398
      %v2400 = vpop.f32.mrb[0].mxu0
      %2401 = vmatprep.mubr.f32.mxu0 0.0
      %2402 = vmatmul.mubr.f32.gmra.mrb[0].mxu0 %v2198
      %v2403 = vpop.f32.mrb[0].mxu0
      %v2404 = vadd.f32 0.0, %v2403
      %v2405 = vpop.f32.mrb[0].mxu0
      %2406 = vmatprep.mubr.f32.mxu0 0.0
      %2407 = vmatmul.mubr.f32.gmra.mrb[0].mxu0 %v2201
      %v2408 = vpop.f32.mrb[0].mxu0
      %v2409 = vadd.f32 0.0, %v2408
      %v2410 = vpop.f32.mrb[0].mxu0
      %2411 = vmatprep.mubr.f32.mxu0 0.0
      %2412 = vmatmul.mubr.f32.gmra.mrb[0].mxu0 %v2204
      %v2413 = vpop.f32.mrb[0].mxu0
      %v2414 = vadd.f32 0.0, %v2413
      %v2415 = vpop.f32.mrb[0].mxu0
      %2416 = vmatprep.mubr.f32.mxu0 0.0
      %2417 = vmatmul.mubr.f32.gmra.mrb[0].mxu0 %v2207
      %v2418 = vpop.f32.mrb[0].mxu0
      %v2419 = vadd.f32 0.0, %v2418
      %v2420 = vpop.f32.mrb[0].mxu0
      %2421 = vmatprep.mubr.f32.mxu0 0.0
      %2422 = vmatmul.mubr.f32.gmra.mrb[0].mxu0 %v2210
      %v2423 = vpop.f32.mrb[0].mxu0
      %v2424 = vadd.f32 0.0, %v2423
      %v2425 = vpop.f32.mrb[0].mxu0
      %2426 = vmatprep.mubr.f32.mxu0 0.0
      %2427 = vmatmul.mubr.f32.gmra.mrb[0].mxu0 %v2213
      %v2428 = vpop.f32.mrb[0].mxu0
      %v2429 = vadd.f32 0.0, %v2428
      %v2430 = vpop.f32.mrb[0].mxu0
      %2431 = vmatprep.mubr.f32.mxu0 0.0
      %2432 = vmatmul.mubr.f32.gmra.mrb[0].mxu0 %v2216
      %v2433 = vpop.f32.mrb[0].mxu0
      %v2434 = vadd.f32 0.0, %v2433
      %v2435 = vpop.f32.mrb[0].mxu0
      %2436 = vmatprep.mubr.f32.mxu0 0.0
      %2437 = vmatmul.mubr.f32.gmra.mrb[0].mxu0 %v2219
      %v2438 = vpop.f32.mrb[0].mxu0
      %v2439 = vadd.f32 0.0, %v2438
      %v2440 = vpop.f32.mrb[0].mxu0
      %2441 = vmatprep.mubr.f32.mxu0 0.0
      %2442 = vmatmul.mubr.f32.gmra.mrb[0].mxu0 %v2222
      %v2443 = vpop.f32.mrb[0].mxu0
      %v2444 = vadd.f32 0.0, %v2443
      %v2445 = vpop.f32.mrb[0].mxu0
      %2446 = vmatprep.mubr.f32.mxu0 0.0
      %2447 = vmatmul.mubr.f32.gmra.mrb[0].mxu0 %v2225
      %v2448 = vpop.f32.mrb[0].mxu0
      %v2449 = vadd.f32 0.0, %v2448
      %v2450 = vpop.f32.mrb[0].mxu0
      %2451 = vdwg.mxu0
      %v2452 = vadd.f32 %v2065, %v2294
      %v2453 = vadd.f32 %v2066, %v2299
      %v2454 = vadd.f32 %v2067, %v2304
      %v2455 = vadd.f32 %v2068, %v2309
      %v2456 = vadd.f32 %v2069, %v2314
      %v2457 = vadd.f32 %v2070, %v2319
      %v2458 = vadd.f32 %v2071, %v2324
      %v2459 = vadd.f32 %v2072, %v2329
      %v2460 = vadd.f32 %v2073, %v2334
      %v2461 = vadd.f32 %v2074, %v2339
      %v2462 = vadd.f32 %v2075, %v2344
      %v2463 = vadd.f32 %v2076, %v2349
      %v2464 = vadd.f32 %v2077, %v2354
      %v2465 = vadd.f32 %v2078, %v2359
      %v2466 = vadd.f32 %v2079, %v2364
      %v2467 = vadd.f32 %v2080, %v2369
      %v2468 = vadd.f32 %v2081, %v2374
      %v2469 = vadd.f32 %v2082, %v2379
      %v2470 = vadd.f32 %v2083, %v2384
      %v2471 = vadd.f32 %v2084, %v2389
      %v2472 = vadd.f32 %v2085, %v2394
      %v2473 = vadd.f32 %v2086, %v2399
      %v2474 = vadd.f32 %v2087, %v2404
      %v2475 = vadd.f32 %v2088, %v2409
      %v2476 = vadd.f32 %v2089, %v2414
      %v2477 = vadd.f32 %v2090, %v2419
      %v2478 = vadd.f32 %v2091, %v2424
      %v2479 = vadd.f32 %v2092, %v2429
      %v2480 = vadd.f32 %v2093, %v2434
      %v2481 = vadd.f32 %v2094, %v2439
      %v2482 = vadd.f32 %v2095, %v2444
      %v2483 = vadd.f32 %v2096, %v2449
      %s2484 = scalar_lea.vmem %s219, 48
      %v2485 = vld [vmem:[%s2484] sm:$0xff]
      %v2486 = vld [vmem:[%s2484 + $0x8] sm:$0xff]
      %v2487 = vld [vmem:[%s2484 + $0x18] sm:$0xff]
      %v2488 = vld [vmem:[%s2484 + $0x20] sm:$0xff]
      %v2489 = vld [vmem:[%s2484 + $0x30] sm:$0xff]
      %v2490 = vld [vmem:[%s2484 + $0x38] sm:$0xff]
      %v2491 = vld [vmem:[%s2484 + $0x48] sm:$0xff]
      %v2492 = vld [vmem:[%s2484 + $0x50] sm:$0xff]
      %v2493 = vld [vmem:[%s2484 + $0x60] sm:$0xff]
      %v2494 = vld [vmem:[%s2484 + $0x68] sm:$0xff]
      %v2495 = vld [vmem:[%s2484 + $0x78] sm:$0xff]
      %v2496 = vld [vmem:[%s2484 + $0x80] sm:$0xff]
      %v2497 = vld [vmem:[%s2484 + $0x90] sm:$0xff]
      %v2498 = vld [vmem:[%s2484 + $0x98] sm:$0xff]
      %v2499 = vld [vmem:[%s2484 + $0xa8] sm:$0xff]
      %v2500 = vld [vmem:[%s2484 + $0xb0] sm:$0xff]
      %v2501 = vld [vmem:[%s2484 + $0xc0] sm:$0xff]
      %v2502 = vld [vmem:[%s2484 + $0xc8] sm:$0xff]
      %v2503 = vld [vmem:[%s2484 + $0xd8] sm:$0xff]
      %v2504 = vld [vmem:[%s2484 + $0xe0] sm:$0xff]
      %v2505 = vld [vmem:[%s2484 + $0xf0] sm:$0xff]
      %v2506 = vld [vmem:[%s2484 + $0xf8] sm:$0xff]
      %v2507 = vld [vmem:[%s2484 + $0x108] sm:$0xff]
      %v2508 = vld [vmem:[%s2484 + $0x110] sm:$0xff]
      %v2509 = vld [vmem:[%s2484 + $0x120] sm:$0xff]
      %v2510 = vld [vmem:[%s2484 + $0x128] sm:$0xff]
      %v2511 = vld [vmem:[%s2484 + $0x138] sm:$0xff]
      %v2512 = vld [vmem:[%s2484 + $0x140] sm:$0xff]
      %v2513 = vld [vmem:[%s2484 + $0x150] sm:$0xff]
      %v2514 = vld [vmem:[%s2484 + $0x158] sm:$0xff]
      %v2515 = vld [vmem:[%s2484 + $0x168] sm:$0xff]
      %v2516 = vld [vmem:[%s2484 + $0x170] sm:$0xff]
      %s2517 = scalar_lea.vmem %s1, 48
      %v2518 = vld [vmem:[%s2517] sm:$0xff]
      %v2520 = vsel %vm292, %v2485, 0
      %v2523 = vsel %vm292, %v2486, 0
      %v2526 = vsel %vm292, %v2487, 0
      %v2529 = vsel %vm292, %v2488, 0
      %v2532 = vsel %vm292, %v2489, 0
      %v2535 = vsel %vm292, %v2490, 0
      %v2538 = vsel %vm292, %v2491, 0
      %v2541 = vsel %vm292, %v2492, 0
      %v2544 = vsel %vm292, %v2493, 0
      %v2547 = vsel %vm292, %v2494, 0
      %v2550 = vsel %vm292, %v2495, 0
      %v2553 = vsel %vm292, %v2496, 0
      %v2556 = vsel %vm292, %v2497, 0
      %v2559 = vsel %vm292, %v2498, 0
      %v2562 = vsel %vm292, %v2499, 0
      %v2565 = vsel %vm292, %v2500, 0
      %v2568 = vsel %vm292, %v2501, 0
      %v2571 = vsel %vm292, %v2502, 0
      %v2574 = vsel %vm292, %v2503, 0
      %v2577 = vsel %vm292, %v2504, 0
      %v2580 = vsel %vm292, %v2505, 0
      %v2583 = vsel %vm292, %v2506, 0
      %v2586 = vsel %vm292, %v2507, 0
      %v2589 = vsel %vm292, %v2508, 0
      %v2592 = vsel %vm292, %v2509, 0
      %v2595 = vsel %vm292, %v2510, 0
      %v2598 = vsel %vm292, %v2511, 0
      %v2601 = vsel %vm292, %v2512, 0
      %v2604 = vsel %vm292, %v2513, 0
      %v2607 = vsel %vm292, %v2514, 0
      %v2610 = vsel %vm292, %v2515, 0
      %v2613 = vsel %vm292, %v2516, 0
      %2615 = vmatprep.subr.mxu0 0.0
      %2616 = vmatpush1.msra.mxu0 %v2518
      %2617 = vmatprep.subr.mxu0 0.0
      %2618 = vmatpush1.msra.mxu0 0.0
      %2619 = vmatprep.subr.mxu0 0.0
      %2620 = vmatpush1.msra.mxu0 0.0
      %2621 = vmatprep.subr.mxu0 0.0
      %2622 = vmatpush1.msra.mxu0 0.0
      %2623 = vmatprep.subr.mxu0 0.0
      %2624 = vmatpush1.msra.mxu0 0.0
      %2625 = vmatprep.subr.mxu0 0.0
      %2626 = vmatpush1.msra.mxu0 0.0
      %2627 = vmatprep.subr.mxu0 0.0
      %2628 = vmatpush1.msra.mxu0 0.0
      %2629 = vmatprep.subr.mxu0 0.0
      %2630 = vmatpush1.msra.mxu0 0.0
      %2631 = vmatprep.subr.mxu0 0.0
      %2632 = vmatpush1.msra.mxu0 0.0
      %2633 = vmatprep.subr.mxu0 0.0
      %2634 = vmatpush1.msra.mxu0 0.0
      %2635 = vmatprep.subr.mxu0 0.0
      %2636 = vmatpush1.msra.mxu0 0.0
      %2637 = vmatprep.subr.mxu0 0.0
      %2638 = vmatpush1.msra.mxu0 0.0
      %2639 = vmatprep.subr.mxu0 0.0
      %2640 = vmatpush1.msra.mxu0 0.0
      %2641 = vmatprep.subr.mxu0 0.0
      %2642 = vmatpush1.msra.mxu0 0.0
      %2643 = vmatprep.subr.mxu0 0.0
      %2644 = vmatpush1.msra.mxu0 0.0
      %2645 = vmatprep.subr.mxu0 0.0
      %2646 = vmatpush1.msra.mxu0 0.0
      %2647 = vmatprep.subr.mxu0 0.0
      %2648 = vmatpush1.msra.mxu0 0.0
      %2649 = vmatprep.subr.mxu0 0.0
      %2650 = vmatpush1.msra.mxu0 0.0
      %2651 = vmatprep.subr.mxu0 0.0
      %2652 = vmatpush1.msra.mxu0 0.0
      %2653 = vmatprep.subr.mxu0 0.0
      %2654 = vmatpush1.msra.mxu0 0.0
      %2655 = vmatprep.subr.mxu0 0.0
      %2656 = vmatpush1.msra.mxu0 0.0
      %2657 = vmatprep.subr.mxu0 0.0
      %2658 = vmatpush1.msra.mxu0 0.0
      %2659 = vmatprep.subr.mxu0 0.0
      %2660 = vmatpush1.msra.mxu0 0.0
      %2661 = vmatprep.subr.mxu0 0.0
      %2662 = vmatpush1.msra.mxu0 0.0
      %2663 = vmatprep.subr.mxu0 0.0
      %2664 = vmatpush1.msra.mxu0 0.0
      %2665 = vmatprep.subr.mxu0 0.0
      %2666 = vmatpush1.msra.mxu0 0.0
      %2667 = vmatprep.subr.mxu0 0.0
      %2668 = vmatpush1.msra.mxu0 0.0
      %2669 = vmatprep.subr.mxu0 0.0
      %2670 = vmatpush1.msra.mxu0 0.0
      %2671 = vmatprep.subr.mxu0 0.0
      %2672 = vmatpush1.msra.mxu0 0.0
      %2673 = vmatprep.subr.mxu0 0.0
      %2674 = vmatpush1.msra.mxu0 0.0
      %2675 = vmatprep.subr.mxu0 0.0
      %2676 = vmatpush1.msra.mxu0 0.0
      %2677 = vmatprep.subr.mxu0 0.0
      %2678 = vmatpush1.msra.mxu0 0.0
      %2679 = vmatprep.mubr.f32.mxu0 0.0
      %2680 = vmatmul.mubr.f32.gmra.mrb[0].mxu0 %v2520
      %v2681 = vpop.f32.mrb[0].mxu0
      %v2682 = vadd.f32 0.0, %v2681
      %v2683 = vpop.f32.mrb[0].mxu0
      %2684 = vmatprep.mubr.f32.mxu0 0.0
      %2685 = vmatmul.mubr.f32.gmra.mrb[0].mxu0 %v2523
      %v2686 = vpop.f32.mrb[0].mxu0
      %v2687 = vadd.f32 0.0, %v2686
      %v2688 = vpop.f32.mrb[0].mxu0
      %2689 = vmatprep.mubr.f32.mxu0 0.0
      %2690 = vmatmul.mubr.f32.gmra.mrb[0].mxu0 %v2526
      %v2691 = vpop.f32.mrb[0].mxu0
      %v2692 = vadd.f32 0.0, %v2691
      %v2693 = vpop.f32.mrb[0].mxu0
      %2694 = vmatprep.mubr.f32.mxu0 0.0
      %2695 = vmatmul.mubr.f32.gmra.mrb[0].mxu0 %v2529
      %v2696 = vpop.f32.mrb[0].mxu0
      %v2697 = vadd.f32 0.0, %v2696
      %v2698 = vpop.f32.mrb[0].mxu0
      %2699 = vmatprep.mubr.f32.mxu0 0.0
      %2700 = vmatmul.mubr.f32.gmra.mrb[0].mxu0 %v2532
      %v2701 = vpop.f32.mrb[0].mxu0
      %v2702 = vadd.f32 0.0, %v2701
      %v2703 = vpop.f32.mrb[0].mxu0
      %2704 = vmatprep.mubr.f32.mxu0 0.0
      %2705 = vmatmul.mubr.f32.gmra.mrb[0].mxu0 %v2535
      %v2706 = vpop.f32.mrb[0].mxu0
      %v2707 = vadd.f32 0.0, %v2706
      %v2708 = vpop.f32.mrb[0].mxu0
      %2709 = vmatprep.mubr.f32.mxu0 0.0
      %2710 = vmatmul.mubr.f32.gmra.mrb[0].mxu0 %v2538
      %v2711 = vpop.f32.mrb[0].mxu0
      %v2712 = vadd.f32 0.0, %v2711
      %v2713 = vpop.f32.mrb[0].mxu0
      %2714 = vmatprep.mubr.f32.mxu0 0.0
      %2715 = vmatmul.mubr.f32.gmra.mrb[0].mxu0 %v2541
      %v2716 = vpop.f32.mrb[0].mxu0
      %v2717 = vadd.f32 0.0, %v2716
      %v2718 = vpop.f32.mrb[0].mxu0
      %2719 = vmatprep.mubr.f32.mxu0 0.0
      %2720 = vmatmul.mubr.f32.gmra.mrb[0].mxu0 %v2544
      %v2721 = vpop.f32.mrb[0].mxu0
      %v2722 = vadd.f32 0.0, %v2721
      %v2723 = vpop.f32.mrb[0].mxu0
      %2724 = vmatprep.mubr.f32.mxu0 0.0
      %2725 = vmatmul.mubr.f32.gmra.mrb[0].mxu0 %v2547
      %v2726 = vpop.f32.mrb[0].mxu0
      %v2727 = vadd.f32 0.0, %v2726
      %v2728 = vpop.f32.mrb[0].mxu0
      %2729 = vmatprep.mubr.f32.mxu0 0.0
      %2730 = vmatmul.mubr.f32.gmra.mrb[0].mxu0 %v2550
      %v2731 = vpop.f32.mrb[0].mxu0
      %v2732 = vadd.f32 0.0, %v2731
      %v2733 = vpop.f32.mrb[0].mxu0
      %2734 = vmatprep.mubr.f32.mxu0 0.0
      %2735 = vmatmul.mubr.f32.gmra.mrb[0].mxu0 %v2553
      %v2736 = vpop.f32.mrb[0].mxu0
      %v2737 = vadd.f32 0.0, %v2736
      %v2738 = vpop.f32.mrb[0].mxu0
      %2739 = vmatprep.mubr.f32.mxu0 0.0
      %2740 = vmatmul.mubr.f32.gmra.mrb[0].mxu0 %v2556
      %v2741 = vpop.f32.mrb[0].mxu0
      %v2742 = vadd.f32 0.0, %v2741
      %v2743 = vpop.f32.mrb[0].mxu0
      %2744 = vmatprep.mubr.f32.mxu0 0.0
      %2745 = vmatmul.mubr.f32.gmra.mrb[0].mxu0 %v2559
      %v2746 = vpop.f32.mrb[0].mxu0
      %v2747 = vadd.f32 0.0, %v2746
      %v2748 = vpop.f32.mrb[0].mxu0
      %2749 = vmatprep.mubr.f32.mxu0 0.0
      %2750 = vmatmul.mubr.f32.gmra.mrb[0].mxu0 %v2562
      %v2751 = vpop.f32.mrb[0].mxu0
      %v2752 = vadd.f32 0.0, %v2751
      %v2753 = vpop.f32.mrb[0].mxu0
      %2754 = vmatprep.mubr.f32.mxu0 0.0
      %2755 = vmatmul.mubr.f32.gmra.mrb[0].mxu0 %v2565
      %v2756 = vpop.f32.mrb[0].mxu0
      %v2757 = vadd.f32 0.0, %v2756
      %v2758 = vpop.f32.mrb[0].mxu0
      %2759 = vmatprep.mubr.f32.mxu0 0.0
      %2760 = vmatmul.mubr.f32.gmra.mrb[0].mxu0 %v2568
      %v2761 = vpop.f32.mrb[0].mxu0
      %v2762 = vadd.f32 0.0, %v2761
      %v2763 = vpop.f32.mrb[0].mxu0
      %2764 = vmatprep.mubr.f32.mxu0 0.0
      %2765 = vmatmul.mubr.f32.gmra.mrb[0].mxu0 %v2571
      %v2766 = vpop.f32.mrb[0].mxu0
      %v2767 = vadd.f32 0.0, %v2766
      %v2768 = vpop.f32.mrb[0].mxu0
      %2769 = vmatprep.mubr.f32.mxu0 0.0
      %2770 = vmatmul.mubr.f32.gmra.mrb[0].mxu0 %v2574
      %v2771 = vpop.f32.mrb[0].mxu0
      %v2772 = vadd.f32 0.0, %v2771
      %v2773 = vpop.f32.mrb[0].mxu0
      %2774 = vmatprep.mubr.f32.mxu0 0.0
      %2775 = vmatmul.mubr.f32.gmra.mrb[0].mxu0 %v2577
      %v2776 = vpop.f32.mrb[0].mxu0
      %v2777 = vadd.f32 0.0, %v2776
      %v2778 = vpop.f32.mrb[0].mxu0
      %2779 = vmatprep.mubr.f32.mxu0 0.0
      %2780 = vmatmul.mubr.f32.gmra.mrb[0].mxu0 %v2580
      %v2781 = vpop.f32.mrb[0].mxu0
      %v2782 = vadd.f32 0.0, %v2781
      %v2783 = vpop.f32.mrb[0].mxu0
      %2784 = vmatprep.mubr.f32.mxu0 0.0
      %2785 = vmatmul.mubr.f32.gmra.mrb[0].mxu0 %v2583
      %v2786 = vpop.f32.mrb[0].mxu0
      %v2787 = vadd.f32 0.0, %v2786
      %v2788 = vpop.f32.mrb[0].mxu0
      %2789 = vmatprep.mubr.f32.mxu0 0.0
      %2790 = vmatmul.mubr.f32.gmra.mrb[0].mxu0 %v2586
      %v2791 = vpop.f32.mrb[0].mxu0
      %v2792 = vadd.f32 0.0, %v2791
      %v2793 = vpop.f32.mrb[0].mxu0
      %2794 = vmatprep.mubr.f32.mxu0 0.0
      %2795 = vmatmul.mubr.f32.gmra.mrb[0].mxu0 %v2589
      %v2796 = vpop.f32.mrb[0].mxu0
      %v2797 = vadd.f32 0.0, %v2796
      %v2798 = vpop.f32.mrb[0].mxu0
      %2799 = vmatprep.mubr.f32.mxu0 0.0
      %2800 = vmatmul.mubr.f32.gmra.mrb[0].mxu0 %v2592
      %v2801 = vpop.f32.mrb[0].mxu0
      %v2802 = vadd.f32 0.0, %v2801
      %v2803 = vpop.f32.mrb[0].mxu0
      %2804 = vmatprep.mubr.f32.mxu0 0.0
      %2805 = vmatmul.mubr.f32.gmra.mrb[0].mxu0 %v2595
      %v2806 = vpop.f32.mrb[0].mxu0
      %v2807 = vadd.f32 0.0, %v2806
      %v2808 = vpop.f32.mrb[0].mxu0
      %2809 = vmatprep.mubr.f32.mxu0 0.0
      %2810 = vmatmul.mubr.f32.gmra.mrb[0].mxu0 %v2598
      %v2811 = vpop.f32.mrb[0].mxu0
      %v2812 = vadd.f32 0.0, %v2811
      %v2813 = vpop.f32.mrb[0].mxu0
      %2814 = vmatprep.mubr.f32.mxu0 0.0
      %2815 = vmatmul.mubr.f32.gmra.mrb[0].mxu0 %v2601
      %v2816 = vpop.f32.mrb[0].mxu0
      %v2817 = vadd.f32 0.0, %v2816
      %v2818 = vpop.f32.mrb[0].mxu0
      %2819 = vmatprep.mubr.f32.mxu0 0.0
      %2820 = vmatmul.mubr.f32.gmra.mrb[0].mxu0 %v2604
      %v2821 = vpop.f32.mrb[0].mxu0
      %v2822 = vadd.f32 0.0, %v2821
      %v2823 = vpop.f32.mrb[0].mxu0
      %2824 = vmatprep.mubr.f32.mxu0 0.0
      %2825 = vmatmul.mubr.f32.gmra.mrb[0].mxu0 %v2607
      %v2826 = vpop.f32.mrb[0].mxu0
      %v2827 = vadd.f32 0.0, %v2826
      %v2828 = vpop.f32.mrb[0].mxu0
      %2829 = vmatprep.mubr.f32.mxu0 0.0
      %2830 = vmatmul.mubr.f32.gmra.mrb[0].mxu0 %v2610
      %v2831 = vpop.f32.mrb[0].mxu0
      %v2832 = vadd.f32 0.0, %v2831
      %v2833 = vpop.f32.mrb[0].mxu0
      %2834 = vmatprep.mubr.f32.mxu0 0.0
      %2835 = vmatmul.mubr.f32.gmra.mrb[0].mxu0 %v2613
      %v2836 = vpop.f32.mrb[0].mxu0
      %v2837 = vadd.f32 0.0, %v2836
      %v2838 = vpop.f32.mrb[0].mxu0
      %2839 = vdwg.mxu0
      %v2840 = vadd.f32 %v2452, %v2682
      %v2841 = vadd.f32 %v2453, %v2687
      %v2842 = vadd.f32 %v2454, %v2692
      %v2843 = vadd.f32 %v2455, %v2697
      %v2844 = vadd.f32 %v2456, %v2702
      %v2845 = vadd.f32 %v2457, %v2707
      %v2846 = vadd.f32 %v2458, %v2712
      %v2847 = vadd.f32 %v2459, %v2717
      %v2848 = vadd.f32 %v2460, %v2722
      %v2849 = vadd.f32 %v2461, %v2727
      %v2850 = vadd.f32 %v2462, %v2732
      %v2851 = vadd.f32 %v2463, %v2737
      %v2852 = vadd.f32 %v2464, %v2742
      %v2853 = vadd.f32 %v2465, %v2747
      %v2854 = vadd.f32 %v2466, %v2752
      %v2855 = vadd.f32 %v2467, %v2757
      %v2856 = vadd.f32 %v2468, %v2762
      %v2857 = vadd.f32 %v2469, %v2767
      %v2858 = vadd.f32 %v2470, %v2772
      %v2859 = vadd.f32 %v2471, %v2777
      %v2860 = vadd.f32 %v2472, %v2782
      %v2861 = vadd.f32 %v2473, %v2787
      %v2862 = vadd.f32 %v2474, %v2792
      %v2863 = vadd.f32 %v2475, %v2797
      %v2864 = vadd.f32 %v2476, %v2802
      %v2865 = vadd.f32 %v2477, %v2807
      %v2866 = vadd.f32 %v2478, %v2812
      %v2867 = vadd.f32 %v2479, %v2817
      %v2868 = vadd.f32 %v2480, %v2822
      %v2869 = vadd.f32 %v2481, %v2827
      %v2870 = vadd.f32 %v2482, %v2832
      %v2871 = vadd.f32 %v2483, %v2837
      %v2872 = vld [vmem:[%s2484 + $0x1] sm:$0xff]
      %v2873 = vld [vmem:[%s2484 + $0x9] sm:$0xff]
      %v2874 = vld [vmem:[%s2484 + $0x19] sm:$0xff]
      %v2875 = vld [vmem:[%s2484 + $0x21] sm:$0xff]
      %v2876 = vld [vmem:[%s2484 + $0x31] sm:$0xff]
      %v2877 = vld [vmem:[%s2484 + $0x39] sm:$0xff]
      %v2878 = vld [vmem:[%s2484 + $0x49] sm:$0xff]
      %v2879 = vld [vmem:[%s2484 + $0x51] sm:$0xff]
      %v2880 = vld [vmem:[%s2484 + $0x61] sm:$0xff]
      %v2881 = vld [vmem:[%s2484 + $0x69] sm:$0xff]
      %v2882 = vld [vmem:[%s2484 + $0x79] sm:$0xff]
      %v2883 = vld [vmem:[%s2484 + $0x81] sm:$0xff]
      %v2884 = vld [vmem:[%s2484 + $0x91] sm:$0xff]
      %v2885 = vld [vmem:[%s2484 + $0x99] sm:$0xff]
      %v2886 = vld [vmem:[%s2484 + $0xa9] sm:$0xff]
      %v2887 = vld [vmem:[%s2484 + $0xb1] sm:$0xff]
      %v2888 = vld [vmem:[%s2484 + $0xc1] sm:$0xff]
      %v2889 = vld [vmem:[%s2484 + $0xc9] sm:$0xff]
      %v2890 = vld [vmem:[%s2484 + $0xd9] sm:$0xff]
      %v2891 = vld [vmem:[%s2484 + $0xe1] sm:$0xff]
      %v2892 = vld [vmem:[%s2484 + $0xf1] sm:$0xff]
      %v2893 = vld [vmem:[%s2484 + $0xf9] sm:$0xff]
      %v2894 = vld [vmem:[%s2484 + $0x109] sm:$0xff]
      %v2895 = vld [vmem:[%s2484 + $0x111] sm:$0xff]
      %v2896 = vld [vmem:[%s2484 + $0x121] sm:$0xff]
      %v2897 = vld [vmem:[%s2484 + $0x129] sm:$0xff]
      %v2898 = vld [vmem:[%s2484 + $0x139] sm:$0xff]
      %v2899 = vld [vmem:[%s2484 + $0x141] sm:$0xff]
      %v2900 = vld [vmem:[%s2484 + $0x151] sm:$0xff]
      %v2901 = vld [vmem:[%s2484 + $0x159] sm:$0xff]
      %v2902 = vld [vmem:[%s2484 + $0x169] sm:$0xff]
      %v2903 = vld [vmem:[%s2484 + $0x171] sm:$0xff]
      %s2904 = scalar_lea.vmem %s1, 56
      %v2905 = vld [vmem:[%s2904] sm:$0xff]
      %v2907 = vsel %vm292, %v2872, 0
      %v2910 = vsel %vm292, %v2873, 0
      %v2913 = vsel %vm292, %v2874, 0
      %v2916 = vsel %vm292, %v2875, 0
      %v2919 = vsel %vm292, %v2876, 0
      %v2922 = vsel %vm292, %v2877, 0
      %v2925 = vsel %vm292, %v2878, 0
      %v2928 = vsel %vm292, %v2879, 0
      %v2931 = vsel %vm292, %v2880, 0
      %v2934 = vsel %vm292, %v2881, 0
      %v2937 = vsel %vm292, %v2882, 0
      %v2940 = vsel %vm292, %v2883, 0
      %v2943 = vsel %vm292, %v2884, 0
      %v2946 = vsel %vm292, %v2885, 0
      %v2949 = vsel %vm292, %v2886, 0
      %v2952 = vsel %vm292, %v2887, 0
      %v2955 = vsel %vm292, %v2888, 0
      %v2958 = vsel %vm292, %v2889, 0
      %v2961 = vsel %vm292, %v2890, 0
      %v2964 = vsel %vm292, %v2891, 0
      %v2967 = vsel %vm292, %v2892, 0
      %v2970 = vsel %vm292, %v2893, 0
      %v2973 = vsel %vm292, %v2894, 0
      %v2976 = vsel %vm292, %v2895, 0
      %v2979 = vsel %vm292, %v2896, 0
      %v2982 = vsel %vm292, %v2897, 0
      %v2985 = vsel %vm292, %v2898, 0
      %v2988 = vsel %vm292, %v2899, 0
      %v2991 = vsel %vm292, %v2900, 0
      %v2994 = vsel %vm292, %v2901, 0
      %v2997 = vsel %vm292, %v2902, 0
      %v3000 = vsel %vm292, %v2903, 0
      %3002 = vmatprep.subr.mxu0 0.0
      %3003 = vmatpush1.msra.mxu0 %v2905
      %3004 = vmatprep.subr.mxu0 0.0
      %3005 = vmatpush1.msra.mxu0 0.0
      %3006 = vmatprep.subr.mxu0 0.0
      %3007 = vmatpush1.msra.mxu0 0.0
      %3008 = vmatprep.subr.mxu0 0.0
      %3009 = vmatpush1.msra.mxu0 0.0
      %3010 = vmatprep.subr.mxu0 0.0
      %3011 = vmatpush1.msra.mxu0 0.0
      %3012 = vmatprep.subr.mxu0 0.0
      %3013 = vmatpush1.msra.mxu0 0.0
      %3014 = vmatprep.subr.mxu0 0.0
      %3015 = vmatpush1.msra.mxu0 0.0
      %3016 = vmatprep.subr.mxu0 0.0
      %3017 = vmatpush1.msra.mxu0 0.0
      %3018 = vmatprep.subr.mxu0 0.0
      %3019 = vmatpush1.msra.mxu0 0.0
      %3020 = vmatprep.subr.mxu0 0.0
      %3021 = vmatpush1.msra.mxu0 0.0
      %3022 = vmatprep.subr.mxu0 0.0
      %3023 = vmatpush1.msra.mxu0 0.0
      %3024 = vmatprep.subr.mxu0 0.0
      %3025 = vmatpush1.msra.mxu0 0.0
      %3026 = vmatprep.subr.mxu0 0.0
      %3027 = vmatpush1.msra.mxu0 0.0
      %3028 = vmatprep.subr.mxu0 0.0
      %3029 = vmatpush1.msra.mxu0 0.0
      %3030 = vmatprep.subr.mxu0 0.0
      %3031 = vmatpush1.msra.mxu0 0.0
      %3032 = vmatprep.subr.mxu0 0.0
      %3033 = vmatpush1.msra.mxu0 0.0
      %3034 = vmatprep.subr.mxu0 0.0
      %3035 = vmatpush1.msra.mxu0 0.0
      %3036 = vmatprep.subr.mxu0 0.0
      %3037 = vmatpush1.msra.mxu0 0.0
      %3038 = vmatprep.subr.mxu0 0.0
      %3039 = vmatpush1.msra.mxu0 0.0
      %3040 = vmatprep.subr.mxu0 0.0
      %3041 = vmatpush1.msra.mxu0 0.0
      %3042 = vmatprep.subr.mxu0 0.0
      %3043 = vmatpush1.msra.mxu0 0.0
      %3044 = vmatprep.subr.mxu0 0.0
      %3045 = vmatpush1.msra.mxu0 0.0
      %3046 = vmatprep.subr.mxu0 0.0
      %3047 = vmatpush1.msra.mxu0 0.0
      %3048 = vmatprep.subr.mxu0 0.0
      %3049 = vmatpush1.msra.mxu0 0.0
      %3050 = vmatprep.subr.mxu0 0.0
      %3051 = vmatpush1.msra.mxu0 0.0
      %3052 = vmatprep.subr.mxu0 0.0
      %3053 = vmatpush1.msra.mxu0 0.0
      %3054 = vmatprep.subr.mxu0 0.0
      %3055 = vmatpush1.msra.mxu0 0.0
      %3056 = vmatprep.subr.mxu0 0.0
      %3057 = vmatpush1.msra.mxu0 0.0
      %3058 = vmatprep.subr.mxu0 0.0
      %3059 = vmatpush1.msra.mxu0 0.0
      %3060 = vmatprep.subr.mxu0 0.0
      %3061 = vmatpush1.msra.mxu0 0.0
      %3062 = vmatprep.subr.mxu0 0.0
      %3063 = vmatpush1.msra.mxu0 0.0
      %3064 = vmatprep.subr.mxu0 0.0
      %3065 = vmatpush1.msra.mxu0 0.0
      %3066 = vmatprep.mubr.f32.mxu0 0.0
      %3067 = vmatmul.mubr.f32.gmra.mrb[0].mxu0 %v2907
      %v3068 = vpop.f32.mrb[0].mxu0
      %v3069 = vadd.f32 0.0, %v3068
      %v3070 = vpop.f32.mrb[0].mxu0
      %3071 = vmatprep.mubr.f32.mxu0 0.0
      %3072 = vmatmul.mubr.f32.gmra.mrb[0].mxu0 %v2910
      %v3073 = vpop.f32.mrb[0].mxu0
      %v3074 = vadd.f32 0.0, %v3073
      %v3075 = vpop.f32.mrb[0].mxu0
      %3076 = vmatprep.mubr.f32.mxu0 0.0
      %3077 = vmatmul.mubr.f32.gmra.mrb[0].mxu0 %v2913
      %v3078 = vpop.f32.mrb[0].mxu0
      %v3079 = vadd.f32 0.0, %v3078
      %v3080 = vpop.f32.mrb[0].mxu0
      %3081 = vmatprep.mubr.f32.mxu0 0.0
      %3082 = vmatmul.mubr.f32.gmra.mrb[0].mxu0 %v2916
      %v3083 = vpop.f32.mrb[0].mxu0
      %v3084 = vadd.f32 0.0, %v3083
      %v3085 = vpop.f32.mrb[0].mxu0
      %3086 = vmatprep.mubr.f32.mxu0 0.0
      %3087 = vmatmul.mubr.f32.gmra.mrb[0].mxu0 %v2919
      %v3088 = vpop.f32.mrb[0].mxu0
      %v3089 = vadd.f32 0.0, %v3088
      %v3090 = vpop.f32.mrb[0].mxu0
      %3091 = vmatprep.mubr.f32.mxu0 0.0
      %3092 = vmatmul.mubr.f32.gmra.mrb[0].mxu0 %v2922
      %v3093 = vpop.f32.mrb[0].mxu0
      %v3094 = vadd.f32 0.0, %v3093
      %v3095 = vpop.f32.mrb[0].mxu0
      %3096 = vmatprep.mubr.f32.mxu0 0.0
      %3097 = vmatmul.mubr.f32.gmra.mrb[0].mxu0 %v2925
      %v3098 = vpop.f32.mrb[0].mxu0
      %v3099 = vadd.f32 0.0, %v3098
      %v3100 = vpop.f32.mrb[0].mxu0
      %3101 = vmatprep.mubr.f32.mxu0 0.0
      %3102 = vmatmul.mubr.f32.gmra.mrb[0].mxu0 %v2928
      %v3103 = vpop.f32.mrb[0].mxu0
      %v3104 = vadd.f32 0.0, %v3103
      %v3105 = vpop.f32.mrb[0].mxu0
      %3106 = vmatprep.mubr.f32.mxu0 0.0
      %3107 = vmatmul.mubr.f32.gmra.mrb[0].mxu0 %v2931
      %v3108 = vpop.f32.mrb[0].mxu0
      %v3109 = vadd.f32 0.0, %v3108
      %v3110 = vpop.f32.mrb[0].mxu0
      %3111 = vmatprep.mubr.f32.mxu0 0.0
      %3112 = vmatmul.mubr.f32.gmra.mrb[0].mxu0 %v2934
      %v3113 = vpop.f32.mrb[0].mxu0
      %v3114 = vadd.f32 0.0, %v3113
      %v3115 = vpop.f32.mrb[0].mxu0
      %3116 = vmatprep.mubr.f32.mxu0 0.0
      %3117 = vmatmul.mubr.f32.gmra.mrb[0].mxu0 %v2937
      %v3118 = vpop.f32.mrb[0].mxu0
      %v3119 = vadd.f32 0.0, %v3118
      %v3120 = vpop.f32.mrb[0].mxu0
      %3121 = vmatprep.mubr.f32.mxu0 0.0
      %3122 = vmatmul.mubr.f32.gmra.mrb[0].mxu0 %v2940
      %v3123 = vpop.f32.mrb[0].mxu0
      %v3124 = vadd.f32 0.0, %v3123
      %v3125 = vpop.f32.mrb[0].mxu0
      %3126 = vmatprep.mubr.f32.mxu0 0.0
      %3127 = vmatmul.mubr.f32.gmra.mrb[0].mxu0 %v2943
      %v3128 = vpop.f32.mrb[0].mxu0
      %v3129 = vadd.f32 0.0, %v3128
      %v3130 = vpop.f32.mrb[0].mxu0
      %3131 = vmatprep.mubr.f32.mxu0 0.0
      %3132 = vmatmul.mubr.f32.gmra.mrb[0].mxu0 %v2946
      %v3133 = vpop.f32.mrb[0].mxu0
      %v3134 = vadd.f32 0.0, %v3133
      %v3135 = vpop.f32.mrb[0].mxu0
      %3136 = vmatprep.mubr.f32.mxu0 0.0
      %3137 = vmatmul.mubr.f32.gmra.mrb[0].mxu0 %v2949
      %v3138 = vpop.f32.mrb[0].mxu0
      %v3139 = vadd.f32 0.0, %v3138
      %v3140 = vpop.f32.mrb[0].mxu0
      %3141 = vmatprep.mubr.f32.mxu0 0.0
      %3142 = vmatmul.mubr.f32.gmra.mrb[0].mxu0 %v2952
      %v3143 = vpop.f32.mrb[0].mxu0
      %v3144 = vadd.f32 0.0, %v3143
      %v3145 = vpop.f32.mrb[0].mxu0
      %3146 = vmatprep.mubr.f32.mxu0 0.0
      %3147 = vmatmul.mubr.f32.gmra.mrb[0].mxu0 %v2955
      %v3148 = vpop.f32.mrb[0].mxu0
      %v3149 = vadd.f32 0.0, %v3148
      %v3150 = vpop.f32.mrb[0].mxu0
      %3151 = vmatprep.mubr.f32.mxu0 0.0
      %3152 = vmatmul.mubr.f32.gmra.mrb[0].mxu0 %v2958
      %v3153 = vpop.f32.mrb[0].mxu0
      %v3154 = vadd.f32 0.0, %v3153
      %v3155 = vpop.f32.mrb[0].mxu0
      %3156 = vmatprep.mubr.f32.mxu0 0.0
      %3157 = vmatmul.mubr.f32.gmra.mrb[0].mxu0 %v2961
      %v3158 = vpop.f32.mrb[0].mxu0
      %v3159 = vadd.f32 0.0, %v3158
      %v3160 = vpop.f32.mrb[0].mxu0
      %3161 = vmatprep.mubr.f32.mxu0 0.0
      %3162 = vmatmul.mubr.f32.gmra.mrb[0].mxu0 %v2964
      %v3163 = vpop.f32.mrb[0].mxu0
      %v3164 = vadd.f32 0.0, %v3163
      %v3165 = vpop.f32.mrb[0].mxu0
      %3166 = vmatprep.mubr.f32.mxu0 0.0
      %3167 = vmatmul.mubr.f32.gmra.mrb[0].mxu0 %v2967
      %v3168 = vpop.f32.mrb[0].mxu0
      %v3169 = vadd.f32 0.0, %v3168
      %v3170 = vpop.f32.mrb[0].mxu0
      %3171 = vmatprep.mubr.f32.mxu0 0.0
      %3172 = vmatmul.mubr.f32.gmra.mrb[0].mxu0 %v2970
      %v3173 = vpop.f32.mrb[0].mxu0
      %v3174 = vadd.f32 0.0, %v3173
      %v3175 = vpop.f32.mrb[0].mxu0
      %3176 = vmatprep.mubr.f32.mxu0 0.0
      %3177 = vmatmul.mubr.f32.gmra.mrb[0].mxu0 %v2973
      %v3178 = vpop.f32.mrb[0].mxu0
      %v3179 = vadd.f32 0.0, %v3178
      %v3180 = vpop.f32.mrb[0].mxu0
      %3181 = vmatprep.mubr.f32.mxu0 0.0
      %3182 = vmatmul.mubr.f32.gmra.mrb[0].mxu0 %v2976
      %v3183 = vpop.f32.mrb[0].mxu0
      %v3184 = vadd.f32 0.0, %v3183
      %v3185 = vpop.f32.mrb[0].mxu0
      %3186 = vmatprep.mubr.f32.mxu0 0.0
      %3187 = vmatmul.mubr.f32.gmra.mrb[0].mxu0 %v2979
      %v3188 = vpop.f32.mrb[0].mxu0
      %v3189 = vadd.f32 0.0, %v3188
      %v3190 = vpop.f32.mrb[0].mxu0
      %3191 = vmatprep.mubr.f32.mxu0 0.0
      %3192 = vmatmul.mubr.f32.gmra.mrb[0].mxu0 %v2982
      %v3193 = vpop.f32.mrb[0].mxu0
      %v3194 = vadd.f32 0.0, %v3193
      %v3195 = vpop.f32.mrb[0].mxu0
      %3196 = vmatprep.mubr.f32.mxu0 0.0
      %3197 = vmatmul.mubr.f32.gmra.mrb[0].mxu0 %v2985
      %v3198 = vpop.f32.mrb[0].mxu0
      %v3199 = vadd.f32 0.0, %v3198
      %v3200 = vpop.f32.mrb[0].mxu0
      %3201 = vmatprep.mubr.f32.mxu0 0.0
      %3202 = vmatmul.mubr.f32.gmra.mrb[0].mxu0 %v2988
      %v3203 = vpop.f32.mrb[0].mxu0
      %v3204 = vadd.f32 0.0, %v3203
      %v3205 = vpop.f32.mrb[0].mxu0
      %3206 = vmatprep.mubr.f32.mxu0 0.0
      %3207 = vmatmul.mubr.f32.gmra.mrb[0].mxu0 %v2991
      %v3208 = vpop.f32.mrb[0].mxu0
      %v3209 = vadd.f32 0.0, %v3208
      %v3210 = vpop.f32.mrb[0].mxu0
      %3211 = vmatprep.mubr.f32.mxu0 0.0
      %3212 = vmatmul.mubr.f32.gmra.mrb[0].mxu0 %v2994
      %v3213 = vpop.f32.mrb[0].mxu0
      %v3214 = vadd.f32 0.0, %v3213
      %v3215 = vpop.f32.mrb[0].mxu0
      %3216 = vmatprep.mubr.f32.mxu0 0.0
      %3217 = vmatmul.mubr.f32.gmra.mrb[0].mxu0 %v2997
      %v3218 = vpop.f32.mrb[0].mxu0
      %v3219 = vadd.f32 0.0, %v3218
      %v3220 = vpop.f32.mrb[0].mxu0
      %3221 = vmatprep.mubr.f32.mxu0 0.0
      %3222 = vmatmul.mubr.f32.gmra.mrb[0].mxu0 %v3000
      %v3223 = vpop.f32.mrb[0].mxu0
      %v3224 = vadd.f32 0.0, %v3223
      %v3225 = vpop.f32.mrb[0].mxu0
      %3226 = vdwg.mxu0
      %v3227 = vadd.f32 %v2840, %v3069
      %v3228 = vadd.f32 %v2841, %v3074
      %v3229 = vadd.f32 %v2842, %v3079
      %v3230 = vadd.f32 %v2843, %v3084
      %v3231 = vadd.f32 %v2844, %v3089
      %v3232 = vadd.f32 %v2845, %v3094
      %v3233 = vadd.f32 %v2846, %v3099
      %v3234 = vadd.f32 %v2847, %v3104
      %v3235 = vadd.f32 %v2848, %v3109
      %v3236 = vadd.f32 %v2849, %v3114
      %v3237 = vadd.f32 %v2850, %v3119
      %v3238 = vadd.f32 %v2851, %v3124
      %v3239 = vadd.f32 %v2852, %v3129
      %v3240 = vadd.f32 %v2853, %v3134
      %v3241 = vadd.f32 %v2854, %v3139
      %v3242 = vadd.f32 %v2855, %v3144
      %v3243 = vadd.f32 %v2856, %v3149
      %v3244 = vadd.f32 %v2857, %v3154
      %v3245 = vadd.f32 %v2858, %v3159
      %v3246 = vadd.f32 %v2859, %v3164
      %v3247 = vadd.f32 %v2860, %v3169
      %v3248 = vadd.f32 %v2861, %v3174
      %v3249 = vadd.f32 %v2862, %v3179
      %v3250 = vadd.f32 %v2863, %v3184
      %v3251 = vadd.f32 %v2864, %v3189
      %v3252 = vadd.f32 %v2865, %v3194
      %v3253 = vadd.f32 %v2866, %v3199
      %v3254 = vadd.f32 %v2867, %v3204
      %v3255 = vadd.f32 %v2868, %v3209
      %v3256 = vadd.f32 %v2869, %v3214
      %v3257 = vadd.f32 %v2870, %v3219
      %v3258 = vadd.f32 %v2871, %v3224
      %v3259 = vld [vmem:[%s2484 + $0x2] sm:$0xff]
      %v3260 = vld [vmem:[%s2484 + $0xa] sm:$0xff]
      %v3261 = vld [vmem:[%s2484 + $0x1a] sm:$0xff]
      %v3262 = vld [vmem:[%s2484 + $0x22] sm:$0xff]
      %v3263 = vld [vmem:[%s2484 + $0x32] sm:$0xff]
      %v3264 = vld [vmem:[%s2484 + $0x3a] sm:$0xff]
      %v3265 = vld [vmem:[%s2484 + $0x4a] sm:$0xff]
      %v3266 = vld [vmem:[%s2484 + $0x52] sm:$0xff]
      %v3267 = vld [vmem:[%s2484 + $0x62] sm:$0xff]
      %v3268 = vld [vmem:[%s2484 + $0x6a] sm:$0xff]
      %v3269 = vld [vmem:[%s2484 + $0x7a] sm:$0xff]
      %v3270 = vld [vmem:[%s2484 + $0x82] sm:$0xff]
      %v3271 = vld [vmem:[%s2484 + $0x92] sm:$0xff]
      %v3272 = vld [vmem:[%s2484 + $0x9a] sm:$0xff]
      %v3273 = vld [vmem:[%s2484 + $0xaa] sm:$0xff]
      %v3274 = vld [vmem:[%s2484 + $0xb2] sm:$0xff]
      %v3275 = vld [vmem:[%s2484 + $0xc2] sm:$0xff]
      %v3276 = vld [vmem:[%s2484 + $0xca] sm:$0xff]
      %v3277 = vld [vmem:[%s2484 + $0xda] sm:$0xff]
      %v3278 = vld [vmem:[%s2484 + $0xe2] sm:$0xff]
      %v3279 = vld [vmem:[%s2484 + $0xf2] sm:$0xff]
      %v3280 = vld [vmem:[%s2484 + $0xfa] sm:$0xff]
      %v3281 = vld [vmem:[%s2484 + $0x10a] sm:$0xff]
      %v3282 = vld [vmem:[%s2484 + $0x112] sm:$0xff]
      %v3283 = vld [vmem:[%s2484 + $0x122] sm:$0xff]
      %v3284 = vld [vmem:[%s2484 + $0x12a] sm:$0xff]
      %v3285 = vld [vmem:[%s2484 + $0x13a] sm:$0xff]
      %v3286 = vld [vmem:[%s2484 + $0x142] sm:$0xff]
      %v3287 = vld [vmem:[%s2484 + $0x152] sm:$0xff]
      %v3288 = vld [vmem:[%s2484 + $0x15a] sm:$0xff]
      %v3289 = vld [vmem:[%s2484 + $0x16a] sm:$0xff]
      %v3290 = vld [vmem:[%s2484 + $0x172] sm:$0xff]
      %s3291 = scalar_lea.vmem %s1, 64
      %v3292 = vld [vmem:[%s3291] sm:$0xff]
      %v3294 = vsel %vm292, %v3259, 0
      %v3297 = vsel %vm292, %v3260, 0
      %v3300 = vsel %vm292, %v3261, 0
      %v3303 = vsel %vm292, %v3262, 0
      %v3306 = vsel %vm292, %v3263, 0
      %v3309 = vsel %vm292, %v3264, 0
      %v3312 = vsel %vm292, %v3265, 0
      %v3315 = vsel %vm292, %v3266, 0
      %v3318 = vsel %vm292, %v3267, 0
      %v3321 = vsel %vm292, %v3268, 0
      %v3324 = vsel %vm292, %v3269, 0
      %v3327 = vsel %vm292, %v3270, 0
      %v3330 = vsel %vm292, %v3271, 0
      %v3333 = vsel %vm292, %v3272, 0
      %v3336 = vsel %vm292, %v3273, 0
      %v3339 = vsel %vm292, %v3274, 0
      %v3342 = vsel %vm292, %v3275, 0
      %v3345 = vsel %vm292, %v3276, 0
      %v3348 = vsel %vm292, %v3277, 0
      %v3351 = vsel %vm292, %v3278, 0
      %v3354 = vsel %vm292, %v3279, 0
      %v3357 = vsel %vm292, %v3280, 0
      %v3360 = vsel %vm292, %v3281, 0
      %v3363 = vsel %vm292, %v3282, 0
      %v3366 = vsel %vm292, %v3283, 0
      %v3369 = vsel %vm292, %v3284, 0
      %v3372 = vsel %vm292, %v3285, 0
      %v3375 = vsel %vm292, %v3286, 0
      %v3378 = vsel %vm292, %v3287, 0
      %v3381 = vsel %vm292, %v3288, 0
      %v3384 = vsel %vm292, %v3289, 0
      %v3387 = vsel %vm292, %v3290, 0
      %3389 = vmatprep.subr.mxu0 0.0
      %3390 = vmatpush1.msra.mxu0 %v3292
      %3391 = vmatprep.subr.mxu0 0.0
      %3392 = vmatpush1.msra.mxu0 0.0
      %3393 = vmatprep.subr.mxu0 0.0
      %3394 = vmatpush1.msra.mxu0 0.0
      %3395 = vmatprep.subr.mxu0 0.0
      %3396 = vmatpush1.msra.mxu0 0.0
      %3397 = vmatprep.subr.mxu0 0.0
      %3398 = vmatpush1.msra.mxu0 0.0
      %3399 = vmatprep.subr.mxu0 0.0
      %3400 = vmatpush1.msra.mxu0 0.0
      %3401 = vmatprep.subr.mxu0 0.0
      %3402 = vmatpush1.msra.mxu0 0.0
      %3403 = vmatprep.subr.mxu0 0.0
      %3404 = vmatpush1.msra.mxu0 0.0
      %3405 = vmatprep.subr.mxu0 0.0
      %3406 = vmatpush1.msra.mxu0 0.0
      %3407 = vmatprep.subr.mxu0 0.0
      %3408 = vmatpush1.msra.mxu0 0.0
      %3409 = vmatprep.subr.mxu0 0.0
      %3410 = vmatpush1.msra.mxu0 0.0
      %3411 = vmatprep.subr.mxu0 0.0
      %3412 = vmatpush1.msra.mxu0 0.0
      %3413 = vmatprep.subr.mxu0 0.0
      %3414 = vmatpush1.msra.mxu0 0.0
      %3415 = vmatprep.subr.mxu0 0.0
      %3416 = vmatpush1.msra.mxu0 0.0
      %3417 = vmatprep.subr.mxu0 0.0
      %3418 = vmatpush1.msra.mxu0 0.0
      %3419 = vmatprep.subr.mxu0 0.0
      %3420 = vmatpush1.msra.mxu0 0.0
      %3421 = vmatprep.subr.mxu0 0.0
      %3422 = vmatpush1.msra.mxu0 0.0
      %3423 = vmatprep.subr.mxu0 0.0
      %3424 = vmatpush1.msra.mxu0 0.0
      %3425 = vmatprep.subr.mxu0 0.0
      %3426 = vmatpush1.msra.mxu0 0.0
      %3427 = vmatprep.subr.mxu0 0.0
      %3428 = vmatpush1.msra.mxu0 0.0
      %3429 = vmatprep.subr.mxu0 0.0
      %3430 = vmatpush1.msra.mxu0 0.0
      %3431 = vmatprep.subr.mxu0 0.0
      %3432 = vmatpush1.msra.mxu0 0.0
      %3433 = vmatprep.subr.mxu0 0.0
      %3434 = vmatpush1.msra.mxu0 0.0
      %3435 = vmatprep.subr.mxu0 0.0
      %3436 = vmatpush1.msra.mxu0 0.0
      %3437 = vmatprep.subr.mxu0 0.0
      %3438 = vmatpush1.msra.mxu0 0.0
      %3439 = vmatprep.subr.mxu0 0.0
      %3440 = vmatpush1.msra.mxu0 0.0
      %3441 = vmatprep.subr.mxu0 0.0
      %3442 = vmatpush1.msra.mxu0 0.0
      %3443 = vmatprep.subr.mxu0 0.0
      %3444 = vmatpush1.msra.mxu0 0.0
      %3445 = vmatprep.subr.mxu0 0.0
      %3446 = vmatpush1.msra.mxu0 0.0
      %3447 = vmatprep.subr.mxu0 0.0
      %3448 = vmatpush1.msra.mxu0 0.0
      %3449 = vmatprep.subr.mxu0 0.0
      %3450 = vmatpush1.msra.mxu0 0.0
      %3451 = vmatprep.subr.mxu0 0.0
      %3452 = vmatpush1.msra.mxu0 0.0
      %3453 = vmatprep.mubr.f32.mxu0 0.0
      %3454 = vmatmul.mubr.f32.gmra.mrb[0].mxu0 %v3294
      %v3455 = vpop.f32.mrb[0].mxu0
      %v3456 = vadd.f32 0.0, %v3455
      %v3457 = vpop.f32.mrb[0].mxu0
      %3458 = vmatprep.mubr.f32.mxu0 0.0
      %3459 = vmatmul.mubr.f32.gmra.mrb[0].mxu0 %v3297
      %v3460 = vpop.f32.mrb[0].mxu0
      %v3461 = vadd.f32 0.0, %v3460
      %v3462 = vpop.f32.mrb[0].mxu0
      %3463 = vmatprep.mubr.f32.mxu0 0.0
      %3464 = vmatmul.mubr.f32.gmra.mrb[0].mxu0 %v3300
      %v3465 = vpop.f32.mrb[0].mxu0
      %v3466 = vadd.f32 0.0, %v3465
      %v3467 = vpop.f32.mrb[0].mxu0
      %3468 = vmatprep.mubr.f32.mxu0 0.0
      %3469 = vmatmul.mubr.f32.gmra.mrb[0].mxu0 %v3303
      %v3470 = vpop.f32.mrb[0].mxu0
      %v3471 = vadd.f32 0.0, %v3470
      %v3472 = vpop.f32.mrb[0].mxu0
      %3473 = vmatprep.mubr.f32.mxu0 0.0
      %3474 = vmatmul.mubr.f32.gmra.mrb[0].mxu0 %v3306
      %v3475 = vpop.f32.mrb[0].mxu0
      %v3476 = vadd.f32 0.0, %v3475
      %v3477 = vpop.f32.mrb[0].mxu0
      %3478 = vmatprep.mubr.f32.mxu0 0.0
      %3479 = vmatmul.mubr.f32.gmra.mrb[0].mxu0 %v3309
      %v3480 = vpop.f32.mrb[0].mxu0
      %v3481 = vadd.f32 0.0, %v3480
      %v3482 = vpop.f32.mrb[0].mxu0
      %3483 = vmatprep.mubr.f32.mxu0 0.0
      %3484 = vmatmul.mubr.f32.gmra.mrb[0].mxu0 %v3312
      %v3485 = vpop.f32.mrb[0].mxu0
      %v3486 = vadd.f32 0.0, %v3485
      %v3487 = vpop.f32.mrb[0].mxu0
      %3488 = vmatprep.mubr.f32.mxu0 0.0
      %3489 = vmatmul.mubr.f32.gmra.mrb[0].mxu0 %v3315
      %v3490 = vpop.f32.mrb[0].mxu0
      %v3491 = vadd.f32 0.0, %v3490
      %v3492 = vpop.f32.mrb[0].mxu0
      %3493 = vmatprep.mubr.f32.mxu0 0.0
      %3494 = vmatmul.mubr.f32.gmra.mrb[0].mxu0 %v3318
      %v3495 = vpop.f32.mrb[0].mxu0
      %v3496 = vadd.f32 0.0, %v3495
      %v3497 = vpop.f32.mrb[0].mxu0
      %3498 = vmatprep.mubr.f32.mxu0 0.0
      %3499 = vmatmul.mubr.f32.gmra.mrb[0].mxu0 %v3321
      %v3500 = vpop.f32.mrb[0].mxu0
      %v3501 = vadd.f32 0.0, %v3500
      %v3502 = vpop.f32.mrb[0].mxu0
      %3503 = vmatprep.mubr.f32.mxu0 0.0
      %3504 = vmatmul.mubr.f32.gmra.mrb[0].mxu0 %v3324
      %v3505 = vpop.f32.mrb[0].mxu0
      %v3506 = vadd.f32 0.0, %v3505
      %v3507 = vpop.f32.mrb[0].mxu0
      %3508 = vmatprep.mubr.f32.mxu0 0.0
      %3509 = vmatmul.mubr.f32.gmra.mrb[0].mxu0 %v3327
      %v3510 = vpop.f32.mrb[0].mxu0
      %v3511 = vadd.f32 0.0, %v3510
      %v3512 = vpop.f32.mrb[0].mxu0
      %3513 = vmatprep.mubr.f32.mxu0 0.0
      %3514 = vmatmul.mubr.f32.gmra.mrb[0].mxu0 %v3330
      %v3515 = vpop.f32.mrb[0].mxu0
      %v3516 = vadd.f32 0.0, %v3515
      %v3517 = vpop.f32.mrb[0].mxu0
      %3518 = vmatprep.mubr.f32.mxu0 0.0
      %3519 = vmatmul.mubr.f32.gmra.mrb[0].mxu0 %v3333
      %v3520 = vpop.f32.mrb[0].mxu0
      %v3521 = vadd.f32 0.0, %v3520
      %v3522 = vpop.f32.mrb[0].mxu0
      %3523 = vmatprep.mubr.f32.mxu0 0.0
      %3524 = vmatmul.mubr.f32.gmra.mrb[0].mxu0 %v3336
      %v3525 = vpop.f32.mrb[0].mxu0
      %v3526 = vadd.f32 0.0, %v3525
      %v3527 = vpop.f32.mrb[0].mxu0
      %3528 = vmatprep.mubr.f32.mxu0 0.0
      %3529 = vmatmul.mubr.f32.gmra.mrb[0].mxu0 %v3339
      %v3530 = vpop.f32.mrb[0].mxu0
      %v3531 = vadd.f32 0.0, %v3530
      %v3532 = vpop.f32.mrb[0].mxu0
      %3533 = vmatprep.mubr.f32.mxu0 0.0
      %3534 = vmatmul.mubr.f32.gmra.mrb[0].mxu0 %v3342
      %v3535 = vpop.f32.mrb[0].mxu0
      %v3536 = vadd.f32 0.0, %v3535
      %v3537 = vpop.f32.mrb[0].mxu0
      %3538 = vmatprep.mubr.f32.mxu0 0.0
      %3539 = vmatmul.mubr.f32.gmra.mrb[0].mxu0 %v3345
      %v3540 = vpop.f32.mrb[0].mxu0
      %v3541 = vadd.f32 0.0, %v3540
      %v3542 = vpop.f32.mrb[0].mxu0
      %3543 = vmatprep.mubr.f32.mxu0 0.0
      %3544 = vmatmul.mubr.f32.gmra.mrb[0].mxu0 %v3348
      %v3545 = vpop.f32.mrb[0].mxu0
      %v3546 = vadd.f32 0.0, %v3545
      %v3547 = vpop.f32.mrb[0].mxu0
      %3548 = vmatprep.mubr.f32.mxu0 0.0
      %3549 = vmatmul.mubr.f32.gmra.mrb[0].mxu0 %v3351
      %v3550 = vpop.f32.mrb[0].mxu0
      %v3551 = vadd.f32 0.0, %v3550
      %v3552 = vpop.f32.mrb[0].mxu0
      %3553 = vmatprep.mubr.f32.mxu0 0.0
      %3554 = vmatmul.mubr.f32.gmra.mrb[0].mxu0 %v3354
      %v3555 = vpop.f32.mrb[0].mxu0
      %v3556 = vadd.f32 0.0, %v3555
      %v3557 = vpop.f32.mrb[0].mxu0
      %3558 = vmatprep.mubr.f32.mxu0 0.0
      %3559 = vmatmul.mubr.f32.gmra.mrb[0].mxu0 %v3357
      %v3560 = vpop.f32.mrb[0].mxu0
      %v3561 = vadd.f32 0.0, %v3560
      %v3562 = vpop.f32.mrb[0].mxu0
      %3563 = vmatprep.mubr.f32.mxu0 0.0
      %3564 = vmatmul.mubr.f32.gmra.mrb[0].mxu0 %v3360
      %v3565 = vpop.f32.mrb[0].mxu0
      %v3566 = vadd.f32 0.0, %v3565
      %v3567 = vpop.f32.mrb[0].mxu0
      %3568 = vmatprep.mubr.f32.mxu0 0.0
      %3569 = vmatmul.mubr.f32.gmra.mrb[0].mxu0 %v3363
      %v3570 = vpop.f32.mrb[0].mxu0
      %v3571 = vadd.f32 0.0, %v3570
      %v3572 = vpop.f32.mrb[0].mxu0
      %3573 = vmatprep.mubr.f32.mxu0 0.0
      %3574 = vmatmul.mubr.f32.gmra.mrb[0].mxu0 %v3366
      %v3575 = vpop.f32.mrb[0].mxu0
      %v3576 = vadd.f32 0.0, %v3575
      %v3577 = vpop.f32.mrb[0].mxu0
      %3578 = vmatprep.mubr.f32.mxu0 0.0
      %3579 = vmatmul.mubr.f32.gmra.mrb[0].mxu0 %v3369
      %v3580 = vpop.f32.mrb[0].mxu0
      %v3581 = vadd.f32 0.0, %v3580
      %v3582 = vpop.f32.mrb[0].mxu0
      %3583 = vmatprep.mubr.f32.mxu0 0.0
      %3584 = vmatmul.mubr.f32.gmra.mrb[0].mxu0 %v3372
      %v3585 = vpop.f32.mrb[0].mxu0
      %v3586 = vadd.f32 0.0, %v3585
      %v3587 = vpop.f32.mrb[0].mxu0
      %3588 = vmatprep.mubr.f32.mxu0 0.0
      %3589 = vmatmul.mubr.f32.gmra.mrb[0].mxu0 %v3375
      %v3590 = vpop.f32.mrb[0].mxu0
      %v3591 = vadd.f32 0.0, %v3590
      %v3592 = vpop.f32.mrb[0].mxu0
      %3593 = vmatprep.mubr.f32.mxu0 0.0
      %3594 = vmatmul.mubr.f32.gmra.mrb[0].mxu0 %v3378
      %v3595 = vpop.f32.mrb[0].mxu0
      %v3596 = vadd.f32 0.0, %v3595
      %v3597 = vpop.f32.mrb[0].mxu0
      %3598 = vmatprep.mubr.f32.mxu0 0.0
      %3599 = vmatmul.mubr.f32.gmra.mrb[0].mxu0 %v3381
      %v3600 = vpop.f32.mrb[0].mxu0
      %v3601 = vadd.f32 0.0, %v3600
      %v3602 = vpop.f32.mrb[0].mxu0
      %3603 = vmatprep.mubr.f32.mxu0 0.0
      %3604 = vmatmul.mubr.f32.gmra.mrb[0].mxu0 %v3384
      %v3605 = vpop.f32.mrb[0].mxu0
      %v3606 = vadd.f32 0.0, %v3605
      %v3607 = vpop.f32.mrb[0].mxu0
      %3608 = vmatprep.mubr.f32.mxu0 0.0
      %3609 = vmatmul.mubr.f32.gmra.mrb[0].mxu0 %v3387
      %v3610 = vpop.f32.mrb[0].mxu0
      %v3611 = vadd.f32 0.0, %v3610
      %v3612 = vpop.f32.mrb[0].mxu0
      %3613 = vdwg.mxu0
      %v3614 = vadd.f32 %v3227, %v3456
      %v3615 = vadd.f32 %v3228, %v3461
      %v3616 = vadd.f32 %v3229, %v3466
      %v3617 = vadd.f32 %v3230, %v3471
      %v3618 = vadd.f32 %v3231, %v3476
      %v3619 = vadd.f32 %v3232, %v3481
      %v3620 = vadd.f32 %v3233, %v3486
      %v3621 = vadd.f32 %v3234, %v3491
      %v3622 = vadd.f32 %v3235, %v3496
      %v3623 = vadd.f32 %v3236, %v3501
      %v3624 = vadd.f32 %v3237, %v3506
      %v3625 = vadd.f32 %v3238, %v3511
      %v3626 = vadd.f32 %v3239, %v3516
      %v3627 = vadd.f32 %v3240, %v3521
      %v3628 = vadd.f32 %v3241, %v3526
      %v3629 = vadd.f32 %v3242, %v3531
      %v3630 = vadd.f32 %v3243, %v3536
      %v3631 = vadd.f32 %v3244, %v3541
      %v3632 = vadd.f32 %v3245, %v3546
      %v3633 = vadd.f32 %v3246, %v3551
      %v3634 = vadd.f32 %v3247, %v3556
      %v3635 = vadd.f32 %v3248, %v3561
      %v3636 = vadd.f32 %v3249, %v3566
      %v3637 = vadd.f32 %v3250, %v3571
      %v3638 = vadd.f32 %v3251, %v3576
      %v3639 = vadd.f32 %v3252, %v3581
      %v3640 = vadd.f32 %v3253, %v3586
      %v3641 = vadd.f32 %v3254, %v3591
      %v3642 = vadd.f32 %v3255, %v3596
      %v3643 = vadd.f32 %v3256, %v3601
      %v3644 = vadd.f32 %v3257, %v3606
      %v3645 = vadd.f32 %v3258, %v3611
      %v3646 = vld [vmem:[%s2] sm:$0x1]
      %v3648 = vlaneseq
      %v3649 = vshrl.u32 %v3648, 7
      %v3650 = vsub.s32 0, %v3649
      %v3651 = vrot.slane %v3646, %v3650
      %v3653 = vadd.f32 %v3614, %v3651
      %v3654 = vadd.f32 %v3615, %v3651
      %v3655 = vadd.f32 %v3616, %v3651
      %v3656 = vadd.f32 %v3617, %v3651
      %v3657 = vadd.f32 %v3618, %v3651
      %v3658 = vadd.f32 %v3619, %v3651
      %v3659 = vadd.f32 %v3620, %v3651
      %v3660 = vadd.f32 %v3621, %v3651
      %v3661 = vadd.f32 %v3622, %v3651
      %v3662 = vadd.f32 %v3623, %v3651
      %v3663 = vadd.f32 %v3624, %v3651
      %v3664 = vadd.f32 %v3625, %v3651
      %v3665 = vadd.f32 %v3626, %v3651
      %v3666 = vadd.f32 %v3627, %v3651
      %v3667 = vadd.f32 %v3628, %v3651
      %v3668 = vadd.f32 %v3629, %v3651
      %v3669 = vadd.f32 %v3630, %v3651
      %v3670 = vadd.f32 %v3631, %v3651
      %v3671 = vadd.f32 %v3632, %v3651
      %v3672 = vadd.f32 %v3633, %v3651
      %v3673 = vadd.f32 %v3634, %v3651
      %v3674 = vadd.f32 %v3635, %v3651
      %v3675 = vadd.f32 %v3636, %v3651
      %v3676 = vadd.f32 %v3637, %v3651
      %v3677 = vadd.f32 %v3638, %v3651
      %v3678 = vadd.f32 %v3639, %v3651
      %v3679 = vadd.f32 %v3640, %v3651
      %v3680 = vadd.f32 %v3641, %v3651
      %v3681 = vadd.f32 %v3642, %v3651
      %v3682 = vadd.f32 %v3643, %v3651
      %v3683 = vadd.f32 %v3644, %v3651
      %v3684 = vadd.f32 %v3645, %v3651
      %v3685 = vmax.f32 %v3653, 0.0
      %v3686 = vmax.f32 %v3654, 0.0
      %v3687 = vmax.f32 %v3655, 0.0
      %v3688 = vmax.f32 %v3656, 0.0
      %v3689 = vmax.f32 %v3657, 0.0
      %v3690 = vmax.f32 %v3658, 0.0
      %v3691 = vmax.f32 %v3659, 0.0
      %v3692 = vmax.f32 %v3660, 0.0
      %v3693 = vmax.f32 %v3661, 0.0
      %v3694 = vmax.f32 %v3662, 0.0
      %v3695 = vmax.f32 %v3663, 0.0
      %v3696 = vmax.f32 %v3664, 0.0
      %v3697 = vmax.f32 %v3665, 0.0
      %v3698 = vmax.f32 %v3666, 0.0
      %v3699 = vmax.f32 %v3667, 0.0
      %v3700 = vmax.f32 %v3668, 0.0
      %v3701 = vmax.f32 %v3669, 0.0
      %v3702 = vmax.f32 %v3670, 0.0
      %v3703 = vmax.f32 %v3671, 0.0
      %v3704 = vmax.f32 %v3672, 0.0
      %v3705 = vmax.f32 %v3673, 0.0
      %v3706 = vmax.f32 %v3674, 0.0
      %v3707 = vmax.f32 %v3675, 0.0
      %v3708 = vmax.f32 %v3676, 0.0
      %v3709 = vmax.f32 %v3677, 0.0
      %v3710 = vmax.f32 %v3678, 0.0
      %v3711 = vmax.f32 %v3679, 0.0
      %v3712 = vmax.f32 %v3680, 0.0
      %v3713 = vmax.f32 %v3681, 0.0
      %v3714 = vmax.f32 %v3682, 0.0
      %v3715 = vmax.f32 %v3683, 0.0
      %v3716 = vmax.f32 %v3684, 0.0
      %3717 = vst [vmem:[#allocation2] sm:$0xff] 0.0
      %3718 = vst [vmem:[#allocation2 + $0x8] sm:$0xff] 0.0
      %3719 = vst [vmem:[#allocation2 + $0x10] sm:$0x3] 0.0
      %3720 = vst [vmem:[#allocation2 + $0x18] sm:$0xff] 0.0
      %3721 = vst [vmem:[#allocation2 + $0x20] sm:$0xff] 0.0
      %3722 = vst [vmem:[#allocation2 + $0x28] sm:$0x3] 0.0
      %3723 = vst [vmem:[#allocation2 + $0x30] sm:$0xff] 0.0
      %3724 = vst [vmem:[#allocation2 + $0x38] sm:$0xff] 0.0
      %3725 = vst [vmem:[#allocation2 + $0x40] sm:$0x3] 0.0
      %3726 = vst [vmem:[#allocation2 + $0x48] sm:$0xff] 0.0
      %3727 = vst [vmem:[#allocation2 + $0x50] sm:$0xff] 0.0
      %3728 = vst [vmem:[#allocation2 + $0x58] sm:$0x3] 0.0
      %3729 = vst [vmem:[#allocation2 + $0x60] sm:$0xff] 0.0
      %3730 = vst [vmem:[#allocation2 + $0x68] sm:$0xff] 0.0
      %3731 = vst [vmem:[#allocation2 + $0x70] sm:$0x3] 0.0
      %3732 = vst [vmem:[#allocation2 + $0x78] sm:$0xff] 0.0
      %3733 = vst [vmem:[#allocation2 + $0x80] sm:$0xff] 0.0
      %3734 = vst [vmem:[#allocation2 + $0x88] sm:$0x3] 0.0
      %3735 = vst [vmem:[#allocation2 + $0x90] sm:$0xff] 0.0
      %3736 = vst [vmem:[#allocation2 + $0x98] sm:$0xff] 0.0
      %3737 = vst [vmem:[#allocation2 + $0xa0] sm:$0x3] 0.0
      %3738 = vst [vmem:[#allocation2 + $0xa8] sm:$0xff] 0.0
      %3739 = vst [vmem:[#allocation2 + $0xb0] sm:$0xff] 0.0
      %3740 = vst [vmem:[#allocation2 + $0xb8] sm:$0x3] 0.0
      %3741 = vst [vmem:[#allocation2 + $0xc0] sm:$0xff] 0.0
      %3742 = vst [vmem:[#allocation2 + $0xc8] sm:$0xff] 0.0
      %3743 = vst [vmem:[#allocation2 + $0xd0] sm:$0x3] 0.0
      %3744 = vst [vmem:[#allocation2 + $0xd8] sm:$0xff] 0.0
      %3745 = vst [vmem:[#allocation2 + $0xe0] sm:$0xff] 0.0
      %3746 = vst [vmem:[#allocation2 + $0xe8] sm:$0x3] 0.0
      %3747 = vst [vmem:[#allocation2 + $0xf0] sm:$0xff] 0.0
      %3748 = vst [vmem:[#allocation2 + $0xf8] sm:$0xff] 0.0
      %3749 = vst [vmem:[#allocation2 + $0x100] sm:$0x3] 0.0
      %3750 = vst [vmem:[#allocation2 + $0x108] sm:$0xff] 0.0
      %3751 = vst [vmem:[#allocation2 + $0x110] sm:$0xff] 0.0
      %3752 = vst [vmem:[#allocation2 + $0x118] sm:$0x3] 0.0
      %3753 = vst [vmem:[#allocation2 + $0x120] sm:$0xff] 0.0
      %3754 = vst [vmem:[#allocation2 + $0x128] sm:$0xff] 0.0
      %3755 = vst [vmem:[#allocation2 + $0x130] sm:$0x3] 0.0
      %3756 = vst [vmem:[#allocation2 + $0x138] sm:$0xff] 0.0
      %3757 = vst [vmem:[#allocation2 + $0x140] sm:$0xff] 0.0
      %3758 = vst [vmem:[#allocation2 + $0x148] sm:$0x3] 0.0
      %3759 = vst [vmem:[#allocation2 + $0x150] sm:$0xff] 0.0
      %3760 = vst [vmem:[#allocation2 + $0x158] sm:$0xff] 0.0
      %3761 = vst [vmem:[#allocation2 + $0x160] sm:$0x3] 0.0
      %3762 = vst [vmem:[#allocation2 + $0x168] sm:$0xff] 0.0
      %3763 = vst [vmem:[#allocation2 + $0x170] sm:$0xff] 0.0
      %3764 = vst [vmem:[#allocation2 + $0x178] sm:$0x3] 0.0
      %3765 = vst [vmem:[#allocation2 + $0x180] sm:$0xff] 0.0
      %3766 = vst [vmem:[#allocation2 + $0x188] sm:$0xff] 0.0
      %3767 = vst [vmem:[#allocation2 + $0x190] sm:$0x3] 0.0
      %3768 = vst [vmem:[#allocation2 + $0x198] sm:$0xff] 0.0
      %3769 = vst [vmem:[#allocation2 + $0x1a0] sm:$0xff] 0.0
      %3770 = vst [vmem:[#allocation2 + $0x1a8] sm:$0x3] 0.0
      %s3771 = scalar_lea.vmem [#allocation2], 24
      %3772 = vst [vmem:[%s3771 + $0x1] sm:$0xff] %v3685
      %3773 = vst [vmem:[%s3771 + $0x9] sm:$0xff] %v3686
      %3774 = vst [vmem:[%s3771 + $0x19] sm:$0xff] %v3687
      %3775 = vst [vmem:[%s3771 + $0x21] sm:$0xff] %v3688
      %3776 = vst [vmem:[%s3771 + $0x31] sm:$0xff] %v3689
      %3777 = vst [vmem:[%s3771 + $0x39] sm:$0xff] %v3690
      %3778 = vst [vmem:[%s3771 + $0x49] sm:$0xff] %v3691
      %3779 = vst [vmem:[%s3771 + $0x51] sm:$0xff] %v3692
      %3780 = vst [vmem:[%s3771 + $0x61] sm:$0xff] %v3693
      %3781 = vst [vmem:[%s3771 + $0x69] sm:$0xff] %v3694
      %3782 = vst [vmem:[%s3771 + $0x79] sm:$0xff] %v3695
      %3783 = vst [vmem:[%s3771 + $0x81] sm:$0xff] %v3696
      %3784 = vst [vmem:[%s3771 + $0x91] sm:$0xff] %v3697
      %3785 = vst [vmem:[%s3771 + $0x99] sm:$0xff] %v3698
      %3786 = vst [vmem:[%s3771 + $0xa9] sm:$0xff] %v3699
      %3787 = vst [vmem:[%s3771 + $0xb1] sm:$0xff] %v3700
      %3788 = vst [vmem:[%s3771 + $0xc1] sm:$0xff] %v3701
      %3789 = vst [vmem:[%s3771 + $0xc9] sm:$0xff] %v3702
      %3790 = vst [vmem:[%s3771 + $0xd9] sm:$0xff] %v3703
      %3791 = vst [vmem:[%s3771 + $0xe1] sm:$0xff] %v3704
      %3792 = vst [vmem:[%s3771 + $0xf1] sm:$0xff] %v3705
      %3793 = vst [vmem:[%s3771 + $0xf9] sm:$0xff] %v3706
      %3794 = vst [vmem:[%s3771 + $0x109] sm:$0xff] %v3707
      %3795 = vst [vmem:[%s3771 + $0x111] sm:$0xff] %v3708
      %3796 = vst [vmem:[%s3771 + $0x121] sm:$0xff] %v3709
      %3797 = vst [vmem:[%s3771 + $0x129] sm:$0xff] %v3710
      %3798 = vst [vmem:[%s3771 + $0x139] sm:$0xff] %v3711
      %3799 = vst [vmem:[%s3771 + $0x141] sm:$0xff] %v3712
      %3800 = vst [vmem:[%s3771 + $0x151] sm:$0xff] %v3713
      %3801 = vst [vmem:[%s3771 + $0x159] sm:$0xff] %v3714
      %3802 = vst [vmem:[%s3771 + $0x169] sm:$0xff] %v3715
      %3803 = vst [vmem:[%s3771 + $0x171] sm:$0xff] %v3716
      %v3804 = vld [vmem:[#allocation2] sm:$0xff]
      %v3805 = vld [vmem:[#allocation2 + $0x8] sm:$0xff]
      %v3806 = vld [vmem:[#allocation2 + $0x18] sm:$0xff]
      %v3807 = vld [vmem:[#allocation2 + $0x20] sm:$0xff]
      %v3808 = vld [vmem:[#allocation2 + $0x30] sm:$0xff]
      %v3809 = vld [vmem:[#allocation2 + $0x38] sm:$0xff]
      %v3810 = vld [vmem:[#allocation2 + $0x48] sm:$0xff]
      %v3811 = vld [vmem:[#allocation2 + $0x50] sm:$0xff]
      %v3812 = vld [vmem:[#allocation2 + $0x60] sm:$0xff]
      %v3813 = vld [vmem:[#allocation2 + $0x68] sm:$0xff]
      %v3814 = vld [vmem:[#allocation2 + $0x78] sm:$0xff]
      %v3815 = vld [vmem:[#allocation2 + $0x80] sm:$0xff]
      %v3816 = vld [vmem:[#allocation2 + $0x90] sm:$0xff]
      %v3817 = vld [vmem:[#allocation2 + $0x98] sm:$0xff]
      %v3818 = vld [vmem:[#allocation2 + $0xa8] sm:$0xff]
      %v3819 = vld [vmem:[#allocation2 + $0xb0] sm:$0xff]
      %v3820 = vld [vmem:[#allocation2 + $0xc0] sm:$0xff]
      %v3821 = vld [vmem:[#allocation2 + $0xc8] sm:$0xff]
      %v3822 = vld [vmem:[#allocation2 + $0xd8] sm:$0xff]
      %v3823 = vld [vmem:[#allocation2 + $0xe0] sm:$0xff]
      %v3824 = vld [vmem:[#allocation2 + $0xf0] sm:$0xff]
      %v3825 = vld [vmem:[#allocation2 + $0xf8] sm:$0xff]
      %v3826 = vld [vmem:[#allocation2 + $0x108] sm:$0xff]
      %v3827 = vld [vmem:[#allocation2 + $0x110] sm:$0xff]
      %v3828 = vld [vmem:[#allocation2 + $0x120] sm:$0xff]
      %v3829 = vld [vmem:[#allocation2 + $0x128] sm:$0xff]
      %v3830 = vld [vmem:[#allocation2 + $0x138] sm:$0xff]
      %v3831 = vld [vmem:[#allocation2 + $0x140] sm:$0xff]
      %v3832 = vld [vmem:[#allocation2 + $0x150] sm:$0xff]
      %v3833 = vld [vmem:[#allocation2 + $0x158] sm:$0xff]
      %v3834 = vld [vmem:[#allocation2 + $0x168] sm:$0xff]
      %v3835 = vld [vmem:[#allocation2 + $0x170] sm:$0xff]
      %v3836 = vld [vmem:[%s3] sm:$0xff]
      %v3837 = vld [vmem:[%s3 + $0x8] sm:$0xff]
      %v3838 = vld [vmem:[%s3 + $0x10] sm:$0xff]
      %v3839 = vld [vmem:[%s3 + $0x18] sm:$0xff]
      %v3840 = vld [vmem:[%s3 + $0x20] sm:$0xff]
      %v3841 = vld [vmem:[%s3 + $0x28] sm:$0xff]
      %v3842 = vld [vmem:[%s3 + $0x30] sm:$0xff]
      %v3843 = vld [vmem:[%s3 + $0x38] sm:$0xff]
      %v3844 = vld [vmem:[%s3 + $0x40] sm:$0xff]
      %v3845 = vld [vmem:[%s3 + $0x48] sm:$0xff]
      %v3846 = vld [vmem:[%s3 + $0x50] sm:$0xff]
      %v3847 = vld [vmem:[%s3 + $0x58] sm:$0xff]
      %v3848 = vld [vmem:[%s3 + $0x60] sm:$0xff]
      %v3849 = vld [vmem:[%s3 + $0x68] sm:$0xff]
      %v3850 = vld [vmem:[%s3 + $0x70] sm:$0xff]
      %v3851 = vld [vmem:[%s3 + $0x78] sm:$0xff]
      %v3852 = vld [vmem:[#allocation2 + $0x1] sm:$0xff]
      %v3853 = vld [vmem:[#allocation2 + $0x9] sm:$0xff]
      %v3854 = vld [vmem:[#allocation2 + $0x19] sm:$0xff]
      %v3855 = vld [vmem:[#allocation2 + $0x21] sm:$0xff]
      %v3856 = vld [vmem:[#allocation2 + $0x31] sm:$0xff]
      %v3857 = vld [vmem:[#allocation2 + $0x39] sm:$0xff]
      %v3858 = vld [vmem:[#allocation2 + $0x49] sm:$0xff]
      %v3859 = vld [vmem:[#allocation2 + $0x51] sm:$0xff]
      %v3860 = vld [vmem:[#allocation2 + $0x61] sm:$0xff]
      %v3861 = vld [vmem:[#allocation2 + $0x69] sm:$0xff]
      %v3862 = vld [vmem:[#allocation2 + $0x79] sm:$0xff]
      %v3863 = vld [vmem:[#allocation2 + $0x81] sm:$0xff]
      %v3864 = vld [vmem:[#allocation2 + $0x91] sm:$0xff]
      %v3865 = vld [vmem:[#allocation2 + $0x99] sm:$0xff]
      %v3866 = vld [vmem:[#allocation2 + $0xa9] sm:$0xff]
      %v3867 = vld [vmem:[#allocation2 + $0xb1] sm:$0xff]
      %v3868 = vld [vmem:[#allocation2 + $0xc1] sm:$0xff]
      %v3869 = vld [vmem:[#allocation2 + $0xc9] sm:$0xff]
      %v3870 = vld [vmem:[#allocation2 + $0xd9] sm:$0xff]
      %v3871 = vld [vmem:[#allocation2 + $0xe1] sm:$0xff]
      %v3872 = vld [vmem:[#allocation2 + $0xf1] sm:$0xff]
      %v3873 = vld [vmem:[#allocation2 + $0xf9] sm:$0xff]
      %v3874 = vld [vmem:[#allocation2 + $0x109] sm:$0xff]
      %v3875 = vld [vmem:[#allocation2 + $0x111] sm:$0xff]
      %v3876 = vld [vmem:[#allocation2 + $0x121] sm:$0xff]
      %v3877 = vld [vmem:[#allocation2 + $0x129] sm:$0xff]
      %v3878 = vld [vmem:[#allocation2 + $0x139] sm:$0xff]
      %v3879 = vld [vmem:[#allocation2 + $0x141] sm:$0xff]
      %v3880 = vld [vmem:[#allocation2 + $0x151] sm:$0xff]
      %v3881 = vld [vmem:[#allocation2 + $0x159] sm:$0xff]
      %v3882 = vld [vmem:[#allocation2 + $0x169] sm:$0xff]
      %v3883 = vld [vmem:[#allocation2 + $0x171] sm:$0xff]
      %s3884 = scalar_lea.vmem %s3, 128
      %v3885 = vld [vmem:[%s3884] sm:$0xff]
      %v3886 = vld [vmem:[%s3884 + $0x8] sm:$0xff]
      %v3887 = vld [vmem:[%s3884 + $0x10] sm:$0xff]
      %v3888 = vld [vmem:[%s3884 + $0x18] sm:$0xff]
      %v3889 = vld [vmem:[%s3884 + $0x20] sm:$0xff]
      %v3890 = vld [vmem:[%s3884 + $0x28] sm:$0xff]
      %v3891 = vld [vmem:[%s3884 + $0x30] sm:$0xff]
      %v3892 = vld [vmem:[%s3884 + $0x38] sm:$0xff]
      %v3893 = vld [vmem:[%s3884 + $0x40] sm:$0xff]
      %v3894 = vld [vmem:[%s3884 + $0x48] sm:$0xff]
      %v3895 = vld [vmem:[%s3884 + $0x50] sm:$0xff]
      %v3896 = vld [vmem:[%s3884 + $0x58] sm:$0xff]
      %v3897 = vld [vmem:[%s3884 + $0x60] sm:$0xff]
      %v3898 = vld [vmem:[%s3884 + $0x68] sm:$0xff]
      %v3899 = vld [vmem:[%s3884 + $0x70] sm:$0xff]
      %v3900 = vld [vmem:[%s3884 + $0x78] sm:$0xff]
      %3901 = vmatprep.subr.mxu0 0.0
      %3902 = vmatpush1.msra.mxu0 %v3885
      %3903 = vmatprep.subr.mxu0 0.0
      %3904 = vmatpush1.msra.mxu0 %v3886
      %3905 = vmatprep.subr.mxu0 0.0
      %3906 = vmatpush1.msra.mxu0 %v3887
      %3907 = vmatprep.subr.mxu0 0.0
      %3908 = vmatpush1.msra.mxu0 %v3888
      %3909 = vmatprep.subr.mxu0 0.0
      %3910 = vmatpush1.msra.mxu0 %v3889
      %3911 = vmatprep.subr.mxu0 0.0
      %3912 = vmatpush1.msra.mxu0 %v3890
      %3913 = vmatprep.subr.mxu0 0.0
      %3914 = vmatpush1.msra.mxu0 %v3891
      %3915 = vmatprep.subr.mxu0 0.0
      %3916 = vmatpush1.msra.mxu0 %v3892
      %3917 = vmatprep.subr.mxu0 0.0
      %3918 = vmatpush1.msra.mxu0 %v3893
      %3919 = vmatprep.subr.mxu0 0.0
      %3920 = vmatpush1.msra.mxu0 %v3894
      %3921 = vmatprep.subr.mxu0 0.0
      %3922 = vmatpush1.msra.mxu0 %v3895
      %3923 = vmatprep.subr.mxu0 0.0
      %3924 = vmatpush1.msra.mxu0 %v3896
      %3925 = vmatprep.subr.mxu0 0.0
      %3926 = vmatpush1.msra.mxu0 %v3897
      %3927 = vmatprep.subr.mxu0 0.0
      %3928 = vmatpush1.msra.mxu0 %v3898
      %3929 = vmatprep.subr.mxu0 0.0
      %3930 = vmatpush1.msra.mxu0 %v3899
      %3931 = vmatprep.subr.mxu0 0.0
      %3932 = vmatpush1.msra.mxu0 %v3900
      %3933 = vmatprep.subr.mxu0 0.0
      %3934 = vmatpush1.msra.mxu0 0.0
      %3935 = vmatprep.subr.mxu0 0.0
      %3936 = vmatpush1.msra.mxu0 0.0
      %3937 = vmatprep.subr.mxu0 0.0
      %3938 = vmatpush1.msra.mxu0 0.0
      %3939 = vmatprep.subr.mxu0 0.0
      %3940 = vmatpush1.msra.mxu0 0.0
      %3941 = vmatprep.subr.mxu0 0.0
      %3942 = vmatpush1.msra.mxu0 0.0
      %3943 = vmatprep.subr.mxu0 0.0
      %3944 = vmatpush1.msra.mxu0 0.0
      %3945 = vmatprep.subr.mxu0 0.0
      %3946 = vmatpush1.msra.mxu0 0.0
      %3947 = vmatprep.subr.mxu0 0.0
      %3948 = vmatpush1.msra.mxu0 0.0
      %3949 = vmatprep.subr.mxu0 0.0
      %3950 = vmatpush1.msra.mxu0 0.0
      %3951 = vmatprep.subr.mxu0 0.0
      %3952 = vmatpush1.msra.mxu0 0.0
      %3953 = vmatprep.subr.mxu0 0.0
      %3954 = vmatpush1.msra.mxu0 0.0
      %3955 = vmatprep.subr.mxu0 0.0
      %3956 = vmatpush1.msra.mxu0 0.0
      %3957 = vmatprep.subr.mxu0 0.0
      %3958 = vmatpush1.msra.mxu0 0.0
      %3959 = vmatprep.subr.mxu0 0.0
      %3960 = vmatpush1.msra.mxu0 0.0
      %3961 = vmatprep.subr.mxu0 0.0
      %3962 = vmatpush1.msra.mxu0 0.0
      %3963 = vmatprep.subr.mxu0 0.0
      %3964 = vmatpush1.msra.mxu0 0.0
      %3965 = vmatprep.mubr.f32.mxu0 0.0
      %3966 = vmatmul.mubr.f32.gmra.mrb[0].mxu0 %v3852
      %v3967 = vpop.f32.mrb[0].mxu0
      %v3968 = vadd.f32 0.0, %v3967
      %v3969 = vpop.f32.mrb[0].mxu0
      %3970 = vmatprep.mubr.f32.mxu0 0.0
      %3971 = vmatmul.mubr.f32.gmra.mrb[0].mxu0 %v3853
      %v3972 = vpop.f32.mrb[0].mxu0
      %v3973 = vadd.f32 0.0, %v3972
      %v3974 = vpop.f32.mrb[0].mxu0
      %3975 = vmatprep.mubr.f32.mxu0 0.0
      %3976 = vmatmul.mubr.f32.gmra.mrb[0].mxu0 %v3854
      %v3977 = vpop.f32.mrb[0].mxu0
      %v3978 = vadd.f32 0.0, %v3977
      %v3979 = vpop.f32.mrb[0].mxu0
      %3980 = vmatprep.mubr.f32.mxu0 0.0
      %3981 = vmatmul.mubr.f32.gmra.mrb[0].mxu0 %v3855
      %v3982 = vpop.f32.mrb[0].mxu0
      %v3983 = vadd.f32 0.0, %v3982
      %v3984 = vpop.f32.mrb[0].mxu0
      %3985 = vmatprep.mubr.f32.mxu0 0.0
      %3986 = vmatmul.mubr.f32.gmra.mrb[0].mxu0 %v3856
      %v3987 = vpop.f32.mrb[0].mxu0
      %v3988 = vadd.f32 0.0, %v3987
      %v3989 = vpop.f32.mrb[0].mxu0
      %3990 = vmatprep.mubr.f32.mxu0 0.0
      %3991 = vmatmul.mubr.f32.gmra.mrb[0].mxu0 %v3857
      %v3992 = vpop.f32.mrb[0].mxu0
      %v3993 = vadd.f32 0.0, %v3992
      %v3994 = vpop.f32.mrb[0].mxu0
      %3995 = vmatprep.mubr.f32.mxu0 0.0
      %3996 = vmatmul.mubr.f32.gmra.mrb[0].mxu0 %v3858
      %v3997 = vpop.f32.mrb[0].mxu0
      %v3998 = vadd.f32 0.0, %v3997
      %v3999 = vpop.f32.mrb[0].mxu0
      %4000 = vmatprep.mubr.f32.mxu0 0.0
      %4001 = vmatmul.mubr.f32.gmra.mrb[0].mxu0 %v3859
      %v4002 = vpop.f32.mrb[0].mxu0
      %v4003 = vadd.f32 0.0, %v4002
      %v4004 = vpop.f32.mrb[0].mxu0
      %4005 = vmatprep.mubr.f32.mxu0 0.0
      %4006 = vmatmul.mubr.f32.gmra.mrb[0].mxu0 %v3860
      %v4007 = vpop.f32.mrb[0].mxu0
      %v4008 = vadd.f32 0.0, %v4007
      %v4009 = vpop.f32.mrb[0].mxu0
      %4010 = vmatprep.mubr.f32.mxu0 0.0
      %4011 = vmatmul.mubr.f32.gmra.mrb[0].mxu0 %v3861
      %v4012 = vpop.f32.mrb[0].mxu0
      %v4013 = vadd.f32 0.0, %v4012
      %v4014 = vpop.f32.mrb[0].mxu0
      %4015 = vmatprep.mubr.f32.mxu0 0.0
      %4016 = vmatmul.mubr.f32.gmra.mrb[0].mxu0 %v3862
      %v4017 = vpop.f32.mrb[0].mxu0
      %v4018 = vadd.f32 0.0, %v4017
      %v4019 = vpop.f32.mrb[0].mxu0
      %4020 = vmatprep.mubr.f32.mxu0 0.0
      %4021 = vmatmul.mubr.f32.gmra.mrb[0].mxu0 %v3863
      %v4022 = vpop.f32.mrb[0].mxu0
      %v4023 = vadd.f32 0.0, %v4022
      %v4024 = vpop.f32.mrb[0].mxu0
      %4025 = vmatprep.mubr.f32.mxu0 0.0
      %4026 = vmatmul.mubr.f32.gmra.mrb[0].mxu0 %v3864
      %v4027 = vpop.f32.mrb[0].mxu0
      %v4028 = vadd.f32 0.0, %v4027
      %v4029 = vpop.f32.mrb[0].mxu0
      %4030 = vmatprep.mubr.f32.mxu0 0.0
      %4031 = vmatmul.mubr.f32.gmra.mrb[0].mxu0 %v3865
      %v4032 = vpop.f32.mrb[0].mxu0
      %v4033 = vadd.f32 0.0, %v4032
      %v4034 = vpop.f32.mrb[0].mxu0
      %4035 = vmatprep.mubr.f32.mxu0 0.0
      %4036 = vmatmul.mubr.f32.gmra.mrb[0].mxu0 %v3866
      %v4037 = vpop.f32.mrb[0].mxu0
      %v4038 = vadd.f32 0.0, %v4037
      %v4039 = vpop.f32.mrb[0].mxu0
      %4040 = vmatprep.mubr.f32.mxu0 0.0
      %4041 = vmatmul.mubr.f32.gmra.mrb[0].mxu0 %v3867
      %v4042 = vpop.f32.mrb[0].mxu0
      %v4043 = vadd.f32 0.0, %v4042
      %v4044 = vpop.f32.mrb[0].mxu0
      %4045 = vmatprep.mubr.f32.mxu0 0.0
      %4046 = vmatmul.mubr.f32.gmra.mrb[0].mxu0 %v3868
      %v4047 = vpop.f32.mrb[0].mxu0
      %v4048 = vadd.f32 0.0, %v4047
      %v4049 = vpop.f32.mrb[0].mxu0
      %4050 = vmatprep.mubr.f32.mxu0 0.0
      %4051 = vmatmul.mubr.f32.gmra.mrb[0].mxu0 %v3869
      %v4052 = vpop.f32.mrb[0].mxu0
      %v4053 = vadd.f32 0.0, %v4052
      %v4054 = vpop.f32.mrb[0].mxu0
      %4055 = vmatprep.mubr.f32.mxu0 0.0
      %4056 = vmatmul.mubr.f32.gmra.mrb[0].mxu0 %v3870
      %v4057 = vpop.f32.mrb[0].mxu0
      %v4058 = vadd.f32 0.0, %v4057
      %v4059 = vpop.f32.mrb[0].mxu0
      %4060 = vmatprep.mubr.f32.mxu0 0.0
      %4061 = vmatmul.mubr.f32.gmra.mrb[0].mxu0 %v3871
      %v4062 = vpop.f32.mrb[0].mxu0
      %v4063 = vadd.f32 0.0, %v4062
      %v4064 = vpop.f32.mrb[0].mxu0
      %4065 = vmatprep.mubr.f32.mxu0 0.0
      %4066 = vmatmul.mubr.f32.gmra.mrb[0].mxu0 %v3872
      %v4067 = vpop.f32.mrb[0].mxu0
      %v4068 = vadd.f32 0.0, %v4067
      %v4069 = vpop.f32.mrb[0].mxu0
      %4070 = vmatprep.mubr.f32.mxu0 0.0
      %4071 = vmatmul.mubr.f32.gmra.mrb[0].mxu0 %v3873
      %v4072 = vpop.f32.mrb[0].mxu0
      %v4073 = vadd.f32 0.0, %v4072
      %v4074 = vpop.f32.mrb[0].mxu0
      %4075 = vmatprep.mubr.f32.mxu0 0.0
      %4076 = vmatmul.mubr.f32.gmra.mrb[0].mxu0 %v3874
      %v4077 = vpop.f32.mrb[0].mxu0
      %v4078 = vadd.f32 0.0, %v4077
      %v4079 = vpop.f32.mrb[0].mxu0
      %4080 = vmatprep.mubr.f32.mxu0 0.0
      %4081 = vmatmul.mubr.f32.gmra.mrb[0].mxu0 %v3875
      %v4082 = vpop.f32.mrb[0].mxu0
      %v4083 = vadd.f32 0.0, %v4082
      %v4084 = vpop.f32.mrb[0].mxu0
      %4085 = vmatprep.mubr.f32.mxu0 0.0
      %4086 = vmatmul.mubr.f32.gmra.mrb[0].mxu0 %v3876
      %v4087 = vpop.f32.mrb[0].mxu0
      %v4088 = vadd.f32 0.0, %v4087
      %v4089 = vpop.f32.mrb[0].mxu0
      %4090 = vmatprep.mubr.f32.mxu0 0.0
      %4091 = vmatmul.mubr.f32.gmra.mrb[0].mxu0 %v3877
      %v4092 = vpop.f32.mrb[0].mxu0
      %v4093 = vadd.f32 0.0, %v4092
      %v4094 = vpop.f32.mrb[0].mxu0
      %4095 = vmatprep.mubr.f32.mxu0 0.0
      %4096 = vmatmul.mubr.f32.gmra.mrb[0].mxu0 %v3878
      %v4097 = vpop.f32.mrb[0].mxu0
      %v4098 = vadd.f32 0.0, %v4097
      %v4099 = vpop.f32.mrb[0].mxu0
      %4100 = vmatprep.mubr.f32.mxu0 0.0
      %4101 = vmatmul.mubr.f32.gmra.mrb[0].mxu0 %v3879
      %v4102 = vpop.f32.mrb[0].mxu0
      %v4103 = vadd.f32 0.0, %v4102
      %v4104 = vpop.f32.mrb[0].mxu0
      %4105 = vmatprep.mubr.f32.mxu0 0.0
      %4106 = vmatmul.mubr.f32.gmra.mrb[0].mxu0 %v3880
      %v4107 = vpop.f32.mrb[0].mxu0
      %v4108 = vadd.f32 0.0, %v4107
      %v4109 = vpop.f32.mrb[0].mxu0
      %4110 = vmatprep.mubr.f32.mxu0 0.0
      %4111 = vmatmul.mubr.f32.gmra.mrb[0].mxu0 %v3881
      %v4112 = vpop.f32.mrb[0].mxu0
      %v4113 = vadd.f32 0.0, %v4112
      %v4114 = vpop.f32.mrb[0].mxu0
      %4115 = vmatprep.mubr.f32.mxu0 0.0
      %4116 = vmatmul.mubr.f32.gmra.mrb[0].mxu0 %v3882
      %v4117 = vpop.f32.mrb[0].mxu0
      %v4118 = vadd.f32 0.0, %v4117
      %v4119 = vpop.f32.mrb[0].mxu0
      %4120 = vmatprep.mubr.f32.mxu0 0.0
      %4121 = vmatmul.mubr.f32.gmra.mrb[0].mxu0 %v3883
      %v4122 = vpop.f32.mrb[0].mxu0
      %v4123 = vadd.f32 0.0, %v4122
      %v4124 = vpop.f32.mrb[0].mxu0
      %4125 = vdwg.mxu0
      %4126 = vmatprep.subr.mxu0 0.0
      %4127 = vmatpush1.msra.mxu0 %v3836
      %4128 = vmatprep.subr.mxu0 0.0
      %4129 = vmatpush1.msra.mxu0 %v3837
      %4130 = vmatprep.subr.mxu0 0.0
      %4131 = vmatpush1.msra.mxu0 %v3838
      %4132 = vmatprep.subr.mxu0 0.0
      %4133 = vmatpush1.msra.mxu0 %v3839
      %4134 = vmatprep.subr.mxu0 0.0
      %4135 = vmatpush1.msra.mxu0 %v3840
      %4136 = vmatprep.subr.mxu0 0.0
      %4137 = vmatpush1.msra.mxu0 %v3841
      %4138 = vmatprep.subr.mxu0 0.0
      %4139 = vmatpush1.msra.mxu0 %v3842
      %4140 = vmatprep.subr.mxu0 0.0
      %4141 = vmatpush1.msra.mxu0 %v3843
      %4142 = vmatprep.subr.mxu0 0.0
      %4143 = vmatpush1.msra.mxu0 %v3844
      %4144 = vmatprep.subr.mxu0 0.0
      %4145 = vmatpush1.msra.mxu0 %v3845
      %4146 = vmatprep.subr.mxu0 0.0
      %4147 = vmatpush1.msra.mxu0 %v3846
      %4148 = vmatprep.subr.mxu0 0.0
      %4149 = vmatpush1.msra.mxu0 %v3847
      %4150 = vmatprep.subr.mxu0 0.0
      %4151 = vmatpush1.msra.mxu0 %v3848
      %4152 = vmatprep.subr.mxu0 0.0
      %4153 = vmatpush1.msra.mxu0 %v3849
      %4154 = vmatprep.subr.mxu0 0.0
      %4155 = vmatpush1.msra.mxu0 %v3850
      %4156 = vmatprep.subr.mxu0 0.0
      %4157 = vmatpush1.msra.mxu0 %v3851
      %4158 = vmatprep.subr.mxu0 0.0
      %4159 = vmatpush1.msra.mxu0 0.0
      %4160 = vmatprep.subr.mxu0 0.0
      %4161 = vmatpush1.msra.mxu0 0.0
      %4162 = vmatprep.subr.mxu0 0.0
      %4163 = vmatpush1.msra.mxu0 0.0
      %4164 = vmatprep.subr.mxu0 0.0
      %4165 = vmatpush1.msra.mxu0 0.0
      %4166 = vmatprep.subr.mxu0 0.0
      %4167 = vmatpush1.msra.mxu0 0.0
      %4168 = vmatprep.subr.mxu0 0.0
      %4169 = vmatpush1.msra.mxu0 0.0
      %4170 = vmatprep.subr.mxu0 0.0
      %4171 = vmatpush1.msra.mxu0 0.0
      %4172 = vmatprep.subr.mxu0 0.0
      %4173 = vmatpush1.msra.mxu0 0.0
      %4174 = vmatprep.subr.mxu0 0.0
      %4175 = vmatpush1.msra.mxu0 0.0
      %4176 = vmatprep.subr.mxu0 0.0
      %4177 = vmatpush1.msra.mxu0 0.0
      %4178 = vmatprep.subr.mxu0 0.0
      %4179 = vmatpush1.msra.mxu0 0.0
      %4180 = vmatprep.subr.mxu0 0.0
      %4181 = vmatpush1.msra.mxu0 0.0
      %4182 = vmatprep.subr.mxu0 0.0
      %4183 = vmatpush1.msra.mxu0 0.0
      %4184 = vmatprep.subr.mxu0 0.0
      %4185 = vmatpush1.msra.mxu0 0.0
      %4186 = vmatprep.subr.mxu0 0.0
      %4187 = vmatpush1.msra.mxu0 0.0
      %4188 = vmatprep.subr.mxu0 0.0
      %4189 = vmatpush1.msra.mxu0 0.0
      %4190 = vmatprep.mubr.f32.mxu0 0.0
      %4191 = vmatmul.mubr.f32.gmra.mrb[0].mxu0 %v3804
      %v4192 = vpop.f32.mrb[0].mxu0
      %v4193 = vadd.f32 %v3968, %v4192
      %v4194 = vpop.f32.mrb[0].mxu0
      %4195 = vmatprep.mubr.f32.mxu0 0.0
      %4196 = vmatmul.mubr.f32.gmra.mrb[0].mxu0 %v3805
      %v4197 = vpop.f32.mrb[0].mxu0
      %v4198 = vadd.f32 %v3973, %v4197
      %v4199 = vpop.f32.mrb[0].mxu0
      %4200 = vmatprep.mubr.f32.mxu0 0.0
      %4201 = vmatmul.mubr.f32.gmra.mrb[0].mxu0 %v3806
      %v4202 = vpop.f32.mrb[0].mxu0
      %v4203 = vadd.f32 %v3978, %v4202
      %v4204 = vpop.f32.mrb[0].mxu0
      %4205 = vmatprep.mubr.f32.mxu0 0.0
      %4206 = vmatmul.mubr.f32.gmra.mrb[0].mxu0 %v3807
      %v4207 = vpop.f32.mrb[0].mxu0
      %v4208 = vadd.f32 %v3983, %v4207
      %v4209 = vpop.f32.mrb[0].mxu0
      %4210 = vmatprep.mubr.f32.mxu0 0.0
      %4211 = vmatmul.mubr.f32.gmra.mrb[0].mxu0 %v3808
      %v4212 = vpop.f32.mrb[0].mxu0
      %v4213 = vadd.f32 %v3988, %v4212
      %v4214 = vpop.f32.mrb[0].mxu0
      %4215 = vmatprep.mubr.f32.mxu0 0.0
      %4216 = vmatmul.mubr.f32.gmra.mrb[0].mxu0 %v3809
      %v4217 = vpop.f32.mrb[0].mxu0
      %v4218 = vadd.f32 %v3993, %v4217
      %v4219 = vpop.f32.mrb[0].mxu0
      %4220 = vmatprep.mubr.f32.mxu0 0.0
      %4221 = vmatmul.mubr.f32.gmra.mrb[0].mxu0 %v3810
      %v4222 = vpop.f32.mrb[0].mxu0
      %v4223 = vadd.f32 %v3998, %v4222
      %v4224 = vpop.f32.mrb[0].mxu0
      %4225 = vmatprep.mubr.f32.mxu0 0.0
      %4226 = vmatmul.mubr.f32.gmra.mrb[0].mxu0 %v3811
      %v4227 = vpop.f32.mrb[0].mxu0
      %v4228 = vadd.f32 %v4003, %v4227
      %v4229 = vpop.f32.mrb[0].mxu0
      %4230 = vmatprep.mubr.f32.mxu0 0.0
      %4231 = vmatmul.mubr.f32.gmra.mrb[0].mxu0 %v3812
      %v4232 = vpop.f32.mrb[0].mxu0
      %v4233 = vadd.f32 %v4008, %v4232
      %v4234 = vpop.f32.mrb[0].mxu0
      %4235 = vmatprep.mubr.f32.mxu0 0.0
      %4236 = vmatmul.mubr.f32.gmra.mrb[0].mxu0 %v3813
      %v4237 = vpop.f32.mrb[0].mxu0
      %v4238 = vadd.f32 %v4013, %v4237
      %v4239 = vpop.f32.mrb[0].mxu0
      %4240 = vmatprep.mubr.f32.mxu0 0.0
      %4241 = vmatmul.mubr.f32.gmra.mrb[0].mxu0 %v3814
      %v4242 = vpop.f32.mrb[0].mxu0
      %v4243 = vadd.f32 %v4018, %v4242
      %v4244 = vpop.f32.mrb[0].mxu0
      %4245 = vmatprep.mubr.f32.mxu0 0.0
      %4246 = vmatmul.mubr.f32.gmra.mrb[0].mxu0 %v3815
      %v4247 = vpop.f32.mrb[0].mxu0
      %v4248 = vadd.f32 %v4023, %v4247
      %v4249 = vpop.f32.mrb[0].mxu0
      %4250 = vmatprep.mubr.f32.mxu0 0.0
      %4251 = vmatmul.mubr.f32.gmra.mrb[0].mxu0 %v3816
      %v4252 = vpop.f32.mrb[0].mxu0
      %v4253 = vadd.f32 %v4028, %v4252
      %v4254 = vpop.f32.mrb[0].mxu0
      %4255 = vmatprep.mubr.f32.mxu0 0.0
      %4256 = vmatmul.mubr.f32.gmra.mrb[0].mxu0 %v3817
      %v4257 = vpop.f32.mrb[0].mxu0
      %v4258 = vadd.f32 %v4033, %v4257
      %v4259 = vpop.f32.mrb[0].mxu0
      %4260 = vmatprep.mubr.f32.mxu0 0.0
      %4261 = vmatmul.mubr.f32.gmra.mrb[0].mxu0 %v3818
      %v4262 = vpop.f32.mrb[0].mxu0
      %v4263 = vadd.f32 %v4038, %v4262
      %v4264 = vpop.f32.mrb[0].mxu0
      %4265 = vmatprep.mubr.f32.mxu0 0.0
      %4266 = vmatmul.mubr.f32.gmra.mrb[0].mxu0 %v3819
      %v4267 = vpop.f32.mrb[0].mxu0
      %v4268 = vadd.f32 %v4043, %v4267
      %v4269 = vpop.f32.mrb[0].mxu0
      %4270 = vmatprep.mubr.f32.mxu0 0.0
      %4271 = vmatmul.mubr.f32.gmra.mrb[0].mxu0 %v3820
      %v4272 = vpop.f32.mrb[0].mxu0
      %v4273 = vadd.f32 %v4048, %v4272
      %v4274 = vpop.f32.mrb[0].mxu0
      %4275 = vmatprep.mubr.f32.mxu0 0.0
      %4276 = vmatmul.mubr.f32.gmra.mrb[0].mxu0 %v3821
      %v4277 = vpop.f32.mrb[0].mxu0
      %v4278 = vadd.f32 %v4053, %v4277
      %v4279 = vpop.f32.mrb[0].mxu0
      %4280 = vmatprep.mubr.f32.mxu0 0.0
      %4281 = vmatmul.mubr.f32.gmra.mrb[0].mxu0 %v3822
      %v4282 = vpop.f32.mrb[0].mxu0
      %v4283 = vadd.f32 %v4058, %v4282
      %v4284 = vpop.f32.mrb[0].mxu0
      %4285 = vmatprep.mubr.f32.mxu0 0.0
      %4286 = vmatmul.mubr.f32.gmra.mrb[0].mxu0 %v3823
      %v4287 = vpop.f32.mrb[0].mxu0
      %v4288 = vadd.f32 %v4063, %v4287
      %v4289 = vpop.f32.mrb[0].mxu0
      %4290 = vmatprep.mubr.f32.mxu0 0.0
      %4291 = vmatmul.mubr.f32.gmra.mrb[0].mxu0 %v3824
      %v4292 = vpop.f32.mrb[0].mxu0
      %v4293 = vadd.f32 %v4068, %v4292
      %v4294 = vpop.f32.mrb[0].mxu0
      %4295 = vmatprep.mubr.f32.mxu0 0.0
      %4296 = vmatmul.mubr.f32.gmra.mrb[0].mxu0 %v3825
      %v4297 = vpop.f32.mrb[0].mxu0
      %v4298 = vadd.f32 %v4073, %v4297
      %v4299 = vpop.f32.mrb[0].mxu0
      %4300 = vmatprep.mubr.f32.mxu0 0.0
      %4301 = vmatmul.mubr.f32.gmra.mrb[0].mxu0 %v3826
      %v4302 = vpop.f32.mrb[0].mxu0
      %v4303 = vadd.f32 %v4078, %v4302
      %v4304 = vpop.f32.mrb[0].mxu0
      %4305 = vmatprep.mubr.f32.mxu0 0.0
      %4306 = vmatmul.mubr.f32.gmra.mrb[0].mxu0 %v3827
      %v4307 = vpop.f32.mrb[0].mxu0
      %v4308 = vadd.f32 %v4083, %v4307
      %v4309 = vpop.f32.mrb[0].mxu0
      %4310 = vmatprep.mubr.f32.mxu0 0.0
      %4311 = vmatmul.mubr.f32.gmra.mrb[0].mxu0 %v3828
      %v4312 = vpop.f32.mrb[0].mxu0
      %v4313 = vadd.f32 %v4088, %v4312
      %v4314 = vpop.f32.mrb[0].mxu0
      %4315 = vmatprep.mubr.f32.mxu0 0.0
      %4316 = vmatmul.mubr.f32.gmra.mrb[0].mxu0 %v3829
      %v4317 = vpop.f32.mrb[0].mxu0
      %v4318 = vadd.f32 %v4093, %v4317
      %v4319 = vpop.f32.mrb[0].mxu0
      %4320 = vmatprep.mubr.f32.mxu0 0.0
      %4321 = vmatmul.mubr.f32.gmra.mrb[0].mxu0 %v3830
      %v4322 = vpop.f32.mrb[0].mxu0
      %v4323 = vadd.f32 %v4098, %v4322
      %v4324 = vpop.f32.mrb[0].mxu0
      %4325 = vmatprep.mubr.f32.mxu0 0.0
      %4326 = vmatmul.mubr.f32.gmra.mrb[0].mxu0 %v3831
      %v4327 = vpop.f32.mrb[0].mxu0
      %v4328 = vadd.f32 %v4103, %v4327
      %v4329 = vpop.f32.mrb[0].mxu0
      %4330 = vmatprep.mubr.f32.mxu0 0.0
      %4331 = vmatmul.mubr.f32.gmra.mrb[0].mxu0 %v3832
      %v4332 = vpop.f32.mrb[0].mxu0
      %v4333 = vadd.f32 %v4108, %v4332
      %v4334 = vpop.f32.mrb[0].mxu0
      %4335 = vmatprep.mubr.f32.mxu0 0.0
      %4336 = vmatmul.mubr.f32.gmra.mrb[0].mxu0 %v3833
      %v4337 = vpop.f32.mrb[0].mxu0
      %v4338 = vadd.f32 %v4113, %v4337
      %v4339 = vpop.f32.mrb[0].mxu0
      %4340 = vmatprep.mubr.f32.mxu0 0.0
      %4341 = vmatmul.mubr.f32.gmra.mrb[0].mxu0 %v3834
      %v4342 = vpop.f32.mrb[0].mxu0
      %v4343 = vadd.f32 %v4118, %v4342
      %v4344 = vpop.f32.mrb[0].mxu0
      %4345 = vmatprep.mubr.f32.mxu0 0.0
      %4346 = vmatmul.mubr.f32.gmra.mrb[0].mxu0 %v3835
      %v4347 = vpop.f32.mrb[0].mxu0
      %v4348 = vadd.f32 %v4123, %v4347
      %v4349 = vpop.f32.mrb[0].mxu0
      %4350 = vdwg.mxu0
      %v4351 = vld [vmem:[#allocation2 + $0x2] sm:$0xff]
      %v4352 = vld [vmem:[#allocation2 + $0xa] sm:$0xff]
      %v4353 = vld [vmem:[#allocation2 + $0x1a] sm:$0xff]
      %v4354 = vld [vmem:[#allocation2 + $0x22] sm:$0xff]
      %v4355 = vld [vmem:[#allocation2 + $0x32] sm:$0xff]
      %v4356 = vld [vmem:[#allocation2 + $0x3a] sm:$0xff]
      %v4357 = vld [vmem:[#allocation2 + $0x4a] sm:$0xff]
      %v4358 = vld [vmem:[#allocation2 + $0x52] sm:$0xff]
      %v4359 = vld [vmem:[#allocation2 + $0x62] sm:$0xff]
      %v4360 = vld [vmem:[#allocation2 + $0x6a] sm:$0xff]
      %v4361 = vld [vmem:[#allocation2 + $0x7a] sm:$0xff]
      %v4362 = vld [vmem:[#allocation2 + $0x82] sm:$0xff]
      %v4363 = vld [vmem:[#allocation2 + $0x92] sm:$0xff]
      %v4364 = vld [vmem:[#allocation2 + $0x9a] sm:$0xff]
      %v4365 = vld [vmem:[#allocation2 + $0xaa] sm:$0xff]
      %v4366 = vld [vmem:[#allocation2 + $0xb2] sm:$0xff]
      %v4367 = vld [vmem:[#allocation2 + $0xc2] sm:$0xff]
      %v4368 = vld [vmem:[#allocation2 + $0xca] sm:$0xff]
      %v4369 = vld [vmem:[#allocation2 + $0xda] sm:$0xff]
      %v4370 = vld [vmem:[#allocation2 + $0xe2] sm:$0xff]
      %v4371 = vld [vmem:[#allocation2 + $0xf2] sm:$0xff]
      %v4372 = vld [vmem:[#allocation2 + $0xfa] sm:$0xff]
      %v4373 = vld [vmem:[#allocation2 + $0x10a] sm:$0xff]
      %v4374 = vld [vmem:[#allocation2 + $0x112] sm:$0xff]
      %v4375 = vld [vmem:[#allocation2 + $0x122] sm:$0xff]
      %v4376 = vld [vmem:[#allocation2 + $0x12a] sm:$0xff]
      %v4377 = vld [vmem:[#allocation2 + $0x13a] sm:$0xff]
      %v4378 = vld [vmem:[#allocation2 + $0x142] sm:$0xff]
      %v4379 = vld [vmem:[#allocation2 + $0x152] sm:$0xff]
      %v4380 = vld [vmem:[#allocation2 + $0x15a] sm:$0xff]
      %v4381 = vld [vmem:[#allocation2 + $0x16a] sm:$0xff]
      %v4382 = vld [vmem:[#allocation2 + $0x172] sm:$0xff]
      %s4383 = scalar_lea.vmem %s3, 256
      %v4384 = vld [vmem:[%s4383] sm:$0xff]
      %v4385 = vld [vmem:[%s4383 + $0x8] sm:$0xff]
      %v4386 = vld [vmem:[%s4383 + $0x10] sm:$0xff]
      %v4387 = vld [vmem:[%s4383 + $0x18] sm:$0xff]
      %v4388 = vld [vmem:[%s4383 + $0x20] sm:$0xff]
      %v4389 = vld [vmem:[%s4383 + $0x28] sm:$0xff]
      %v4390 = vld [vmem:[%s4383 + $0x30] sm:$0xff]
      %v4391 = vld [vmem:[%s4383 + $0x38] sm:$0xff]
      %v4392 = vld [vmem:[%s4383 + $0x40] sm:$0xff]
      %v4393 = vld [vmem:[%s4383 + $0x48] sm:$0xff]
      %v4394 = vld [vmem:[%s4383 + $0x50] sm:$0xff]
      %v4395 = vld [vmem:[%s4383 + $0x58] sm:$0xff]
      %v4396 = vld [vmem:[%s4383 + $0x60] sm:$0xff]
      %v4397 = vld [vmem:[%s4383 + $0x68] sm:$0xff]
      %v4398 = vld [vmem:[%s4383 + $0x70] sm:$0xff]
      %v4399 = vld [vmem:[%s4383 + $0x78] sm:$0xff]
      %4400 = vmatprep.subr.mxu0 0.0
      %4401 = vmatpush1.msra.mxu0 %v4384
      %4402 = vmatprep.subr.mxu0 0.0
      %4403 = vmatpush1.msra.mxu0 %v4385
      %4404 = vmatprep.subr.mxu0 0.0
      %4405 = vmatpush1.msra.mxu0 %v4386
      %4406 = vmatprep.subr.mxu0 0.0
      %4407 = vmatpush1.msra.mxu0 %v4387
      %4408 = vmatprep.subr.mxu0 0.0
      %4409 = vmatpush1.msra.mxu0 %v4388
      %4410 = vmatprep.subr.mxu0 0.0
      %4411 = vmatpush1.msra.mxu0 %v4389
      %4412 = vmatprep.subr.mxu0 0.0
      %4413 = vmatpush1.msra.mxu0 %v4390
      %4414 = vmatprep.subr.mxu0 0.0
      %4415 = vmatpush1.msra.mxu0 %v4391
      %4416 = vmatprep.subr.mxu0 0.0
      %4417 = vmatpush1.msra.mxu0 %v4392
      %4418 = vmatprep.subr.mxu0 0.0
      %4419 = vmatpush1.msra.mxu0 %v4393
      %4420 = vmatprep.subr.mxu0 0.0
      %4421 = vmatpush1.msra.mxu0 %v4394
      %4422 = vmatprep.subr.mxu0 0.0
      %4423 = vmatpush1.msra.mxu0 %v4395
      %4424 = vmatprep.subr.mxu0 0.0
      %4425 = vmatpush1.msra.mxu0 %v4396
      %4426 = vmatprep.subr.mxu0 0.0
      %4427 = vmatpush1.msra.mxu0 %v4397
      %4428 = vmatprep.subr.mxu0 0.0
      %4429 = vmatpush1.msra.mxu0 %v4398
      %4430 = vmatprep.subr.mxu0 0.0
      %4431 = vmatpush1.msra.mxu0 %v4399
      %4432 = vmatprep.subr.mxu0 0.0
      %4433 = vmatpush1.msra.mxu0 0.0
      %4434 = vmatprep.subr.mxu0 0.0
      %4435 = vmatpush1.msra.mxu0 0.0
      %4436 = vmatprep.subr.mxu0 0.0
      %4437 = vmatpush1.msra.mxu0 0.0
      %4438 = vmatprep.subr.mxu0 0.0
      %4439 = vmatpush1.msra.mxu0 0.0
      %4440 = vmatprep.subr.mxu0 0.0
      %4441 = vmatpush1.msra.mxu0 0.0
      %4442 = vmatprep.subr.mxu0 0.0
      %4443 = vmatpush1.msra.mxu0 0.0
      %4444 = vmatprep.subr.mxu0 0.0
      %4445 = vmatpush1.msra.mxu0 0.0
      %4446 = vmatprep.subr.mxu0 0.0
      %4447 = vmatpush1.msra.mxu0 0.0
      %4448 = vmatprep.subr.mxu0 0.0
      %4449 = vmatpush1.msra.mxu0 0.0
      %4450 = vmatprep.subr.mxu0 0.0
      %4451 = vmatpush1.msra.mxu0 0.0
      %4452 = vmatprep.subr.mxu0 0.0
      %4453 = vmatpush1.msra.mxu0 0.0
      %4454 = vmatprep.subr.mxu0 0.0
      %4455 = vmatpush1.msra.mxu0 0.0
      %4456 = vmatprep.subr.mxu0 0.0
      %4457 = vmatpush1.msra.mxu0 0.0
      %4458 = vmatprep.subr.mxu0 0.0
      %4459 = vmatpush1.msra.mxu0 0.0
      %4460 = vmatprep.subr.mxu0 0.0
      %4461 = vmatpush1.msra.mxu0 0.0
      %4462 = vmatprep.subr.mxu0 0.0
      %4463 = vmatpush1.msra.mxu0 0.0
      %4464 = vmatprep.mubr.f32.mxu0 0.0
      %4465 = vmatmul.mubr.f32.gmra.mrb[0].mxu0 %v4351
      %v4466 = vpop.f32.mrb[0].mxu0
      %v4467 = vadd.f32 0.0, %v4466
      %v4468 = vpop.f32.mrb[0].mxu0
      %4469 = vmatprep.mubr.f32.mxu0 0.0
      %4470 = vmatmul.mubr.f32.gmra.mrb[0].mxu0 %v4352
      %v4471 = vpop.f32.mrb[0].mxu0
      %v4472 = vadd.f32 0.0, %v4471
      %v4473 = vpop.f32.mrb[0].mxu0
      %4474 = vmatprep.mubr.f32.mxu0 0.0
      %4475 = vmatmul.mubr.f32.gmra.mrb[0].mxu0 %v4353
      %v4476 = vpop.f32.mrb[0].mxu0
      %v4477 = vadd.f32 0.0, %v4476
      %v4478 = vpop.f32.mrb[0].mxu0
      %4479 = vmatprep.mubr.f32.mxu0 0.0
      %4480 = vmatmul.mubr.f32.gmra.mrb[0].mxu0 %v4354
      %v4481 = vpop.f32.mrb[0].mxu0
      %v4482 = vadd.f32 0.0, %v4481
      %v4483 = vpop.f32.mrb[0].mxu0
      %4484 = vmatprep.mubr.f32.mxu0 0.0
      %4485 = vmatmul.mubr.f32.gmra.mrb[0].mxu0 %v4355
      %v4486 = vpop.f32.mrb[0].mxu0
      %v4487 = vadd.f32 0.0, %v4486
      %v4488 = vpop.f32.mrb[0].mxu0
      %4489 = vmatprep.mubr.f32.mxu0 0.0
      %4490 = vmatmul.mubr.f32.gmra.mrb[0].mxu0 %v4356
      %v4491 = vpop.f32.mrb[0].mxu0
      %v4492 = vadd.f32 0.0, %v4491
      %v4493 = vpop.f32.mrb[0].mxu0
      %4494 = vmatprep.mubr.f32.mxu0 0.0
      %4495 = vmatmul.mubr.f32.gmra.mrb[0].mxu0 %v4357
      %v4496 = vpop.f32.mrb[0].mxu0
      %v4497 = vadd.f32 0.0, %v4496
      %v4498 = vpop.f32.mrb[0].mxu0
      %4499 = vmatprep.mubr.f32.mxu0 0.0
      %4500 = vmatmul.mubr.f32.gmra.mrb[0].mxu0 %v4358
      %v4501 = vpop.f32.mrb[0].mxu0
      %v4502 = vadd.f32 0.0, %v4501
      %v4503 = vpop.f32.mrb[0].mxu0
      %4504 = vmatprep.mubr.f32.mxu0 0.0
      %4505 = vmatmul.mubr.f32.gmra.mrb[0].mxu0 %v4359
      %v4506 = vpop.f32.mrb[0].mxu0
      %v4507 = vadd.f32 0.0, %v4506
      %v4508 = vpop.f32.mrb[0].mxu0
      %4509 = vmatprep.mubr.f32.mxu0 0.0
      %4510 = vmatmul.mubr.f32.gmra.mrb[0].mxu0 %v4360
      %v4511 = vpop.f32.mrb[0].mxu0
      %v4512 = vadd.f32 0.0, %v4511
      %v4513 = vpop.f32.mrb[0].mxu0
      %4514 = vmatprep.mubr.f32.mxu0 0.0
      %4515 = vmatmul.mubr.f32.gmra.mrb[0].mxu0 %v4361
      %v4516 = vpop.f32.mrb[0].mxu0
      %v4517 = vadd.f32 0.0, %v4516
      %v4518 = vpop.f32.mrb[0].mxu0
      %4519 = vmatprep.mubr.f32.mxu0 0.0
      %4520 = vmatmul.mubr.f32.gmra.mrb[0].mxu0 %v4362
      %v4521 = vpop.f32.mrb[0].mxu0
      %v4522 = vadd.f32 0.0, %v4521
      %v4523 = vpop.f32.mrb[0].mxu0
      %4524 = vmatprep.mubr.f32.mxu0 0.0
      %4525 = vmatmul.mubr.f32.gmra.mrb[0].mxu0 %v4363
      %v4526 = vpop.f32.mrb[0].mxu0
      %v4527 = vadd.f32 0.0, %v4526
      %v4528 = vpop.f32.mrb[0].mxu0
      %4529 = vmatprep.mubr.f32.mxu0 0.0
      %4530 = vmatmul.mubr.f32.gmra.mrb[0].mxu0 %v4364
      %v4531 = vpop.f32.mrb[0].mxu0
      %v4532 = vadd.f32 0.0, %v4531
      %v4533 = vpop.f32.mrb[0].mxu0
      %4534 = vmatprep.mubr.f32.mxu0 0.0
      %4535 = vmatmul.mubr.f32.gmra.mrb[0].mxu0 %v4365
      %v4536 = vpop.f32.mrb[0].mxu0
      %v4537 = vadd.f32 0.0, %v4536
      %v4538 = vpop.f32.mrb[0].mxu0
      %4539 = vmatprep.mubr.f32.mxu0 0.0
      %4540 = vmatmul.mubr.f32.gmra.mrb[0].mxu0 %v4366
      %v4541 = vpop.f32.mrb[0].mxu0
      %v4542 = vadd.f32 0.0, %v4541
      %v4543 = vpop.f32.mrb[0].mxu0
      %4544 = vmatprep.mubr.f32.mxu0 0.0
      %4545 = vmatmul.mubr.f32.gmra.mrb[0].mxu0 %v4367
      %v4546 = vpop.f32.mrb[0].mxu0
      %v4547 = vadd.f32 0.0, %v4546
      %v4548 = vpop.f32.mrb[0].mxu0
      %4549 = vmatprep.mubr.f32.mxu0 0.0
      %4550 = vmatmul.mubr.f32.gmra.mrb[0].mxu0 %v4368
      %v4551 = vpop.f32.mrb[0].mxu0
      %v4552 = vadd.f32 0.0, %v4551
      %v4553 = vpop.f32.mrb[0].mxu0
      %4554 = vmatprep.mubr.f32.mxu0 0.0
      %4555 = vmatmul.mubr.f32.gmra.mrb[0].mxu0 %v4369
      %v4556 = vpop.f32.mrb[0].mxu0
      %v4557 = vadd.f32 0.0, %v4556
      %v4558 = vpop.f32.mrb[0].mxu0
      %4559 = vmatprep.mubr.f32.mxu0 0.0
      %4560 = vmatmul.mubr.f32.gmra.mrb[0].mxu0 %v4370
      %v4561 = vpop.f32.mrb[0].mxu0
      %v4562 = vadd.f32 0.0, %v4561
      %v4563 = vpop.f32.mrb[0].mxu0
      %4564 = vmatprep.mubr.f32.mxu0 0.0
      %4565 = vmatmul.mubr.f32.gmra.mrb[0].mxu0 %v4371
      %v4566 = vpop.f32.mrb[0].mxu0
      %v4567 = vadd.f32 0.0, %v4566
      %v4568 = vpop.f32.mrb[0].mxu0
      %4569 = vmatprep.mubr.f32.mxu0 0.0
      %4570 = vmatmul.mubr.f32.gmra.mrb[0].mxu0 %v4372
      %v4571 = vpop.f32.mrb[0].mxu0
      %v4572 = vadd.f32 0.0, %v4571
      %v4573 = vpop.f32.mrb[0].mxu0
      %4574 = vmatprep.mubr.f32.mxu0 0.0
      %4575 = vmatmul.mubr.f32.gmra.mrb[0].mxu0 %v4373
      %v4576 = vpop.f32.mrb[0].mxu0
      %v4577 = vadd.f32 0.0, %v4576
      %v4578 = vpop.f32.mrb[0].mxu0
      %4579 = vmatprep.mubr.f32.mxu0 0.0
      %4580 = vmatmul.mubr.f32.gmra.mrb[0].mxu0 %v4374
      %v4581 = vpop.f32.mrb[0].mxu0
      %v4582 = vadd.f32 0.0, %v4581
      %v4583 = vpop.f32.mrb[0].mxu0
      %4584 = vmatprep.mubr.f32.mxu0 0.0
      %4585 = vmatmul.mubr.f32.gmra.mrb[0].mxu0 %v4375
      %v4586 = vpop.f32.mrb[0].mxu0
      %v4587 = vadd.f32 0.0, %v4586
      %v4588 = vpop.f32.mrb[0].mxu0
      %4589 = vmatprep.mubr.f32.mxu0 0.0
      %4590 = vmatmul.mubr.f32.gmra.mrb[0].mxu0 %v4376
      %v4591 = vpop.f32.mrb[0].mxu0
      %v4592 = vadd.f32 0.0, %v4591
      %v4593 = vpop.f32.mrb[0].mxu0
      %4594 = vmatprep.mubr.f32.mxu0 0.0
      %4595 = vmatmul.mubr.f32.gmra.mrb[0].mxu0 %v4377
      %v4596 = vpop.f32.mrb[0].mxu0
      %v4597 = vadd.f32 0.0, %v4596
      %v4598 = vpop.f32.mrb[0].mxu0
      %4599 = vmatprep.mubr.f32.mxu0 0.0
      %4600 = vmatmul.mubr.f32.gmra.mrb[0].mxu0 %v4378
      %v4601 = vpop.f32.mrb[0].mxu0
      %v4602 = vadd.f32 0.0, %v4601
      %v4603 = vpop.f32.mrb[0].mxu0
      %4604 = vmatprep.mubr.f32.mxu0 0.0
      %4605 = vmatmul.mubr.f32.gmra.mrb[0].mxu0 %v4379
      %v4606 = vpop.f32.mrb[0].mxu0
      %v4607 = vadd.f32 0.0, %v4606
      %v4608 = vpop.f32.mrb[0].mxu0
      %4609 = vmatprep.mubr.f32.mxu0 0.0
      %4610 = vmatmul.mubr.f32.gmra.mrb[0].mxu0 %v4380
      %v4611 = vpop.f32.mrb[0].mxu0
      %v4612 = vadd.f32 0.0, %v4611
      %v4613 = vpop.f32.mrb[0].mxu0
      %4614 = vmatprep.mubr.f32.mxu0 0.0
      %4615 = vmatmul.mubr.f32.gmra.mrb[0].mxu0 %v4381
      %v4616 = vpop.f32.mrb[0].mxu0
      %v4617 = vadd.f32 0.0, %v4616
      %v4618 = vpop.f32.mrb[0].mxu0
      %4619 = vmatprep.mubr.f32.mxu0 0.0
      %4620 = vmatmul.mubr.f32.gmra.mrb[0].mxu0 %v4382
      %v4621 = vpop.f32.mrb[0].mxu0
      %v4622 = vadd.f32 0.0, %v4621
      %v4623 = vpop.f32.mrb[0].mxu0
      %4624 = vdwg.mxu0
      %v4625 = vadd.f32 %v4193, %v4467
      %v4626 = vadd.f32 %v4198, %v4472
      %v4627 = vadd.f32 %v4203, %v4477
      %v4628 = vadd.f32 %v4208, %v4482
      %v4629 = vadd.f32 %v4213, %v4487
      %v4630 = vadd.f32 %v4218, %v4492
      %v4631 = vadd.f32 %v4223, %v4497
      %v4632 = vadd.f32 %v4228, %v4502
      %v4633 = vadd.f32 %v4233, %v4507
      %v4634 = vadd.f32 %v4238, %v4512
      %v4635 = vadd.f32 %v4243, %v4517
      %v4636 = vadd.f32 %v4248, %v4522
      %v4637 = vadd.f32 %v4253, %v4527
      %v4638 = vadd.f32 %v4258, %v4532
      %v4639 = vadd.f32 %v4263, %v4537
      %v4640 = vadd.f32 %v4268, %v4542
      %v4641 = vadd.f32 %v4273, %v4547
      %v4642 = vadd.f32 %v4278, %v4552
      %v4643 = vadd.f32 %v4283, %v4557
      %v4644 = vadd.f32 %v4288, %v4562
      %v4645 = vadd.f32 %v4293, %v4567
      %v4646 = vadd.f32 %v4298, %v4572
      %v4647 = vadd.f32 %v4303, %v4577
      %v4648 = vadd.f32 %v4308, %v4582
      %v4649 = vadd.f32 %v4313, %v4587
      %v4650 = vadd.f32 %v4318, %v4592
      %v4651 = vadd.f32 %v4323, %v4597
      %v4652 = vadd.f32 %v4328, %v4602
      %v4653 = vadd.f32 %v4333, %v4607
      %v4654 = vadd.f32 %v4338, %v4612
      %v4655 = vadd.f32 %v4343, %v4617
      %v4656 = vadd.f32 %v4348, %v4622
      %v4657 = vld [vmem:[%s3771] sm:$0xff]
      %v4658 = vld [vmem:[%s3771 + $0x8] sm:$0xff]
      %v4659 = vld [vmem:[%s3771 + $0x18] sm:$0xff]
      %v4660 = vld [vmem:[%s3771 + $0x20] sm:$0xff]
      %v4661 = vld [vmem:[%s3771 + $0x30] sm:$0xff]
      %v4662 = vld [vmem:[%s3771 + $0x38] sm:$0xff]
      %v4663 = vld [vmem:[%s3771 + $0x48] sm:$0xff]
      %v4664 = vld [vmem:[%s3771 + $0x50] sm:$0xff]
      %v4665 = vld [vmem:[%s3771 + $0x60] sm:$0xff]
      %v4666 = vld [vmem:[%s3771 + $0x68] sm:$0xff]
      %v4667 = vld [vmem:[%s3771 + $0x78] sm:$0xff]
      %v4668 = vld [vmem:[%s3771 + $0x80] sm:$0xff]
      %v4669 = vld [vmem:[%s3771 + $0x90] sm:$0xff]
      %v4670 = vld [vmem:[%s3771 + $0x98] sm:$0xff]
      %v4671 = vld [vmem:[%s3771 + $0xa8] sm:$0xff]
      %v4672 = vld [vmem:[%s3771 + $0xb0] sm:$0xff]
      %v4673 = vld [vmem:[%s3771 + $0xc0] sm:$0xff]
      %v4674 = vld [vmem:[%s3771 + $0xc8] sm:$0xff]
      %v4675 = vld [vmem:[%s3771 + $0xd8] sm:$0xff]
      %v4676 = vld [vmem:[%s3771 + $0xe0] sm:$0xff]
      %v4677 = vld [vmem:[%s3771 + $0xf0] sm:$0xff]
      %v4678 = vld [vmem:[%s3771 + $0xf8] sm:$0xff]
      %v4679 = vld [vmem:[%s3771 + $0x108] sm:$0xff]
      %v4680 = vld [vmem:[%s3771 + $0x110] sm:$0xff]
      %v4681 = vld [vmem:[%s3771 + $0x120] sm:$0xff]
      %v4682 = vld [vmem:[%s3771 + $0x128] sm:$0xff]
      %v4683 = vld [vmem:[%s3771 + $0x138] sm:$0xff]
      %v4684 = vld [vmem:[%s3771 + $0x140] sm:$0xff]
      %v4685 = vld [vmem:[%s3771 + $0x150] sm:$0xff]
      %v4686 = vld [vmem:[%s3771 + $0x158] sm:$0xff]
      %v4687 = vld [vmem:[%s3771 + $0x168] sm:$0xff]
      %v4688 = vld [vmem:[%s3771 + $0x170] sm:$0xff]
      %s4689 = scalar_lea.vmem %s3, 384
      %v4690 = vld [vmem:[%s4689] sm:$0xff]
      %v4691 = vld [vmem:[%s4689 + $0x8] sm:$0xff]
      %v4692 = vld [vmem:[%s4689 + $0x10] sm:$0xff]
      %v4693 = vld [vmem:[%s4689 + $0x18] sm:$0xff]
      %v4694 = vld [vmem:[%s4689 + $0x20] sm:$0xff]
      %v4695 = vld [vmem:[%s4689 + $0x28] sm:$0xff]
      %v4696 = vld [vmem:[%s4689 + $0x30] sm:$0xff]
      %v4697 = vld [vmem:[%s4689 + $0x38] sm:$0xff]
      %v4698 = vld [vmem:[%s4689 + $0x40] sm:$0xff]
      %v4699 = vld [vmem:[%s4689 + $0x48] sm:$0xff]
      %v4700 = vld [vmem:[%s4689 + $0x50] sm:$0xff]
      %v4701 = vld [vmem:[%s4689 + $0x58] sm:$0xff]
      %v4702 = vld [vmem:[%s4689 + $0x60] sm:$0xff]
      %v4703 = vld [vmem:[%s4689 + $0x68] sm:$0xff]
      %v4704 = vld [vmem:[%s4689 + $0x70] sm:$0xff]
      %v4705 = vld [vmem:[%s4689 + $0x78] sm:$0xff]
      %4706 = vmatprep.subr.mxu0 0.0
      %4707 = vmatpush1.msra.mxu0 %v4690
      %4708 = vmatprep.subr.mxu0 0.0
      %4709 = vmatpush1.msra.mxu0 %v4691
      %4710 = vmatprep.subr.mxu0 0.0
      %4711 = vmatpush1.msra.mxu0 %v4692
      %4712 = vmatprep.subr.mxu0 0.0
      %4713 = vmatpush1.msra.mxu0 %v4693
      %4714 = vmatprep.subr.mxu0 0.0
      %4715 = vmatpush1.msra.mxu0 %v4694
      %4716 = vmatprep.subr.mxu0 0.0
      %4717 = vmatpush1.msra.mxu0 %v4695
      %4718 = vmatprep.subr.mxu0 0.0
      %4719 = vmatpush1.msra.mxu0 %v4696
      %4720 = vmatprep.subr.mxu0 0.0
      %4721 = vmatpush1.msra.mxu0 %v4697
      %4722 = vmatprep.subr.mxu0 0.0
      %4723 = vmatpush1.msra.mxu0 %v4698
      %4724 = vmatprep.subr.mxu0 0.0
      %4725 = vmatpush1.msra.mxu0 %v4699
      %4726 = vmatprep.subr.mxu0 0.0
      %4727 = vmatpush1.msra.mxu0 %v4700
      %4728 = vmatprep.subr.mxu0 0.0
      %4729 = vmatpush1.msra.mxu0 %v4701
      %4730 = vmatprep.subr.mxu0 0.0
      %4731 = vmatpush1.msra.mxu0 %v4702
      %4732 = vmatprep.subr.mxu0 0.0
      %4733 = vmatpush1.msra.mxu0 %v4703
      %4734 = vmatprep.subr.mxu0 0.0
      %4735 = vmatpush1.msra.mxu0 %v4704
      %4736 = vmatprep.subr.mxu0 0.0
      %4737 = vmatpush1.msra.mxu0 %v4705
      %4738 = vmatprep.subr.mxu0 0.0
      %4739 = vmatpush1.msra.mxu0 0.0
      %4740 = vmatprep.subr.mxu0 0.0
      %4741 = vmatpush1.msra.mxu0 0.0
      %4742 = vmatprep.subr.mxu0 0.0
      %4743 = vmatpush1.msra.mxu0 0.0
      %4744 = vmatprep.subr.mxu0 0.0
      %4745 = vmatpush1.msra.mxu0 0.0
      %4746 = vmatprep.subr.mxu0 0.0
      %4747 = vmatpush1.msra.mxu0 0.0
      %4748 = vmatprep.subr.mxu0 0.0
      %4749 = vmatpush1.msra.mxu0 0.0
      %4750 = vmatprep.subr.mxu0 0.0
      %4751 = vmatpush1.msra.mxu0 0.0
      %4752 = vmatprep.subr.mxu0 0.0
      %4753 = vmatpush1.msra.mxu0 0.0
      %4754 = vmatprep.subr.mxu0 0.0
      %4755 = vmatpush1.msra.mxu0 0.0
      %4756 = vmatprep.subr.mxu0 0.0
      %4757 = vmatpush1.msra.mxu0 0.0
      %4758 = vmatprep.subr.mxu0 0.0
      %4759 = vmatpush1.msra.mxu0 0.0
      %4760 = vmatprep.subr.mxu0 0.0
      %4761 = vmatpush1.msra.mxu0 0.0
      %4762 = vmatprep.subr.mxu0 0.0
      %4763 = vmatpush1.msra.mxu0 0.0
      %4764 = vmatprep.subr.mxu0 0.0
      %4765 = vmatpush1.msra.mxu0 0.0
      %4766 = vmatprep.subr.mxu0 0.0
      %4767 = vmatpush1.msra.mxu0 0.0
      %4768 = vmatprep.subr.mxu0 0.0
      %4769 = vmatpush1.msra.mxu0 0.0
      %4770 = vmatprep.mubr.f32.mxu0 0.0
      %4771 = vmatmul.mubr.f32.gmra.mrb[0].mxu0 %v4657
      %v4772 = vpop.f32.mrb[0].mxu0
      %v4773 = vadd.f32 0.0, %v4772
      %v4774 = vpop.f32.mrb[0].mxu0
      %4775 = vmatprep.mubr.f32.mxu0 0.0
      %4776 = vmatmul.mubr.f32.gmra.mrb[0].mxu0 %v4658
      %v4777 = vpop.f32.mrb[0].mxu0
      %v4778 = vadd.f32 0.0, %v4777
      %v4779 = vpop.f32.mrb[0].mxu0
      %4780 = vmatprep.mubr.f32.mxu0 0.0
      %4781 = vmatmul.mubr.f32.gmra.mrb[0].mxu0 %v4659
      %v4782 = vpop.f32.mrb[0].mxu0
      %v4783 = vadd.f32 0.0, %v4782
      %v4784 = vpop.f32.mrb[0].mxu0
      %4785 = vmatprep.mubr.f32.mxu0 0.0
      %4786 = vmatmul.mubr.f32.gmra.mrb[0].mxu0 %v4660
      %v4787 = vpop.f32.mrb[0].mxu0
      %v4788 = vadd.f32 0.0, %v4787
      %v4789 = vpop.f32.mrb[0].mxu0
      %4790 = vmatprep.mubr.f32.mxu0 0.0
      %4791 = vmatmul.mubr.f32.gmra.mrb[0].mxu0 %v4661
      %v4792 = vpop.f32.mrb[0].mxu0
      %v4793 = vadd.f32 0.0, %v4792
      %v4794 = vpop.f32.mrb[0].mxu0
      %4795 = vmatprep.mubr.f32.mxu0 0.0
      %4796 = vmatmul.mubr.f32.gmra.mrb[0].mxu0 %v4662
      %v4797 = vpop.f32.mrb[0].mxu0
      %v4798 = vadd.f32 0.0, %v4797
      %v4799 = vpop.f32.mrb[0].mxu0
      %4800 = vmatprep.mubr.f32.mxu0 0.0
      %4801 = vmatmul.mubr.f32.gmra.mrb[0].mxu0 %v4663
      %v4802 = vpop.f32.mrb[0].mxu0
      %v4803 = vadd.f32 0.0, %v4802
      %v4804 = vpop.f32.mrb[0].mxu0
      %4805 = vmatprep.mubr.f32.mxu0 0.0
      %4806 = vmatmul.mubr.f32.gmra.mrb[0].mxu0 %v4664
      %v4807 = vpop.f32.mrb[0].mxu0
      %v4808 = vadd.f32 0.0, %v4807
      %v4809 = vpop.f32.mrb[0].mxu0
      %4810 = vmatprep.mubr.f32.mxu0 0.0
      %4811 = vmatmul.mubr.f32.gmra.mrb[0].mxu0 %v4665
      %v4812 = vpop.f32.mrb[0].mxu0
      %v4813 = vadd.f32 0.0, %v4812
      %v4814 = vpop.f32.mrb[0].mxu0
      %4815 = vmatprep.mubr.f32.mxu0 0.0
      %4816 = vmatmul.mubr.f32.gmra.mrb[0].mxu0 %v4666
      %v4817 = vpop.f32.mrb[0].mxu0
      %v4818 = vadd.f32 0.0, %v4817
      %v4819 = vpop.f32.mrb[0].mxu0
      %4820 = vmatprep.mubr.f32.mxu0 0.0
      %4821 = vmatmul.mubr.f32.gmra.mrb[0].mxu0 %v4667
      %v4822 = vpop.f32.mrb[0].mxu0
      %v4823 = vadd.f32 0.0, %v4822
      %v4824 = vpop.f32.mrb[0].mxu0
      %4825 = vmatprep.mubr.f32.mxu0 0.0
      %4826 = vmatmul.mubr.f32.gmra.mrb[0].mxu0 %v4668
      %v4827 = vpop.f32.mrb[0].mxu0
      %v4828 = vadd.f32 0.0, %v4827
      %v4829 = vpop.f32.mrb[0].mxu0
      %4830 = vmatprep.mubr.f32.mxu0 0.0
      %4831 = vmatmul.mubr.f32.gmra.mrb[0].mxu0 %v4669
      %v4832 = vpop.f32.mrb[0].mxu0
      %v4833 = vadd.f32 0.0, %v4832
      %v4834 = vpop.f32.mrb[0].mxu0
      %4835 = vmatprep.mubr.f32.mxu0 0.0
      %4836 = vmatmul.mubr.f32.gmra.mrb[0].mxu0 %v4670
      %v4837 = vpop.f32.mrb[0].mxu0
      %v4838 = vadd.f32 0.0, %v4837
      %v4839 = vpop.f32.mrb[0].mxu0
      %4840 = vmatprep.mubr.f32.mxu0 0.0
      %4841 = vmatmul.mubr.f32.gmra.mrb[0].mxu0 %v4671
      %v4842 = vpop.f32.mrb[0].mxu0
      %v4843 = vadd.f32 0.0, %v4842
      %v4844 = vpop.f32.mrb[0].mxu0
      %4845 = vmatprep.mubr.f32.mxu0 0.0
      %4846 = vmatmul.mubr.f32.gmra.mrb[0].mxu0 %v4672
      %v4847 = vpop.f32.mrb[0].mxu0
      %v4848 = vadd.f32 0.0, %v4847
      %v4849 = vpop.f32.mrb[0].mxu0
      %4850 = vmatprep.mubr.f32.mxu0 0.0
      %4851 = vmatmul.mubr.f32.gmra.mrb[0].mxu0 %v4673
      %v4852 = vpop.f32.mrb[0].mxu0
      %v4853 = vadd.f32 0.0, %v4852
      %v4854 = vpop.f32.mrb[0].mxu0
      %4855 = vmatprep.mubr.f32.mxu0 0.0
      %4856 = vmatmul.mubr.f32.gmra.mrb[0].mxu0 %v4674
      %v4857 = vpop.f32.mrb[0].mxu0
      %v4858 = vadd.f32 0.0, %v4857
      %v4859 = vpop.f32.mrb[0].mxu0
      %4860 = vmatprep.mubr.f32.mxu0 0.0
      %4861 = vmatmul.mubr.f32.gmra.mrb[0].mxu0 %v4675
      %v4862 = vpop.f32.mrb[0].mxu0
      %v4863 = vadd.f32 0.0, %v4862
      %v4864 = vpop.f32.mrb[0].mxu0
      %4865 = vmatprep.mubr.f32.mxu0 0.0
      %4866 = vmatmul.mubr.f32.gmra.mrb[0].mxu0 %v4676
      %v4867 = vpop.f32.mrb[0].mxu0
      %v4868 = vadd.f32 0.0, %v4867
      %v4869 = vpop.f32.mrb[0].mxu0
      %4870 = vmatprep.mubr.f32.mxu0 0.0
      %4871 = vmatmul.mubr.f32.gmra.mrb[0].mxu0 %v4677
      %v4872 = vpop.f32.mrb[0].mxu0
      %v4873 = vadd.f32 0.0, %v4872
      %v4874 = vpop.f32.mrb[0].mxu0
      %4875 = vmatprep.mubr.f32.mxu0 0.0
      %4876 = vmatmul.mubr.f32.gmra.mrb[0].mxu0 %v4678
      %v4877 = vpop.f32.mrb[0].mxu0
      %v4878 = vadd.f32 0.0, %v4877
      %v4879 = vpop.f32.mrb[0].mxu0
      %4880 = vmatprep.mubr.f32.mxu0 0.0
      %4881 = vmatmul.mubr.f32.gmra.mrb[0].mxu0 %v4679
      %v4882 = vpop.f32.mrb[0].mxu0
      %v4883 = vadd.f32 0.0, %v4882
      %v4884 = vpop.f32.mrb[0].mxu0
      %4885 = vmatprep.mubr.f32.mxu0 0.0
      %4886 = vmatmul.mubr.f32.gmra.mrb[0].mxu0 %v4680
      %v4887 = vpop.f32.mrb[0].mxu0
      %v4888 = vadd.f32 0.0, %v4887
      %v4889 = vpop.f32.mrb[0].mxu0
      %4890 = vmatprep.mubr.f32.mxu0 0.0
      %4891 = vmatmul.mubr.f32.gmra.mrb[0].mxu0 %v4681
      %v4892 = vpop.f32.mrb[0].mxu0
      %v4893 = vadd.f32 0.0, %v4892
      %v4894 = vpop.f32.mrb[0].mxu0
      %4895 = vmatprep.mubr.f32.mxu0 0.0
      %4896 = vmatmul.mubr.f32.gmra.mrb[0].mxu0 %v4682
      %v4897 = vpop.f32.mrb[0].mxu0
      %v4898 = vadd.f32 0.0, %v4897
      %v4899 = vpop.f32.mrb[0].mxu0
      %4900 = vmatprep.mubr.f32.mxu0 0.0
      %4901 = vmatmul.mubr.f32.gmra.mrb[0].mxu0 %v4683
      %v4902 = vpop.f32.mrb[0].mxu0
      %v4903 = vadd.f32 0.0, %v4902
      %v4904 = vpop.f32.mrb[0].mxu0
      %4905 = vmatprep.mubr.f32.mxu0 0.0
      %4906 = vmatmul.mubr.f32.gmra.mrb[0].mxu0 %v4684
      %v4907 = vpop.f32.mrb[0].mxu0
      %v4908 = vadd.f32 0.0, %v4907
      %v4909 = vpop.f32.mrb[0].mxu0
      %4910 = vmatprep.mubr.f32.mxu0 0.0
      %4911 = vmatmul.mubr.f32.gmra.mrb[0].mxu0 %v4685
      %v4912 = vpop.f32.mrb[0].mxu0
      %v4913 = vadd.f32 0.0, %v4912
      %v4914 = vpop.f32.mrb[0].mxu0
      %4915 = vmatprep.mubr.f32.mxu0 0.0
      %4916 = vmatmul.mubr.f32.gmra.mrb[0].mxu0 %v4686
      %v4917 = vpop.f32.mrb[0].mxu0
      %v4918 = vadd.f32 0.0, %v4917
      %v4919 = vpop.f32.mrb[0].mxu0
      %4920 = vmatprep.mubr.f32.mxu0 0.0
      %4921 = vmatmul.mubr.f32.gmra.mrb[0].mxu0 %v4687
      %v4922 = vpop.f32.mrb[0].mxu0
      %v4923 = vadd.f32 0.0, %v4922
      %v4924 = vpop.f32.mrb[0].mxu0
      %4925 = vmatprep.mubr.f32.mxu0 0.0
      %4926 = vmatmul.mubr.f32.gmra.mrb[0].mxu0 %v4688
      %v4927 = vpop.f32.mrb[0].mxu0
      %v4928 = vadd.f32 0.0, %v4927
      %v4929 = vpop.f32.mrb[0].mxu0
      %4930 = vdwg.mxu0
      %v4931 = vadd.f32 %v4625, %v4773
      %v4932 = vadd.f32 %v4626, %v4778
      %v4933 = vadd.f32 %v4627, %v4783
      %v4934 = vadd.f32 %v4628, %v4788
      %v4935 = vadd.f32 %v4629, %v4793
      %v4936 = vadd.f32 %v4630, %v4798
      %v4937 = vadd.f32 %v4631, %v4803
      %v4938 = vadd.f32 %v4632, %v4808
      %v4939 = vadd.f32 %v4633, %v4813
      %v4940 = vadd.f32 %v4634, %v4818
      %v4941 = vadd.f32 %v4635, %v4823
      %v4942 = vadd.f32 %v4636, %v4828
      %v4943 = vadd.f32 %v4637, %v4833
      %v4944 = vadd.f32 %v4638, %v4838
      %v4945 = vadd.f32 %v4639, %v4843
      %v4946 = vadd.f32 %v4640, %v4848
      %v4947 = vadd.f32 %v4641, %v4853
      %v4948 = vadd.f32 %v4642, %v4858
      %v4949 = vadd.f32 %v4643, %v4863
      %v4950 = vadd.f32 %v4644, %v4868
      %v4951 = vadd.f32 %v4645, %v4873
      %v4952 = vadd.f32 %v4646, %v4878
      %v4953 = vadd.f32 %v4647, %v4883
      %v4954 = vadd.f32 %v4648, %v4888
      %v4955 = vadd.f32 %v4649, %v4893
      %v4956 = vadd.f32 %v4650, %v4898
      %v4957 = vadd.f32 %v4651, %v4903
      %v4958 = vadd.f32 %v4652, %v4908
      %v4959 = vadd.f32 %v4653, %v4913
      %v4960 = vadd.f32 %v4654, %v4918
      %v4961 = vadd.f32 %v4655, %v4923
      %v4962 = vadd.f32 %v4656, %v4928
      %v4963 = vld [vmem:[%s3771 + $0x1] sm:$0xff]
      %v4964 = vld [vmem:[%s3771 + $0x9] sm:$0xff]
      %v4965 = vld [vmem:[%s3771 + $0x19] sm:$0xff]
      %v4966 = vld [vmem:[%s3771 + $0x21] sm:$0xff]
      %v4967 = vld [vmem:[%s3771 + $0x31] sm:$0xff]
      %v4968 = vld [vmem:[%s3771 + $0x39] sm:$0xff]
      %v4969 = vld [vmem:[%s3771 + $0x49] sm:$0xff]
      %v4970 = vld [vmem:[%s3771 + $0x51] sm:$0xff]
      %v4971 = vld [vmem:[%s3771 + $0x61] sm:$0xff]
      %v4972 = vld [vmem:[%s3771 + $0x69] sm:$0xff]
      %v4973 = vld [vmem:[%s3771 + $0x79] sm:$0xff]
      %v4974 = vld [vmem:[%s3771 + $0x81] sm:$0xff]
      %v4975 = vld [vmem:[%s3771 + $0x91] sm:$0xff]
      %v4976 = vld [vmem:[%s3771 + $0x99] sm:$0xff]
      %v4977 = vld [vmem:[%s3771 + $0xa9] sm:$0xff]
      %v4978 = vld [vmem:[%s3771 + $0xb1] sm:$0xff]
      %v4979 = vld [vmem:[%s3771 + $0xc1] sm:$0xff]
      %v4980 = vld [vmem:[%s3771 + $0xc9] sm:$0xff]
      %v4981 = vld [vmem:[%s3771 + $0xd9] sm:$0xff]
      %v4982 = vld [vmem:[%s3771 + $0xe1] sm:$0xff]
      %v4983 = vld [vmem:[%s3771 + $0xf1] sm:$0xff]
      %v4984 = vld [vmem:[%s3771 + $0xf9] sm:$0xff]
      %v4985 = vld [vmem:[%s3771 + $0x109] sm:$0xff]
      %v4986 = vld [vmem:[%s3771 + $0x111] sm:$0xff]
      %v4987 = vld [vmem:[%s3771 + $0x121] sm:$0xff]
      %v4988 = vld [vmem:[%s3771 + $0x129] sm:$0xff]
      %v4989 = vld [vmem:[%s3771 + $0x139] sm:$0xff]
      %v4990 = vld [vmem:[%s3771 + $0x141] sm:$0xff]
      %v4991 = vld [vmem:[%s3771 + $0x151] sm:$0xff]
      %v4992 = vld [vmem:[%s3771 + $0x159] sm:$0xff]
      %v4993 = vld [vmem:[%s3771 + $0x169] sm:$0xff]
      %v4994 = vld [vmem:[%s3771 + $0x171] sm:$0xff]
      %s4995 = scalar_lea.vmem %s3, 512
      %v4996 = vld [vmem:[%s4995] sm:$0xff]
      %v4997 = vld [vmem:[%s4995 + $0x8] sm:$0xff]
      %v4998 = vld [vmem:[%s4995 + $0x10] sm:$0xff]
      %v4999 = vld [vmem:[%s4995 + $0x18] sm:$0xff]
      %v5000 = vld [vmem:[%s4995 + $0x20] sm:$0xff]
      %v5001 = vld [vmem:[%s4995 + $0x28] sm:$0xff]
      %v5002 = vld [vmem:[%s4995 + $0x30] sm:$0xff]
      %v5003 = vld [vmem:[%s4995 + $0x38] sm:$0xff]
      %v5004 = vld [vmem:[%s4995 + $0x40] sm:$0xff]
      %v5005 = vld [vmem:[%s4995 + $0x48] sm:$0xff]
      %v5006 = vld [vmem:[%s4995 + $0x50] sm:$0xff]
      %v5007 = vld [vmem:[%s4995 + $0x58] sm:$0xff]
      %v5008 = vld [vmem:[%s4995 + $0x60] sm:$0xff]
      %v5009 = vld [vmem:[%s4995 + $0x68] sm:$0xff]
      %v5010 = vld [vmem:[%s4995 + $0x70] sm:$0xff]
      %v5011 = vld [vmem:[%s4995 + $0x78] sm:$0xff]
      %5012 = vmatprep.subr.mxu0 0.0
      %5013 = vmatpush1.msra.mxu0 %v4996
      %5014 = vmatprep.subr.mxu0 0.0
      %5015 = vmatpush1.msra.mxu0 %v4997
      %5016 = vmatprep.subr.mxu0 0.0
      %5017 = vmatpush1.msra.mxu0 %v4998
      %5018 = vmatprep.subr.mxu0 0.0
      %5019 = vmatpush1.msra.mxu0 %v4999
      %5020 = vmatprep.subr.mxu0 0.0
      %5021 = vmatpush1.msra.mxu0 %v5000
      %5022 = vmatprep.subr.mxu0 0.0
      %5023 = vmatpush1.msra.mxu0 %v5001
      %5024 = vmatprep.subr.mxu0 0.0
      %5025 = vmatpush1.msra.mxu0 %v5002
      %5026 = vmatprep.subr.mxu0 0.0
      %5027 = vmatpush1.msra.mxu0 %v5003
      %5028 = vmatprep.subr.mxu0 0.0
      %5029 = vmatpush1.msra.mxu0 %v5004
      %5030 = vmatprep.subr.mxu0 0.0
      %5031 = vmatpush1.msra.mxu0 %v5005
      %5032 = vmatprep.subr.mxu0 0.0
      %5033 = vmatpush1.msra.mxu0 %v5006
      %5034 = vmatprep.subr.mxu0 0.0
      %5035 = vmatpush1.msra.mxu0 %v5007
      %5036 = vmatprep.subr.mxu0 0.0
      %5037 = vmatpush1.msra.mxu0 %v5008
      %5038 = vmatprep.subr.mxu0 0.0
      %5039 = vmatpush1.msra.mxu0 %v5009
      %5040 = vmatprep.subr.mxu0 0.0
      %5041 = vmatpush1.msra.mxu0 %v5010
      %5042 = vmatprep.subr.mxu0 0.0
      %5043 = vmatpush1.msra.mxu0 %v5011
      %5044 = vmatprep.subr.mxu0 0.0
      %5045 = vmatpush1.msra.mxu0 0.0
      %5046 = vmatprep.subr.mxu0 0.0
      %5047 = vmatpush1.msra.mxu0 0.0
      %5048 = vmatprep.subr.mxu0 0.0
      %5049 = vmatpush1.msra.mxu0 0.0
      %5050 = vmatprep.subr.mxu0 0.0
      %5051 = vmatpush1.msra.mxu0 0.0
      %5052 = vmatprep.subr.mxu0 0.0
      %5053 = vmatpush1.msra.mxu0 0.0
      %5054 = vmatprep.subr.mxu0 0.0
      %5055 = vmatpush1.msra.mxu0 0.0
      %5056 = vmatprep.subr.mxu0 0.0
      %5057 = vmatpush1.msra.mxu0 0.0
      %5058 = vmatprep.subr.mxu0 0.0
      %5059 = vmatpush1.msra.mxu0 0.0
      %5060 = vmatprep.subr.mxu0 0.0
      %5061 = vmatpush1.msra.mxu0 0.0
      %5062 = vmatprep.subr.mxu0 0.0
      %5063 = vmatpush1.msra.mxu0 0.0
      %5064 = vmatprep.subr.mxu0 0.0
      %5065 = vmatpush1.msra.mxu0 0.0
      %5066 = vmatprep.subr.mxu0 0.0
      %5067 = vmatpush1.msra.mxu0 0.0
      %5068 = vmatprep.subr.mxu0 0.0
      %5069 = vmatpush1.msra.mxu0 0.0
      %5070 = vmatprep.subr.mxu0 0.0
      %5071 = vmatpush1.msra.mxu0 0.0
      %5072 = vmatprep.subr.mxu0 0.0
      %5073 = vmatpush1.msra.mxu0 0.0
      %5074 = vmatprep.subr.mxu0 0.0
      %5075 = vmatpush1.msra.mxu0 0.0
      %5076 = vmatprep.mubr.f32.mxu0 0.0
      %5077 = vmatmul.mubr.f32.gmra.mrb[0].mxu0 %v4963
      %v5078 = vpop.f32.mrb[0].mxu0
      %v5079 = vadd.f32 0.0, %v5078
      %v5080 = vpop.f32.mrb[0].mxu0
      %5081 = vmatprep.mubr.f32.mxu0 0.0
      %5082 = vmatmul.mubr.f32.gmra.mrb[0].mxu0 %v4964
      %v5083 = vpop.f32.mrb[0].mxu0
      %v5084 = vadd.f32 0.0, %v5083
      %v5085 = vpop.f32.mrb[0].mxu0
      %5086 = vmatprep.mubr.f32.mxu0 0.0
      %5087 = vmatmul.mubr.f32.gmra.mrb[0].mxu0 %v4965
      %v5088 = vpop.f32.mrb[0].mxu0
      %v5089 = vadd.f32 0.0, %v5088
      %v5090 = vpop.f32.mrb[0].mxu0
      %5091 = vmatprep.mubr.f32.mxu0 0.0
      %5092 = vmatmul.mubr.f32.gmra.mrb[0].mxu0 %v4966
      %v5093 = vpop.f32.mrb[0].mxu0
      %v5094 = vadd.f32 0.0, %v5093
      %v5095 = vpop.f32.mrb[0].mxu0
      %5096 = vmatprep.mubr.f32.mxu0 0.0
      %5097 = vmatmul.mubr.f32.gmra.mrb[0].mxu0 %v4967
      %v5098 = vpop.f32.mrb[0].mxu0
      %v5099 = vadd.f32 0.0, %v5098
      %v5100 = vpop.f32.mrb[0].mxu0
      %5101 = vmatprep.mubr.f32.mxu0 0.0
      %5102 = vmatmul.mubr.f32.gmra.mrb[0].mxu0 %v4968
      %v5103 = vpop.f32.mrb[0].mxu0
      %v5104 = vadd.f32 0.0, %v5103
      %v5105 = vpop.f32.mrb[0].mxu0
      %5106 = vmatprep.mubr.f32.mxu0 0.0
      %5107 = vmatmul.mubr.f32.gmra.mrb[0].mxu0 %v4969
      %v5108 = vpop.f32.mrb[0].mxu0
      %v5109 = vadd.f32 0.0, %v5108
      %v5110 = vpop.f32.mrb[0].mxu0
      %5111 = vmatprep.mubr.f32.mxu0 0.0
      %5112 = vmatmul.mubr.f32.gmra.mrb[0].mxu0 %v4970
      %v5113 = vpop.f32.mrb[0].mxu0
      %v5114 = vadd.f32 0.0, %v5113
      %v5115 = vpop.f32.mrb[0].mxu0
      %5116 = vmatprep.mubr.f32.mxu0 0.0
      %5117 = vmatmul.mubr.f32.gmra.mrb[0].mxu0 %v4971
      %v5118 = vpop.f32.mrb[0].mxu0
      %v5119 = vadd.f32 0.0, %v5118
      %v5120 = vpop.f32.mrb[0].mxu0
      %5121 = vmatprep.mubr.f32.mxu0 0.0
      %5122 = vmatmul.mubr.f32.gmra.mrb[0].mxu0 %v4972
      %v5123 = vpop.f32.mrb[0].mxu0
      %v5124 = vadd.f32 0.0, %v5123
      %v5125 = vpop.f32.mrb[0].mxu0
      %5126 = vmatprep.mubr.f32.mxu0 0.0
      %5127 = vmatmul.mubr.f32.gmra.mrb[0].mxu0 %v4973
      %v5128 = vpop.f32.mrb[0].mxu0
      %v5129 = vadd.f32 0.0, %v5128
      %v5130 = vpop.f32.mrb[0].mxu0
      %5131 = vmatprep.mubr.f32.mxu0 0.0
      %5132 = vmatmul.mubr.f32.gmra.mrb[0].mxu0 %v4974
      %v5133 = vpop.f32.mrb[0].mxu0
      %v5134 = vadd.f32 0.0, %v5133
      %v5135 = vpop.f32.mrb[0].mxu0
      %5136 = vmatprep.mubr.f32.mxu0 0.0
      %5137 = vmatmul.mubr.f32.gmra.mrb[0].mxu0 %v4975
      %v5138 = vpop.f32.mrb[0].mxu0
      %v5139 = vadd.f32 0.0, %v5138
      %v5140 = vpop.f32.mrb[0].mxu0
      %5141 = vmatprep.mubr.f32.mxu0 0.0
      %5142 = vmatmul.mubr.f32.gmra.mrb[0].mxu0 %v4976
      %v5143 = vpop.f32.mrb[0].mxu0
      %v5144 = vadd.f32 0.0, %v5143
      %v5145 = vpop.f32.mrb[0].mxu0
      %5146 = vmatprep.mubr.f32.mxu0 0.0
      %5147 = vmatmul.mubr.f32.gmra.mrb[0].mxu0 %v4977
      %v5148 = vpop.f32.mrb[0].mxu0
      %v5149 = vadd.f32 0.0, %v5148
      %v5150 = vpop.f32.mrb[0].mxu0
      %5151 = vmatprep.mubr.f32.mxu0 0.0
      %5152 = vmatmul.mubr.f32.gmra.mrb[0].mxu0 %v4978
      %v5153 = vpop.f32.mrb[0].mxu0
      %v5154 = vadd.f32 0.0, %v5153
      %v5155 = vpop.f32.mrb[0].mxu0
      %5156 = vmatprep.mubr.f32.mxu0 0.0
      %5157 = vmatmul.mubr.f32.gmra.mrb[0].mxu0 %v4979
      %v5158 = vpop.f32.mrb[0].mxu0
      %v5159 = vadd.f32 0.0, %v5158
      %v5160 = vpop.f32.mrb[0].mxu0
      %5161 = vmatprep.mubr.f32.mxu0 0.0
      %5162 = vmatmul.mubr.f32.gmra.mrb[0].mxu0 %v4980
      %v5163 = vpop.f32.mrb[0].mxu0
      %v5164 = vadd.f32 0.0, %v5163
      %v5165 = vpop.f32.mrb[0].mxu0
      %5166 = vmatprep.mubr.f32.mxu0 0.0
      %5167 = vmatmul.mubr.f32.gmra.mrb[0].mxu0 %v4981
      %v5168 = vpop.f32.mrb[0].mxu0
      %v5169 = vadd.f32 0.0, %v5168
      %v5170 = vpop.f32.mrb[0].mxu0
      %5171 = vmatprep.mubr.f32.mxu0 0.0
      %5172 = vmatmul.mubr.f32.gmra.mrb[0].mxu0 %v4982
      %v5173 = vpop.f32.mrb[0].mxu0
      %v5174 = vadd.f32 0.0, %v5173
      %v5175 = vpop.f32.mrb[0].mxu0
      %5176 = vmatprep.mubr.f32.mxu0 0.0
      %5177 = vmatmul.mubr.f32.gmra.mrb[0].mxu0 %v4983
      %v5178 = vpop.f32.mrb[0].mxu0
      %v5179 = vadd.f32 0.0, %v5178
      %v5180 = vpop.f32.mrb[0].mxu0
      %5181 = vmatprep.mubr.f32.mxu0 0.0
      %5182 = vmatmul.mubr.f32.gmra.mrb[0].mxu0 %v4984
      %v5183 = vpop.f32.mrb[0].mxu0
      %v5184 = vadd.f32 0.0, %v5183
      %v5185 = vpop.f32.mrb[0].mxu0
      %5186 = vmatprep.mubr.f32.mxu0 0.0
      %5187 = vmatmul.mubr.f32.gmra.mrb[0].mxu0 %v4985
      %v5188 = vpop.f32.mrb[0].mxu0
      %v5189 = vadd.f32 0.0, %v5188
      %v5190 = vpop.f32.mrb[0].mxu0
      %5191 = vmatprep.mubr.f32.mxu0 0.0
      %5192 = vmatmul.mubr.f32.gmra.mrb[0].mxu0 %v4986
      %v5193 = vpop.f32.mrb[0].mxu0
      %v5194 = vadd.f32 0.0, %v5193
      %v5195 = vpop.f32.mrb[0].mxu0
      %5196 = vmatprep.mubr.f32.mxu0 0.0
      %5197 = vmatmul.mubr.f32.gmra.mrb[0].mxu0 %v4987
      %v5198 = vpop.f32.mrb[0].mxu0
      %v5199 = vadd.f32 0.0, %v5198
      %v5200 = vpop.f32.mrb[0].mxu0
      %5201 = vmatprep.mubr.f32.mxu0 0.0
      %5202 = vmatmul.mubr.f32.gmra.mrb[0].mxu0 %v4988
      %v5203 = vpop.f32.mrb[0].mxu0
      %v5204 = vadd.f32 0.0, %v5203
      %v5205 = vpop.f32.mrb[0].mxu0
      %5206 = vmatprep.mubr.f32.mxu0 0.0
      %5207 = vmatmul.mubr.f32.gmra.mrb[0].mxu0 %v4989
      %v5208 = vpop.f32.mrb[0].mxu0
      %v5209 = vadd.f32 0.0, %v5208
      %v5210 = vpop.f32.mrb[0].mxu0
      %5211 = vmatprep.mubr.f32.mxu0 0.0
      %5212 = vmatmul.mubr.f32.gmra.mrb[0].mxu0 %v4990
      %v5213 = vpop.f32.mrb[0].mxu0
      %v5214 = vadd.f32 0.0, %v5213
      %v5215 = vpop.f32.mrb[0].mxu0
      %5216 = vmatprep.mubr.f32.mxu0 0.0
      %5217 = vmatmul.mubr.f32.gmra.mrb[0].mxu0 %v4991
      %v5218 = vpop.f32.mrb[0].mxu0
      %v5219 = vadd.f32 0.0, %v5218
      %v5220 = vpop.f32.mrb[0].mxu0
      %5221 = vmatprep.mubr.f32.mxu0 0.0
      %5222 = vmatmul.mubr.f32.gmra.mrb[0].mxu0 %v4992
      %v5223 = vpop.f32.mrb[0].mxu0
      %v5224 = vadd.f32 0.0, %v5223
      %v5225 = vpop.f32.mrb[0].mxu0
      %5226 = vmatprep.mubr.f32.mxu0 0.0
      %5227 = vmatmul.mubr.f32.gmra.mrb[0].mxu0 %v4993
      %v5228 = vpop.f32.mrb[0].mxu0
      %v5229 = vadd.f32 0.0, %v5228
      %v5230 = vpop.f32.mrb[0].mxu0
      %5231 = vmatprep.mubr.f32.mxu0 0.0
      %5232 = vmatmul.mubr.f32.gmra.mrb[0].mxu0 %v4994
      %v5233 = vpop.f32.mrb[0].mxu0
      %v5234 = vadd.f32 0.0, %v5233
      %v5235 = vpop.f32.mrb[0].mxu0
      %5236 = vdwg.mxu0
      %v5237 = vadd.f32 %v4931, %v5079
      %v5238 = vadd.f32 %v4932, %v5084
      %v5239 = vadd.f32 %v4933, %v5089
      %v5240 = vadd.f32 %v4934, %v5094
      %v5241 = vadd.f32 %v4935, %v5099
      %v5242 = vadd.f32 %v4936, %v5104
      %v5243 = vadd.f32 %v4937, %v5109
      %v5244 = vadd.f32 %v4938, %v5114
      %v5245 = vadd.f32 %v4939, %v5119
      %v5246 = vadd.f32 %v4940, %v5124
      %v5247 = vadd.f32 %v4941, %v5129
      %v5248 = vadd.f32 %v4942, %v5134
      %v5249 = vadd.f32 %v4943, %v5139
      %v5250 = vadd.f32 %v4944, %v5144
      %v5251 = vadd.f32 %v4945, %v5149
      %v5252 = vadd.f32 %v4946, %v5154
      %v5253 = vadd.f32 %v4947, %v5159
      %v5254 = vadd.f32 %v4948, %v5164
      %v5255 = vadd.f32 %v4949, %v5169
      %v5256 = vadd.f32 %v4950, %v5174
      %v5257 = vadd.f32 %v4951, %v5179
      %v5258 = vadd.f32 %v4952, %v5184
      %v5259 = vadd.f32 %v4953, %v5189
      %v5260 = vadd.f32 %v4954, %v5194
      %v5261 = vadd.f32 %v4955, %v5199
      %v5262 = vadd.f32 %v4956, %v5204
      %v5263 = vadd.f32 %v4957, %v5209
      %v5264 = vadd.f32 %v4958, %v5214
      %v5265 = vadd.f32 %v4959, %v5219
      %v5266 = vadd.f32 %v4960, %v5224
      %v5267 = vadd.f32 %v4961, %v5229
      %v5268 = vadd.f32 %v4962, %v5234
      %v5269 = vld [vmem:[%s3771 + $0x2] sm:$0xff]
      %v5270 = vld [vmem:[%s3771 + $0xa] sm:$0xff]
      %v5271 = vld [vmem:[%s3771 + $0x1a] sm:$0xff]
      %v5272 = vld [vmem:[%s3771 + $0x22] sm:$0xff]
      %v5273 = vld [vmem:[%s3771 + $0x32] sm:$0xff]
      %v5274 = vld [vmem:[%s3771 + $0x3a] sm:$0xff]
      %v5275 = vld [vmem:[%s3771 + $0x4a] sm:$0xff]
      %v5276 = vld [vmem:[%s3771 + $0x52] sm:$0xff]
      %v5277 = vld [vmem:[%s3771 + $0x62] sm:$0xff]
      %v5278 = vld [vmem:[%s3771 + $0x6a] sm:$0xff]
      %v5279 = vld [vmem:[%s3771 + $0x7a] sm:$0xff]
      %v5280 = vld [vmem:[%s3771 + $0x82] sm:$0xff]
      %v5281 = vld [vmem:[%s3771 + $0x92] sm:$0xff]
      %v5282 = vld [vmem:[%s3771 + $0x9a] sm:$0xff]
      %v5283 = vld [vmem:[%s3771 + $0xaa] sm:$0xff]
      %v5284 = vld [vmem:[%s3771 + $0xb2] sm:$0xff]
      %v5285 = vld [vmem:[%s3771 + $0xc2] sm:$0xff]
      %v5286 = vld [vmem:[%s3771 + $0xca] sm:$0xff]
      %v5287 = vld [vmem:[%s3771 + $0xda] sm:$0xff]
      %v5288 = vld [vmem:[%s3771 + $0xe2] sm:$0xff]
      %v5289 = vld [vmem:[%s3771 + $0xf2] sm:$0xff]
      %v5290 = vld [vmem:[%s3771 + $0xfa] sm:$0xff]
      %v5291 = vld [vmem:[%s3771 + $0x10a] sm:$0xff]
      %v5292 = vld [vmem:[%s3771 + $0x112] sm:$0xff]
      %v5293 = vld [vmem:[%s3771 + $0x122] sm:$0xff]
      %v5294 = vld [vmem:[%s3771 + $0x12a] sm:$0xff]
      %v5295 = vld [vmem:[%s3771 + $0x13a] sm:$0xff]
      %v5296 = vld [vmem:[%s3771 + $0x142] sm:$0xff]
      %v5297 = vld [vmem:[%s3771 + $0x152] sm:$0xff]
      %v5298 = vld [vmem:[%s3771 + $0x15a] sm:$0xff]
      %v5299 = vld [vmem:[%s3771 + $0x16a] sm:$0xff]
      %v5300 = vld [vmem:[%s3771 + $0x172] sm:$0xff]
      %s5301 = scalar_lea.vmem %s3, 640
      %v5302 = vld [vmem:[%s5301] sm:$0xff]
      %v5303 = vld [vmem:[%s5301 + $0x8] sm:$0xff]
      %v5304 = vld [vmem:[%s5301 + $0x10] sm:$0xff]
      %v5305 = vld [vmem:[%s5301 + $0x18] sm:$0xff]
      %v5306 = vld [vmem:[%s5301 + $0x20] sm:$0xff]
      %v5307 = vld [vmem:[%s5301 + $0x28] sm:$0xff]
      %v5308 = vld [vmem:[%s5301 + $0x30] sm:$0xff]
      %v5309 = vld [vmem:[%s5301 + $0x38] sm:$0xff]
      %v5310 = vld [vmem:[%s5301 + $0x40] sm:$0xff]
      %v5311 = vld [vmem:[%s5301 + $0x48] sm:$0xff]
      %v5312 = vld [vmem:[%s5301 + $0x50] sm:$0xff]
      %v5313 = vld [vmem:[%s5301 + $0x58] sm:$0xff]
      %v5314 = vld [vmem:[%s5301 + $0x60] sm:$0xff]
      %v5315 = vld [vmem:[%s5301 + $0x68] sm:$0xff]
      %v5316 = vld [vmem:[%s5301 + $0x70] sm:$0xff]
      %v5317 = vld [vmem:[%s5301 + $0x78] sm:$0xff]
      %5318 = vmatprep.subr.mxu0 0.0
      %5319 = vmatpush1.msra.mxu0 %v5302
      %5320 = vmatprep.subr.mxu0 0.0
      %5321 = vmatpush1.msra.mxu0 %v5303
      %5322 = vmatprep.subr.mxu0 0.0
      %5323 = vmatpush1.msra.mxu0 %v5304
      %5324 = vmatprep.subr.mxu0 0.0
      %5325 = vmatpush1.msra.mxu0 %v5305
      %5326 = vmatprep.subr.mxu0 0.0
      %5327 = vmatpush1.msra.mxu0 %v5306
      %5328 = vmatprep.subr.mxu0 0.0
      %5329 = vmatpush1.msra.mxu0 %v5307
      %5330 = vmatprep.subr.mxu0 0.0
      %5331 = vmatpush1.msra.mxu0 %v5308
      %5332 = vmatprep.subr.mxu0 0.0
      %5333 = vmatpush1.msra.mxu0 %v5309
      %5334 = vmatprep.subr.mxu0 0.0
      %5335 = vmatpush1.msra.mxu0 %v5310
      %5336 = vmatprep.subr.mxu0 0.0
      %5337 = vmatpush1.msra.mxu0 %v5311
      %5338 = vmatprep.subr.mxu0 0.0
      %5339 = vmatpush1.msra.mxu0 %v5312
      %5340 = vmatprep.subr.mxu0 0.0
      %5341 = vmatpush1.msra.mxu0 %v5313
      %5342 = vmatprep.subr.mxu0 0.0
      %5343 = vmatpush1.msra.mxu0 %v5314
      %5344 = vmatprep.subr.mxu0 0.0
      %5345 = vmatpush1.msra.mxu0 %v5315
      %5346 = vmatprep.subr.mxu0 0.0
      %5347 = vmatpush1.msra.mxu0 %v5316
      %5348 = vmatprep.subr.mxu0 0.0
      %5349 = vmatpush1.msra.mxu0 %v5317
      %5350 = vmatprep.subr.mxu0 0.0
      %5351 = vmatpush1.msra.mxu0 0.0
      %5352 = vmatprep.subr.mxu0 0.0
      %5353 = vmatpush1.msra.mxu0 0.0
      %5354 = vmatprep.subr.mxu0 0.0
      %5355 = vmatpush1.msra.mxu0 0.0
      %5356 = vmatprep.subr.mxu0 0.0
      %5357 = vmatpush1.msra.mxu0 0.0
      %5358 = vmatprep.subr.mxu0 0.0
      %5359 = vmatpush1.msra.mxu0 0.0
      %5360 = vmatprep.subr.mxu0 0.0
      %5361 = vmatpush1.msra.mxu0 0.0
      %5362 = vmatprep.subr.mxu0 0.0
      %5363 = vmatpush1.msra.mxu0 0.0
      %5364 = vmatprep.subr.mxu0 0.0
      %5365 = vmatpush1.msra.mxu0 0.0
      %5366 = vmatprep.subr.mxu0 0.0
      %5367 = vmatpush1.msra.mxu0 0.0
      %5368 = vmatprep.subr.mxu0 0.0
      %5369 = vmatpush1.msra.mxu0 0.0
      %5370 = vmatprep.subr.mxu0 0.0
      %5371 = vmatpush1.msra.mxu0 0.0
      %5372 = vmatprep.subr.mxu0 0.0
      %5373 = vmatpush1.msra.mxu0 0.0
      %5374 = vmatprep.subr.mxu0 0.0
      %5375 = vmatpush1.msra.mxu0 0.0
      %5376 = vmatprep.subr.mxu0 0.0
      %5377 = vmatpush1.msra.mxu0 0.0
      %5378 = vmatprep.subr.mxu0 0.0
      %5379 = vmatpush1.msra.mxu0 0.0
      %5380 = vmatprep.subr.mxu0 0.0
      %5381 = vmatpush1.msra.mxu0 0.0
      %5382 = vmatprep.mubr.f32.mxu0 0.0
      %5383 = vmatmul.mubr.f32.gmra.mrb[0].mxu0 %v5269
      %v5384 = vpop.f32.mrb[0].mxu0
      %v5385 = vadd.f32 0.0, %v5384
      %v5386 = vpop.f32.mrb[0].mxu0
      %5387 = vmatprep.mubr.f32.mxu0 0.0
      %5388 = vmatmul.mubr.f32.gmra.mrb[0].mxu0 %v5270
      %v5389 = vpop.f32.mrb[0].mxu0
      %v5390 = vadd.f32 0.0, %v5389
      %v5391 = vpop.f32.mrb[0].mxu0
      %5392 = vmatprep.mubr.f32.mxu0 0.0
      %5393 = vmatmul.mubr.f32.gmra.mrb[0].mxu0 %v5271
      %v5394 = vpop.f32.mrb[0].mxu0
      %v5395 = vadd.f32 0.0, %v5394
      %v5396 = vpop.f32.mrb[0].mxu0
      %5397 = vmatprep.mubr.f32.mxu0 0.0
      %5398 = vmatmul.mubr.f32.gmra.mrb[0].mxu0 %v5272
      %v5399 = vpop.f32.mrb[0].mxu0
      %v5400 = vadd.f32 0.0, %v5399
      %v5401 = vpop.f32.mrb[0].mxu0
      %5402 = vmatprep.mubr.f32.mxu0 0.0
      %5403 = vmatmul.mubr.f32.gmra.mrb[0].mxu0 %v5273
      %v5404 = vpop.f32.mrb[0].mxu0
      %v5405 = vadd.f32 0.0, %v5404
      %v5406 = vpop.f32.mrb[0].mxu0
      %5407 = vmatprep.mubr.f32.mxu0 0.0
      %5408 = vmatmul.mubr.f32.gmra.mrb[0].mxu0 %v5274
      %v5409 = vpop.f32.mrb[0].mxu0
      %v5410 = vadd.f32 0.0, %v5409
      %v5411 = vpop.f32.mrb[0].mxu0
      %5412 = vmatprep.mubr.f32.mxu0 0.0
      %5413 = vmatmul.mubr.f32.gmra.mrb[0].mxu0 %v5275
      %v5414 = vpop.f32.mrb[0].mxu0
      %v5415 = vadd.f32 0.0, %v5414
      %v5416 = vpop.f32.mrb[0].mxu0
      %5417 = vmatprep.mubr.f32.mxu0 0.0
      %5418 = vmatmul.mubr.f32.gmra.mrb[0].mxu0 %v5276
      %v5419 = vpop.f32.mrb[0].mxu0
      %v5420 = vadd.f32 0.0, %v5419
      %v5421 = vpop.f32.mrb[0].mxu0
      %5422 = vmatprep.mubr.f32.mxu0 0.0
      %5423 = vmatmul.mubr.f32.gmra.mrb[0].mxu0 %v5277
      %v5424 = vpop.f32.mrb[0].mxu0
      %v5425 = vadd.f32 0.0, %v5424
      %v5426 = vpop.f32.mrb[0].mxu0
      %5427 = vmatprep.mubr.f32.mxu0 0.0
      %5428 = vmatmul.mubr.f32.gmra.mrb[0].mxu0 %v5278
      %v5429 = vpop.f32.mrb[0].mxu0
      %v5430 = vadd.f32 0.0, %v5429
      %v5431 = vpop.f32.mrb[0].mxu0
      %5432 = vmatprep.mubr.f32.mxu0 0.0
      %5433 = vmatmul.mubr.f32.gmra.mrb[0].mxu0 %v5279
      %v5434 = vpop.f32.mrb[0].mxu0
      %v5435 = vadd.f32 0.0, %v5434
      %v5436 = vpop.f32.mrb[0].mxu0
      %5437 = vmatprep.mubr.f32.mxu0 0.0
      %5438 = vmatmul.mubr.f32.gmra.mrb[0].mxu0 %v5280
      %v5439 = vpop.f32.mrb[0].mxu0
      %v5440 = vadd.f32 0.0, %v5439
      %v5441 = vpop.f32.mrb[0].mxu0
      %5442 = vmatprep.mubr.f32.mxu0 0.0
      %5443 = vmatmul.mubr.f32.gmra.mrb[0].mxu0 %v5281
      %v5444 = vpop.f32.mrb[0].mxu0
      %v5445 = vadd.f32 0.0, %v5444
      %v5446 = vpop.f32.mrb[0].mxu0
      %5447 = vmatprep.mubr.f32.mxu0 0.0
      %5448 = vmatmul.mubr.f32.gmra.mrb[0].mxu0 %v5282
      %v5449 = vpop.f32.mrb[0].mxu0
      %v5450 = vadd.f32 0.0, %v5449
      %v5451 = vpop.f32.mrb[0].mxu0
      %5452 = vmatprep.mubr.f32.mxu0 0.0
      %5453 = vmatmul.mubr.f32.gmra.mrb[0].mxu0 %v5283
      %v5454 = vpop.f32.mrb[0].mxu0
      %v5455 = vadd.f32 0.0, %v5454
      %v5456 = vpop.f32.mrb[0].mxu0
      %5457 = vmatprep.mubr.f32.mxu0 0.0
      %5458 = vmatmul.mubr.f32.gmra.mrb[0].mxu0 %v5284
      %v5459 = vpop.f32.mrb[0].mxu0
      %v5460 = vadd.f32 0.0, %v5459
      %v5461 = vpop.f32.mrb[0].mxu0
      %5462 = vmatprep.mubr.f32.mxu0 0.0
      %5463 = vmatmul.mubr.f32.gmra.mrb[0].mxu0 %v5285
      %v5464 = vpop.f32.mrb[0].mxu0
      %v5465 = vadd.f32 0.0, %v5464
      %v5466 = vpop.f32.mrb[0].mxu0
      %5467 = vmatprep.mubr.f32.mxu0 0.0
      %5468 = vmatmul.mubr.f32.gmra.mrb[0].mxu0 %v5286
      %v5469 = vpop.f32.mrb[0].mxu0
      %v5470 = vadd.f32 0.0, %v5469
      %v5471 = vpop.f32.mrb[0].mxu0
      %5472 = vmatprep.mubr.f32.mxu0 0.0
      %5473 = vmatmul.mubr.f32.gmra.mrb[0].mxu0 %v5287
      %v5474 = vpop.f32.mrb[0].mxu0
      %v5475 = vadd.f32 0.0, %v5474
      %v5476 = vpop.f32.mrb[0].mxu0
      %5477 = vmatprep.mubr.f32.mxu0 0.0
      %5478 = vmatmul.mubr.f32.gmra.mrb[0].mxu0 %v5288
      %v5479 = vpop.f32.mrb[0].mxu0
      %v5480 = vadd.f32 0.0, %v5479
      %v5481 = vpop.f32.mrb[0].mxu0
      %5482 = vmatprep.mubr.f32.mxu0 0.0
      %5483 = vmatmul.mubr.f32.gmra.mrb[0].mxu0 %v5289
      %v5484 = vpop.f32.mrb[0].mxu0
      %v5485 = vadd.f32 0.0, %v5484
      %v5486 = vpop.f32.mrb[0].mxu0
      %5487 = vmatprep.mubr.f32.mxu0 0.0
      %5488 = vmatmul.mubr.f32.gmra.mrb[0].mxu0 %v5290
      %v5489 = vpop.f32.mrb[0].mxu0
      %v5490 = vadd.f32 0.0, %v5489
      %v5491 = vpop.f32.mrb[0].mxu0
      %5492 = vmatprep.mubr.f32.mxu0 0.0
      %5493 = vmatmul.mubr.f32.gmra.mrb[0].mxu0 %v5291
      %v5494 = vpop.f32.mrb[0].mxu0
      %v5495 = vadd.f32 0.0, %v5494
      %v5496 = vpop.f32.mrb[0].mxu0
      %5497 = vmatprep.mubr.f32.mxu0 0.0
      %5498 = vmatmul.mubr.f32.gmra.mrb[0].mxu0 %v5292
      %v5499 = vpop.f32.mrb[0].mxu0
      %v5500 = vadd.f32 0.0, %v5499
      %v5501 = vpop.f32.mrb[0].mxu0
      %5502 = vmatprep.mubr.f32.mxu0 0.0
      %5503 = vmatmul.mubr.f32.gmra.mrb[0].mxu0 %v5293
      %v5504 = vpop.f32.mrb[0].mxu0
      %v5505 = vadd.f32 0.0, %v5504
      %v5506 = vpop.f32.mrb[0].mxu0
      %5507 = vmatprep.mubr.f32.mxu0 0.0
      %5508 = vmatmul.mubr.f32.gmra.mrb[0].mxu0 %v5294
      %v5509 = vpop.f32.mrb[0].mxu0
      %v5510 = vadd.f32 0.0, %v5509
      %v5511 = vpop.f32.mrb[0].mxu0
      %5512 = vmatprep.mubr.f32.mxu0 0.0
      %5513 = vmatmul.mubr.f32.gmra.mrb[0].mxu0 %v5295
      %v5514 = vpop.f32.mrb[0].mxu0
      %v5515 = vadd.f32 0.0, %v5514
      %v5516 = vpop.f32.mrb[0].mxu0
      %5517 = vmatprep.mubr.f32.mxu0 0.0
      %5518 = vmatmul.mubr.f32.gmra.mrb[0].mxu0 %v5296
      %v5519 = vpop.f32.mrb[0].mxu0
      %v5520 = vadd.f32 0.0, %v5519
      %v5521 = vpop.f32.mrb[0].mxu0
      %5522 = vmatprep.mubr.f32.mxu0 0.0
      %5523 = vmatmul.mubr.f32.gmra.mrb[0].mxu0 %v5297
      %v5524 = vpop.f32.mrb[0].mxu0
      %v5525 = vadd.f32 0.0, %v5524
      %v5526 = vpop.f32.mrb[0].mxu0
      %5527 = vmatprep.mubr.f32.mxu0 0.0
      %5528 = vmatmul.mubr.f32.gmra.mrb[0].mxu0 %v5298
      %v5529 = vpop.f32.mrb[0].mxu0
      %v5530 = vadd.f32 0.0, %v5529
      %v5531 = vpop.f32.mrb[0].mxu0
      %5532 = vmatprep.mubr.f32.mxu0 0.0
      %5533 = vmatmul.mubr.f32.gmra.mrb[0].mxu0 %v5299
      %v5534 = vpop.f32.mrb[0].mxu0
      %v5535 = vadd.f32 0.0, %v5534
      %v5536 = vpop.f32.mrb[0].mxu0
      %5537 = vmatprep.mubr.f32.mxu0 0.0
      %5538 = vmatmul.mubr.f32.gmra.mrb[0].mxu0 %v5300
      %v5539 = vpop.f32.mrb[0].mxu0
      %v5540 = vadd.f32 0.0, %v5539
      %v5541 = vpop.f32.mrb[0].mxu0
      %5542 = vdwg.mxu0
      %v5543 = vadd.f32 %v5237, %v5385
      %v5544 = vadd.f32 %v5238, %v5390
      %v5545 = vadd.f32 %v5239, %v5395
      %v5546 = vadd.f32 %v5240, %v5400
      %v5547 = vadd.f32 %v5241, %v5405
      %v5548 = vadd.f32 %v5242, %v5410
      %v5549 = vadd.f32 %v5243, %v5415
      %v5550 = vadd.f32 %v5244, %v5420
      %v5551 = vadd.f32 %v5245, %v5425
      %v5552 = vadd.f32 %v5246, %v5430
      %v5553 = vadd.f32 %v5247, %v5435
      %v5554 = vadd.f32 %v5248, %v5440
      %v5555 = vadd.f32 %v5249, %v5445
      %v5556 = vadd.f32 %v5250, %v5450
      %v5557 = vadd.f32 %v5251, %v5455
      %v5558 = vadd.f32 %v5252, %v5460
      %v5559 = vadd.f32 %v5253, %v5465
      %v5560 = vadd.f32 %v5254, %v5470
      %v5561 = vadd.f32 %v5255, %v5475
      %v5562 = vadd.f32 %v5256, %v5480
      %v5563 = vadd.f32 %v5257, %v5485
      %v5564 = vadd.f32 %v5258, %v5490
      %v5565 = vadd.f32 %v5259, %v5495
      %v5566 = vadd.f32 %v5260, %v5500
      %v5567 = vadd.f32 %v5261, %v5505
      %v5568 = vadd.f32 %v5262, %v5510
      %v5569 = vadd.f32 %v5263, %v5515
      %v5570 = vadd.f32 %v5264, %v5520
      %v5571 = vadd.f32 %v5265, %v5525
      %v5572 = vadd.f32 %v5266, %v5530
      %v5573 = vadd.f32 %v5267, %v5535
      %v5574 = vadd.f32 %v5268, %v5540
      %s5575 = scalar_lea.vmem [#allocation2], 48
      %v5576 = vld [vmem:[%s5575] sm:$0xff]
      %v5577 = vld [vmem:[%s5575 + $0x8] sm:$0xff]
      %v5578 = vld [vmem:[%s5575 + $0x18] sm:$0xff]
      %v5579 = vld [vmem:[%s5575 + $0x20] sm:$0xff]
      %v5580 = vld [vmem:[%s5575 + $0x30] sm:$0xff]
      %v5581 = vld [vmem:[%s5575 + $0x38] sm:$0xff]
      %v5582 = vld [vmem:[%s5575 + $0x48] sm:$0xff]
      %v5583 = vld [vmem:[%s5575 + $0x50] sm:$0xff]
      %v5584 = vld [vmem:[%s5575 + $0x60] sm:$0xff]
      %v5585 = vld [vmem:[%s5575 + $0x68] sm:$0xff]
      %v5586 = vld [vmem:[%s5575 + $0x78] sm:$0xff]
      %v5587 = vld [vmem:[%s5575 + $0x80] sm:$0xff]
      %v5588 = vld [vmem:[%s5575 + $0x90] sm:$0xff]
      %v5589 = vld [vmem:[%s5575 + $0x98] sm:$0xff]
      %v5590 = vld [vmem:[%s5575 + $0xa8] sm:$0xff]
      %v5591 = vld [vmem:[%s5575 + $0xb0] sm:$0xff]
      %v5592 = vld [vmem:[%s5575 + $0xc0] sm:$0xff]
      %v5593 = vld [vmem:[%s5575 + $0xc8] sm:$0xff]
      %v5594 = vld [vmem:[%s5575 + $0xd8] sm:$0xff]
      %v5595 = vld [vmem:[%s5575 + $0xe0] sm:$0xff]
      %v5596 = vld [vmem:[%s5575 + $0xf0] sm:$0xff]
      %v5597 = vld [vmem:[%s5575 + $0xf8] sm:$0xff]
      %v5598 = vld [vmem:[%s5575 + $0x108] sm:$0xff]
      %v5599 = vld [vmem:[%s5575 + $0x110] sm:$0xff]
      %v5600 = vld [vmem:[%s5575 + $0x120] sm:$0xff]
      %v5601 = vld [vmem:[%s5575 + $0x128] sm:$0xff]
      %v5602 = vld [vmem:[%s5575 + $0x138] sm:$0xff]
      %v5603 = vld [vmem:[%s5575 + $0x140] sm:$0xff]
      %v5604 = vld [vmem:[%s5575 + $0x150] sm:$0xff]
      %v5605 = vld [vmem:[%s5575 + $0x158] sm:$0xff]
      %v5606 = vld [vmem:[%s5575 + $0x168] sm:$0xff]
      %v5607 = vld [vmem:[%s5575 + $0x170] sm:$0xff]
      %s5608 = scalar_lea.vmem %s3, 768
      %v5609 = vld [vmem:[%s5608] sm:$0xff]
      %v5610 = vld [vmem:[%s5608 + $0x8] sm:$0xff]
      %v5611 = vld [vmem:[%s5608 + $0x10] sm:$0xff]
      %v5612 = vld [vmem:[%s5608 + $0x18] sm:$0xff]
      %v5613 = vld [vmem:[%s5608 + $0x20] sm:$0xff]
      %v5614 = vld [vmem:[%s5608 + $0x28] sm:$0xff]
      %v5615 = vld [vmem:[%s5608 + $0x30] sm:$0xff]
      %v5616 = vld [vmem:[%s5608 + $0x38] sm:$0xff]
      %v5617 = vld [vmem:[%s5608 + $0x40] sm:$0xff]
      %v5618 = vld [vmem:[%s5608 + $0x48] sm:$0xff]
      %v5619 = vld [vmem:[%s5608 + $0x50] sm:$0xff]
      %v5620 = vld [vmem:[%s5608 + $0x58] sm:$0xff]
      %v5621 = vld [vmem:[%s5608 + $0x60] sm:$0xff]
      %v5622 = vld [vmem:[%s5608 + $0x68] sm:$0xff]
      %v5623 = vld [vmem:[%s5608 + $0x70] sm:$0xff]
      %v5624 = vld [vmem:[%s5608 + $0x78] sm:$0xff]
      %5625 = vmatprep.subr.mxu0 0.0
      %5626 = vmatpush1.msra.mxu0 %v5609
      %5627 = vmatprep.subr.mxu0 0.0
      %5628 = vmatpush1.msra.mxu0 %v5610
      %5629 = vmatprep.subr.mxu0 0.0
      %5630 = vmatpush1.msra.mxu0 %v5611
      %5631 = vmatprep.subr.mxu0 0.0
      %5632 = vmatpush1.msra.mxu0 %v5612
      %5633 = vmatprep.subr.mxu0 0.0
      %5634 = vmatpush1.msra.mxu0 %v5613
      %5635 = vmatprep.subr.mxu0 0.0
      %5636 = vmatpush1.msra.mxu0 %v5614
      %5637 = vmatprep.subr.mxu0 0.0
      %5638 = vmatpush1.msra.mxu0 %v5615
      %5639 = vmatprep.subr.mxu0 0.0
      %5640 = vmatpush1.msra.mxu0 %v5616
      %5641 = vmatprep.subr.mxu0 0.0
      %5642 = vmatpush1.msra.mxu0 %v5617
      %5643 = vmatprep.subr.mxu0 0.0
      %5644 = vmatpush1.msra.mxu0 %v5618
      %5645 = vmatprep.subr.mxu0 0.0
      %5646 = vmatpush1.msra.mxu0 %v5619
      %5647 = vmatprep.subr.mxu0 0.0
      %5648 = vmatpush1.msra.mxu0 %v5620
      %5649 = vmatprep.subr.mxu0 0.0
      %5650 = vmatpush1.msra.mxu0 %v5621
      %5651 = vmatprep.subr.mxu0 0.0
      %5652 = vmatpush1.msra.mxu0 %v5622
      %5653 = vmatprep.subr.mxu0 0.0
      %5654 = vmatpush1.msra.mxu0 %v5623
      %5655 = vmatprep.subr.mxu0 0.0
      %5656 = vmatpush1.msra.mxu0 %v5624
      %5657 = vmatprep.subr.mxu0 0.0
      %5658 = vmatpush1.msra.mxu0 0.0
      %5659 = vmatprep.subr.mxu0 0.0
      %5660 = vmatpush1.msra.mxu0 0.0
      %5661 = vmatprep.subr.mxu0 0.0
      %5662 = vmatpush1.msra.mxu0 0.0
      %5663 = vmatprep.subr.mxu0 0.0
      %5664 = vmatpush1.msra.mxu0 0.0
      %5665 = vmatprep.subr.mxu0 0.0
      %5666 = vmatpush1.msra.mxu0 0.0
      %5667 = vmatprep.subr.mxu0 0.0
      %5668 = vmatpush1.msra.mxu0 0.0
      %5669 = vmatprep.subr.mxu0 0.0
      %5670 = vmatpush1.msra.mxu0 0.0
      %5671 = vmatprep.subr.mxu0 0.0
      %5672 = vmatpush1.msra.mxu0 0.0
      %5673 = vmatprep.subr.mxu0 0.0
      %5674 = vmatpush1.msra.mxu0 0.0
      %5675 = vmatprep.subr.mxu0 0.0
      %5676 = vmatpush1.msra.mxu0 0.0
      %5677 = vmatprep.subr.mxu0 0.0
      %5678 = vmatpush1.msra.mxu0 0.0
      %5679 = vmatprep.subr.mxu0 0.0
      %5680 = vmatpush1.msra.mxu0 0.0
      %5681 = vmatprep.subr.mxu0 0.0
      %5682 = vmatpush1.msra.mxu0 0.0
      %5683 = vmatprep.subr.mxu0 0.0
      %5684 = vmatpush1.msra.mxu0 0.0
      %5685 = vmatprep.subr.mxu0 0.0
      %5686 = vmatpush1.msra.mxu0 0.0
      %5687 = vmatprep.subr.mxu0 0.0
      %5688 = vmatpush1.msra.mxu0 0.0
      %5689 = vmatprep.mubr.f32.mxu0 0.0
      %5690 = vmatmul.mubr.f32.gmra.mrb[0].mxu0 %v5576
      %v5691 = vpop.f32.mrb[0].mxu0
      %v5692 = vadd.f32 0.0, %v5691
      %v5693 = vpop.f32.mrb[0].mxu0
      %5694 = vmatprep.mubr.f32.mxu0 0.0
      %5695 = vmatmul.mubr.f32.gmra.mrb[0].mxu0 %v5577
      %v5696 = vpop.f32.mrb[0].mxu0
      %v5697 = vadd.f32 0.0, %v5696
      %v5698 = vpop.f32.mrb[0].mxu0
      %5699 = vmatprep.mubr.f32.mxu0 0.0
      %5700 = vmatmul.mubr.f32.gmra.mrb[0].mxu0 %v5578
      %v5701 = vpop.f32.mrb[0].mxu0
      %v5702 = vadd.f32 0.0, %v5701
      %v5703 = vpop.f32.mrb[0].mxu0
      %5704 = vmatprep.mubr.f32.mxu0 0.0
      %5705 = vmatmul.mubr.f32.gmra.mrb[0].mxu0 %v5579
      %v5706 = vpop.f32.mrb[0].mxu0
      %v5707 = vadd.f32 0.0, %v5706
      %v5708 = vpop.f32.mrb[0].mxu0
      %5709 = vmatprep.mubr.f32.mxu0 0.0
      %5710 = vmatmul.mubr.f32.gmra.mrb[0].mxu0 %v5580
      %v5711 = vpop.f32.mrb[0].mxu0
      %v5712 = vadd.f32 0.0, %v5711
      %v5713 = vpop.f32.mrb[0].mxu0
      %5714 = vmatprep.mubr.f32.mxu0 0.0
      %5715 = vmatmul.mubr.f32.gmra.mrb[0].mxu0 %v5581
      %v5716 = vpop.f32.mrb[0].mxu0
      %v5717 = vadd.f32 0.0, %v5716
      %v5718 = vpop.f32.mrb[0].mxu0
      %5719 = vmatprep.mubr.f32.mxu0 0.0
      %5720 = vmatmul.mubr.f32.gmra.mrb[0].mxu0 %v5582
      %v5721 = vpop.f32.mrb[0].mxu0
      %v5722 = vadd.f32 0.0, %v5721
      %v5723 = vpop.f32.mrb[0].mxu0
      %5724 = vmatprep.mubr.f32.mxu0 0.0
      %5725 = vmatmul.mubr.f32.gmra.mrb[0].mxu0 %v5583
      %v5726 = vpop.f32.mrb[0].mxu0
      %v5727 = vadd.f32 0.0, %v5726
      %v5728 = vpop.f32.mrb[0].mxu0
      %5729 = vmatprep.mubr.f32.mxu0 0.0
      %5730 = vmatmul.mubr.f32.gmra.mrb[0].mxu0 %v5584
      %v5731 = vpop.f32.mrb[0].mxu0
      %v5732 = vadd.f32 0.0, %v5731
      %v5733 = vpop.f32.mrb[0].mxu0
      %5734 = vmatprep.mubr.f32.mxu0 0.0
      %5735 = vmatmul.mubr.f32.gmra.mrb[0].mxu0 %v5585
      %v5736 = vpop.f32.mrb[0].mxu0
      %v5737 = vadd.f32 0.0, %v5736
      %v5738 = vpop.f32.mrb[0].mxu0
      %5739 = vmatprep.mubr.f32.mxu0 0.0
      %5740 = vmatmul.mubr.f32.gmra.mrb[0].mxu0 %v5586
      %v5741 = vpop.f32.mrb[0].mxu0
      %v5742 = vadd.f32 0.0, %v5741
      %v5743 = vpop.f32.mrb[0].mxu0
      %5744 = vmatprep.mubr.f32.mxu0 0.0
      %5745 = vmatmul.mubr.f32.gmra.mrb[0].mxu0 %v5587
      %v5746 = vpop.f32.mrb[0].mxu0
      %v5747 = vadd.f32 0.0, %v5746
      %v5748 = vpop.f32.mrb[0].mxu0
      %5749 = vmatprep.mubr.f32.mxu0 0.0
      %5750 = vmatmul.mubr.f32.gmra.mrb[0].mxu0 %v5588
      %v5751 = vpop.f32.mrb[0].mxu0
      %v5752 = vadd.f32 0.0, %v5751
      %v5753 = vpop.f32.mrb[0].mxu0
      %5754 = vmatprep.mubr.f32.mxu0 0.0
      %5755 = vmatmul.mubr.f32.gmra.mrb[0].mxu0 %v5589
      %v5756 = vpop.f32.mrb[0].mxu0
      %v5757 = vadd.f32 0.0, %v5756
      %v5758 = vpop.f32.mrb[0].mxu0
      %5759 = vmatprep.mubr.f32.mxu0 0.0
      %5760 = vmatmul.mubr.f32.gmra.mrb[0].mxu0 %v5590
      %v5761 = vpop.f32.mrb[0].mxu0
      %v5762 = vadd.f32 0.0, %v5761
      %v5763 = vpop.f32.mrb[0].mxu0
      %5764 = vmatprep.mubr.f32.mxu0 0.0
      %5765 = vmatmul.mubr.f32.gmra.mrb[0].mxu0 %v5591
      %v5766 = vpop.f32.mrb[0].mxu0
      %v5767 = vadd.f32 0.0, %v5766
      %v5768 = vpop.f32.mrb[0].mxu0
      %5769 = vmatprep.mubr.f32.mxu0 0.0
      %5770 = vmatmul.mubr.f32.gmra.mrb[0].mxu0 %v5592
      %v5771 = vpop.f32.mrb[0].mxu0
      %v5772 = vadd.f32 0.0, %v5771
      %v5773 = vpop.f32.mrb[0].mxu0
      %5774 = vmatprep.mubr.f32.mxu0 0.0
      %5775 = vmatmul.mubr.f32.gmra.mrb[0].mxu0 %v5593
      %v5776 = vpop.f32.mrb[0].mxu0
      %v5777 = vadd.f32 0.0, %v5776
      %v5778 = vpop.f32.mrb[0].mxu0
      %5779 = vmatprep.mubr.f32.mxu0 0.0
      %5780 = vmatmul.mubr.f32.gmra.mrb[0].mxu0 %v5594
      %v5781 = vpop.f32.mrb[0].mxu0
      %v5782 = vadd.f32 0.0, %v5781
      %v5783 = vpop.f32.mrb[0].mxu0
      %5784 = vmatprep.mubr.f32.mxu0 0.0
      %5785 = vmatmul.mubr.f32.gmra.mrb[0].mxu0 %v5595
      %v5786 = vpop.f32.mrb[0].mxu0
      %v5787 = vadd.f32 0.0, %v5786
      %v5788 = vpop.f32.mrb[0].mxu0
      %5789 = vmatprep.mubr.f32.mxu0 0.0
      %5790 = vmatmul.mubr.f32.gmra.mrb[0].mxu0 %v5596
      %v5791 = vpop.f32.mrb[0].mxu0
      %v5792 = vadd.f32 0.0, %v5791
      %v5793 = vpop.f32.mrb[0].mxu0
      %5794 = vmatprep.mubr.f32.mxu0 0.0
      %5795 = vmatmul.mubr.f32.gmra.mrb[0].mxu0 %v5597
      %v5796 = vpop.f32.mrb[0].mxu0
      %v5797 = vadd.f32 0.0, %v5796
      %v5798 = vpop.f32.mrb[0].mxu0
      %5799 = vmatprep.mubr.f32.mxu0 0.0
      %5800 = vmatmul.mubr.f32.gmra.mrb[0].mxu0 %v5598
      %v5801 = vpop.f32.mrb[0].mxu0
      %v5802 = vadd.f32 0.0, %v5801
      %v5803 = vpop.f32.mrb[0].mxu0
      %5804 = vmatprep.mubr.f32.mxu0 0.0
      %5805 = vmatmul.mubr.f32.gmra.mrb[0].mxu0 %v5599
      %v5806 = vpop.f32.mrb[0].mxu0
      %v5807 = vadd.f32 0.0, %v5806
      %v5808 = vpop.f32.mrb[0].mxu0
      %5809 = vmatprep.mubr.f32.mxu0 0.0
      %5810 = vmatmul.mubr.f32.gmra.mrb[0].mxu0 %v5600
      %v5811 = vpop.f32.mrb[0].mxu0
      %v5812 = vadd.f32 0.0, %v5811
      %v5813 = vpop.f32.mrb[0].mxu0
      %5814 = vmatprep.mubr.f32.mxu0 0.0
      %5815 = vmatmul.mubr.f32.gmra.mrb[0].mxu0 %v5601
      %v5816 = vpop.f32.mrb[0].mxu0
      %v5817 = vadd.f32 0.0, %v5816
      %v5818 = vpop.f32.mrb[0].mxu0
      %5819 = vmatprep.mubr.f32.mxu0 0.0
      %5820 = vmatmul.mubr.f32.gmra.mrb[0].mxu0 %v5602
      %v5821 = vpop.f32.mrb[0].mxu0
      %v5822 = vadd.f32 0.0, %v5821
      %v5823 = vpop.f32.mrb[0].mxu0
      %5824 = vmatprep.mubr.f32.mxu0 0.0
      %5825 = vmatmul.mubr.f32.gmra.mrb[0].mxu0 %v5603
      %v5826 = vpop.f32.mrb[0].mxu0
      %v5827 = vadd.f32 0.0, %v5826
      %v5828 = vpop.f32.mrb[0].mxu0
      %5829 = vmatprep.mubr.f32.mxu0 0.0
      %5830 = vmatmul.mubr.f32.gmra.mrb[0].mxu0 %v5604
      %v5831 = vpop.f32.mrb[0].mxu0
      %v5832 = vadd.f32 0.0, %v5831
      %v5833 = vpop.f32.mrb[0].mxu0
      %5834 = vmatprep.mubr.f32.mxu0 0.0
      %5835 = vmatmul.mubr.f32.gmra.mrb[0].mxu0 %v5605
      %v5836 = vpop.f32.mrb[0].mxu0
      %v5837 = vadd.f32 0.0, %v5836
      %v5838 = vpop.f32.mrb[0].mxu0
      %5839 = vmatprep.mubr.f32.mxu0 0.0
      %5840 = vmatmul.mubr.f32.gmra.mrb[0].mxu0 %v5606
      %v5841 = vpop.f32.mrb[0].mxu0
      %v5842 = vadd.f32 0.0, %v5841
      %v5843 = vpop.f32.mrb[0].mxu0
      %5844 = vmatprep.mubr.f32.mxu0 0.0
      %5845 = vmatmul.mubr.f32.gmra.mrb[0].mxu0 %v5607
      %v5846 = vpop.f32.mrb[0].mxu0
      %v5847 = vadd.f32 0.0, %v5846
      %v5848 = vpop.f32.mrb[0].mxu0
      %5849 = vdwg.mxu0
      %v5850 = vadd.f32 %v5543, %v5692
      %v5851 = vadd.f32 %v5544, %v5697
      %v5852 = vadd.f32 %v5545, %v5702
      %v5853 = vadd.f32 %v5546, %v5707
      %v5854 = vadd.f32 %v5547, %v5712
      %v5855 = vadd.f32 %v5548, %v5717
      %v5856 = vadd.f32 %v5549, %v5722
      %v5857 = vadd.f32 %v5550, %v5727
      %v5858 = vadd.f32 %v5551, %v5732
      %v5859 = vadd.f32 %v5552, %v5737
      %v5860 = vadd.f32 %v5553, %v5742
      %v5861 = vadd.f32 %v5554, %v5747
      %v5862 = vadd.f32 %v5555, %v5752
      %v5863 = vadd.f32 %v5556, %v5757
      %v5864 = vadd.f32 %v5557, %v5762
      %v5865 = vadd.f32 %v5558, %v5767
      %v5866 = vadd.f32 %v5559, %v5772
      %v5867 = vadd.f32 %v5560, %v5777
      %v5868 = vadd.f32 %v5561, %v5782
      %v5869 = vadd.f32 %v5562, %v5787
      %v5870 = vadd.f32 %v5563, %v5792
      %v5871 = vadd.f32 %v5564, %v5797
      %v5872 = vadd.f32 %v5565, %v5802
      %v5873 = vadd.f32 %v5566, %v5807
      %v5874 = vadd.f32 %v5567, %v5812
      %v5875 = vadd.f32 %v5568, %v5817
      %v5876 = vadd.f32 %v5569, %v5822
      %v5877 = vadd.f32 %v5570, %v5827
      %v5878 = vadd.f32 %v5571, %v5832
      %v5879 = vadd.f32 %v5572, %v5837
      %v5880 = vadd.f32 %v5573, %v5842
      %v5881 = vadd.f32 %v5574, %v5847
      %v5882 = vld [vmem:[%s5575 + $0x1] sm:$0xff]
      %v5883 = vld [vmem:[%s5575 + $0x9] sm:$0xff]
      %v5884 = vld [vmem:[%s5575 + $0x19] sm:$0xff]
      %v5885 = vld [vmem:[%s5575 + $0x21] sm:$0xff]
      %v5886 = vld [vmem:[%s5575 + $0x31] sm:$0xff]
      %v5887 = vld [vmem:[%s5575 + $0x39] sm:$0xff]
      %v5888 = vld [vmem:[%s5575 + $0x49] sm:$0xff]
      %v5889 = vld [vmem:[%s5575 + $0x51] sm:$0xff]
      %v5890 = vld [vmem:[%s5575 + $0x61] sm:$0xff]
      %v5891 = vld [vmem:[%s5575 + $0x69] sm:$0xff]
      %v5892 = vld [vmem:[%s5575 + $0x79] sm:$0xff]
      %v5893 = vld [vmem:[%s5575 + $0x81] sm:$0xff]
      %v5894 = vld [vmem:[%s5575 + $0x91] sm:$0xff]
      %v5895 = vld [vmem:[%s5575 + $0x99] sm:$0xff]
      %v5896 = vld [vmem:[%s5575 + $0xa9] sm:$0xff]
      %v5897 = vld [vmem:[%s5575 + $0xb1] sm:$0xff]
      %v5898 = vld [vmem:[%s5575 + $0xc1] sm:$0xff]
      %v5899 = vld [vmem:[%s5575 + $0xc9] sm:$0xff]
      %v5900 = vld [vmem:[%s5575 + $0xd9] sm:$0xff]
      %v5901 = vld [vmem:[%s5575 + $0xe1] sm:$0xff]
      %v5902 = vld [vmem:[%s5575 + $0xf1] sm:$0xff]
      %v5903 = vld [vmem:[%s5575 + $0xf9] sm:$0xff]
      %v5904 = vld [vmem:[%s5575 + $0x109] sm:$0xff]
      %v5905 = vld [vmem:[%s5575 + $0x111] sm:$0xff]
      %v5906 = vld [vmem:[%s5575 + $0x121] sm:$0xff]
      %v5907 = vld [vmem:[%s5575 + $0x129] sm:$0xff]
      %v5908 = vld [vmem:[%s5575 + $0x139] sm:$0xff]
      %v5909 = vld [vmem:[%s5575 + $0x141] sm:$0xff]
      %v5910 = vld [vmem:[%s5575 + $0x151] sm:$0xff]
      %v5911 = vld [vmem:[%s5575 + $0x159] sm:$0xff]
      %v5912 = vld [vmem:[%s5575 + $0x169] sm:$0xff]
      %v5913 = vld [vmem:[%s5575 + $0x171] sm:$0xff]
      %s5914 = scalar_lea.vmem %s3, 896
      %v5915 = vld [vmem:[%s5914] sm:$0xff]
      %v5916 = vld [vmem:[%s5914 + $0x8] sm:$0xff]
      %v5917 = vld [vmem:[%s5914 + $0x10] sm:$0xff]
      %v5918 = vld [vmem:[%s5914 + $0x18] sm:$0xff]
      %v5919 = vld [vmem:[%s5914 + $0x20] sm:$0xff]
      %v5920 = vld [vmem:[%s5914 + $0x28] sm:$0xff]
      %v5921 = vld [vmem:[%s5914 + $0x30] sm:$0xff]
      %v5922 = vld [vmem:[%s5914 + $0x38] sm:$0xff]
      %v5923 = vld [vmem:[%s5914 + $0x40] sm:$0xff]
      %v5924 = vld [vmem:[%s5914 + $0x48] sm:$0xff]
      %v5925 = vld [vmem:[%s5914 + $0x50] sm:$0xff]
      %v5926 = vld [vmem:[%s5914 + $0x58] sm:$0xff]
      %v5927 = vld [vmem:[%s5914 + $0x60] sm:$0xff]
      %v5928 = vld [vmem:[%s5914 + $0x68] sm:$0xff]
      %v5929 = vld [vmem:[%s5914 + $0x70] sm:$0xff]
      %v5930 = vld [vmem:[%s5914 + $0x78] sm:$0xff]
      %5931 = vmatprep.subr.mxu0 0.0
      %5932 = vmatpush1.msra.mxu0 %v5915
      %5933 = vmatprep.subr.mxu0 0.0
      %5934 = vmatpush1.msra.mxu0 %v5916
      %5935 = vmatprep.subr.mxu0 0.0
      %5936 = vmatpush1.msra.mxu0 %v5917
      %5937 = vmatprep.subr.mxu0 0.0
      %5938 = vmatpush1.msra.mxu0 %v5918
      %5939 = vmatprep.subr.mxu0 0.0
      %5940 = vmatpush1.msra.mxu0 %v5919
      %5941 = vmatprep.subr.mxu0 0.0
      %5942 = vmatpush1.msra.mxu0 %v5920
      %5943 = vmatprep.subr.mxu0 0.0
      %5944 = vmatpush1.msra.mxu0 %v5921
      %5945 = vmatprep.subr.mxu0 0.0
      %5946 = vmatpush1.msra.mxu0 %v5922
      %5947 = vmatprep.subr.mxu0 0.0
      %5948 = vmatpush1.msra.mxu0 %v5923
      %5949 = vmatprep.subr.mxu0 0.0
      %5950 = vmatpush1.msra.mxu0 %v5924
      %5951 = vmatprep.subr.mxu0 0.0
      %5952 = vmatpush1.msra.mxu0 %v5925
      %5953 = vmatprep.subr.mxu0 0.0
      %5954 = vmatpush1.msra.mxu0 %v5926
      %5955 = vmatprep.subr.mxu0 0.0
      %5956 = vmatpush1.msra.mxu0 %v5927
      %5957 = vmatprep.subr.mxu0 0.0
      %5958 = vmatpush1.msra.mxu0 %v5928
      %5959 = vmatprep.subr.mxu0 0.0
      %5960 = vmatpush1.msra.mxu0 %v5929
      %5961 = vmatprep.subr.mxu0 0.0
      %5962 = vmatpush1.msra.mxu0 %v5930
      %5963 = vmatprep.subr.mxu0 0.0
      %5964 = vmatpush1.msra.mxu0 0.0
      %5965 = vmatprep.subr.mxu0 0.0
      %5966 = vmatpush1.msra.mxu0 0.0
      %5967 = vmatprep.subr.mxu0 0.0
      %5968 = vmatpush1.msra.mxu0 0.0
      %5969 = vmatprep.subr.mxu0 0.0
      %5970 = vmatpush1.msra.mxu0 0.0
      %5971 = vmatprep.subr.mxu0 0.0
      %5972 = vmatpush1.msra.mxu0 0.0
      %5973 = vmatprep.subr.mxu0 0.0
      %5974 = vmatpush1.msra.mxu0 0.0
      %5975 = vmatprep.subr.mxu0 0.0
      %5976 = vmatpush1.msra.mxu0 0.0
      %5977 = vmatprep.subr.mxu0 0.0
      %5978 = vmatpush1.msra.mxu0 0.0
      %5979 = vmatprep.subr.mxu0 0.0
      %5980 = vmatpush1.msra.mxu0 0.0
      %5981 = vmatprep.subr.mxu0 0.0
      %5982 = vmatpush1.msra.mxu0 0.0
      %5983 = vmatprep.subr.mxu0 0.0
      %5984 = vmatpush1.msra.mxu0 0.0
      %5985 = vmatprep.subr.mxu0 0.0
      %5986 = vmatpush1.msra.mxu0 0.0
      %5987 = vmatprep.subr.mxu0 0.0
      %5988 = vmatpush1.msra.mxu0 0.0
      %5989 = vmatprep.subr.mxu0 0.0
      %5990 = vmatpush1.msra.mxu0 0.0
      %5991 = vmatprep.subr.mxu0 0.0
      %5992 = vmatpush1.msra.mxu0 0.0
      %5993 = vmatprep.subr.mxu0 0.0
      %5994 = vmatpush1.msra.mxu0 0.0
      %5995 = vmatprep.mubr.f32.mxu0 0.0
      %5996 = vmatmul.mubr.f32.gmra.mrb[0].mxu0 %v5882
      %v5997 = vpop.f32.mrb[0].mxu0
      %v5998 = vadd.f32 0.0, %v5997
      %v5999 = vpop.f32.mrb[0].mxu0
      %6000 = vmatprep.mubr.f32.mxu0 0.0
      %6001 = vmatmul.mubr.f32.gmra.mrb[0].mxu0 %v5883
      %v6002 = vpop.f32.mrb[0].mxu0
      %v6003 = vadd.f32 0.0, %v6002
      %v6004 = vpop.f32.mrb[0].mxu0
      %6005 = vmatprep.mubr.f32.mxu0 0.0
      %6006 = vmatmul.mubr.f32.gmra.mrb[0].mxu0 %v5884
      %v6007 = vpop.f32.mrb[0].mxu0
      %v6008 = vadd.f32 0.0, %v6007
      %v6009 = vpop.f32.mrb[0].mxu0
      %6010 = vmatprep.mubr.f32.mxu0 0.0
      %6011 = vmatmul.mubr.f32.gmra.mrb[0].mxu0 %v5885
      %v6012 = vpop.f32.mrb[0].mxu0
      %v6013 = vadd.f32 0.0, %v6012
      %v6014 = vpop.f32.mrb[0].mxu0
      %6015 = vmatprep.mubr.f32.mxu0 0.0
      %6016 = vmatmul.mubr.f32.gmra.mrb[0].mxu0 %v5886
      %v6017 = vpop.f32.mrb[0].mxu0
      %v6018 = vadd.f32 0.0, %v6017
      %v6019 = vpop.f32.mrb[0].mxu0
      %6020 = vmatprep.mubr.f32.mxu0 0.0
      %6021 = vmatmul.mubr.f32.gmra.mrb[0].mxu0 %v5887
      %v6022 = vpop.f32.mrb[0].mxu0
      %v6023 = vadd.f32 0.0, %v6022
      %v6024 = vpop.f32.mrb[0].mxu0
      %6025 = vmatprep.mubr.f32.mxu0 0.0
      %6026 = vmatmul.mubr.f32.gmra.mrb[0].mxu0 %v5888
      %v6027 = vpop.f32.mrb[0].mxu0
      %v6028 = vadd.f32 0.0, %v6027
      %v6029 = vpop.f32.mrb[0].mxu0
      %6030 = vmatprep.mubr.f32.mxu0 0.0
      %6031 = vmatmul.mubr.f32.gmra.mrb[0].mxu0 %v5889
      %v6032 = vpop.f32.mrb[0].mxu0
      %v6033 = vadd.f32 0.0, %v6032
      %v6034 = vpop.f32.mrb[0].mxu0
      %6035 = vmatprep.mubr.f32.mxu0 0.0
      %6036 = vmatmul.mubr.f32.gmra.mrb[0].mxu0 %v5890
      %v6037 = vpop.f32.mrb[0].mxu0
      %v6038 = vadd.f32 0.0, %v6037
      %v6039 = vpop.f32.mrb[0].mxu0
      %6040 = vmatprep.mubr.f32.mxu0 0.0
      %6041 = vmatmul.mubr.f32.gmra.mrb[0].mxu0 %v5891
      %v6042 = vpop.f32.mrb[0].mxu0
      %v6043 = vadd.f32 0.0, %v6042
      %v6044 = vpop.f32.mrb[0].mxu0
      %6045 = vmatprep.mubr.f32.mxu0 0.0
      %6046 = vmatmul.mubr.f32.gmra.mrb[0].mxu0 %v5892
      %v6047 = vpop.f32.mrb[0].mxu0
      %v6048 = vadd.f32 0.0, %v6047
      %v6049 = vpop.f32.mrb[0].mxu0
      %6050 = vmatprep.mubr.f32.mxu0 0.0
      %6051 = vmatmul.mubr.f32.gmra.mrb[0].mxu0 %v5893
      %v6052 = vpop.f32.mrb[0].mxu0
      %v6053 = vadd.f32 0.0, %v6052
      %v6054 = vpop.f32.mrb[0].mxu0
      %6055 = vmatprep.mubr.f32.mxu0 0.0
      %6056 = vmatmul.mubr.f32.gmra.mrb[0].mxu0 %v5894
      %v6057 = vpop.f32.mrb[0].mxu0
      %v6058 = vadd.f32 0.0, %v6057
      %v6059 = vpop.f32.mrb[0].mxu0
      %6060 = vmatprep.mubr.f32.mxu0 0.0
      %6061 = vmatmul.mubr.f32.gmra.mrb[0].mxu0 %v5895
      %v6062 = vpop.f32.mrb[0].mxu0
      %v6063 = vadd.f32 0.0, %v6062
      %v6064 = vpop.f32.mrb[0].mxu0
      %6065 = vmatprep.mubr.f32.mxu0 0.0
      %6066 = vmatmul.mubr.f32.gmra.mrb[0].mxu0 %v5896
      %v6067 = vpop.f32.mrb[0].mxu0
      %v6068 = vadd.f32 0.0, %v6067
      %v6069 = vpop.f32.mrb[0].mxu0
      %6070 = vmatprep.mubr.f32.mxu0 0.0
      %6071 = vmatmul.mubr.f32.gmra.mrb[0].mxu0 %v5897
      %v6072 = vpop.f32.mrb[0].mxu0
      %v6073 = vadd.f32 0.0, %v6072
      %v6074 = vpop.f32.mrb[0].mxu0
      %6075 = vmatprep.mubr.f32.mxu0 0.0
      %6076 = vmatmul.mubr.f32.gmra.mrb[0].mxu0 %v5898
      %v6077 = vpop.f32.mrb[0].mxu0
      %v6078 = vadd.f32 0.0, %v6077
      %v6079 = vpop.f32.mrb[0].mxu0
      %6080 = vmatprep.mubr.f32.mxu0 0.0
      %6081 = vmatmul.mubr.f32.gmra.mrb[0].mxu0 %v5899
      %v6082 = vpop.f32.mrb[0].mxu0
      %v6083 = vadd.f32 0.0, %v6082
      %v6084 = vpop.f32.mrb[0].mxu0
      %6085 = vmatprep.mubr.f32.mxu0 0.0
      %6086 = vmatmul.mubr.f32.gmra.mrb[0].mxu0 %v5900
      %v6087 = vpop.f32.mrb[0].mxu0
      %v6088 = vadd.f32 0.0, %v6087
      %v6089 = vpop.f32.mrb[0].mxu0
      %6090 = vmatprep.mubr.f32.mxu0 0.0
      %6091 = vmatmul.mubr.f32.gmra.mrb[0].mxu0 %v5901
      %v6092 = vpop.f32.mrb[0].mxu0
      %v6093 = vadd.f32 0.0, %v6092
      %v6094 = vpop.f32.mrb[0].mxu0
      %6095 = vmatprep.mubr.f32.mxu0 0.0
      %6096 = vmatmul.mubr.f32.gmra.mrb[0].mxu0 %v5902
      %v6097 = vpop.f32.mrb[0].mxu0
      %v6098 = vadd.f32 0.0, %v6097
      %v6099 = vpop.f32.mrb[0].mxu0
      %6100 = vmatprep.mubr.f32.mxu0 0.0
      %6101 = vmatmul.mubr.f32.gmra.mrb[0].mxu0 %v5903
      %v6102 = vpop.f32.mrb[0].mxu0
      %v6103 = vadd.f32 0.0, %v6102
      %v6104 = vpop.f32.mrb[0].mxu0
      %6105 = vmatprep.mubr.f32.mxu0 0.0
      %6106 = vmatmul.mubr.f32.gmra.mrb[0].mxu0 %v5904
      %v6107 = vpop.f32.mrb[0].mxu0
      %v6108 = vadd.f32 0.0, %v6107
      %v6109 = vpop.f32.mrb[0].mxu0
      %6110 = vmatprep.mubr.f32.mxu0 0.0
      %6111 = vmatmul.mubr.f32.gmra.mrb[0].mxu0 %v5905
      %v6112 = vpop.f32.mrb[0].mxu0
      %v6113 = vadd.f32 0.0, %v6112
      %v6114 = vpop.f32.mrb[0].mxu0
      %6115 = vmatprep.mubr.f32.mxu0 0.0
      %6116 = vmatmul.mubr.f32.gmra.mrb[0].mxu0 %v5906
      %v6117 = vpop.f32.mrb[0].mxu0
      %v6118 = vadd.f32 0.0, %v6117
      %v6119 = vpop.f32.mrb[0].mxu0
      %6120 = vmatprep.mubr.f32.mxu0 0.0
      %6121 = vmatmul.mubr.f32.gmra.mrb[0].mxu0 %v5907
      %v6122 = vpop.f32.mrb[0].mxu0
      %v6123 = vadd.f32 0.0, %v6122
      %v6124 = vpop.f32.mrb[0].mxu0
      %6125 = vmatprep.mubr.f32.mxu0 0.0
      %6126 = vmatmul.mubr.f32.gmra.mrb[0].mxu0 %v5908
      %v6127 = vpop.f32.mrb[0].mxu0
      %v6128 = vadd.f32 0.0, %v6127
      %v6129 = vpop.f32.mrb[0].mxu0
      %6130 = vmatprep.mubr.f32.mxu0 0.0
      %6131 = vmatmul.mubr.f32.gmra.mrb[0].mxu0 %v5909
      %v6132 = vpop.f32.mrb[0].mxu0
      %v6133 = vadd.f32 0.0, %v6132
      %v6134 = vpop.f32.mrb[0].mxu0
      %6135 = vmatprep.mubr.f32.mxu0 0.0
      %6136 = vmatmul.mubr.f32.gmra.mrb[0].mxu0 %v5910
      %v6137 = vpop.f32.mrb[0].mxu0
      %v6138 = vadd.f32 0.0, %v6137
      %v6139 = vpop.f32.mrb[0].mxu0
      %6140 = vmatprep.mubr.f32.mxu0 0.0
      %6141 = vmatmul.mubr.f32.gmra.mrb[0].mxu0 %v5911
      %v6142 = vpop.f32.mrb[0].mxu0
      %v6143 = vadd.f32 0.0, %v6142
      %v6144 = vpop.f32.mrb[0].mxu0
      %6145 = vmatprep.mubr.f32.mxu0 0.0
      %6146 = vmatmul.mubr.f32.gmra.mrb[0].mxu0 %v5912
      %v6147 = vpop.f32.mrb[0].mxu0
      %v6148 = vadd.f32 0.0, %v6147
      %v6149 = vpop.f32.mrb[0].mxu0
      %6150 = vmatprep.mubr.f32.mxu0 0.0
      %6151 = vmatmul.mubr.f32.gmra.mrb[0].mxu0 %v5913
      %v6152 = vpop.f32.mrb[0].mxu0
      %v6153 = vadd.f32 0.0, %v6152
      %v6154 = vpop.f32.mrb[0].mxu0
      %6155 = vdwg.mxu0
      %v6156 = vadd.f32 %v5850, %v5998
      %v6157 = vadd.f32 %v5851, %v6003
      %v6158 = vadd.f32 %v5852, %v6008
      %v6159 = vadd.f32 %v5853, %v6013
      %v6160 = vadd.f32 %v5854, %v6018
      %v6161 = vadd.f32 %v5855, %v6023
      %v6162 = vadd.f32 %v5856, %v6028
      %v6163 = vadd.f32 %v5857, %v6033
      %v6164 = vadd.f32 %v5858, %v6038
      %v6165 = vadd.f32 %v5859, %v6043
      %v6166 = vadd.f32 %v5860, %v6048
      %v6167 = vadd.f32 %v5861, %v6053
      %v6168 = vadd.f32 %v5862, %v6058
      %v6169 = vadd.f32 %v5863, %v6063
      %v6170 = vadd.f32 %v5864, %v6068
      %v6171 = vadd.f32 %v5865, %v6073
      %v6172 = vadd.f32 %v5866, %v6078
      %v6173 = vadd.f32 %v5867, %v6083
      %v6174 = vadd.f32 %v5868, %v6088
      %v6175 = vadd.f32 %v5869, %v6093
      %v6176 = vadd.f32 %v5870, %v6098
      %v6177 = vadd.f32 %v5871, %v6103
      %v6178 = vadd.f32 %v5872, %v6108
      %v6179 = vadd.f32 %v5873, %v6113
      %v6180 = vadd.f32 %v5874, %v6118
      %v6181 = vadd.f32 %v5875, %v6123
      %v6182 = vadd.f32 %v5876, %v6128
      %v6183 = vadd.f32 %v5877, %v6133
      %v6184 = vadd.f32 %v5878, %v6138
      %v6185 = vadd.f32 %v5879, %v6143
      %v6186 = vadd.f32 %v5880, %v6148
      %v6187 = vadd.f32 %v5881, %v6153
      %v6188 = vld [vmem:[%s5575 + $0x2] sm:$0xff]
      %v6189 = vld [vmem:[%s5575 + $0xa] sm:$0xff]
      %v6190 = vld [vmem:[%s5575 + $0x1a] sm:$0xff]
      %v6191 = vld [vmem:[%s5575 + $0x22] sm:$0xff]
      %v6192 = vld [vmem:[%s5575 + $0x32] sm:$0xff]
      %v6193 = vld [vmem:[%s5575 + $0x3a] sm:$0xff]
      %v6194 = vld [vmem:[%s5575 + $0x4a] sm:$0xff]
      %v6195 = vld [vmem:[%s5575 + $0x52] sm:$0xff]
      %v6196 = vld [vmem:[%s5575 + $0x62] sm:$0xff]
      %v6197 = vld [vmem:[%s5575 + $0x6a] sm:$0xff]
      %v6198 = vld [vmem:[%s5575 + $0x7a] sm:$0xff]
      %v6199 = vld [vmem:[%s5575 + $0x82] sm:$0xff]
      %v6200 = vld [vmem:[%s5575 + $0x92] sm:$0xff]
      %v6201 = vld [vmem:[%s5575 + $0x9a] sm:$0xff]
      %v6202 = vld [vmem:[%s5575 + $0xaa] sm:$0xff]
      %v6203 = vld [vmem:[%s5575 + $0xb2] sm:$0xff]
      %v6204 = vld [vmem:[%s5575 + $0xc2] sm:$0xff]
      %v6205 = vld [vmem:[%s5575 + $0xca] sm:$0xff]
      %v6206 = vld [vmem:[%s5575 + $0xda] sm:$0xff]
      %v6207 = vld [vmem:[%s5575 + $0xe2] sm:$0xff]
      %v6208 = vld [vmem:[%s5575 + $0xf2] sm:$0xff]
      %v6209 = vld [vmem:[%s5575 + $0xfa] sm:$0xff]
      %v6210 = vld [vmem:[%s5575 + $0x10a] sm:$0xff]
      %v6211 = vld [vmem:[%s5575 + $0x112] sm:$0xff]
      %v6212 = vld [vmem:[%s5575 + $0x122] sm:$0xff]
      %v6213 = vld [vmem:[%s5575 + $0x12a] sm:$0xff]
      %v6214 = vld [vmem:[%s5575 + $0x13a] sm:$0xff]
      %v6215 = vld [vmem:[%s5575 + $0x142] sm:$0xff]
      %v6216 = vld [vmem:[%s5575 + $0x152] sm:$0xff]
      %v6217 = vld [vmem:[%s5575 + $0x15a] sm:$0xff]
      %v6218 = vld [vmem:[%s5575 + $0x16a] sm:$0xff]
      %v6219 = vld [vmem:[%s5575 + $0x172] sm:$0xff]
      %s6220 = scalar_lea.vmem %s3, 1024
      %v6221 = vld [vmem:[%s6220] sm:$0xff]
      %v6222 = vld [vmem:[%s6220 + $0x8] sm:$0xff]
      %v6223 = vld [vmem:[%s6220 + $0x10] sm:$0xff]
      %v6224 = vld [vmem:[%s6220 + $0x18] sm:$0xff]
      %v6225 = vld [vmem:[%s6220 + $0x20] sm:$0xff]
      %v6226 = vld [vmem:[%s6220 + $0x28] sm:$0xff]
      %v6227 = vld [vmem:[%s6220 + $0x30] sm:$0xff]
      %v6228 = vld [vmem:[%s6220 + $0x38] sm:$0xff]
      %v6229 = vld [vmem:[%s6220 + $0x40] sm:$0xff]
      %v6230 = vld [vmem:[%s6220 + $0x48] sm:$0xff]
      %v6231 = vld [vmem:[%s6220 + $0x50] sm:$0xff]
      %v6232 = vld [vmem:[%s6220 + $0x58] sm:$0xff]
      %v6233 = vld [vmem:[%s6220 + $0x60] sm:$0xff]
      %v6234 = vld [vmem:[%s6220 + $0x68] sm:$0xff]
      %v6235 = vld [vmem:[%s6220 + $0x70] sm:$0xff]
      %v6236 = vld [vmem:[%s6220 + $0x78] sm:$0xff]
      %6237 = vmatprep.subr.mxu0 0.0
      %6238 = vmatpush1.msra.mxu0 %v6221
      %6239 = vmatprep.subr.mxu0 0.0
      %6240 = vmatpush1.msra.mxu0 %v6222
      %6241 = vmatprep.subr.mxu0 0.0
      %6242 = vmatpush1.msra.mxu0 %v6223
      %6243 = vmatprep.subr.mxu0 0.0
      %6244 = vmatpush1.msra.mxu0 %v6224
      %6245 = vmatprep.subr.mxu0 0.0
      %6246 = vmatpush1.msra.mxu0 %v6225
      %6247 = vmatprep.subr.mxu0 0.0
      %6248 = vmatpush1.msra.mxu0 %v6226
      %6249 = vmatprep.subr.mxu0 0.0
      %6250 = vmatpush1.msra.mxu0 %v6227
      %6251 = vmatprep.subr.mxu0 0.0
      %6252 = vmatpush1.msra.mxu0 %v6228
      %6253 = vmatprep.subr.mxu0 0.0
      %6254 = vmatpush1.msra.mxu0 %v6229
      %6255 = vmatprep.subr.mxu0 0.0
      %6256 = vmatpush1.msra.mxu0 %v6230
      %6257 = vmatprep.subr.mxu0 0.0
      %6258 = vmatpush1.msra.mxu0 %v6231
      %6259 = vmatprep.subr.mxu0 0.0
      %6260 = vmatpush1.msra.mxu0 %v6232
      %6261 = vmatprep.subr.mxu0 0.0
      %6262 = vmatpush1.msra.mxu0 %v6233
      %6263 = vmatprep.subr.mxu0 0.0
      %6264 = vmatpush1.msra.mxu0 %v6234
      %6265 = vmatprep.subr.mxu0 0.0
      %6266 = vmatpush1.msra.mxu0 %v6235
      %6267 = vmatprep.subr.mxu0 0.0
      %6268 = vmatpush1.msra.mxu0 %v6236
      %6269 = vmatprep.subr.mxu0 0.0
      %6270 = vmatpush1.msra.mxu0 0.0
      %6271 = vmatprep.subr.mxu0 0.0
      %6272 = vmatpush1.msra.mxu0 0.0
      %6273 = vmatprep.subr.mxu0 0.0
      %6274 = vmatpush1.msra.mxu0 0.0
      %6275 = vmatprep.subr.mxu0 0.0
      %6276 = vmatpush1.msra.mxu0 0.0
      %6277 = vmatprep.subr.mxu0 0.0
      %6278 = vmatpush1.msra.mxu0 0.0
      %6279 = vmatprep.subr.mxu0 0.0
      %6280 = vmatpush1.msra.mxu0 0.0
      %6281 = vmatprep.subr.mxu0 0.0
      %6282 = vmatpush1.msra.mxu0 0.0
      %6283 = vmatprep.subr.mxu0 0.0
      %6284 = vmatpush1.msra.mxu0 0.0
      %6285 = vmatprep.subr.mxu0 0.0
      %6286 = vmatpush1.msra.mxu0 0.0
      %6287 = vmatprep.subr.mxu0 0.0
      %6288 = vmatpush1.msra.mxu0 0.0
      %6289 = vmatprep.subr.mxu0 0.0
      %6290 = vmatpush1.msra.mxu0 0.0
      %6291 = vmatprep.subr.mxu0 0.0
      %6292 = vmatpush1.msra.mxu0 0.0
      %6293 = vmatprep.subr.mxu0 0.0
      %6294 = vmatpush1.msra.mxu0 0.0
      %6295 = vmatprep.subr.mxu0 0.0
      %6296 = vmatpush1.msra.mxu0 0.0
      %6297 = vmatprep.subr.mxu0 0.0
      %6298 = vmatpush1.msra.mxu0 0.0
      %6299 = vmatprep.subr.mxu0 0.0
      %6300 = vmatpush1.msra.mxu0 0.0
      %6301 = vmatprep.mubr.f32.mxu0 0.0
      %6302 = vmatmul.mubr.f32.gmra.mrb[0].mxu0 %v6188
      %v6303 = vpop.f32.mrb[0].mxu0
      %v6304 = vadd.f32 0.0, %v6303
      %v6305 = vpop.f32.mrb[0].mxu0
      %6306 = vmatprep.mubr.f32.mxu0 0.0
      %6307 = vmatmul.mubr.f32.gmra.mrb[0].mxu0 %v6189
      %v6308 = vpop.f32.mrb[0].mxu0
      %v6309 = vadd.f32 0.0, %v6308
      %v6310 = vpop.f32.mrb[0].mxu0
      %6311 = vmatprep.mubr.f32.mxu0 0.0
      %6312 = vmatmul.mubr.f32.gmra.mrb[0].mxu0 %v6190
      %v6313 = vpop.f32.mrb[0].mxu0
      %v6314 = vadd.f32 0.0, %v6313
      %v6315 = vpop.f32.mrb[0].mxu0
      %6316 = vmatprep.mubr.f32.mxu0 0.0
      %6317 = vmatmul.mubr.f32.gmra.mrb[0].mxu0 %v6191
      %v6318 = vpop.f32.mrb[0].mxu0
      %v6319 = vadd.f32 0.0, %v6318
      %v6320 = vpop.f32.mrb[0].mxu0
      %6321 = vmatprep.mubr.f32.mxu0 0.0
      %6322 = vmatmul.mubr.f32.gmra.mrb[0].mxu0 %v6192
      %v6323 = vpop.f32.mrb[0].mxu0
      %v6324 = vadd.f32 0.0, %v6323
      %v6325 = vpop.f32.mrb[0].mxu0
      %6326 = vmatprep.mubr.f32.mxu0 0.0
      %6327 = vmatmul.mubr.f32.gmra.mrb[0].mxu0 %v6193
      %v6328 = vpop.f32.mrb[0].mxu0
      %v6329 = vadd.f32 0.0, %v6328
      %v6330 = vpop.f32.mrb[0].mxu0
      %6331 = vmatprep.mubr.f32.mxu0 0.0
      %6332 = vmatmul.mubr.f32.gmra.mrb[0].mxu0 %v6194
      %v6333 = vpop.f32.mrb[0].mxu0
      %v6334 = vadd.f32 0.0, %v6333
      %v6335 = vpop.f32.mrb[0].mxu0
      %6336 = vmatprep.mubr.f32.mxu0 0.0
      %6337 = vmatmul.mubr.f32.gmra.mrb[0].mxu0 %v6195
      %v6338 = vpop.f32.mrb[0].mxu0
      %v6339 = vadd.f32 0.0, %v6338
      %v6340 = vpop.f32.mrb[0].mxu0
      %6341 = vmatprep.mubr.f32.mxu0 0.0
      %6342 = vmatmul.mubr.f32.gmra.mrb[0].mxu0 %v6196
      %v6343 = vpop.f32.mrb[0].mxu0
      %v6344 = vadd.f32 0.0, %v6343
      %v6345 = vpop.f32.mrb[0].mxu0
      %6346 = vmatprep.mubr.f32.mxu0 0.0
      %6347 = vmatmul.mubr.f32.gmra.mrb[0].mxu0 %v6197
      %v6348 = vpop.f32.mrb[0].mxu0
      %v6349 = vadd.f32 0.0, %v6348
      %v6350 = vpop.f32.mrb[0].mxu0
      %6351 = vmatprep.mubr.f32.mxu0 0.0
      %6352 = vmatmul.mubr.f32.gmra.mrb[0].mxu0 %v6198
      %v6353 = vpop.f32.mrb[0].mxu0
      %v6354 = vadd.f32 0.0, %v6353
      %v6355 = vpop.f32.mrb[0].mxu0
      %6356 = vmatprep.mubr.f32.mxu0 0.0
      %6357 = vmatmul.mubr.f32.gmra.mrb[0].mxu0 %v6199
      %v6358 = vpop.f32.mrb[0].mxu0
      %v6359 = vadd.f32 0.0, %v6358
      %v6360 = vpop.f32.mrb[0].mxu0
      %6361 = vmatprep.mubr.f32.mxu0 0.0
      %6362 = vmatmul.mubr.f32.gmra.mrb[0].mxu0 %v6200
      %v6363 = vpop.f32.mrb[0].mxu0
      %v6364 = vadd.f32 0.0, %v6363
      %v6365 = vpop.f32.mrb[0].mxu0
      %6366 = vmatprep.mubr.f32.mxu0 0.0
      %6367 = vmatmul.mubr.f32.gmra.mrb[0].mxu0 %v6201
      %v6368 = vpop.f32.mrb[0].mxu0
      %v6369 = vadd.f32 0.0, %v6368
      %v6370 = vpop.f32.mrb[0].mxu0
      %6371 = vmatprep.mubr.f32.mxu0 0.0
      %6372 = vmatmul.mubr.f32.gmra.mrb[0].mxu0 %v6202
      %v6373 = vpop.f32.mrb[0].mxu0
      %v6374 = vadd.f32 0.0, %v6373
      %v6375 = vpop.f32.mrb[0].mxu0
      %6376 = vmatprep.mubr.f32.mxu0 0.0
      %6377 = vmatmul.mubr.f32.gmra.mrb[0].mxu0 %v6203
      %v6378 = vpop.f32.mrb[0].mxu0
      %v6379 = vadd.f32 0.0, %v6378
      %v6380 = vpop.f32.mrb[0].mxu0
      %6381 = vmatprep.mubr.f32.mxu0 0.0
      %6382 = vmatmul.mubr.f32.gmra.mrb[0].mxu0 %v6204
      %v6383 = vpop.f32.mrb[0].mxu0
      %v6384 = vadd.f32 0.0, %v6383
      %v6385 = vpop.f32.mrb[0].mxu0
      %6386 = vmatprep.mubr.f32.mxu0 0.0
      %6387 = vmatmul.mubr.f32.gmra.mrb[0].mxu0 %v6205
      %v6388 = vpop.f32.mrb[0].mxu0
      %v6389 = vadd.f32 0.0, %v6388
      %v6390 = vpop.f32.mrb[0].mxu0
      %6391 = vmatprep.mubr.f32.mxu0 0.0
      %6392 = vmatmul.mubr.f32.gmra.mrb[0].mxu0 %v6206
      %v6393 = vpop.f32.mrb[0].mxu0
      %v6394 = vadd.f32 0.0, %v6393
      %v6395 = vpop.f32.mrb[0].mxu0
      %6396 = vmatprep.mubr.f32.mxu0 0.0
      %6397 = vmatmul.mubr.f32.gmra.mrb[0].mxu0 %v6207
      %v6398 = vpop.f32.mrb[0].mxu0
      %v6399 = vadd.f32 0.0, %v6398
      %v6400 = vpop.f32.mrb[0].mxu0
      %6401 = vmatprep.mubr.f32.mxu0 0.0
      %6402 = vmatmul.mubr.f32.gmra.mrb[0].mxu0 %v6208
      %v6403 = vpop.f32.mrb[0].mxu0
      %v6404 = vadd.f32 0.0, %v6403
      %v6405 = vpop.f32.mrb[0].mxu0
      %6406 = vmatprep.mubr.f32.mxu0 0.0
      %6407 = vmatmul.mubr.f32.gmra.mrb[0].mxu0 %v6209
      %v6408 = vpop.f32.mrb[0].mxu0
      %v6409 = vadd.f32 0.0, %v6408
      %v6410 = vpop.f32.mrb[0].mxu0
      %6411 = vmatprep.mubr.f32.mxu0 0.0
      %6412 = vmatmul.mubr.f32.gmra.mrb[0].mxu0 %v6210
      %v6413 = vpop.f32.mrb[0].mxu0
      %v6414 = vadd.f32 0.0, %v6413
      %v6415 = vpop.f32.mrb[0].mxu0
      %6416 = vmatprep.mubr.f32.mxu0 0.0
      %6417 = vmatmul.mubr.f32.gmra.mrb[0].mxu0 %v6211
      %v6418 = vpop.f32.mrb[0].mxu0
      %v6419 = vadd.f32 0.0, %v6418
      %v6420 = vpop.f32.mrb[0].mxu0
      %6421 = vmatprep.mubr.f32.mxu0 0.0
      %6422 = vmatmul.mubr.f32.gmra.mrb[0].mxu0 %v6212
      %v6423 = vpop.f32.mrb[0].mxu0
      %v6424 = vadd.f32 0.0, %v6423
      %v6425 = vpop.f32.mrb[0].mxu0
      %6426 = vmatprep.mubr.f32.mxu0 0.0
      %6427 = vmatmul.mubr.f32.gmra.mrb[0].mxu0 %v6213
      %v6428 = vpop.f32.mrb[0].mxu0
      %v6429 = vadd.f32 0.0, %v6428
      %v6430 = vpop.f32.mrb[0].mxu0
      %6431 = vmatprep.mubr.f32.mxu0 0.0
      %6432 = vmatmul.mubr.f32.gmra.mrb[0].mxu0 %v6214
      %v6433 = vpop.f32.mrb[0].mxu0
      %v6434 = vadd.f32 0.0, %v6433
      %v6435 = vpop.f32.mrb[0].mxu0
      %6436 = vmatprep.mubr.f32.mxu0 0.0
      %6437 = vmatmul.mubr.f32.gmra.mrb[0].mxu0 %v6215
      %v6438 = vpop.f32.mrb[0].mxu0
      %v6439 = vadd.f32 0.0, %v6438
      %v6440 = vpop.f32.mrb[0].mxu0
      %6441 = vmatprep.mubr.f32.mxu0 0.0
      %6442 = vmatmul.mubr.f32.gmra.mrb[0].mxu0 %v6216
      %v6443 = vpop.f32.mrb[0].mxu0
      %v6444 = vadd.f32 0.0, %v6443
      %v6445 = vpop.f32.mrb[0].mxu0
      %6446 = vmatprep.mubr.f32.mxu0 0.0
      %6447 = vmatmul.mubr.f32.gmra.mrb[0].mxu0 %v6217
      %v6448 = vpop.f32.mrb[0].mxu0
      %v6449 = vadd.f32 0.0, %v6448
      %v6450 = vpop.f32.mrb[0].mxu0
      %6451 = vmatprep.mubr.f32.mxu0 0.0
      %6452 = vmatmul.mubr.f32.gmra.mrb[0].mxu0 %v6218
      %v6453 = vpop.f32.mrb[0].mxu0
      %v6454 = vadd.f32 0.0, %v6453
      %v6455 = vpop.f32.mrb[0].mxu0
      %6456 = vmatprep.mubr.f32.mxu0 0.0
      %6457 = vmatmul.mubr.f32.gmra.mrb[0].mxu0 %v6219
      %v6458 = vpop.f32.mrb[0].mxu0
      %v6459 = vadd.f32 0.0, %v6458
      %v6460 = vpop.f32.mrb[0].mxu0
      %6461 = vdwg.mxu0
      %v6462 = vadd.f32 %v6156, %v6304
      %v6463 = vadd.f32 %v6157, %v6309
      %v6464 = vadd.f32 %v6158, %v6314
      %v6465 = vadd.f32 %v6159, %v6319
      %v6466 = vadd.f32 %v6160, %v6324
      %v6467 = vadd.f32 %v6161, %v6329
      %v6468 = vadd.f32 %v6162, %v6334
      %v6469 = vadd.f32 %v6163, %v6339
      %v6470 = vadd.f32 %v6164, %v6344
      %v6471 = vadd.f32 %v6165, %v6349
      %v6472 = vadd.f32 %v6166, %v6354
      %v6473 = vadd.f32 %v6167, %v6359
      %v6474 = vadd.f32 %v6168, %v6364
      %v6475 = vadd.f32 %v6169, %v6369
      %v6476 = vadd.f32 %v6170, %v6374
      %v6477 = vadd.f32 %v6171, %v6379
      %v6478 = vadd.f32 %v6172, %v6384
      %v6479 = vadd.f32 %v6173, %v6389
      %v6480 = vadd.f32 %v6174, %v6394
      %v6481 = vadd.f32 %v6175, %v6399
      %v6482 = vadd.f32 %v6176, %v6404
      %v6483 = vadd.f32 %v6177, %v6409
      %v6484 = vadd.f32 %v6178, %v6414
      %v6485 = vadd.f32 %v6179, %v6419
      %v6486 = vadd.f32 %v6180, %v6424
      %v6487 = vadd.f32 %v6181, %v6429
      %v6488 = vadd.f32 %v6182, %v6434
      %v6489 = vadd.f32 %v6183, %v6439
      %v6490 = vadd.f32 %v6184, %v6444
      %v6491 = vadd.f32 %v6185, %v6449
      %v6492 = vadd.f32 %v6186, %v6454
      %v6493 = vadd.f32 %v6187, %v6459
      %v6494 = vld [vmem:[%s4] sm:$0x1]
      %v6496 = vlaneseq
      %v6497 = vshrl.u32 %v6496, 7
      %v6498 = vsub.s32 0, %v6497
      %v6499 = vrot.slane %v6494, %v6498
      %v6501 = vadd.f32 %v6462, %v6499
      %v6502 = vadd.f32 %v6463, %v6499
      %v6503 = vadd.f32 %v6464, %v6499
      %v6504 = vadd.f32 %v6465, %v6499
      %v6505 = vadd.f32 %v6466, %v6499
      %v6506 = vadd.f32 %v6467, %v6499
      %v6507 = vadd.f32 %v6468, %v6499
      %v6508 = vadd.f32 %v6469, %v6499
      %v6509 = vadd.f32 %v6470, %v6499
      %v6510 = vadd.f32 %v6471, %v6499
      %v6511 = vadd.f32 %v6472, %v6499
      %v6512 = vadd.f32 %v6473, %v6499
      %v6513 = vadd.f32 %v6474, %v6499
      %v6514 = vadd.f32 %v6475, %v6499
      %v6515 = vadd.f32 %v6476, %v6499
      %v6516 = vadd.f32 %v6477, %v6499
      %v6517 = vadd.f32 %v6478, %v6499
      %v6518 = vadd.f32 %v6479, %v6499
      %v6519 = vadd.f32 %v6480, %v6499
      %v6520 = vadd.f32 %v6481, %v6499
      %v6521 = vadd.f32 %v6482, %v6499
      %v6522 = vadd.f32 %v6483, %v6499
      %v6523 = vadd.f32 %v6484, %v6499
      %v6524 = vadd.f32 %v6485, %v6499
      %v6525 = vadd.f32 %v6486, %v6499
      %v6526 = vadd.f32 %v6487, %v6499
      %v6527 = vadd.f32 %v6488, %v6499
      %v6528 = vadd.f32 %v6489, %v6499
      %v6529 = vadd.f32 %v6490, %v6499
      %v6530 = vadd.f32 %v6491, %v6499
      %v6531 = vadd.f32 %v6492, %v6499
      %v6532 = vadd.f32 %v6493, %v6499
      %v6533 = vmax.f32 %v6501, 0.0
      %v6534 = vmax.f32 %v6502, 0.0
      %v6535 = vmax.f32 %v6503, 0.0
      %v6536 = vmax.f32 %v6504, 0.0
      %v6537 = vmax.f32 %v6505, 0.0
      %v6538 = vmax.f32 %v6506, 0.0
      %v6539 = vmax.f32 %v6507, 0.0
      %v6540 = vmax.f32 %v6508, 0.0
      %v6541 = vmax.f32 %v6509, 0.0
      %v6542 = vmax.f32 %v6510, 0.0
      %v6543 = vmax.f32 %v6511, 0.0
      %v6544 = vmax.f32 %v6512, 0.0
      %v6545 = vmax.f32 %v6513, 0.0
      %v6546 = vmax.f32 %v6514, 0.0
      %v6547 = vmax.f32 %v6515, 0.0
      %v6548 = vmax.f32 %v6516, 0.0
      %v6549 = vmax.f32 %v6517, 0.0
      %v6550 = vmax.f32 %v6518, 0.0
      %v6551 = vmax.f32 %v6519, 0.0
      %v6552 = vmax.f32 %v6520, 0.0
      %v6553 = vmax.f32 %v6521, 0.0
      %v6554 = vmax.f32 %v6522, 0.0
      %v6555 = vmax.f32 %v6523, 0.0
      %v6556 = vmax.f32 %v6524, 0.0
      %v6557 = vmax.f32 %v6525, 0.0
      %v6558 = vmax.f32 %v6526, 0.0
      %v6559 = vmax.f32 %v6527, 0.0
      %v6560 = vmax.f32 %v6528, 0.0
      %v6561 = vmax.f32 %v6529, 0.0
      %v6562 = vmax.f32 %v6530, 0.0
      %v6563 = vmax.f32 %v6531, 0.0
      %v6564 = vmax.f32 %v6532, 0.0
      %6565 = vst [vmem:[%s224] sm:$0xff] %v6533
      %6566 = vst [vmem:[%s224 + $0x8] sm:$0xff] %v6534
      %6567 = vst [vmem:[%s224 + $0x10] sm:$0xff] %v6535
      %6568 = vst [vmem:[%s224 + $0x18] sm:$0xff] %v6536
      %6569 = vst [vmem:[%s224 + $0x20] sm:$0xff] %v6537
      %6570 = vst [vmem:[%s224 + $0x28] sm:$0xff] %v6538
      %6571 = vst [vmem:[%s224 + $0x30] sm:$0xff] %v6539
      %6572 = vst [vmem:[%s224 + $0x38] sm:$0xff] %v6540
      %6573 = vst [vmem:[%s224 + $0x40] sm:$0xff] %v6541
      %6574 = vst [vmem:[%s224 + $0x48] sm:$0xff] %v6542
      %6575 = vst [vmem:[%s224 + $0x50] sm:$0xff] %v6543
      %6576 = vst [vmem:[%s224 + $0x58] sm:$0xff] %v6544
      %6577 = vst [vmem:[%s224 + $0x60] sm:$0xff] %v6545
      %6578 = vst [vmem:[%s224 + $0x68] sm:$0xff] %v6546
      %6579 = vst [vmem:[%s224 + $0x70] sm:$0xff] %v6547
      %6580 = vst [vmem:[%s224 + $0x78] sm:$0xff] %v6548
      %6581 = vst [vmem:[%s224 + $0x80] sm:$0xff] %v6549
      %6582 = vst [vmem:[%s224 + $0x88] sm:$0xff] %v6550
      %6583 = vst [vmem:[%s224 + $0x90] sm:$0xff] %v6551
      %6584 = vst [vmem:[%s224 + $0x98] sm:$0xff] %v6552
      %6585 = vst [vmem:[%s224 + $0xa0] sm:$0xff] %v6553
      %6586 = vst [vmem:[%s224 + $0xa8] sm:$0xff] %v6554
      %6587 = vst [vmem:[%s224 + $0xb0] sm:$0xff] %v6555
      %6588 = vst [vmem:[%s224 + $0xb8] sm:$0xff] %v6556
      %6589 = vst [vmem:[%s224 + $0xc0] sm:$0xff] %v6557
      %6590 = vst [vmem:[%s224 + $0xc8] sm:$0xff] %v6558
      %6591 = vst [vmem:[%s224 + $0xd0] sm:$0xff] %v6559
      %6592 = vst [vmem:[%s224 + $0xd8] sm:$0xff] %v6560
      %6593 = vst [vmem:[%s224 + $0xe0] sm:$0xff] %v6561
      %6594 = vst [vmem:[%s224 + $0xe8] sm:$0xff] %v6562
      %6595 = vst [vmem:[%s224 + $0xf0] sm:$0xff] %v6563
      %6596 = vst [vmem:[%s224 + $0xf8] sm:$0xff] %v6564
      %p6597 = scmp.lt.s32.totalorder %s16, 1
      %s6598 = scalar_select %p6597, %s16, 1
      %s6599 = smul.addr %s6598, 32
      %s6600 = smul.addr %s6599, 8
      %s6601 = scalar_lea.vmem %s5, %s6600
      // Predicated region
      $region41: #{forward.1} parent=39 // pred_check
        %p6602 = pneg %p144
      $region42: #{forward.1} parent=39 // pred_check_branch
        %6604 = sbr.rel (%p6602) target = $region44
      $region43: #{forward.1} parent=39 // pred_region
        _
      $region44: #{forward.1} parent=39 // pred_fallthru
        _
    $region40: #{forward.1} parent=5 // pred_fallthru
      _
    %p6605 = scmp.le.s32.totalorder 2, %s11
    // Predicated region
    $region45: #{forward.1} parent=5 // pred_check
      %p6606 = pneg %p6605
    $region46: #{forward.1} parent=5 // pred_check_branch
      %6608 = sbr.rel (%p6606) target = $region48
    $region47: #{forward.1} parent=5 // pred_region
      %s6609 = ssub.s32 %s11, 2
      // Predicated region
      $region49: #{forward.1} parent=47 // pred_check
        %p6610 = pneg %p150
      $region50: #{forward.1} parent=47 // pred_check_branch
        %6612 = sbr.rel (%p6610) target = $region52
      $region51: #{forward.1} parent=47 // pred_region
        %p6613 = scmp.lt.s32.totalorder %s17, 1
        %s6614 = scalar_select %p6613, %s17, 1
        %s6615 = smul.addr %s6614, 32
        %s6616 = smul.addr %s6615, 8
        %s6617 = scalar_lea.vmem %s5, %s6616
      $region52: #{forward.1} parent=47 // pred_fallthru
        _
    $region48: #{forward.1} parent=5 // pred_fallthru
      _
  $region6: #{forward.1} parent=0 // loop_footer
    %s15 = sadd.s32 1, %s11
  $region7: #{forward.1} parent=0 // loop_footer_branch
    %10 = sbr.rel target = $region3
  $region8: #{forward.1} parent=0 // loop_exit
    _

</llo_original>
